<compile_context>
chip_gen: v7x
topology: tpu7x:2x2x1
jax: 0.10.0
libtpu: 0.0.40
codegen_flags: <defaults>
</compile_context>

<pallas_src>
import jax
import jax.numpy as jnp
from jax.experimental import pallas as pl
from jax.experimental.pallas import tpu as pltpu

NET_CONFIG = [8, 8, 'M', 16, 16, 'M', 16, 16, 'M', 32, 32, 'M', 32, 32, 'M']
BN_EPS = 1e-5
_PAD = 128       # lane-aligned zero pad for the shifted conv / pool reads
_CIN_PAD = 8     # first-layer input channels padded 3 -> 8 (sublane aligned)


# ---------------------------------------------------------------------------
# In-kernel building blocks (operate on (C, N) values, N = Bt * H * W)
# ---------------------------------------------------------------------------
def _tap_masks(H, W, N, cache):
    """Boundary masks for the 9 conv taps at one resolution (cached per (H,W)).
    Masks are (1, N) bool; they also zero reads that would cross image
    boundaries in the lane-batched layout (lane = img*H*W + h*W + w)."""
    key = (H, W)
    if key in cache:
        return cache[key]
    shift = W.bit_length() - 1                       # log2(W), W power of two
    lane = jax.lax.broadcasted_iota(jnp.int32, (1, N), 1)
    p = lane & (H * W - 1)                           # pixel index inside image
    wpos = p & (W - 1)
    hpos = p >> shift
    cl, cr = wpos >= 1, wpos <= W - 2                # can read w-1 / w+1
    rt, rb = hpos >= 1, hpos <= H - 2                # can read h-1 / h+1
    masks = {}
    for dy in range(3):
        for dx in range(3):
            parts = []
            if dy == 0:
                parts.append(rt)
            if dy == 2:
                parts.append(rb)
            if dx == 0:
                parts.append(cl)
            if dx == 2:
                parts.append(cr)
            m = None
            for q in parts:
                m = q if m is None else (m & q)
            masks[(dy, dx)] = m
    cache[key] = masks
    return masks


def _conv3x3_bn_relu(a, w_ref, shift_ref, W, masks):
    """a: (Cin, N) f32.  w_ref: Ref[(Cout, 9*Cin) bf16] (BN scale pre-folded).
    shift_ref: Ref[(Cout, 1) f32].  Returns ReLU(conv3x3(a) + shift) (Cout, N) f32."""
    Cin, N = a.shape
    zpad = jnp.zeros((Cin, _PAD), jnp.float32)
    xp = jnp.concatenate([zpad, a, zpad], axis=1)    # (Cin, N + 2*_PAD)
    pieces = []
    for dy in range(3):
        for dx in range(3):
            if dy == 1 and dx == 1:
                sh = a
            else:
                off = _PAD + (dy - 1) * W + (dx - 1)
                sh = xp[:, off:off + N]              # zero-filled spatial shift
            m = masks[(dy, dx)]
            if m is not None:                        # mask in f32, then one cast
                sh = jnp.where(m, sh, 0.0)
            pieces.append(sh)
    stacked = jnp.concatenate(pieces, axis=0).astype(jnp.bfloat16)   # (9*Cin, N)
    acc = jnp.dot(w_ref[...], stacked, preferred_element_type=jnp.float32)
    return jnp.maximum(acc + shift_ref[...], 0.0)


def _maxpool2x2(a, s_ref, W):
    """a: (C, N) f32 -> (C, N//4) f32.  s_ref: (N, N//4) bf16 exact 0/1
    block-diagonal (per lane-batched image) anchor selector."""
    C, N = a.shape
    xp = jnp.concatenate([a, jnp.zeros((C, _PAD), jnp.float32)], axis=1)
    m = jnp.maximum(jnp.maximum(a, xp[:, 1:1 + N]),
                    jnp.maximum(xp[:, W:W + N], xp[:, W + 1:W + 1 + N]))
    # Even-(h,w) anchors never read across image boundaries / the zero fill, so
    # no masking is needed; the 0/1 matmul exactly compacts the anchor lanes.
    return jnp.dot(m.astype(jnp.bfloat16), s_ref[...],
                   preferred_element_type=jnp.float32)


def _make_net_kernel(plan, n_conv, n_pool):
    def kernel(*refs):
        x_ref = refs[0]
        conv_refs = refs[1:1 + 2 * n_conv]
        pool_refs = refs[1 + 2 * n_conv:1 + 2 * n_conv + n_pool]
        (w1_ref, b1_ref, w2_ref, b2_ref, w3_ref, b3_ref) = refs[
            1 + 2 * n_conv + n_pool:1 + 2 * n_conv + n_pool + 6]
        o_ref = refs[1 + 2 * n_conv + n_pool + 6]

        a = x_ref[0].astype(jnp.float32)                    # (8, Bt*H0*W0)
        mask_cache = {}
        ci = pi = 0
        for kind, H, W in plan:
            if kind == 'M':
                a = _maxpool2x2(a, pool_refs[pi], W)
                pi += 1
            else:
                masks = _tap_masks(H, W, a.shape[1], mask_cache)
                a = _conv3x3_bn_relu(a, conv_refs[2 * ci], conv_refs[2 * ci + 1],
                                     W, masks)
                ci += 1
        # a: (32, Bt).  AdaptiveAvgPool2d(7) on a 1x1 map broadcasts; the first
        # Linear was pre-folded over the 49 identical positions (w1 -> (64, 32)),
        # so the classifier consumes the (32, Bt) slab directly.
        h = jnp.maximum(jnp.dot(w1_ref[...], a, preferred_element_type=jnp.float32)
                        + b1_ref[...], 0.0)
        # TODO(synk): Dropout(0.5) implemented as inference-mode identity (no RNG mask).
        h = jnp.maximum(jnp.dot(w2_ref[...], h, preferred_element_type=jnp.float32)
                        + b2_ref[...], 0.0)
        o_ref[0] = (jnp.dot(w3_ref[...], h, preferred_element_type=jnp.float32)
                    + b3_ref[...])
    return kernel


# ---------------------------------------------------------------------------
# Parameter init (deterministic, synthetic, PyTorch-native layouts) and prep
# ---------------------------------------------------------------------------
def init_params(key):
    params = {"convs": []}
    in_c = 3
    for c in NET_CONFIG:
        if c == 'M':
            continue
        key, kw, kb, kg, kbe, km, kv = jax.random.split(key, 7)
        params["convs"].append(dict(
            w=jax.random.normal(kw, (c, in_c, 3, 3), jnp.float32) * jnp.sqrt(2.0 / (9 * in_c)),
            bias=0.01 * jax.random.normal(kb, (c,), jnp.float32),
            gamma=1.0 + 0.1 * jax.random.normal(kg, (c,), jnp.float32),
            beta=0.1 * jax.random.normal(kbe, (c,), jnp.float32),
            rmean=0.1 * jax.random.normal(km, (c,), jnp.float32),
            rvar=jax.random.uniform(kv, (c,), jnp.float32, minval=0.5, maxval=1.5),
        ))
        in_c = c

    def lin(k, fin, fout):
        k1, k2 = jax.random.split(k)
        return (jax.random.normal(k1, (fout, fin), jnp.float32) / jnp.sqrt(fin),
                0.01 * jax.random.normal(k2, (fout,), jnp.float32))

    key, k1, k2, k3 = jax.random.split(key, 4)
    params["fc1"] = lin(k1, 32 * 7 * 7, 64)
    params["fc2"] = lin(k2, 64, 64)
    params["fc3"] = lin(k3, 64, 2)
    return params


def _pool_selector(H, W, bt):
    """Exact 0/1 selector compacting even-(h,w) anchors, block-diagonal over the
    bt lane-batched images: (bt*H*W, bt*H*W//4) bf16."""
    HW, Wo = H * W, W // 2
    HWo = HW // 4
    r = jnp.arange(bt * HW, dtype=jnp.int32)[:, None]
    c = jnp.arange(bt * HWo, dtype=jnp.int32)[None, :]
    rb, rr = r // HW, r % HW
    cb, cc = c // HWo, c % HWo
    anchor = 2 * (cc // Wo) * W + 2 * (cc % Wo)
    return ((rb == cb) & (rr == anchor)).astype(jnp.bfloat16)


def prepare_operands(params, H, W, bt):
    """One-time prep: fold conv-bias + eval-BN into the bf16 conv weights and an
    additive shift, reorder weights to im2row layout (Cout, 9*Cin) (first layer
    Cin padded 3->8), build bf16 maxpool selectors for the lane batch, and
    pre-fold the first Linear over the 49 broadcast positions of the 1x1 -> 7x7
    adaptive average pool."""
    assert H == 32 and W == 32, "kernel is specialized to 32x32 inputs"
    assert (H & (H - 1)) == 0 and (W & (W - 1)) == 0, "H, W must be powers of two"
    # TODO(synk): general input sizes (pre-avgpool map != 1x1) would need a full
    # adaptive-avg-pool path instead of the folded-w1 shortcut.
    plan, conv_ops, pool_ops = [], [], []
    h, w, in_c, ci = H, W, 3, 0
    for c in NET_CONFIG:
        if c == 'M':
            plan.append(('M', h, w))
            pool_ops.append(_pool_selector(h, w, bt))
            h, w = h // 2, w // 2
        else:
            p = params["convs"][ci]
            ci += 1
            cin_pad = max(_CIN_PAD, ((in_c + 7) // 8) * 8)
            wt = jnp.transpose(p["w"], (0, 2, 3, 1))            # (Cout, 3, 3, Cin)
            if cin_pad != in_c:
                wt = jnp.pad(wt, ((0, 0), (0, 0), (0, 0), (0, cin_pad - in_c)))
            scale = p["gamma"] / jnp.sqrt(p["rvar"] + BN_EPS)
            shift = (p["bias"] - p["rmean"]) * scale + p["beta"]
            wfold = (wt * scale[:, None, None, None]).reshape(c, 9 * cin_pad)
            conv_ops += [wfold.astype(jnp.bfloat16),
                         shift.reshape(c, 1).astype(jnp.float32)]
            plan.append(('C', h, w))
            in_c = c
    assert h == 1 and w == 1
    w1, b1 = params["fc1"]
    w2, b2 = params["fc2"]
    w3, b3 = params["fc3"]
    w1_folded = w1.reshape(w1.shape[0], in_c, 49).sum(axis=-1)  # (64, 32)
    cls_ops = [w1_folded, b1.reshape(-1, 1), w2, b2.reshape(-1, 1),
               w3, b3.reshape(-1, 1)]
    return plan, conv_ops, pool_ops, cls_ops


# ---------------------------------------------------------------------------
# Forward: one fused pallas_call for the whole network
# ---------------------------------------------------------------------------
def choose_batch_tile(B):
    # TODO(synk): for large B, Bt could grow beyond 2 by switching the pool
    # compaction to a shared per-image selector (block-diagonal memory ~ Bt^2).
    return 2 if B % 2 == 0 else 1


def net_forward(x_nchw, plan, conv_ops, pool_ops, cls_ops, bt):
    B, C, H, W = x_nchw.shape
    assert B % bt == 0
    G = B // bt
    HW = H * W
    # bf16 input, channels padded 3->8, bt images packed along the lane axis.
    x = x_nchw.reshape(B, C, HW)
    x = jnp.pad(x, ((0, 0), (0, _CIN_PAD - C), (0, 0)))
    x = x.reshape(G, bt, _CIN_PAD, HW).transpose(0, 2, 1, 3).reshape(G, _CIN_PAD, bt * HW)
    x = x.astype(jnp.bfloat16)

    n_conv, n_pool = len(conv_ops) // 2, len(pool_ops)
    out_dim = cls_ops[4].shape[0]
    vmem = pl.BlockSpec(memory_space=pltpu.MemorySpace.VMEM)
    out = pl.pallas_call(
        _make_net_kernel(plan, n_conv, n_pool),
        out_shape=jax.ShapeDtypeStruct((G, out_dim, bt), jnp.float32),
        grid=(G,),
        in_specs=[pl.BlockSpec((1, _CIN_PAD, bt * HW), lambda g: (g, 0, 0))]
                 + [vmem] * (2 * n_conv + n_pool + 6),
        out_specs=pl.BlockSpec((1, out_dim, bt), lambda g: (g, 0, 0)),
        compiler_params=pltpu.CompilerParams(
            dimension_semantics=("parallel",)),
    )(x, *conv_ops, *pool_ops, *cls_ops)
    return out.transpose(0, 2, 1).reshape(B, out_dim)          # (B, 2)


if __name__ == "__main__":
    key = jax.random.PRNGKey(0)
    kp, kx = jax.random.split(key)
    params = init_params(kp)
    # NCHW input like the PyTorch module: 3 channels, 32x32 spatial, batch 2.
    x = jax.random.normal(kx, (2, 3, 32, 32), jnp.float32)
    B = x.shape[0]
    bt = choose_batch_tile(B)
    plan, conv_ops, pool_ops, cls_ops = prepare_operands(params, 32, 32, bt)
    out = net_forward(x, plan, conv_ops, pool_ops, cls_ops, bt)
    jax.block_until_ready(out)
    assert out.shape == (2, 2)
    assert bool(jnp.all(jnp.isfinite(out)))
    print("KERNEL_OK")
</pallas_src>

<mosaic_0001>
module attributes {stable_mosaic.version = 11 : i64} {
  func.func @kernel(%arg0: i32, %arg1: memref<1x8x2048xbf16, #tpu.memory_space<vmem>>, %arg2: memref<8x72xbf16, #tpu.memory_space<vmem>>, %arg3: memref<8x1xf32, #tpu.memory_space<vmem>>, %arg4: memref<8x72xbf16, #tpu.memory_space<vmem>>, %arg5: memref<8x1xf32, #tpu.memory_space<vmem>>, %arg6: memref<16x72xbf16, #tpu.memory_space<vmem>>, %arg7: memref<16x1xf32, #tpu.memory_space<vmem>>, %arg8: memref<16x144xbf16, #tpu.memory_space<vmem>>, %arg9: memref<16x1xf32, #tpu.memory_space<vmem>>, %arg10: memref<16x144xbf16, #tpu.memory_space<vmem>>, %arg11: memref<16x1xf32, #tpu.memory_space<vmem>>, %arg12: memref<16x144xbf16, #tpu.memory_space<vmem>>, %arg13: memref<16x1xf32, #tpu.memory_space<vmem>>, %arg14: memref<32x144xbf16, #tpu.memory_space<vmem>>, %arg15: memref<32x1xf32, #tpu.memory_space<vmem>>, %arg16: memref<32x288xbf16, #tpu.memory_space<vmem>>, %arg17: memref<32x1xf32, #tpu.memory_space<vmem>>, %arg18: memref<32x288xbf16, #tpu.memory_space<vmem>>, %arg19: memref<32x1xf32, #tpu.memory_space<vmem>>, %arg20: memref<32x288xbf16, #tpu.memory_space<vmem>>, %arg21: memref<32x1xf32, #tpu.memory_space<vmem>>, %arg22: memref<2048x512xbf16, #tpu.memory_space<vmem>>, %arg23: memref<512x128xbf16, #tpu.memory_space<vmem>>, %arg24: memref<128x32xbf16, #tpu.memory_space<vmem>>, %arg25: memref<32x8xbf16, #tpu.memory_space<vmem>>, %arg26: memref<8x2xbf16, #tpu.memory_space<vmem>>, %arg27: memref<64x32xf32, #tpu.memory_space<vmem>>, %arg28: memref<64x1xf32, #tpu.memory_space<vmem>>, %arg29: memref<64x64xf32, #tpu.memory_space<vmem>>, %arg30: memref<64x1xf32, #tpu.memory_space<vmem>>, %arg31: memref<2x64xf32, #tpu.memory_space<vmem>>, %arg32: memref<2x1xf32, #tpu.memory_space<vmem>>, %arg33: memref<1x2x2xf32, #tpu.memory_space<vmem>>) attributes {dimension_semantics = [#tpu.dimension_semantics<parallel>], iteration_bounds = array<i64: 1>, scalar_prefetch = 0 : i64, scratch_operands = 0 : i64, tpu.core_type = #tpu.core_type<tc>, window_params = [{transform_indices = @transform_0, window_bounds = array<i64: 1, 8, 2048>}, {pipeline_mode = #tpu.pipeline_mode<synchronous>, transform_indices = @transform_1, window_bounds = array<i64: 8, 72>}, {pipeline_mode = #tpu.pipeline_mode<synchronous>, transform_indices = @transform_2, window_bounds = array<i64: 8, 1>}, {pipeline_mode = #tpu.pipeline_mode<synchronous>, transform_indices = @transform_3, window_bounds = array<i64: 8, 72>}, {pipeline_mode = #tpu.pipeline_mode<synchronous>, transform_indices = @transform_4, window_bounds = array<i64: 8, 1>}, {pipeline_mode = #tpu.pipeline_mode<synchronous>, transform_indices = @transform_5, window_bounds = array<i64: 16, 72>}, {pipeline_mode = #tpu.pipeline_mode<synchronous>, transform_indices = @transform_6, window_bounds = array<i64: 16, 1>}, {pipeline_mode = #tpu.pipeline_mode<synchronous>, transform_indices = @transform_7, window_bounds = array<i64: 16, 144>}, {pipeline_mode = #tpu.pipeline_mode<synchronous>, transform_indices = @transform_8, window_bounds = array<i64: 16, 1>}, {pipeline_mode = #tpu.pipeline_mode<synchronous>, transform_indices = @transform_9, window_bounds = array<i64: 16, 144>}, {pipeline_mode = #tpu.pipeline_mode<synchronous>, transform_indices = @transform_10, window_bounds = array<i64: 16, 1>}, {pipeline_mode = #tpu.pipeline_mode<synchronous>, transform_indices = @transform_11, window_bounds = array<i64: 16, 144>}, {pipeline_mode = #tpu.pipeline_mode<synchronous>, transform_indices = @transform_12, window_bounds = array<i64: 16, 1>}, {pipeline_mode = #tpu.pipeline_mode<synchronous>, transform_indices = @transform_13, window_bounds = array<i64: 32, 144>}, {pipeline_mode = #tpu.pipeline_mode<synchronous>, transform_indices = @transform_14, window_bounds = array<i64: 32, 1>}, {pipeline_mode = #tpu.pipeline_mode<synchronous>, transform_indices = @transform_15, window_bounds = array<i64: 32, 288>}, {pipeline_mode = #tpu.pipeline_mode<synchronous>, transform_indices = @transform_16, window_bounds = array<i64: 32, 1>}, {pipeline_mode = #tpu.pipeline_mode<synchronous>, transform_indices = @transform_17, window_bounds = array<i64: 32, 288>}, {pipeline_mode = #tpu.pipeline_mode<synchronous>, transform_indices = @transform_18, window_bounds = array<i64: 32, 1>}, {pipeline_mode = #tpu.pipeline_mode<synchronous>, transform_indices = @transform_19, window_bounds = array<i64: 32, 288>}, {pipeline_mode = #tpu.pipeline_mode<synchronous>, transform_indices = @transform_20, window_bounds = array<i64: 32, 1>}, {pipeline_mode = #tpu.pipeline_mode<synchronous>, transform_indices = @transform_21, window_bounds = array<i64: 2048, 512>}, {pipeline_mode = #tpu.pipeline_mode<synchronous>, transform_indices = @transform_22, window_bounds = array<i64: 512, 128>}, {pipeline_mode = #tpu.pipeline_mode<synchronous>, transform_indices = @transform_23, window_bounds = array<i64: 128, 32>}, {pipeline_mode = #tpu.pipeline_mode<synchronous>, transform_indices = @transform_24, window_bounds = array<i64: 32, 8>}, {pipeline_mode = #tpu.pipeline_mode<synchronous>, transform_indices = @transform_25, window_bounds = array<i64: 8, 2>}, {pipeline_mode = #tpu.pipeline_mode<synchronous>, transform_indices = @transform_26, window_bounds = array<i64: 64, 32>}, {pipeline_mode = #tpu.pipeline_mode<synchronous>, transform_indices = @transform_27, window_bounds = array<i64: 64, 1>}, {pipeline_mode = #tpu.pipeline_mode<synchronous>, transform_indices = @transform_28, window_bounds = array<i64: 64, 64>}, {pipeline_mode = #tpu.pipeline_mode<synchronous>, transform_indices = @transform_29, window_bounds = array<i64: 64, 1>}, {pipeline_mode = #tpu.pipeline_mode<synchronous>, transform_indices = @transform_30, window_bounds = array<i64: 2, 64>}, {pipeline_mode = #tpu.pipeline_mode<synchronous>, transform_indices = @transform_31, window_bounds = array<i64: 2, 1>}, {transform_indices = @transform_32, window_bounds = array<i64: 1, 2, 2>}]} {
    %c0 = arith.constant 0 : index
    %c0_0 = arith.constant 0 : index
    %c0_1 = arith.constant 0 : index
    %0 = vector.load %arg1[%c0, %c0_0, %c0_1] : memref<1x8x2048xbf16, #tpu.memory_space<vmem>>, vector<1x8x2048xbf16>
    %1 = vector.shape_cast %0 : vector<1x8x2048xbf16> to vector<8x2048xbf16>
    %2 = arith.extf %1 : vector<8x2048xbf16> to vector<8x2048xf32>
    %3 = tpu.iota {dimensions = array<i32: 1>} : vector<1x2048xi32>
    %c1023_i32 = arith.constant 1023 : i32
    %4 = vector.broadcast %c1023_i32 : i32 to vector<1x2048xi32>
    %5 = arith.andi %3, %4 : vector<1x2048xi32>
    %c31_i32 = arith.constant 31 : i32
    %6 = vector.broadcast %c31_i32 : i32 to vector<1x2048xi32>
    %7 = arith.andi %5, %6 : vector<1x2048xi32>
    %c5_i32 = arith.constant 5 : i32
    %8 = vector.broadcast %c5_i32 : i32 to vector<1x2048xi32>
    %9 = arith.shrsi %5, %8 : vector<1x2048xi32>
    %c1_i32 = arith.constant 1 : i32
    %10 = vector.broadcast %c1_i32 : i32 to vector<1x2048xi32>
    %11 = arith.cmpi sge, %7, %10 : vector<1x2048xi32>
    %c30_i32 = arith.constant 30 : i32
    %12 = vector.broadcast %c30_i32 : i32 to vector<1x2048xi32>
    %13 = arith.cmpi sle, %7, %12 : vector<1x2048xi32>
    %c1_i32_2 = arith.constant 1 : i32
    %14 = vector.broadcast %c1_i32_2 : i32 to vector<1x2048xi32>
    %15 = arith.cmpi sge, %9, %14 : vector<1x2048xi32>
    %c30_i32_3 = arith.constant 30 : i32
    %16 = vector.broadcast %c30_i32_3 : i32 to vector<1x2048xi32>
    %17 = arith.cmpi sle, %9, %16 : vector<1x2048xi32>
    %18 = arith.andi %15, %11 : vector<1x2048xi1>
    %19 = arith.andi %15, %13 : vector<1x2048xi1>
    %20 = arith.andi %17, %11 : vector<1x2048xi1>
    %21 = arith.andi %17, %13 : vector<1x2048xi1>
    %cst = arith.constant 0.000000e+00 : f32
    %22 = vector.broadcast %cst : f32 to vector<8x128xf32>
    %23 = tpu.concatenate %22, %2, %22 in 1 : vector<8x128xf32>, vector<8x2048xf32>, vector<8x128xf32> -> vector<8x2304xf32>
    %24 = vector.extract_strided_slice %23 {offsets = [0, 95], sizes = [8, 2048], strides = [1, 1]} : vector<8x2304xf32> to vector<8x2048xf32>
    %cst_4 = arith.constant 0.000000e+00 : f32
    %25 = vector.shape_cast %18 : vector<1x2048xi1> to vector<1x2048xi1>
    %26 = vector.broadcast %25 : vector<1x2048xi1> to vector<8x2048xi1>
    %27 = vector.broadcast %cst_4 : f32 to vector<8x2048xf32>
    %28 = arith.select %26, %24, %27 : vector<8x2048xi1>, vector<8x2048xf32>
    %29 = vector.extract_strided_slice %23 {offsets = [0, 96], sizes = [8, 2048], strides = [1, 1]} : vector<8x2304xf32> to vector<8x2048xf32>
    %cst_5 = arith.constant 0.000000e+00 : f32
    %30 = vector.shape_cast %15 : vector<1x2048xi1> to vector<1x2048xi1>
    %31 = vector.broadcast %30 : vector<1x2048xi1> to vector<8x2048xi1>
    %32 = vector.broadcast %cst_5 : f32 to vector<8x2048xf32>
    %33 = arith.select %31, %29, %32 : vector<8x2048xi1>, vector<8x2048xf32>
    %34 = vector.extract_strided_slice %23 {offsets = [0, 97], sizes = [8, 2048], strides = [1, 1]} : vector<8x2304xf32> to vector<8x2048xf32>
    %cst_6 = arith.constant 0.000000e+00 : f32
    %35 = vector.shape_cast %19 : vector<1x2048xi1> to vector<1x2048xi1>
    %36 = vector.broadcast %35 : vector<1x2048xi1> to vector<8x2048xi1>
    %37 = vector.broadcast %cst_6 : f32 to vector<8x2048xf32>
    %38 = arith.select %36, %34, %37 : vector<8x2048xi1>, vector<8x2048xf32>
    %39 = vector.extract_strided_slice %23 {offsets = [0, 127], sizes = [8, 2048], strides = [1, 1]} : vector<8x2304xf32> to vector<8x2048xf32>
    %cst_7 = arith.constant 0.000000e+00 : f32
    %40 = vector.shape_cast %11 : vector<1x2048xi1> to vector<1x2048xi1>
    %41 = vector.broadcast %40 : vector<1x2048xi1> to vector<8x2048xi1>
    %42 = vector.broadcast %cst_7 : f32 to vector<8x2048xf32>
    %43 = arith.select %41, %39, %42 : vector<8x2048xi1>, vector<8x2048xf32>
    %44 = vector.extract_strided_slice %23 {offsets = [0, 129], sizes = [8, 2048], strides = [1, 1]} : vector<8x2304xf32> to vector<8x2048xf32>
    %cst_8 = arith.constant 0.000000e+00 : f32
    %45 = vector.shape_cast %13 : vector<1x2048xi1> to vector<1x2048xi1>
    %46 = vector.broadcast %45 : vector<1x2048xi1> to vector<8x2048xi1>
    %47 = vector.broadcast %cst_8 : f32 to vector<8x2048xf32>
    %48 = arith.select %46, %44, %47 : vector<8x2048xi1>, vector<8x2048xf32>
    %49 = vector.extract_strided_slice %23 {offsets = [0, 159], sizes = [8, 2048], strides = [1, 1]} : vector<8x2304xf32> to vector<8x2048xf32>
    %cst_9 = arith.constant 0.000000e+00 : f32
    %50 = vector.shape_cast %20 : vector<1x2048xi1> to vector<1x2048xi1>
    %51 = vector.broadcast %50 : vector<1x2048xi1> to vector<8x2048xi1>
    %52 = vector.broadcast %cst_9 : f32 to vector<8x2048xf32>
    %53 = arith.select %51, %49, %52 : vector<8x2048xi1>, vector<8x2048xf32>
    %54 = vector.extract_strided_slice %23 {offsets = [0, 160], sizes = [8, 2048], strides = [1, 1]} : vector<8x2304xf32> to vector<8x2048xf32>
    %cst_10 = arith.constant 0.000000e+00 : f32
    %55 = vector.shape_cast %17 : vector<1x2048xi1> to vector<1x2048xi1>
    %56 = vector.broadcast %55 : vector<1x2048xi1> to vector<8x2048xi1>
    %57 = vector.broadcast %cst_10 : f32 to vector<8x2048xf32>
    %58 = arith.select %56, %54, %57 : vector<8x2048xi1>, vector<8x2048xf32>
    %59 = vector.extract_strided_slice %23 {offsets = [0, 161], sizes = [8, 2048], strides = [1, 1]} : vector<8x2304xf32> to vector<8x2048xf32>
    %cst_11 = arith.constant 0.000000e+00 : f32
    %60 = vector.shape_cast %21 : vector<1x2048xi1> to vector<1x2048xi1>
    %61 = vector.broadcast %60 : vector<1x2048xi1> to vector<8x2048xi1>
    %62 = vector.broadcast %cst_11 : f32 to vector<8x2048xf32>
    %63 = arith.select %61, %59, %62 : vector<8x2048xi1>, vector<8x2048xf32>
    %64 = tpu.concatenate %28, %33, %38, %43, %2, %48, %53, %58, %63 in 0 : vector<8x2048xf32>, vector<8x2048xf32>, vector<8x2048xf32>, vector<8x2048xf32>, vector<8x2048xf32>, vector<8x2048xf32>, vector<8x2048xf32>, vector<8x2048xf32>, vector<8x2048xf32> -> vector<72x2048xf32>
    %65 = arith.truncf %64 : vector<72x2048xf32> to vector<72x2048xbf16>
    %c0_12 = arith.constant 0 : index
    %c0_13 = arith.constant 0 : index
    %66 = vector.load %arg2[%c0_12, %c0_13] : memref<8x72xbf16, #tpu.memory_space<vmem>>, vector<8x72xbf16>
    %cst_14 = arith.constant dense<0.000000e+00> : vector<8x2048xf32>
    %67 = tpu.matmul %66, %65, %cst_14 {dimension_numbers = #tpu.dot_dimension_numbers<[1], [0], [0], [1], [0, 0, 1, 1], [], []>} : vector<8x72xbf16>, vector<72x2048xbf16>, vector<8x2048xf32> -> vector<8x2048xf32>
    %c0_15 = arith.constant 0 : index
    %c0_16 = arith.constant 0 : index
    %68 = vector.load %arg3[%c0_15, %c0_16] : memref<8x1xf32, #tpu.memory_space<vmem>>, vector<8x1xf32>
    %69 = vector.broadcast %68 : vector<8x1xf32> to vector<8x2048xf32>
    %70 = arith.addf %67, %69 : vector<8x2048xf32>
    %cst_17 = arith.constant 0.000000e+00 : f32
    %71 = vector.broadcast %cst_17 : f32 to vector<8x2048xf32>
    %72 = arith.maximumf %70, %71 : vector<8x2048xf32>
    %cst_18 = arith.constant 0.000000e+00 : f32
    %73 = vector.broadcast %cst_18 : f32 to vector<8x128xf32>
    %74 = tpu.concatenate %73, %72, %73 in 1 : vector<8x128xf32>, vector<8x2048xf32>, vector<8x128xf32> -> vector<8x2304xf32>
    %75 = vector.extract_strided_slice %74 {offsets = [0, 95], sizes = [8, 2048], strides = [1, 1]} : vector<8x2304xf32> to vector<8x2048xf32>
    %cst_19 = arith.constant 0.000000e+00 : f32
    %76 = vector.shape_cast %18 : vector<1x2048xi1> to vector<1x2048xi1>
    %77 = vector.broadcast %76 : vector<1x2048xi1> to vector<8x2048xi1>
    %78 = vector.broadcast %cst_19 : f32 to vector<8x2048xf32>
    %79 = arith.select %77, %75, %78 : vector<8x2048xi1>, vector<8x2048xf32>
    %80 = vector.extract_strided_slice %74 {offsets = [0, 96], sizes = [8, 2048], strides = [1, 1]} : vector<8x2304xf32> to vector<8x2048xf32>
    %cst_20 = arith.constant 0.000000e+00 : f32
    %81 = vector.shape_cast %15 : vector<1x2048xi1> to vector<1x2048xi1>
    %82 = vector.broadcast %81 : vector<1x2048xi1> to vector<8x2048xi1>
    %83 = vector.broadcast %cst_20 : f32 to vector<8x2048xf32>
    %84 = arith.select %82, %80, %83 : vector<8x2048xi1>, vector<8x2048xf32>
    %85 = vector.extract_strided_slice %74 {offsets = [0, 97], sizes = [8, 2048], strides = [1, 1]} : vector<8x2304xf32> to vector<8x2048xf32>
    %cst_21 = arith.constant 0.000000e+00 : f32
    %86 = vector.shape_cast %19 : vector<1x2048xi1> to vector<1x2048xi1>
    %87 = vector.broadcast %86 : vector<1x2048xi1> to vector<8x2048xi1>
    %88 = vector.broadcast %cst_21 : f32 to vector<8x2048xf32>
    %89 = arith.select %87, %85, %88 : vector<8x2048xi1>, vector<8x2048xf32>
    %90 = vector.extract_strided_slice %74 {offsets = [0, 127], sizes = [8, 2048], strides = [1, 1]} : vector<8x2304xf32> to vector<8x2048xf32>
    %cst_22 = arith.constant 0.000000e+00 : f32
    %91 = vector.shape_cast %11 : vector<1x2048xi1> to vector<1x2048xi1>
    %92 = vector.broadcast %91 : vector<1x2048xi1> to vector<8x2048xi1>
    %93 = vector.broadcast %cst_22 : f32 to vector<8x2048xf32>
    %94 = arith.select %92, %90, %93 : vector<8x2048xi1>, vector<8x2048xf32>
    %95 = vector.extract_strided_slice %74 {offsets = [0, 129], sizes = [8, 2048], strides = [1, 1]} : vector<8x2304xf32> to vector<8x2048xf32>
    %cst_23 = arith.constant 0.000000e+00 : f32
    %96 = vector.shape_cast %13 : vector<1x2048xi1> to vector<1x2048xi1>
    %97 = vector.broadcast %96 : vector<1x2048xi1> to vector<8x2048xi1>
    %98 = vector.broadcast %cst_23 : f32 to vector<8x2048xf32>
    %99 = arith.select %97, %95, %98 : vector<8x2048xi1>, vector<8x2048xf32>
    %100 = vector.extract_strided_slice %74 {offsets = [0, 159], sizes = [8, 2048], strides = [1, 1]} : vector<8x2304xf32> to vector<8x2048xf32>
    %cst_24 = arith.constant 0.000000e+00 : f32
    %101 = vector.shape_cast %20 : vector<1x2048xi1> to vector<1x2048xi1>
    %102 = vector.broadcast %101 : vector<1x2048xi1> to vector<8x2048xi1>
    %103 = vector.broadcast %cst_24 : f32 to vector<8x2048xf32>
    %104 = arith.select %102, %100, %103 : vector<8x2048xi1>, vector<8x2048xf32>
    %105 = vector.extract_strided_slice %74 {offsets = [0, 160], sizes = [8, 2048], strides = [1, 1]} : vector<8x2304xf32> to vector<8x2048xf32>
    %cst_25 = arith.constant 0.000000e+00 : f32
    %106 = vector.shape_cast %17 : vector<1x2048xi1> to vector<1x2048xi1>
    %107 = vector.broadcast %106 : vector<1x2048xi1> to vector<8x2048xi1>
    %108 = vector.broadcast %cst_25 : f32 to vector<8x2048xf32>
    %109 = arith.select %107, %105, %108 : vector<8x2048xi1>, vector<8x2048xf32>
    %110 = vector.extract_strided_slice %74 {offsets = [0, 161], sizes = [8, 2048], strides = [1, 1]} : vector<8x2304xf32> to vector<8x2048xf32>
    %cst_26 = arith.constant 0.000000e+00 : f32
    %111 = vector.shape_cast %21 : vector<1x2048xi1> to vector<1x2048xi1>
    %112 = vector.broadcast %111 : vector<1x2048xi1> to vector<8x2048xi1>
    %113 = vector.broadcast %cst_26 : f32 to vector<8x2048xf32>
    %114 = arith.select %112, %110, %113 : vector<8x2048xi1>, vector<8x2048xf32>
    %115 = tpu.concatenate %79, %84, %89, %94, %72, %99, %104, %109, %114 in 0 : vector<8x2048xf32>, vector<8x2048xf32>, vector<8x2048xf32>, vector<8x2048xf32>, vector<8x2048xf32>, vector<8x2048xf32>, vector<8x2048xf32>, vector<8x2048xf32>, vector<8x2048xf32> -> vector<72x2048xf32>
    %116 = arith.truncf %115 : vector<72x2048xf32> to vector<72x2048xbf16>
    %c0_27 = arith.constant 0 : index
    %c0_28 = arith.constant 0 : index
    %117 = vector.load %arg4[%c0_27, %c0_28] : memref<8x72xbf16, #tpu.memory_space<vmem>>, vector<8x72xbf16>
    %cst_29 = arith.constant dense<0.000000e+00> : vector<8x2048xf32>
    %118 = tpu.matmul %117, %116, %cst_29 {dimension_numbers = #tpu.dot_dimension_numbers<[1], [0], [0], [1], [0, 0, 1, 1], [], []>} : vector<8x72xbf16>, vector<72x2048xbf16>, vector<8x2048xf32> -> vector<8x2048xf32>
    %c0_30 = arith.constant 0 : index
    %c0_31 = arith.constant 0 : index
    %119 = vector.load %arg5[%c0_30, %c0_31] : memref<8x1xf32, #tpu.memory_space<vmem>>, vector<8x1xf32>
    %120 = vector.broadcast %119 : vector<8x1xf32> to vector<8x2048xf32>
    %121 = arith.addf %118, %120 : vector<8x2048xf32>
    %cst_32 = arith.constant 0.000000e+00 : f32
    %122 = vector.broadcast %cst_32 : f32 to vector<8x2048xf32>
    %123 = arith.maximumf %121, %122 : vector<8x2048xf32>
    %cst_33 = arith.constant 0.000000e+00 : f32
    %124 = vector.broadcast %cst_33 : f32 to vector<8x128xf32>
    %125 = tpu.concatenate %123, %124 in 1 : vector<8x2048xf32>, vector<8x128xf32> -> vector<8x2176xf32>
    %126 = vector.extract_strided_slice %125 {offsets = [0, 1], sizes = [8, 2048], strides = [1, 1]} : vector<8x2176xf32> to vector<8x2048xf32>
    %127 = arith.maximumf %123, %126 : vector<8x2048xf32>
    %128 = vector.extract_strided_slice %125 {offsets = [0, 32], sizes = [8, 2048], strides = [1, 1]} : vector<8x2176xf32> to vector<8x2048xf32>
    %129 = vector.extract_strided_slice %125 {offsets = [0, 33], sizes = [8, 2048], strides = [1, 1]} : vector<8x2176xf32> to vector<8x2048xf32>
    %130 = arith.maximumf %128, %129 : vector<8x2048xf32>
    %131 = arith.maximumf %127, %130 : vector<8x2048xf32>
    %132 = arith.truncf %131 : vector<8x2048xf32> to vector<8x2048xbf16>
    %c0_34 = arith.constant 0 : index
    %c0_35 = arith.constant 0 : index
    %133 = vector.load %arg22[%c0_34, %c0_35] : memref<2048x512xbf16, #tpu.memory_space<vmem>>, vector<2048x512xbf16>
    %cst_36 = arith.constant dense<0.000000e+00> : vector<8x512xf32>
    %134 = tpu.matmul %132, %133, %cst_36 {dimension_numbers = #tpu.dot_dimension_numbers<[1], [0], [0], [1], [0, 0, 1, 1], [], []>} : vector<8x2048xbf16>, vector<2048x512xbf16>, vector<8x512xf32> -> vector<8x512xf32>
    %135 = tpu.iota {dimensions = array<i32: 1>} : vector<1x512xi32>
    %c255_i32 = arith.constant 255 : i32
    %136 = vector.broadcast %c255_i32 : i32 to vector<1x512xi32>
    %137 = arith.andi %135, %136 : vector<1x512xi32>
    %c15_i32 = arith.constant 15 : i32
    %138 = vector.broadcast %c15_i32 : i32 to vector<1x512xi32>
    %139 = arith.andi %137, %138 : vector<1x512xi32>
    %c4_i32 = arith.constant 4 : i32
    %140 = vector.broadcast %c4_i32 : i32 to vector<1x512xi32>
    %141 = arith.shrsi %137, %140 : vector<1x512xi32>
    %c1_i32_37 = arith.constant 1 : i32
    %142 = vector.broadcast %c1_i32_37 : i32 to vector<1x512xi32>
    %143 = arith.cmpi sge, %139, %142 : vector<1x512xi32>
    %c14_i32 = arith.constant 14 : i32
    %144 = vector.broadcast %c14_i32 : i32 to vector<1x512xi32>
    %145 = arith.cmpi sle, %139, %144 : vector<1x512xi32>
    %c1_i32_38 = arith.constant 1 : i32
    %146 = vector.broadcast %c1_i32_38 : i32 to vector<1x512xi32>
    %147 = arith.cmpi sge, %141, %146 : vector<1x512xi32>
    %c14_i32_39 = arith.constant 14 : i32
    %148 = vector.broadcast %c14_i32_39 : i32 to vector<1x512xi32>
    %149 = arith.cmpi sle, %141, %148 : vector<1x512xi32>
    %150 = arith.andi %147, %143 : vector<1x512xi1>
    %151 = arith.andi %147, %145 : vector<1x512xi1>
    %152 = arith.andi %149, %143 : vector<1x512xi1>
    %153 = arith.andi %149, %145 : vector<1x512xi1>
    %cst_40 = arith.constant 0.000000e+00 : f32
    %154 = vector.broadcast %cst_40 : f32 to vector<8x128xf32>
    %155 = tpu.concatenate %154, %134, %154 in 1 : vector<8x128xf32>, vector<8x512xf32>, vector<8x128xf32> -> vector<8x768xf32>
    %156 = vector.extract_strided_slice %155 {offsets = [0, 111], sizes = [8, 512], strides = [1, 1]} : vector<8x768xf32> to vector<8x512xf32>
    %cst_41 = arith.constant 0.000000e+00 : f32
    %157 = vector.shape_cast %150 : vector<1x512xi1> to vector<1x512xi1>
    %158 = vector.broadcast %157 : vector<1x512xi1> to vector<8x512xi1>
    %159 = vector.broadcast %cst_41 : f32 to vector<8x512xf32>
    %160 = arith.select %158, %156, %159 : vector<8x512xi1>, vector<8x512xf32>
    %161 = vector.extract_strided_slice %155 {offsets = [0, 112], sizes = [8, 512], strides = [1, 1]} : vector<8x768xf32> to vector<8x512xf32>
    %cst_42 = arith.constant 0.000000e+00 : f32
    %162 = vector.shape_cast %147 : vector<1x512xi1> to vector<1x512xi1>
    %163 = vector.broadcast %162 : vector<1x512xi1> to vector<8x512xi1>
    %164 = vector.broadcast %cst_42 : f32 to vector<8x512xf32>
    %165 = arith.select %163, %161, %164 : vector<8x512xi1>, vector<8x512xf32>
    %166 = vector.extract_strided_slice %155 {offsets = [0, 113], sizes = [8, 512], strides = [1, 1]} : vector<8x768xf32> to vector<8x512xf32>
    %cst_43 = arith.constant 0.000000e+00 : f32
    %167 = vector.shape_cast %151 : vector<1x512xi1> to vector<1x512xi1>
    %168 = vector.broadcast %167 : vector<1x512xi1> to vector<8x512xi1>
    %169 = vector.broadcast %cst_43 : f32 to vector<8x512xf32>
    %170 = arith.select %168, %166, %169 : vector<8x512xi1>, vector<8x512xf32>
    %171 = vector.extract_strided_slice %155 {offsets = [0, 127], sizes = [8, 512], strides = [1, 1]} : vector<8x768xf32> to vector<8x512xf32>
    %cst_44 = arith.constant 0.000000e+00 : f32
    %172 = vector.shape_cast %143 : vector<1x512xi1> to vector<1x512xi1>
    %173 = vector.broadcast %172 : vector<1x512xi1> to vector<8x512xi1>
    %174 = vector.broadcast %cst_44 : f32 to vector<8x512xf32>
    %175 = arith.select %173, %171, %174 : vector<8x512xi1>, vector<8x512xf32>
    %176 = vector.extract_strided_slice %155 {offsets = [0, 129], sizes = [8, 512], strides = [1, 1]} : vector<8x768xf32> to vector<8x512xf32>
    %cst_45 = arith.constant 0.000000e+00 : f32
    %177 = vector.shape_cast %145 : vector<1x512xi1> to vector<1x512xi1>
    %178 = vector.broadcast %177 : vector<1x512xi1> to vector<8x512xi1>
    %179 = vector.broadcast %cst_45 : f32 to vector<8x512xf32>
    %180 = arith.select %178, %176, %179 : vector<8x512xi1>, vector<8x512xf32>
    %181 = vector.extract_strided_slice %155 {offsets = [0, 143], sizes = [8, 512], strides = [1, 1]} : vector<8x768xf32> to vector<8x512xf32>
    %cst_46 = arith.constant 0.000000e+00 : f32
    %182 = vector.shape_cast %152 : vector<1x512xi1> to vector<1x512xi1>
    %183 = vector.broadcast %182 : vector<1x512xi1> to vector<8x512xi1>
    %184 = vector.broadcast %cst_46 : f32 to vector<8x512xf32>
    %185 = arith.select %183, %181, %184 : vector<8x512xi1>, vector<8x512xf32>
    %186 = vector.extract_strided_slice %155 {offsets = [0, 144], sizes = [8, 512], strides = [1, 1]} : vector<8x768xf32> to vector<8x512xf32>
    %cst_47 = arith.constant 0.000000e+00 : f32
    %187 = vector.shape_cast %149 : vector<1x512xi1> to vector<1x512xi1>
    %188 = vector.broadcast %187 : vector<1x512xi1> to vector<8x512xi1>
    %189 = vector.broadcast %cst_47 : f32 to vector<8x512xf32>
    %190 = arith.select %188, %186, %189 : vector<8x512xi1>, vector<8x512xf32>
    %191 = vector.extract_strided_slice %155 {offsets = [0, 145], sizes = [8, 512], strides = [1, 1]} : vector<8x768xf32> to vector<8x512xf32>
    %cst_48 = arith.constant 0.000000e+00 : f32
    %192 = vector.shape_cast %153 : vector<1x512xi1> to vector<1x512xi1>
    %193 = vector.broadcast %192 : vector<1x512xi1> to vector<8x512xi1>
    %194 = vector.broadcast %cst_48 : f32 to vector<8x512xf32>
    %195 = arith.select %193, %191, %194 : vector<8x512xi1>, vector<8x512xf32>
    %196 = tpu.concatenate %160, %165, %170, %175, %134, %180, %185, %190, %195 in 0 : vector<8x512xf32>, vector<8x512xf32>, vector<8x512xf32>, vector<8x512xf32>, vector<8x512xf32>, vector<8x512xf32>, vector<8x512xf32>, vector<8x512xf32>, vector<8x512xf32> -> vector<72x512xf32>
    %197 = arith.truncf %196 : vector<72x512xf32> to vector<72x512xbf16>
    %c0_49 = arith.constant 0 : index
    %c0_50 = arith.constant 0 : index
    %198 = vector.load %arg6[%c0_49, %c0_50] : memref<16x72xbf16, #tpu.memory_space<vmem>>, vector<16x72xbf16>
    %cst_51 = arith.constant dense<0.000000e+00> : vector<16x512xf32>
    %199 = tpu.matmul %198, %197, %cst_51 {dimension_numbers = #tpu.dot_dimension_numbers<[1], [0], [0], [1], [0, 0, 1, 1], [], []>} : vector<16x72xbf16>, vector<72x512xbf16>, vector<16x512xf32> -> vector<16x512xf32>
    %c0_52 = arith.constant 0 : index
    %c0_53 = arith.constant 0 : index
    %200 = vector.load %arg7[%c0_52, %c0_53] : memref<16x1xf32, #tpu.memory_space<vmem>>, vector<16x1xf32>
    %201 = vector.broadcast %200 : vector<16x1xf32> to vector<16x512xf32>
    %202 = arith.addf %199, %201 : vector<16x512xf32>
    %cst_54 = arith.constant 0.000000e+00 : f32
    %203 = vector.broadcast %cst_54 : f32 to vector<16x512xf32>
    %204 = arith.maximumf %202, %203 : vector<16x512xf32>
    %cst_55 = arith.constant 0.000000e+00 : f32
    %205 = vector.broadcast %cst_55 : f32 to vector<16x128xf32>
    %206 = tpu.concatenate %205, %204, %205 in 1 : vector<16x128xf32>, vector<16x512xf32>, vector<16x128xf32> -> vector<16x768xf32>
    %207 = vector.extract_strided_slice %206 {offsets = [0, 111], sizes = [16, 512], strides = [1, 1]} : vector<16x768xf32> to vector<16x512xf32>
    %cst_56 = arith.constant 0.000000e+00 : f32
    %208 = vector.shape_cast %150 : vector<1x512xi1> to vector<1x512xi1>
    %209 = vector.broadcast %208 : vector<1x512xi1> to vector<16x512xi1>
    %210 = vector.broadcast %cst_56 : f32 to vector<16x512xf32>
    %211 = arith.select %209, %207, %210 : vector<16x512xi1>, vector<16x512xf32>
    %212 = vector.extract_strided_slice %206 {offsets = [0, 112], sizes = [16, 512], strides = [1, 1]} : vector<16x768xf32> to vector<16x512xf32>
    %cst_57 = arith.constant 0.000000e+00 : f32
    %213 = vector.shape_cast %147 : vector<1x512xi1> to vector<1x512xi1>
    %214 = vector.broadcast %213 : vector<1x512xi1> to vector<16x512xi1>
    %215 = vector.broadcast %cst_57 : f32 to vector<16x512xf32>
    %216 = arith.select %214, %212, %215 : vector<16x512xi1>, vector<16x512xf32>
    %217 = vector.extract_strided_slice %206 {offsets = [0, 113], sizes = [16, 512], strides = [1, 1]} : vector<16x768xf32> to vector<16x512xf32>
    %cst_58 = arith.constant 0.000000e+00 : f32
    %218 = vector.shape_cast %151 : vector<1x512xi1> to vector<1x512xi1>
    %219 = vector.broadcast %218 : vector<1x512xi1> to vector<16x512xi1>
    %220 = vector.broadcast %cst_58 : f32 to vector<16x512xf32>
    %221 = arith.select %219, %217, %220 : vector<16x512xi1>, vector<16x512xf32>
    %222 = vector.extract_strided_slice %206 {offsets = [0, 127], sizes = [16, 512], strides = [1, 1]} : vector<16x768xf32> to vector<16x512xf32>
    %cst_59 = arith.constant 0.000000e+00 : f32
    %223 = vector.shape_cast %143 : vector<1x512xi1> to vector<1x512xi1>
    %224 = vector.broadcast %223 : vector<1x512xi1> to vector<16x512xi1>
    %225 = vector.broadcast %cst_59 : f32 to vector<16x512xf32>
    %226 = arith.select %224, %222, %225 : vector<16x512xi1>, vector<16x512xf32>
    %227 = vector.extract_strided_slice %206 {offsets = [0, 129], sizes = [16, 512], strides = [1, 1]} : vector<16x768xf32> to vector<16x512xf32>
    %cst_60 = arith.constant 0.000000e+00 : f32
    %228 = vector.shape_cast %145 : vector<1x512xi1> to vector<1x512xi1>
    %229 = vector.broadcast %228 : vector<1x512xi1> to vector<16x512xi1>
    %230 = vector.broadcast %cst_60 : f32 to vector<16x512xf32>
    %231 = arith.select %229, %227, %230 : vector<16x512xi1>, vector<16x512xf32>
    %232 = vector.extract_strided_slice %206 {offsets = [0, 143], sizes = [16, 512], strides = [1, 1]} : vector<16x768xf32> to vector<16x512xf32>
    %cst_61 = arith.constant 0.000000e+00 : f32
    %233 = vector.shape_cast %152 : vector<1x512xi1> to vector<1x512xi1>
    %234 = vector.broadcast %233 : vector<1x512xi1> to vector<16x512xi1>
    %235 = vector.broadcast %cst_61 : f32 to vector<16x512xf32>
    %236 = arith.select %234, %232, %235 : vector<16x512xi1>, vector<16x512xf32>
    %237 = vector.extract_strided_slice %206 {offsets = [0, 144], sizes = [16, 512], strides = [1, 1]} : vector<16x768xf32> to vector<16x512xf32>
    %cst_62 = arith.constant 0.000000e+00 : f32
    %238 = vector.shape_cast %149 : vector<1x512xi1> to vector<1x512xi1>
    %239 = vector.broadcast %238 : vector<1x512xi1> to vector<16x512xi1>
    %240 = vector.broadcast %cst_62 : f32 to vector<16x512xf32>
    %241 = arith.select %239, %237, %240 : vector<16x512xi1>, vector<16x512xf32>
    %242 = vector.extract_strided_slice %206 {offsets = [0, 145], sizes = [16, 512], strides = [1, 1]} : vector<16x768xf32> to vector<16x512xf32>
    %cst_63 = arith.constant 0.000000e+00 : f32
    %243 = vector.shape_cast %153 : vector<1x512xi1> to vector<1x512xi1>
    %244 = vector.broadcast %243 : vector<1x512xi1> to vector<16x512xi1>
    %245 = vector.broadcast %cst_63 : f32 to vector<16x512xf32>
    %246 = arith.select %244, %242, %245 : vector<16x512xi1>, vector<16x512xf32>
    %247 = tpu.concatenate %211, %216, %221, %226, %204, %231, %236, %241, %246 in 0 : vector<16x512xf32>, vector<16x512xf32>, vector<16x512xf32>, vector<16x512xf32>, vector<16x512xf32>, vector<16x512xf32>, vector<16x512xf32>, vector<16x512xf32>, vector<16x512xf32> -> vector<144x512xf32>
    %248 = arith.truncf %247 : vector<144x512xf32> to vector<144x512xbf16>
    %c0_64 = arith.constant 0 : index
    %c0_65 = arith.constant 0 : index
    %249 = vector.load %arg8[%c0_64, %c0_65] : memref<16x144xbf16, #tpu.memory_space<vmem>>, vector<16x144xbf16>
    %cst_66 = arith.constant dense<0.000000e+00> : vector<16x512xf32>
    %250 = tpu.matmul %249, %248, %cst_66 {dimension_numbers = #tpu.dot_dimension_numbers<[1], [0], [0], [1], [0, 0, 1, 1], [], []>} : vector<16x144xbf16>, vector<144x512xbf16>, vector<16x512xf32> -> vector<16x512xf32>
    %c0_67 = arith.constant 0 : index
    %c0_68 = arith.constant 0 : index
    %251 = vector.load %arg9[%c0_67, %c0_68] : memref<16x1xf32, #tpu.memory_space<vmem>>, vector<16x1xf32>
    %252 = vector.broadcast %251 : vector<16x1xf32> to vector<16x512xf32>
    %253 = arith.addf %250, %252 : vector<16x512xf32>
    %cst_69 = arith.constant 0.000000e+00 : f32
    %254 = vector.broadcast %cst_69 : f32 to vector<16x512xf32>
    %255 = arith.maximumf %253, %254 : vector<16x512xf32>
    %cst_70 = arith.constant 0.000000e+00 : f32
    %256 = vector.broadcast %cst_70 : f32 to vector<16x128xf32>
    %257 = tpu.concatenate %255, %256 in 1 : vector<16x512xf32>, vector<16x128xf32> -> vector<16x640xf32>
    %258 = vector.extract_strided_slice %257 {offsets = [0, 1], sizes = [16, 512], strides = [1, 1]} : vector<16x640xf32> to vector<16x512xf32>
    %259 = arith.maximumf %255, %258 : vector<16x512xf32>
    %260 = vector.extract_strided_slice %257 {offsets = [0, 16], sizes = [16, 512], strides = [1, 1]} : vector<16x640xf32> to vector<16x512xf32>
    %261 = vector.extract_strided_slice %257 {offsets = [0, 17], sizes = [16, 512], strides = [1, 1]} : vector<16x640xf32> to vector<16x512xf32>
    %262 = arith.maximumf %260, %261 : vector<16x512xf32>
    %263 = arith.maximumf %259, %262 : vector<16x512xf32>
    %264 = arith.truncf %263 : vector<16x512xf32> to vector<16x512xbf16>
    %c0_71 = arith.constant 0 : index
    %c0_72 = arith.constant 0 : index
    %265 = vector.load %arg23[%c0_71, %c0_72] : memref<512x128xbf16, #tpu.memory_space<vmem>>, vector<512x128xbf16>
    %cst_73 = arith.constant dense<0.000000e+00> : vector<16x128xf32>
    %266 = tpu.matmul %264, %265, %cst_73 {dimension_numbers = #tpu.dot_dimension_numbers<[1], [0], [0], [1], [0, 0, 1, 1], [], []>} : vector<16x512xbf16>, vector<512x128xbf16>, vector<16x128xf32> -> vector<16x128xf32>
    %267 = tpu.iota {dimensions = array<i32: 1>} : vector<1x128xi32>
    %c63_i32 = arith.constant 63 : i32
    %268 = vector.broadcast %c63_i32 : i32 to vector<1x128xi32>
    %269 = arith.andi %267, %268 : vector<1x128xi32>
    %c7_i32 = arith.constant 7 : i32
    %270 = vector.broadcast %c7_i32 : i32 to vector<1x128xi32>
    %271 = arith.andi %269, %270 : vector<1x128xi32>
    %c3_i32 = arith.constant 3 : i32
    %272 = vector.broadcast %c3_i32 : i32 to vector<1x128xi32>
    %273 = arith.shrsi %269, %272 : vector<1x128xi32>
    %c1_i32_74 = arith.constant 1 : i32
    %274 = vector.broadcast %c1_i32_74 : i32 to vector<1x128xi32>
    %275 = arith.cmpi sge, %271, %274 : vector<1x128xi32>
    %c6_i32 = arith.constant 6 : i32
    %276 = vector.broadcast %c6_i32 : i32 to vector<1x128xi32>
    %277 = arith.cmpi sle, %271, %276 : vector<1x128xi32>
    %c1_i32_75 = arith.constant 1 : i32
    %278 = vector.broadcast %c1_i32_75 : i32 to vector<1x128xi32>
    %279 = arith.cmpi sge, %273, %278 : vector<1x128xi32>
    %c6_i32_76 = arith.constant 6 : i32
    %280 = vector.broadcast %c6_i32_76 : i32 to vector<1x128xi32>
    %281 = arith.cmpi sle, %273, %280 : vector<1x128xi32>
    %282 = arith.andi %279, %275 : vector<1x128xi1>
    %283 = arith.andi %279, %277 : vector<1x128xi1>
    %284 = arith.andi %281, %275 : vector<1x128xi1>
    %285 = arith.andi %281, %277 : vector<1x128xi1>
    %cst_77 = arith.constant 0.000000e+00 : f32
    %286 = vector.broadcast %cst_77 : f32 to vector<16x128xf32>
    %287 = tpu.concatenate %286, %266, %286 in 1 : vector<16x128xf32>, vector<16x128xf32>, vector<16x128xf32> -> vector<16x384xf32>
    %288 = vector.extract_strided_slice %287 {offsets = [0, 119], sizes = [16, 128], strides = [1, 1]} : vector<16x384xf32> to vector<16x128xf32>
    %cst_78 = arith.constant 0.000000e+00 : f32
    %289 = vector.shape_cast %282 : vector<1x128xi1> to vector<1x128xi1>
    %290 = vector.broadcast %289 : vector<1x128xi1> to vector<16x128xi1>
    %291 = vector.broadcast %cst_78 : f32 to vector<16x128xf32>
    %292 = arith.select %290, %288, %291 : vector<16x128xi1>, vector<16x128xf32>
    %293 = vector.extract_strided_slice %287 {offsets = [0, 120], sizes = [16, 128], strides = [1, 1]} : vector<16x384xf32> to vector<16x128xf32>
    %cst_79 = arith.constant 0.000000e+00 : f32
    %294 = vector.shape_cast %279 : vector<1x128xi1> to vector<1x128xi1>
    %295 = vector.broadcast %294 : vector<1x128xi1> to vector<16x128xi1>
    %296 = vector.broadcast %cst_79 : f32 to vector<16x128xf32>
    %297 = arith.select %295, %293, %296 : vector<16x128xi1>, vector<16x128xf32>
    %298 = vector.extract_strided_slice %287 {offsets = [0, 121], sizes = [16, 128], strides = [1, 1]} : vector<16x384xf32> to vector<16x128xf32>
    %cst_80 = arith.constant 0.000000e+00 : f32
    %299 = vector.shape_cast %283 : vector<1x128xi1> to vector<1x128xi1>
    %300 = vector.broadcast %299 : vector<1x128xi1> to vector<16x128xi1>
    %301 = vector.broadcast %cst_80 : f32 to vector<16x128xf32>
    %302 = arith.select %300, %298, %301 : vector<16x128xi1>, vector<16x128xf32>
    %303 = vector.extract_strided_slice %287 {offsets = [0, 127], sizes = [16, 128], strides = [1, 1]} : vector<16x384xf32> to vector<16x128xf32>
    %cst_81 = arith.constant 0.000000e+00 : f32
    %304 = vector.shape_cast %275 : vector<1x128xi1> to vector<1x128xi1>
    %305 = vector.broadcast %304 : vector<1x128xi1> to vector<16x128xi1>
    %306 = vector.broadcast %cst_81 : f32 to vector<16x128xf32>
    %307 = arith.select %305, %303, %306 : vector<16x128xi1>, vector<16x128xf32>
    %308 = vector.extract_strided_slice %287 {offsets = [0, 129], sizes = [16, 128], strides = [1, 1]} : vector<16x384xf32> to vector<16x128xf32>
    %cst_82 = arith.constant 0.000000e+00 : f32
    %309 = vector.shape_cast %277 : vector<1x128xi1> to vector<1x128xi1>
    %310 = vector.broadcast %309 : vector<1x128xi1> to vector<16x128xi1>
    %311 = vector.broadcast %cst_82 : f32 to vector<16x128xf32>
    %312 = arith.select %310, %308, %311 : vector<16x128xi1>, vector<16x128xf32>
    %313 = vector.extract_strided_slice %287 {offsets = [0, 135], sizes = [16, 128], strides = [1, 1]} : vector<16x384xf32> to vector<16x128xf32>
    %cst_83 = arith.constant 0.000000e+00 : f32
    %314 = vector.shape_cast %284 : vector<1x128xi1> to vector<1x128xi1>
    %315 = vector.broadcast %314 : vector<1x128xi1> to vector<16x128xi1>
    %316 = vector.broadcast %cst_83 : f32 to vector<16x128xf32>
    %317 = arith.select %315, %313, %316 : vector<16x128xi1>, vector<16x128xf32>
    %318 = vector.extract_strided_slice %287 {offsets = [0, 136], sizes = [16, 128], strides = [1, 1]} : vector<16x384xf32> to vector<16x128xf32>
    %cst_84 = arith.constant 0.000000e+00 : f32
    %319 = vector.shape_cast %281 : vector<1x128xi1> to vector<1x128xi1>
    %320 = vector.broadcast %319 : vector<1x128xi1> to vector<16x128xi1>
    %321 = vector.broadcast %cst_84 : f32 to vector<16x128xf32>
    %322 = arith.select %320, %318, %321 : vector<16x128xi1>, vector<16x128xf32>
    %323 = vector.extract_strided_slice %287 {offsets = [0, 137], sizes = [16, 128], strides = [1, 1]} : vector<16x384xf32> to vector<16x128xf32>
    %cst_85 = arith.constant 0.000000e+00 : f32
    %324 = vector.shape_cast %285 : vector<1x128xi1> to vector<1x128xi1>
    %325 = vector.broadcast %324 : vector<1x128xi1> to vector<16x128xi1>
    %326 = vector.broadcast %cst_85 : f32 to vector<16x128xf32>
    %327 = arith.select %325, %323, %326 : vector<16x128xi1>, vector<16x128xf32>
    %328 = tpu.concatenate %292, %297, %302, %307, %266, %312, %317, %322, %327 in 0 : vector<16x128xf32>, vector<16x128xf32>, vector<16x128xf32>, vector<16x128xf32>, vector<16x128xf32>, vector<16x128xf32>, vector<16x128xf32>, vector<16x128xf32>, vector<16x128xf32> -> vector<144x128xf32>
    %329 = arith.truncf %328 : vector<144x128xf32> to vector<144x128xbf16>
    %c0_86 = arith.constant 0 : index
    %c0_87 = arith.constant 0 : index
    %330 = vector.load %arg10[%c0_86, %c0_87] : memref<16x144xbf16, #tpu.memory_space<vmem>>, vector<16x144xbf16>
    %cst_88 = arith.constant dense<0.000000e+00> : vector<16x128xf32>
    %331 = tpu.matmul %330, %329, %cst_88 {dimension_numbers = #tpu.dot_dimension_numbers<[1], [0], [0], [1], [0, 0, 1, 1], [], []>} : vector<16x144xbf16>, vector<144x128xbf16>, vector<16x128xf32> -> vector<16x128xf32>
    %c0_89 = arith.constant 0 : index
    %c0_90 = arith.constant 0 : index
    %332 = vector.load %arg11[%c0_89, %c0_90] : memref<16x1xf32, #tpu.memory_space<vmem>>, vector<16x1xf32>
    %333 = vector.broadcast %332 : vector<16x1xf32> to vector<16x128xf32>
    %334 = arith.addf %331, %333 : vector<16x128xf32>
    %cst_91 = arith.constant 0.000000e+00 : f32
    %335 = vector.broadcast %cst_91 : f32 to vector<16x128xf32>
    %336 = arith.maximumf %334, %335 : vector<16x128xf32>
    %cst_92 = arith.constant 0.000000e+00 : f32
    %337 = vector.broadcast %cst_92 : f32 to vector<16x128xf32>
    %338 = tpu.concatenate %337, %336, %337 in 1 : vector<16x128xf32>, vector<16x128xf32>, vector<16x128xf32> -> vector<16x384xf32>
    %339 = vector.extract_strided_slice %338 {offsets = [0, 119], sizes = [16, 128], strides = [1, 1]} : vector<16x384xf32> to vector<16x128xf32>
    %cst_93 = arith.constant 0.000000e+00 : f32
    %340 = vector.shape_cast %282 : vector<1x128xi1> to vector<1x128xi1>
    %341 = vector.broadcast %340 : vector<1x128xi1> to vector<16x128xi1>
    %342 = vector.broadcast %cst_93 : f32 to vector<16x128xf32>
    %343 = arith.select %341, %339, %342 : vector<16x128xi1>, vector<16x128xf32>
    %344 = vector.extract_strided_slice %338 {offsets = [0, 120], sizes = [16, 128], strides = [1, 1]} : vector<16x384xf32> to vector<16x128xf32>
    %cst_94 = arith.constant 0.000000e+00 : f32
    %345 = vector.shape_cast %279 : vector<1x128xi1> to vector<1x128xi1>
    %346 = vector.broadcast %345 : vector<1x128xi1> to vector<16x128xi1>
    %347 = vector.broadcast %cst_94 : f32 to vector<16x128xf32>
    %348 = arith.select %346, %344, %347 : vector<16x128xi1>, vector<16x128xf32>
    %349 = vector.extract_strided_slice %338 {offsets = [0, 121], sizes = [16, 128], strides = [1, 1]} : vector<16x384xf32> to vector<16x128xf32>
    %cst_95 = arith.constant 0.000000e+00 : f32
    %350 = vector.shape_cast %283 : vector<1x128xi1> to vector<1x128xi1>
    %351 = vector.broadcast %350 : vector<1x128xi1> to vector<16x128xi1>
    %352 = vector.broadcast %cst_95 : f32 to vector<16x128xf32>
    %353 = arith.select %351, %349, %352 : vector<16x128xi1>, vector<16x128xf32>
    %354 = vector.extract_strided_slice %338 {offsets = [0, 127], sizes = [16, 128], strides = [1, 1]} : vector<16x384xf32> to vector<16x128xf32>
    %cst_96 = arith.constant 0.000000e+00 : f32
    %355 = vector.shape_cast %275 : vector<1x128xi1> to vector<1x128xi1>
    %356 = vector.broadcast %355 : vector<1x128xi1> to vector<16x128xi1>
    %357 = vector.broadcast %cst_96 : f32 to vector<16x128xf32>
    %358 = arith.select %356, %354, %357 : vector<16x128xi1>, vector<16x128xf32>
    %359 = vector.extract_strided_slice %338 {offsets = [0, 129], sizes = [16, 128], strides = [1, 1]} : vector<16x384xf32> to vector<16x128xf32>
    %cst_97 = arith.constant 0.000000e+00 : f32
    %360 = vector.shape_cast %277 : vector<1x128xi1> to vector<1x128xi1>
    %361 = vector.broadcast %360 : vector<1x128xi1> to vector<16x128xi1>
    %362 = vector.broadcast %cst_97 : f32 to vector<16x128xf32>
    %363 = arith.select %361, %359, %362 : vector<16x128xi1>, vector<16x128xf32>
    %364 = vector.extract_strided_slice %338 {offsets = [0, 135], sizes = [16, 128], strides = [1, 1]} : vector<16x384xf32> to vector<16x128xf32>
    %cst_98 = arith.constant 0.000000e+00 : f32
    %365 = vector.shape_cast %284 : vector<1x128xi1> to vector<1x128xi1>
    %366 = vector.broadcast %365 : vector<1x128xi1> to vector<16x128xi1>
    %367 = vector.broadcast %cst_98 : f32 to vector<16x128xf32>
    %368 = arith.select %366, %364, %367 : vector<16x128xi1>, vector<16x128xf32>
    %369 = vector.extract_strided_slice %338 {offsets = [0, 136], sizes = [16, 128], strides = [1, 1]} : vector<16x384xf32> to vector<16x128xf32>
    %cst_99 = arith.constant 0.000000e+00 : f32
    %370 = vector.shape_cast %281 : vector<1x128xi1> to vector<1x128xi1>
    %371 = vector.broadcast %370 : vector<1x128xi1> to vector<16x128xi1>
    %372 = vector.broadcast %cst_99 : f32 to vector<16x128xf32>
    %373 = arith.select %371, %369, %372 : vector<16x128xi1>, vector<16x128xf32>
    %374 = vector.extract_strided_slice %338 {offsets = [0, 137], sizes = [16, 128], strides = [1, 1]} : vector<16x384xf32> to vector<16x128xf32>
    %cst_100 = arith.constant 0.000000e+00 : f32
    %375 = vector.shape_cast %285 : vector<1x128xi1> to vector<1x128xi1>
    %376 = vector.broadcast %375 : vector<1x128xi1> to vector<16x128xi1>
    %377 = vector.broadcast %cst_100 : f32 to vector<16x128xf32>
    %378 = arith.select %376, %374, %377 : vector<16x128xi1>, vector<16x128xf32>
    %379 = tpu.concatenate %343, %348, %353, %358, %336, %363, %368, %373, %378 in 0 : vector<16x128xf32>, vector<16x128xf32>, vector<16x128xf32>, vector<16x128xf32>, vector<16x128xf32>, vector<16x128xf32>, vector<16x128xf32>, vector<16x128xf32>, vector<16x128xf32> -> vector<144x128xf32>
    %380 = arith.truncf %379 : vector<144x128xf32> to vector<144x128xbf16>
    %c0_101 = arith.constant 0 : index
    %c0_102 = arith.constant 0 : index
    %381 = vector.load %arg12[%c0_101, %c0_102] : memref<16x144xbf16, #tpu.memory_space<vmem>>, vector<16x144xbf16>
    %cst_103 = arith.constant dense<0.000000e+00> : vector<16x128xf32>
    %382 = tpu.matmul %381, %380, %cst_103 {dimension_numbers = #tpu.dot_dimension_numbers<[1], [0], [0], [1], [0, 0, 1, 1], [], []>} : vector<16x144xbf16>, vector<144x128xbf16>, vector<16x128xf32> -> vector<16x128xf32>
    %c0_104 = arith.constant 0 : index
    %c0_105 = arith.constant 0 : index
    %383 = vector.load %arg13[%c0_104, %c0_105] : memref<16x1xf32, #tpu.memory_space<vmem>>, vector<16x1xf32>
    %384 = vector.broadcast %383 : vector<16x1xf32> to vector<16x128xf32>
    %385 = arith.addf %382, %384 : vector<16x128xf32>
    %cst_106 = arith.constant 0.000000e+00 : f32
    %386 = vector.broadcast %cst_106 : f32 to vector<16x128xf32>
    %387 = arith.maximumf %385, %386 : vector<16x128xf32>
    %cst_107 = arith.constant 0.000000e+00 : f32
    %388 = vector.broadcast %cst_107 : f32 to vector<16x128xf32>
    %389 = tpu.concatenate %387, %388 in 1 : vector<16x128xf32>, vector<16x128xf32> -> vector<16x256xf32>
    %390 = vector.extract_strided_slice %389 {offsets = [0, 1], sizes = [16, 128], strides = [1, 1]} : vector<16x256xf32> to vector<16x128xf32>
    %391 = arith.maximumf %387, %390 : vector<16x128xf32>
    %392 = vector.extract_strided_slice %389 {offsets = [0, 8], sizes = [16, 128], strides = [1, 1]} : vector<16x256xf32> to vector<16x128xf32>
    %393 = vector.extract_strided_slice %389 {offsets = [0, 9], sizes = [16, 128], strides = [1, 1]} : vector<16x256xf32> to vector<16x128xf32>
    %394 = arith.maximumf %392, %393 : vector<16x128xf32>
    %395 = arith.maximumf %391, %394 : vector<16x128xf32>
    %396 = arith.truncf %395 : vector<16x128xf32> to vector<16x128xbf16>
    %c0_108 = arith.constant 0 : index
    %c0_109 = arith.constant 0 : index
    %397 = vector.load %arg24[%c0_108, %c0_109] : memref<128x32xbf16, #tpu.memory_space<vmem>>, vector<128x32xbf16>
    %cst_110 = arith.constant dense<0.000000e+00> : vector<16x32xf32>
    %398 = tpu.matmul %396, %397, %cst_110 {dimension_numbers = #tpu.dot_dimension_numbers<[1], [0], [0], [1], [0, 0, 1, 1], [], []>} : vector<16x128xbf16>, vector<128x32xbf16>, vector<16x32xf32> -> vector<16x32xf32>
    %399 = tpu.iota {dimensions = array<i32: 1>} : vector<1x32xi32>
    %c15_i32_111 = arith.constant 15 : i32
    %400 = vector.broadcast %c15_i32_111 : i32 to vector<1x32xi32>
    %401 = arith.andi %399, %400 : vector<1x32xi32>
    %c3_i32_112 = arith.constant 3 : i32
    %402 = vector.broadcast %c3_i32_112 : i32 to vector<1x32xi32>
    %403 = arith.andi %401, %402 : vector<1x32xi32>
    %c2_i32 = arith.constant 2 : i32
    %404 = vector.broadcast %c2_i32 : i32 to vector<1x32xi32>
    %405 = arith.shrsi %401, %404 : vector<1x32xi32>
    %c1_i32_113 = arith.constant 1 : i32
    %406 = vector.broadcast %c1_i32_113 : i32 to vector<1x32xi32>
    %407 = arith.cmpi sge, %403, %406 : vector<1x32xi32>
    %c2_i32_114 = arith.constant 2 : i32
    %408 = vector.broadcast %c2_i32_114 : i32 to vector<1x32xi32>
    %409 = arith.cmpi sle, %403, %408 : vector<1x32xi32>
    %c1_i32_115 = arith.constant 1 : i32
    %410 = vector.broadcast %c1_i32_115 : i32 to vector<1x32xi32>
    %411 = arith.cmpi sge, %405, %410 : vector<1x32xi32>
    %c2_i32_116 = arith.constant 2 : i32
    %412 = vector.broadcast %c2_i32_116 : i32 to vector<1x32xi32>
    %413 = arith.cmpi sle, %405, %412 : vector<1x32xi32>
    %414 = arith.andi %411, %407 : vector<1x32xi1>
    %415 = arith.andi %411, %409 : vector<1x32xi1>
    %416 = arith.andi %413, %407 : vector<1x32xi1>
    %417 = arith.andi %413, %409 : vector<1x32xi1>
    %cst_117 = arith.constant 0.000000e+00 : f32
    %418 = vector.broadcast %cst_117 : f32 to vector<16x128xf32>
    %419 = tpu.concatenate %418, %398, %418 in 1 : vector<16x128xf32>, vector<16x32xf32>, vector<16x128xf32> -> vector<16x288xf32>
    %420 = vector.extract_strided_slice %419 {offsets = [0, 123], sizes = [16, 32], strides = [1, 1]} : vector<16x288xf32> to vector<16x32xf32>
    %cst_118 = arith.constant 0.000000e+00 : f32
    %421 = vector.shape_cast %414 : vector<1x32xi1> to vector<1x32xi1>
    %422 = vector.broadcast %421 : vector<1x32xi1> to vector<16x32xi1>
    %423 = vector.broadcast %cst_118 : f32 to vector<16x32xf32>
    %424 = arith.select %422, %420, %423 : vector<16x32xi1>, vector<16x32xf32>
    %425 = vector.extract_strided_slice %419 {offsets = [0, 124], sizes = [16, 32], strides = [1, 1]} : vector<16x288xf32> to vector<16x32xf32>
    %cst_119 = arith.constant 0.000000e+00 : f32
    %426 = vector.shape_cast %411 : vector<1x32xi1> to vector<1x32xi1>
    %427 = vector.broadcast %426 : vector<1x32xi1> to vector<16x32xi1>
    %428 = vector.broadcast %cst_119 : f32 to vector<16x32xf32>
    %429 = arith.select %427, %425, %428 : vector<16x32xi1>, vector<16x32xf32>
    %430 = vector.extract_strided_slice %419 {offsets = [0, 125], sizes = [16, 32], strides = [1, 1]} : vector<16x288xf32> to vector<16x32xf32>
    %cst_120 = arith.constant 0.000000e+00 : f32
    %431 = vector.shape_cast %415 : vector<1x32xi1> to vector<1x32xi1>
    %432 = vector.broadcast %431 : vector<1x32xi1> to vector<16x32xi1>
    %433 = vector.broadcast %cst_120 : f32 to vector<16x32xf32>
    %434 = arith.select %432, %430, %433 : vector<16x32xi1>, vector<16x32xf32>
    %435 = vector.extract_strided_slice %419 {offsets = [0, 127], sizes = [16, 32], strides = [1, 1]} : vector<16x288xf32> to vector<16x32xf32>
    %cst_121 = arith.constant 0.000000e+00 : f32
    %436 = vector.shape_cast %407 : vector<1x32xi1> to vector<1x32xi1>
    %437 = vector.broadcast %436 : vector<1x32xi1> to vector<16x32xi1>
    %438 = vector.broadcast %cst_121 : f32 to vector<16x32xf32>
    %439 = arith.select %437, %435, %438 : vector<16x32xi1>, vector<16x32xf32>
    %440 = vector.extract_strided_slice %419 {offsets = [0, 129], sizes = [16, 32], strides = [1, 1]} : vector<16x288xf32> to vector<16x32xf32>
    %cst_122 = arith.constant 0.000000e+00 : f32
    %441 = vector.shape_cast %409 : vector<1x32xi1> to vector<1x32xi1>
    %442 = vector.broadcast %441 : vector<1x32xi1> to vector<16x32xi1>
    %443 = vector.broadcast %cst_122 : f32 to vector<16x32xf32>
    %444 = arith.select %442, %440, %443 : vector<16x32xi1>, vector<16x32xf32>
    %445 = vector.extract_strided_slice %419 {offsets = [0, 131], sizes = [16, 32], strides = [1, 1]} : vector<16x288xf32> to vector<16x32xf32>
    %cst_123 = arith.constant 0.000000e+00 : f32
    %446 = vector.shape_cast %416 : vector<1x32xi1> to vector<1x32xi1>
    %447 = vector.broadcast %446 : vector<1x32xi1> to vector<16x32xi1>
    %448 = vector.broadcast %cst_123 : f32 to vector<16x32xf32>
    %449 = arith.select %447, %445, %448 : vector<16x32xi1>, vector<16x32xf32>
    %450 = vector.extract_strided_slice %419 {offsets = [0, 132], sizes = [16, 32], strides = [1, 1]} : vector<16x288xf32> to vector<16x32xf32>
    %cst_124 = arith.constant 0.000000e+00 : f32
    %451 = vector.shape_cast %413 : vector<1x32xi1> to vector<1x32xi1>
    %452 = vector.broadcast %451 : vector<1x32xi1> to vector<16x32xi1>
    %453 = vector.broadcast %cst_124 : f32 to vector<16x32xf32>
    %454 = arith.select %452, %450, %453 : vector<16x32xi1>, vector<16x32xf32>
    %455 = vector.extract_strided_slice %419 {offsets = [0, 133], sizes = [16, 32], strides = [1, 1]} : vector<16x288xf32> to vector<16x32xf32>
    %cst_125 = arith.constant 0.000000e+00 : f32
    %456 = vector.shape_cast %417 : vector<1x32xi1> to vector<1x32xi1>
    %457 = vector.broadcast %456 : vector<1x32xi1> to vector<16x32xi1>
    %458 = vector.broadcast %cst_125 : f32 to vector<16x32xf32>
    %459 = arith.select %457, %455, %458 : vector<16x32xi1>, vector<16x32xf32>
    %460 = tpu.concatenate %424, %429, %434, %439, %398, %444, %449, %454, %459 in 0 : vector<16x32xf32>, vector<16x32xf32>, vector<16x32xf32>, vector<16x32xf32>, vector<16x32xf32>, vector<16x32xf32>, vector<16x32xf32>, vector<16x32xf32>, vector<16x32xf32> -> vector<144x32xf32>
    %461 = arith.truncf %460 : vector<144x32xf32> to vector<144x32xbf16>
    %c0_126 = arith.constant 0 : index
    %c0_127 = arith.constant 0 : index
    %462 = vector.load %arg14[%c0_126, %c0_127] : memref<32x144xbf16, #tpu.memory_space<vmem>>, vector<32x144xbf16>
    %cst_128 = arith.constant dense<0.000000e+00> : vector<32x32xf32>
    %463 = tpu.matmul %462, %461, %cst_128 {dimension_numbers = #tpu.dot_dimension_numbers<[1], [0], [0], [1], [0, 0, 1, 1], [], []>} : vector<32x144xbf16>, vector<144x32xbf16>, vector<32x32xf32> -> vector<32x32xf32>
    %c0_129 = arith.constant 0 : index
    %c0_130 = arith.constant 0 : index
    %464 = vector.load %arg15[%c0_129, %c0_130] : memref<32x1xf32, #tpu.memory_space<vmem>>, vector<32x1xf32>
    %465 = vector.broadcast %464 : vector<32x1xf32> to vector<32x32xf32>
    %466 = arith.addf %463, %465 : vector<32x32xf32>
    %cst_131 = arith.constant 0.000000e+00 : f32
    %467 = vector.broadcast %cst_131 : f32 to vector<32x32xf32>
    %468 = arith.maximumf %466, %467 : vector<32x32xf32>
    %cst_132 = arith.constant 0.000000e+00 : f32
    %469 = vector.broadcast %cst_132 : f32 to vector<32x128xf32>
    %470 = tpu.concatenate %469, %468, %469 in 1 : vector<32x128xf32>, vector<32x32xf32>, vector<32x128xf32> -> vector<32x288xf32>
    %471 = vector.extract_strided_slice %470 {offsets = [0, 123], sizes = [32, 32], strides = [1, 1]} : vector<32x288xf32> to vector<32x32xf32>
    %cst_133 = arith.constant 0.000000e+00 : f32
    %472 = vector.shape_cast %414 : vector<1x32xi1> to vector<1x32xi1>
    %473 = vector.broadcast %472 : vector<1x32xi1> to vector<32x32xi1>
    %474 = vector.broadcast %cst_133 : f32 to vector<32x32xf32>
    %475 = arith.select %473, %471, %474 : vector<32x32xi1>, vector<32x32xf32>
    %476 = vector.extract_strided_slice %470 {offsets = [0, 124], sizes = [32, 32], strides = [1, 1]} : vector<32x288xf32> to vector<32x32xf32>
    %cst_134 = arith.constant 0.000000e+00 : f32
    %477 = vector.shape_cast %411 : vector<1x32xi1> to vector<1x32xi1>
    %478 = vector.broadcast %477 : vector<1x32xi1> to vector<32x32xi1>
    %479 = vector.broadcast %cst_134 : f32 to vector<32x32xf32>
    %480 = arith.select %478, %476, %479 : vector<32x32xi1>, vector<32x32xf32>
    %481 = vector.extract_strided_slice %470 {offsets = [0, 125], sizes = [32, 32], strides = [1, 1]} : vector<32x288xf32> to vector<32x32xf32>
    %cst_135 = arith.constant 0.000000e+00 : f32
    %482 = vector.shape_cast %415 : vector<1x32xi1> to vector<1x32xi1>
    %483 = vector.broadcast %482 : vector<1x32xi1> to vector<32x32xi1>
    %484 = vector.broadcast %cst_135 : f32 to vector<32x32xf32>
    %485 = arith.select %483, %481, %484 : vector<32x32xi1>, vector<32x32xf32>
    %486 = vector.extract_strided_slice %470 {offsets = [0, 127], sizes = [32, 32], strides = [1, 1]} : vector<32x288xf32> to vector<32x32xf32>
    %cst_136 = arith.constant 0.000000e+00 : f32
    %487 = vector.shape_cast %407 : vector<1x32xi1> to vector<1x32xi1>
    %488 = vector.broadcast %487 : vector<1x32xi1> to vector<32x32xi1>
    %489 = vector.broadcast %cst_136 : f32 to vector<32x32xf32>
    %490 = arith.select %488, %486, %489 : vector<32x32xi1>, vector<32x32xf32>
    %491 = vector.extract_strided_slice %470 {offsets = [0, 129], sizes = [32, 32], strides = [1, 1]} : vector<32x288xf32> to vector<32x32xf32>
    %cst_137 = arith.constant 0.000000e+00 : f32
    %492 = vector.shape_cast %409 : vector<1x32xi1> to vector<1x32xi1>
    %493 = vector.broadcast %492 : vector<1x32xi1> to vector<32x32xi1>
    %494 = vector.broadcast %cst_137 : f32 to vector<32x32xf32>
    %495 = arith.select %493, %491, %494 : vector<32x32xi1>, vector<32x32xf32>
    %496 = vector.extract_strided_slice %470 {offsets = [0, 131], sizes = [32, 32], strides = [1, 1]} : vector<32x288xf32> to vector<32x32xf32>
    %cst_138 = arith.constant 0.000000e+00 : f32
    %497 = vector.shape_cast %416 : vector<1x32xi1> to vector<1x32xi1>
    %498 = vector.broadcast %497 : vector<1x32xi1> to vector<32x32xi1>
    %499 = vector.broadcast %cst_138 : f32 to vector<32x32xf32>
    %500 = arith.select %498, %496, %499 : vector<32x32xi1>, vector<32x32xf32>
    %501 = vector.extract_strided_slice %470 {offsets = [0, 132], sizes = [32, 32], strides = [1, 1]} : vector<32x288xf32> to vector<32x32xf32>
    %cst_139 = arith.constant 0.000000e+00 : f32
    %502 = vector.shape_cast %413 : vector<1x32xi1> to vector<1x32xi1>
    %503 = vector.broadcast %502 : vector<1x32xi1> to vector<32x32xi1>
    %504 = vector.broadcast %cst_139 : f32 to vector<32x32xf32>
    %505 = arith.select %503, %501, %504 : vector<32x32xi1>, vector<32x32xf32>
    %506 = vector.extract_strided_slice %470 {offsets = [0, 133], sizes = [32, 32], strides = [1, 1]} : vector<32x288xf32> to vector<32x32xf32>
    %cst_140 = arith.constant 0.000000e+00 : f32
    %507 = vector.shape_cast %417 : vector<1x32xi1> to vector<1x32xi1>
    %508 = vector.broadcast %507 : vector<1x32xi1> to vector<32x32xi1>
    %509 = vector.broadcast %cst_140 : f32 to vector<32x32xf32>
    %510 = arith.select %508, %506, %509 : vector<32x32xi1>, vector<32x32xf32>
    %511 = tpu.concatenate %475, %480, %485, %490, %468, %495, %500, %505, %510 in 0 : vector<32x32xf32>, vector<32x32xf32>, vector<32x32xf32>, vector<32x32xf32>, vector<32x32xf32>, vector<32x32xf32>, vector<32x32xf32>, vector<32x32xf32>, vector<32x32xf32> -> vector<288x32xf32>
    %512 = arith.truncf %511 : vector<288x32xf32> to vector<288x32xbf16>
    %c0_141 = arith.constant 0 : index
    %c0_142 = arith.constant 0 : index
    %513 = vector.load %arg16[%c0_141, %c0_142] : memref<32x288xbf16, #tpu.memory_space<vmem>>, vector<32x288xbf16>
    %cst_143 = arith.constant dense<0.000000e+00> : vector<32x32xf32>
    %514 = tpu.matmul %513, %512, %cst_143 {dimension_numbers = #tpu.dot_dimension_numbers<[1], [0], [0], [1], [0, 0, 1, 1], [], []>} : vector<32x288xbf16>, vector<288x32xbf16>, vector<32x32xf32> -> vector<32x32xf32>
    %c0_144 = arith.constant 0 : index
    %c0_145 = arith.constant 0 : index
    %515 = vector.load %arg17[%c0_144, %c0_145] : memref<32x1xf32, #tpu.memory_space<vmem>>, vector<32x1xf32>
    %516 = vector.broadcast %515 : vector<32x1xf32> to vector<32x32xf32>
    %517 = arith.addf %514, %516 : vector<32x32xf32>
    %cst_146 = arith.constant 0.000000e+00 : f32
    %518 = vector.broadcast %cst_146 : f32 to vector<32x32xf32>
    %519 = arith.maximumf %517, %518 : vector<32x32xf32>
    %cst_147 = arith.constant 0.000000e+00 : f32
    %520 = vector.broadcast %cst_147 : f32 to vector<32x128xf32>
    %521 = tpu.concatenate %519, %520 in 1 : vector<32x32xf32>, vector<32x128xf32> -> vector<32x160xf32>
    %522 = vector.extract_strided_slice %521 {offsets = [0, 1], sizes = [32, 32], strides = [1, 1]} : vector<32x160xf32> to vector<32x32xf32>
    %523 = arith.maximumf %519, %522 : vector<32x32xf32>
    %524 = vector.extract_strided_slice %521 {offsets = [0, 4], sizes = [32, 32], strides = [1, 1]} : vector<32x160xf32> to vector<32x32xf32>
    %525 = vector.extract_strided_slice %521 {offsets = [0, 5], sizes = [32, 32], strides = [1, 1]} : vector<32x160xf32> to vector<32x32xf32>
    %526 = arith.maximumf %524, %525 : vector<32x32xf32>
    %527 = arith.maximumf %523, %526 : vector<32x32xf32>
    %528 = arith.truncf %527 : vector<32x32xf32> to vector<32x32xbf16>
    %c0_148 = arith.constant 0 : index
    %c0_149 = arith.constant 0 : index
    %529 = vector.load %arg25[%c0_148, %c0_149] : memref<32x8xbf16, #tpu.memory_space<vmem>>, vector<32x8xbf16>
    %cst_150 = arith.constant dense<0.000000e+00> : vector<32x8xf32>
    %530 = tpu.matmul %528, %529, %cst_150 {dimension_numbers = #tpu.dot_dimension_numbers<[1], [0], [0], [1], [0, 0, 1, 1], [], []>} : vector<32x32xbf16>, vector<32x8xbf16>, vector<32x8xf32> -> vector<32x8xf32>
    %531 = tpu.iota {dimensions = array<i32: 1>} : vector<1x8xi32>
    %c3_i32_151 = arith.constant 3 : i32
    %532 = vector.broadcast %c3_i32_151 : i32 to vector<1x8xi32>
    %533 = arith.andi %531, %532 : vector<1x8xi32>
    %c1_i32_152 = arith.constant 1 : i32
    %534 = vector.broadcast %c1_i32_152 : i32 to vector<1x8xi32>
    %535 = arith.andi %533, %534 : vector<1x8xi32>
    %c1_i32_153 = arith.constant 1 : i32
    %536 = vector.broadcast %c1_i32_153 : i32 to vector<1x8xi32>
    %537 = arith.shrsi %533, %536 : vector<1x8xi32>
    %c1_i32_154 = arith.constant 1 : i32
    %538 = vector.broadcast %c1_i32_154 : i32 to vector<1x8xi32>
    %539 = arith.cmpi sge, %535, %538 : vector<1x8xi32>
    %c0_i32 = arith.constant 0 : i32
    %540 = vector.broadcast %c0_i32 : i32 to vector<1x8xi32>
    %541 = arith.cmpi sle, %535, %540 : vector<1x8xi32>
    %c1_i32_155 = arith.constant 1 : i32
    %542 = vector.broadcast %c1_i32_155 : i32 to vector<1x8xi32>
    %543 = arith.cmpi sge, %537, %542 : vector<1x8xi32>
    %c0_i32_156 = arith.constant 0 : i32
    %544 = vector.broadcast %c0_i32_156 : i32 to vector<1x8xi32>
    %545 = arith.cmpi sle, %537, %544 : vector<1x8xi32>
    %546 = arith.andi %543, %539 : vector<1x8xi1>
    %547 = arith.andi %543, %541 : vector<1x8xi1>
    %548 = arith.andi %545, %539 : vector<1x8xi1>
    %549 = arith.andi %545, %541 : vector<1x8xi1>
    %cst_157 = arith.constant 0.000000e+00 : f32
    %550 = vector.broadcast %cst_157 : f32 to vector<32x128xf32>
    %551 = tpu.concatenate %550, %530, %550 in 1 : vector<32x128xf32>, vector<32x8xf32>, vector<32x128xf32> -> vector<32x264xf32>
    %552 = vector.extract_strided_slice %551 {offsets = [0, 125], sizes = [32, 8], strides = [1, 1]} : vector<32x264xf32> to vector<32x8xf32>
    %cst_158 = arith.constant 0.000000e+00 : f32
    %553 = vector.shape_cast %546 : vector<1x8xi1> to vector<1x8xi1>
    %554 = vector.broadcast %553 : vector<1x8xi1> to vector<32x8xi1>
    %555 = vector.broadcast %cst_158 : f32 to vector<32x8xf32>
    %556 = arith.select %554, %552, %555 : vector<32x8xi1>, vector<32x8xf32>
    %557 = vector.extract_strided_slice %551 {offsets = [0, 126], sizes = [32, 8], strides = [1, 1]} : vector<32x264xf32> to vector<32x8xf32>
    %cst_159 = arith.constant 0.000000e+00 : f32
    %558 = vector.shape_cast %543 : vector<1x8xi1> to vector<1x8xi1>
    %559 = vector.broadcast %558 : vector<1x8xi1> to vector<32x8xi1>
    %560 = vector.broadcast %cst_159 : f32 to vector<32x8xf32>
    %561 = arith.select %559, %557, %560 : vector<32x8xi1>, vector<32x8xf32>
    %562 = vector.extract_strided_slice %551 {offsets = [0, 127], sizes = [32, 8], strides = [1, 1]} : vector<32x264xf32> to vector<32x8xf32>
    %cst_160 = arith.constant 0.000000e+00 : f32
    %563 = vector.shape_cast %547 : vector<1x8xi1> to vector<1x8xi1>
    %564 = vector.broadcast %563 : vector<1x8xi1> to vector<32x8xi1>
    %565 = vector.broadcast %cst_160 : f32 to vector<32x8xf32>
    %566 = arith.select %564, %562, %565 : vector<32x8xi1>, vector<32x8xf32>
    %567 = vector.extract_strided_slice %551 {offsets = [0, 127], sizes = [32, 8], strides = [1, 1]} : vector<32x264xf32> to vector<32x8xf32>
    %cst_161 = arith.constant 0.000000e+00 : f32
    %568 = vector.shape_cast %539 : vector<1x8xi1> to vector<1x8xi1>
    %569 = vector.broadcast %568 : vector<1x8xi1> to vector<32x8xi1>
    %570 = vector.broadcast %cst_161 : f32 to vector<32x8xf32>
    %571 = arith.select %569, %567, %570 : vector<32x8xi1>, vector<32x8xf32>
    %572 = vector.extract_strided_slice %551 {offsets = [0, 129], sizes = [32, 8], strides = [1, 1]} : vector<32x264xf32> to vector<32x8xf32>
    %cst_162 = arith.constant 0.000000e+00 : f32
    %573 = vector.shape_cast %541 : vector<1x8xi1> to vector<1x8xi1>
    %574 = vector.broadcast %573 : vector<1x8xi1> to vector<32x8xi1>
    %575 = vector.broadcast %cst_162 : f32 to vector<32x8xf32>
    %576 = arith.select %574, %572, %575 : vector<32x8xi1>, vector<32x8xf32>
    %577 = vector.extract_strided_slice %551 {offsets = [0, 129], sizes = [32, 8], strides = [1, 1]} : vector<32x264xf32> to vector<32x8xf32>
    %cst_163 = arith.constant 0.000000e+00 : f32
    %578 = vector.shape_cast %548 : vector<1x8xi1> to vector<1x8xi1>
    %579 = vector.broadcast %578 : vector<1x8xi1> to vector<32x8xi1>
    %580 = vector.broadcast %cst_163 : f32 to vector<32x8xf32>
    %581 = arith.select %579, %577, %580 : vector<32x8xi1>, vector<32x8xf32>
    %582 = vector.extract_strided_slice %551 {offsets = [0, 130], sizes = [32, 8], strides = [1, 1]} : vector<32x264xf32> to vector<32x8xf32>
    %cst_164 = arith.constant 0.000000e+00 : f32
    %583 = vector.shape_cast %545 : vector<1x8xi1> to vector<1x8xi1>
    %584 = vector.broadcast %583 : vector<1x8xi1> to vector<32x8xi1>
    %585 = vector.broadcast %cst_164 : f32 to vector<32x8xf32>
    %586 = arith.select %584, %582, %585 : vector<32x8xi1>, vector<32x8xf32>
    %587 = vector.extract_strided_slice %551 {offsets = [0, 131], sizes = [32, 8], strides = [1, 1]} : vector<32x264xf32> to vector<32x8xf32>
    %cst_165 = arith.constant 0.000000e+00 : f32
    %588 = vector.shape_cast %549 : vector<1x8xi1> to vector<1x8xi1>
    %589 = vector.broadcast %588 : vector<1x8xi1> to vector<32x8xi1>
    %590 = vector.broadcast %cst_165 : f32 to vector<32x8xf32>
    %591 = arith.select %589, %587, %590 : vector<32x8xi1>, vector<32x8xf32>
    %592 = tpu.concatenate %556, %561, %566, %571, %530, %576, %581, %586, %591 in 0 : vector<32x8xf32>, vector<32x8xf32>, vector<32x8xf32>, vector<32x8xf32>, vector<32x8xf32>, vector<32x8xf32>, vector<32x8xf32>, vector<32x8xf32>, vector<32x8xf32> -> vector<288x8xf32>
    %593 = arith.truncf %592 : vector<288x8xf32> to vector<288x8xbf16>
    %c0_166 = arith.constant 0 : index
    %c0_167 = arith.constant 0 : index
    %594 = vector.load %arg18[%c0_166, %c0_167] : memref<32x288xbf16, #tpu.memory_space<vmem>>, vector<32x288xbf16>
    %cst_168 = arith.constant dense<0.000000e+00> : vector<32x8xf32>
    %595 = tpu.matmul %594, %593, %cst_168 {dimension_numbers = #tpu.dot_dimension_numbers<[1], [0], [0], [1], [0, 0, 1, 1], [], []>} : vector<32x288xbf16>, vector<288x8xbf16>, vector<32x8xf32> -> vector<32x8xf32>
    %c0_169 = arith.constant 0 : index
    %c0_170 = arith.constant 0 : index
    %596 = vector.load %arg19[%c0_169, %c0_170] : memref<32x1xf32, #tpu.memory_space<vmem>>, vector<32x1xf32>
    %597 = vector.broadcast %596 : vector<32x1xf32> to vector<32x8xf32>
    %598 = arith.addf %595, %597 : vector<32x8xf32>
    %cst_171 = arith.constant 0.000000e+00 : f32
    %599 = vector.broadcast %cst_171 : f32 to vector<32x8xf32>
    %600 = arith.maximumf %598, %599 : vector<32x8xf32>
    %cst_172 = arith.constant 0.000000e+00 : f32
    %601 = vector.broadcast %cst_172 : f32 to vector<32x128xf32>
    %602 = tpu.concatenate %601, %600, %601 in 1 : vector<32x128xf32>, vector<32x8xf32>, vector<32x128xf32> -> vector<32x264xf32>
    %603 = vector.extract_strided_slice %602 {offsets = [0, 125], sizes = [32, 8], strides = [1, 1]} : vector<32x264xf32> to vector<32x8xf32>
    %cst_173 = arith.constant 0.000000e+00 : f32
    %604 = vector.shape_cast %546 : vector<1x8xi1> to vector<1x8xi1>
    %605 = vector.broadcast %604 : vector<1x8xi1> to vector<32x8xi1>
    %606 = vector.broadcast %cst_173 : f32 to vector<32x8xf32>
    %607 = arith.select %605, %603, %606 : vector<32x8xi1>, vector<32x8xf32>
    %608 = vector.extract_strided_slice %602 {offsets = [0, 126], sizes = [32, 8], strides = [1, 1]} : vector<32x264xf32> to vector<32x8xf32>
    %cst_174 = arith.constant 0.000000e+00 : f32
    %609 = vector.shape_cast %543 : vector<1x8xi1> to vector<1x8xi1>
    %610 = vector.broadcast %609 : vector<1x8xi1> to vector<32x8xi1>
    %611 = vector.broadcast %cst_174 : f32 to vector<32x8xf32>
    %612 = arith.select %610, %608, %611 : vector<32x8xi1>, vector<32x8xf32>
    %613 = vector.extract_strided_slice %602 {offsets = [0, 127], sizes = [32, 8], strides = [1, 1]} : vector<32x264xf32> to vector<32x8xf32>
    %cst_175 = arith.constant 0.000000e+00 : f32
    %614 = vector.shape_cast %547 : vector<1x8xi1> to vector<1x8xi1>
    %615 = vector.broadcast %614 : vector<1x8xi1> to vector<32x8xi1>
    %616 = vector.broadcast %cst_175 : f32 to vector<32x8xf32>
    %617 = arith.select %615, %613, %616 : vector<32x8xi1>, vector<32x8xf32>
    %618 = vector.extract_strided_slice %602 {offsets = [0, 127], sizes = [32, 8], strides = [1, 1]} : vector<32x264xf32> to vector<32x8xf32>
    %cst_176 = arith.constant 0.000000e+00 : f32
    %619 = vector.shape_cast %539 : vector<1x8xi1> to vector<1x8xi1>
    %620 = vector.broadcast %619 : vector<1x8xi1> to vector<32x8xi1>
    %621 = vector.broadcast %cst_176 : f32 to vector<32x8xf32>
    %622 = arith.select %620, %618, %621 : vector<32x8xi1>, vector<32x8xf32>
    %623 = vector.extract_strided_slice %602 {offsets = [0, 129], sizes = [32, 8], strides = [1, 1]} : vector<32x264xf32> to vector<32x8xf32>
    %cst_177 = arith.constant 0.000000e+00 : f32
    %624 = vector.shape_cast %541 : vector<1x8xi1> to vector<1x8xi1>
    %625 = vector.broadcast %624 : vector<1x8xi1> to vector<32x8xi1>
    %626 = vector.broadcast %cst_177 : f32 to vector<32x8xf32>
    %627 = arith.select %625, %623, %626 : vector<32x8xi1>, vector<32x8xf32>
    %628 = vector.extract_strided_slice %602 {offsets = [0, 129], sizes = [32, 8], strides = [1, 1]} : vector<32x264xf32> to vector<32x8xf32>
    %cst_178 = arith.constant 0.000000e+00 : f32
    %629 = vector.shape_cast %548 : vector<1x8xi1> to vector<1x8xi1>
    %630 = vector.broadcast %629 : vector<1x8xi1> to vector<32x8xi1>
    %631 = vector.broadcast %cst_178 : f32 to vector<32x8xf32>
    %632 = arith.select %630, %628, %631 : vector<32x8xi1>, vector<32x8xf32>
    %633 = vector.extract_strided_slice %602 {offsets = [0, 130], sizes = [32, 8], strides = [1, 1]} : vector<32x264xf32> to vector<32x8xf32>
    %cst_179 = arith.constant 0.000000e+00 : f32
    %634 = vector.shape_cast %545 : vector<1x8xi1> to vector<1x8xi1>
    %635 = vector.broadcast %634 : vector<1x8xi1> to vector<32x8xi1>
    %636 = vector.broadcast %cst_179 : f32 to vector<32x8xf32>
    %637 = arith.select %635, %633, %636 : vector<32x8xi1>, vector<32x8xf32>
    %638 = vector.extract_strided_slice %602 {offsets = [0, 131], sizes = [32, 8], strides = [1, 1]} : vector<32x264xf32> to vector<32x8xf32>
    %cst_180 = arith.constant 0.000000e+00 : f32
    %639 = vector.shape_cast %549 : vector<1x8xi1> to vector<1x8xi1>
    %640 = vector.broadcast %639 : vector<1x8xi1> to vector<32x8xi1>
    %641 = vector.broadcast %cst_180 : f32 to vector<32x8xf32>
    %642 = arith.select %640, %638, %641 : vector<32x8xi1>, vector<32x8xf32>
    %643 = tpu.concatenate %607, %612, %617, %622, %600, %627, %632, %637, %642 in 0 : vector<32x8xf32>, vector<32x8xf32>, vector<32x8xf32>, vector<32x8xf32>, vector<32x8xf32>, vector<32x8xf32>, vector<32x8xf32>, vector<32x8xf32>, vector<32x8xf32> -> vector<288x8xf32>
    %644 = arith.truncf %643 : vector<288x8xf32> to vector<288x8xbf16>
    %c0_181 = arith.constant 0 : index
    %c0_182 = arith.constant 0 : index
    %645 = vector.load %arg20[%c0_181, %c0_182] : memref<32x288xbf16, #tpu.memory_space<vmem>>, vector<32x288xbf16>
    %cst_183 = arith.constant dense<0.000000e+00> : vector<32x8xf32>
    %646 = tpu.matmul %645, %644, %cst_183 {dimension_numbers = #tpu.dot_dimension_numbers<[1], [0], [0], [1], [0, 0, 1, 1], [], []>} : vector<32x288xbf16>, vector<288x8xbf16>, vector<32x8xf32> -> vector<32x8xf32>
    %c0_184 = arith.constant 0 : index
    %c0_185 = arith.constant 0 : index
    %647 = vector.load %arg21[%c0_184, %c0_185] : memref<32x1xf32, #tpu.memory_space<vmem>>, vector<32x1xf32>
    %648 = vector.broadcast %647 : vector<32x1xf32> to vector<32x8xf32>
    %649 = arith.addf %646, %648 : vector<32x8xf32>
    %cst_186 = arith.constant 0.000000e+00 : f32
    %650 = vector.broadcast %cst_186 : f32 to vector<32x8xf32>
    %651 = arith.maximumf %649, %650 : vector<32x8xf32>
    %cst_187 = arith.constant 0.000000e+00 : f32
    %652 = vector.broadcast %cst_187 : f32 to vector<32x128xf32>
    %653 = tpu.concatenate %651, %652 in 1 : vector<32x8xf32>, vector<32x128xf32> -> vector<32x136xf32>
    %654 = vector.extract_strided_slice %653 {offsets = [0, 1], sizes = [32, 8], strides = [1, 1]} : vector<32x136xf32> to vector<32x8xf32>
    %655 = arith.maximumf %651, %654 : vector<32x8xf32>
    %656 = vector.extract_strided_slice %653 {offsets = [0, 2], sizes = [32, 8], strides = [1, 1]} : vector<32x136xf32> to vector<32x8xf32>
    %657 = vector.extract_strided_slice %653 {offsets = [0, 3], sizes = [32, 8], strides = [1, 1]} : vector<32x136xf32> to vector<32x8xf32>
    %658 = arith.maximumf %656, %657 : vector<32x8xf32>
    %659 = arith.maximumf %655, %658 : vector<32x8xf32>
    %660 = arith.truncf %659 : vector<32x8xf32> to vector<32x8xbf16>
    %c0_188 = arith.constant 0 : index
    %c0_189 = arith.constant 0 : index
    %661 = vector.load %arg26[%c0_188, %c0_189] : memref<8x2xbf16, #tpu.memory_space<vmem>>, vector<8x2xbf16>
    %cst_190 = arith.constant dense<0.000000e+00> : vector<32x2xf32>
    %662 = tpu.matmul %660, %661, %cst_190 {dimension_numbers = #tpu.dot_dimension_numbers<[1], [0], [0], [1], [0, 0, 1, 1], [], []>} : vector<32x8xbf16>, vector<8x2xbf16>, vector<32x2xf32> -> vector<32x2xf32>
    %c0_191 = arith.constant 0 : index
    %c0_192 = arith.constant 0 : index
    %663 = vector.load %arg27[%c0_191, %c0_192] : memref<64x32xf32, #tpu.memory_space<vmem>>, vector<64x32xf32>
    %cst_193 = arith.constant dense<0.000000e+00> : vector<64x2xf32>
    %664 = tpu.matmul %663, %662, %cst_193 {dimension_numbers = #tpu.dot_dimension_numbers<[1], [0], [0], [1], [0, 0, 1, 1], [], []>} : vector<64x32xf32>, vector<32x2xf32>, vector<64x2xf32> -> vector<64x2xf32>
    %c0_194 = arith.constant 0 : index
    %c0_195 = arith.constant 0 : index
    %665 = vector.load %arg28[%c0_194, %c0_195] : memref<64x1xf32, #tpu.memory_space<vmem>>, vector<64x1xf32>
    %666 = vector.broadcast %665 : vector<64x1xf32> to vector<64x2xf32>
    %667 = arith.addf %664, %666 : vector<64x2xf32>
    %cst_196 = arith.constant 0.000000e+00 : f32
    %668 = vector.broadcast %cst_196 : f32 to vector<64x2xf32>
    %669 = arith.maximumf %667, %668 : vector<64x2xf32>
    %c0_197 = arith.constant 0 : index
    %c0_198 = arith.constant 0 : index
    %670 = vector.load %arg29[%c0_197, %c0_198] : memref<64x64xf32, #tpu.memory_space<vmem>>, vector<64x64xf32>
    %cst_199 = arith.constant dense<0.000000e+00> : vector<64x2xf32>
    %671 = tpu.matmul %670, %669, %cst_199 {dimension_numbers = #tpu.dot_dimension_numbers<[1], [0], [0], [1], [0, 0, 1, 1], [], []>} : vector<64x64xf32>, vector<64x2xf32>, vector<64x2xf32> -> vector<64x2xf32>
    %c0_200 = arith.constant 0 : index
    %c0_201 = arith.constant 0 : index
    %672 = vector.load %arg30[%c0_200, %c0_201] : memref<64x1xf32, #tpu.memory_space<vmem>>, vector<64x1xf32>
    %673 = vector.broadcast %672 : vector<64x1xf32> to vector<64x2xf32>
    %674 = arith.addf %671, %673 : vector<64x2xf32>
    %cst_202 = arith.constant 0.000000e+00 : f32
    %675 = vector.broadcast %cst_202 : f32 to vector<64x2xf32>
    %676 = arith.maximumf %674, %675 : vector<64x2xf32>
    %c0_203 = arith.constant 0 : index
    %c0_204 = arith.constant 0 : index
    %677 = vector.load %arg31[%c0_203, %c0_204] : memref<2x64xf32, #tpu.memory_space<vmem>>, vector<2x64xf32>
    %cst_205 = arith.constant dense<0.000000e+00> : vector<2x2xf32>
    %678 = tpu.matmul %677, %676, %cst_205 {dimension_numbers = #tpu.dot_dimension_numbers<[1], [0], [0], [1], [0, 0, 1, 1], [], []>} : vector<2x64xf32>, vector<64x2xf32>, vector<2x2xf32> -> vector<2x2xf32>
    %c0_206 = arith.constant 0 : index
    %c0_207 = arith.constant 0 : index
    %679 = vector.load %arg32[%c0_206, %c0_207] : memref<2x1xf32, #tpu.memory_space<vmem>>, vector<2x1xf32>
    %680 = vector.broadcast %679 : vector<2x1xf32> to vector<2x2xf32>
    %681 = arith.addf %678, %680 : vector<2x2xf32>
    %c0_208 = arith.constant 0 : index
    %c0_209 = arith.constant 0 : index
    %c0_210 = arith.constant 0 : index
    %682 = vector.load %arg33[%c0_208, %c0_209, %c0_210] : memref<1x2x2xf32, #tpu.memory_space<vmem>>, vector<1x2x2xf32>
    %683 = vector.shape_cast %682 : vector<1x2x2xf32> to vector<2x2xf32>
    %684 = vector.shape_cast %681 : vector<2x2xf32> to vector<1x2x2xf32>
    tpu.vector_store %arg33[%c0_208, %c0_209, %c0_210], %684 {strides = array<i32>} : memref<1x2x2xf32, #tpu.memory_space<vmem>>, vector<1x2x2xf32>,
    return
  }
  func.func @transform_0(%arg0: i32) -> (i32, i32, i32) {
    %c0_i32 = arith.constant 0 : i32
    %c0_i32_0 = arith.constant 0 : i32
    %c0_i32_1 = arith.constant 0 : i32
    return %arg0, %c0_i32, %c0_i32_0 : i32, i32, i32
  }
  func.func @transform_1(%arg0: i32) -> (i32, i32) {
    %c0_i32 = arith.constant 0 : i32
    %c0_i32_0 = arith.constant 0 : i32
    %c0_i32_1 = arith.constant 0 : i32
    return %c0_i32, %c0_i32_0 : i32, i32
  }
  func.func @transform_2(%arg0: i32) -> (i32, i32) {
    %c0_i32 = arith.constant 0 : i32
    %c0_i32_0 = arith.constant 0 : i32
    %c0_i32_1 = arith.constant 0 : i32
    return %c0_i32, %c0_i32_0 : i32, i32
  }
  func.func @transform_3(%arg0: i32) -> (i32, i32) {
    %c0_i32 = arith.constant 0 : i32
    %c0_i32_0 = arith.constant 0 : i32
    %c0_i32_1 = arith.constant 0 : i32
    return %c0_i32, %c0_i32_0 : i32, i32
  }
  func.func @transform_4(%arg0: i32) -> (i32, i32) {
    %c0_i32 = arith.constant 0 : i32
    %c0_i32_0 = arith.constant 0 : i32
    %c0_i32_1 = arith.constant 0 : i32
    return %c0_i32, %c0_i32_0 : i32, i32
  }
  func.func @transform_5(%arg0: i32) -> (i32, i32) {
    %c0_i32 = arith.constant 0 : i32
    %c0_i32_0 = arith.constant 0 : i32
    %c0_i32_1 = arith.constant 0 : i32
    return %c0_i32, %c0_i32_0 : i32, i32
  }
  func.func @transform_6(%arg0: i32) -> (i32, i32) {
    %c0_i32 = arith.constant 0 : i32
    %c0_i32_0 = arith.constant 0 : i32
    %c0_i32_1 = arith.constant 0 : i32
    return %c0_i32, %c0_i32_0 : i32, i32
  }
  func.func @transform_7(%arg0: i32) -> (i32, i32) {
    %c0_i32 = arith.constant 0 : i32
    %c0_i32_0 = arith.constant 0 : i32
    %c0_i32_1 = arith.constant 0 : i32
    return %c0_i32, %c0_i32_0 : i32, i32
  }
  func.func @transform_8(%arg0: i32) -> (i32, i32) {
    %c0_i32 = arith.constant 0 : i32
    %c0_i32_0 = arith.constant 0 : i32
    %c0_i32_1 = arith.constant 0 : i32
    return %c0_i32, %c0_i32_0 : i32, i32
  }
  func.func @transform_9(%arg0: i32) -> (i32, i32) {
    %c0_i32 = arith.constant 0 : i32
    %c0_i32_0 = arith.constant 0 : i32
    %c0_i32_1 = arith.constant 0 : i32
    return %c0_i32, %c0_i32_0 : i32, i32
  }
  func.func @transform_10(%arg0: i32) -> (i32, i32) {
    %c0_i32 = arith.constant 0 : i32
    %c0_i32_0 = arith.constant 0 : i32
    %c0_i32_1 = arith.constant 0 : i32
    return %c0_i32, %c0_i32_0 : i32, i32
  }
  func.func @transform_11(%arg0: i32) -> (i32, i32) {
    %c0_i32 = arith.constant 0 : i32
    %c0_i32_0 = arith.constant 0 : i32
    %c0_i32_1 = arith.constant 0 : i32
    return %c0_i32, %c0_i32_0 : i32, i32
  }
  func.func @transform_12(%arg0: i32) -> (i32, i32) {
    %c0_i32 = arith.constant 0 : i32
    %c0_i32_0 = arith.constant 0 : i32
    %c0_i32_1 = arith.constant 0 : i32
    return %c0_i32, %c0_i32_0 : i32, i32
  }
  func.func @transform_13(%arg0: i32) -> (i32, i32) {
    %c0_i32 = arith.constant 0 : i32
    %c0_i32_0 = arith.constant 0 : i32
    %c0_i32_1 = arith.constant 0 : i32
    return %c0_i32, %c0_i32_0 : i32, i32
  }
  func.func @transform_14(%arg0: i32) -> (i32, i32) {
    %c0_i32 = arith.constant 0 : i32
    %c0_i32_0 = arith.constant 0 : i32
    %c0_i32_1 = arith.constant 0 : i32
    return %c0_i32, %c0_i32_0 : i32, i32
  }
  func.func @transform_15(%arg0: i32) -> (i32, i32) {
    %c0_i32 = arith.constant 0 : i32
    %c0_i32_0 = arith.constant 0 : i32
    %c0_i32_1 = arith.constant 0 : i32
    return %c0_i32, %c0_i32_0 : i32, i32
  }
  func.func @transform_16(%arg0: i32) -> (i32, i32) {
    %c0_i32 = arith.constant 0 : i32
    %c0_i32_0 = arith.constant 0 : i32
    %c0_i32_1 = arith.constant 0 : i32
    return %c0_i32, %c0_i32_0 : i32, i32
  }
  func.func @transform_17(%arg0: i32) -> (i32, i32) {
    %c0_i32 = arith.constant 0 : i32
    %c0_i32_0 = arith.constant 0 : i32
    %c0_i32_1 = arith.constant 0 : i32
    return %c0_i32, %c0_i32_0 : i32, i32
  }
  func.func @transform_18(%arg0: i32) -> (i32, i32) {
    %c0_i32 = arith.constant 0 : i32
    %c0_i32_0 = arith.constant 0 : i32
    %c0_i32_1 = arith.constant 0 : i32
    return %c0_i32, %c0_i32_0 : i32, i32
  }
  func.func @transform_19(%arg0: i32) -> (i32, i32) {
    %c0_i32 = arith.constant 0 : i32
    %c0_i32_0 = arith.constant 0 : i32
    %c0_i32_1 = arith.constant 0 : i32
    return %c0_i32, %c0_i32_0 : i32, i32
  }
  func.func @transform_20(%arg0: i32) -> (i32, i32) {
    %c0_i32 = arith.constant 0 : i32
    %c0_i32_0 = arith.constant 0 : i32
    %c0_i32_1 = arith.constant 0 : i32
    return %c0_i32, %c0_i32_0 : i32, i32
  }
  func.func @transform_21(%arg0: i32) -> (i32, i32) {
    %c0_i32 = arith.constant 0 : i32
    %c0_i32_0 = arith.constant 0 : i32
    %c0_i32_1 = arith.constant 0 : i32
    return %c0_i32, %c0_i32_0 : i32, i32
  }
  func.func @transform_22(%arg0: i32) -> (i32, i32) {
    %c0_i32 = arith.constant 0 : i32
    %c0_i32_0 = arith.constant 0 : i32
    %c0_i32_1 = arith.constant 0 : i32
    return %c0_i32, %c0_i32_0 : i32, i32
  }
  func.func @transform_23(%arg0: i32) -> (i32, i32) {
    %c0_i32 = arith.constant 0 : i32
    %c0_i32_0 = arith.constant 0 : i32
    %c0_i32_1 = arith.constant 0 : i32
    return %c0_i32, %c0_i32_0 : i32, i32
  }
  func.func @transform_24(%arg0: i32) -> (i32, i32) {
    %c0_i32 = arith.constant 0 : i32
    %c0_i32_0 = arith.constant 0 : i32
    %c0_i32_1 = arith.constant 0 : i32
    return %c0_i32, %c0_i32_0 : i32, i32
  }
  func.func @transform_25(%arg0: i32) -> (i32, i32) {
    %c0_i32 = arith.constant 0 : i32
    %c0_i32_0 = arith.constant 0 : i32
    %c0_i32_1 = arith.constant 0 : i32
    return %c0_i32, %c0_i32_0 : i32, i32
  }
  func.func @transform_26(%arg0: i32) -> (i32, i32) {
    %c0_i32 = arith.constant 0 : i32
    %c0_i32_0 = arith.constant 0 : i32
    %c0_i32_1 = arith.constant 0 : i32
    return %c0_i32, %c0_i32_0 : i32, i32
  }
  func.func @transform_27(%arg0: i32) -> (i32, i32) {
    %c0_i32 = arith.constant 0 : i32
    %c0_i32_0 = arith.constant 0 : i32
    %c0_i32_1 = arith.constant 0 : i32
    return %c0_i32, %c0_i32_0 : i32, i32
  }
  func.func @transform_28(%arg0: i32) -> (i32, i32) {
    %c0_i32 = arith.constant 0 : i32
    %c0_i32_0 = arith.constant 0 : i32
    %c0_i32_1 = arith.constant 0 : i32
    return %c0_i32, %c0_i32_0 : i32, i32
  }
  func.func @transform_29(%arg0: i32) -> (i32, i32) {
    %c0_i32 = arith.constant 0 : i32
    %c0_i32_0 = arith.constant 0 : i32
    %c0_i32_1 = arith.constant 0 : i32
    return %c0_i32, %c0_i32_0 : i32, i32
  }
  func.func @transform_30(%arg0: i32) -> (i32, i32) {
    %c0_i32 = arith.constant 0 : i32
    %c0_i32_0 = arith.constant 0 : i32
    %c0_i32_1 = arith.constant 0 : i32
    return %c0_i32, %c0_i32_0 : i32, i32
  }
  func.func @transform_31(%arg0: i32) -> (i32, i32) {
    %c0_i32 = arith.constant 0 : i32
    %c0_i32_0 = arith.constant 0 : i32
    %c0_i32_1 = arith.constant 0 : i32
    return %c0_i32, %c0_i32_0 : i32, i32
  }
  func.func @transform_32(%arg0: i32) -> (i32, i32, i32) {
    %c0_i32 = arith.constant 0 : i32
    %c0_i32_0 = arith.constant 0 : i32
    %c0_i32_1 = arith.constant 0 : i32
    return %arg0, %c0_i32, %c0_i32_0 : i32, i32, i32
  }
}

</mosaic_0001>

<llo_original>
// kernel: tpu_custom_call.1
$region0: #{tpu_custom_call.1}
  #allocation0 [shape = 'u32[]', space=smem, size = 0x4, offset = 0x4, fixed_abs, tag = 'smem constant byte address 0x4 - core index']
  #allocation1 [shape = 'u32[144,128]{1,0:T(1,128)}', space=vmem, size = 0x12000, scoped, tag = 'internal scratch']
  %s0 = inlined_call_operand.smem [shape: u32[33], index: -1, kind: input, shape index: {}]
  %s1 = sld [smem:[%s0]]
  %s2 = scalar_lea.smem %s0, 1
  %s3 = sld [smem:[%s2]]
  %s4 = scalar_lea.smem %s0, 2
  %s5 = sld [smem:[%s4]]
  %s6 = scalar_lea.smem %s0, 3
  %s7 = sld [smem:[%s6]]
  %s8 = scalar_lea.smem %s0, 4
  %s9 = sld [smem:[%s8]]
  %s10 = scalar_lea.smem %s0, 5
  %s11 = sld [smem:[%s10]]
  %s12 = scalar_lea.smem %s0, 6
  %s13 = sld [smem:[%s12]]
  %s14 = scalar_lea.smem %s0, 7
  %s15 = sld [smem:[%s14]]
  %s16 = scalar_lea.smem %s0, 8
  %s17 = sld [smem:[%s16]]
  %s18 = scalar_lea.smem %s0, 9
  %s19 = sld [smem:[%s18]]
  %s20 = scalar_lea.smem %s0, 10
  %s21 = sld [smem:[%s20]]
  %s22 = scalar_lea.smem %s0, 11
  %s23 = sld [smem:[%s22]]
  %s24 = scalar_lea.smem %s0, 12
  %s25 = sld [smem:[%s24]]
  %s26 = scalar_lea.smem %s0, 13
  %s27 = sld [smem:[%s26]]
  %s28 = scalar_lea.smem %s0, 14
  %s29 = sld [smem:[%s28]]
  %s30 = scalar_lea.smem %s0, 15
  %s31 = sld [smem:[%s30]]
  %s32 = scalar_lea.smem %s0, 16
  %s33 = sld [smem:[%s32]]
  %s34 = scalar_lea.smem %s0, 17
  %s35 = sld [smem:[%s34]]
  %s36 = scalar_lea.smem %s0, 18
  %s37 = sld [smem:[%s36]]
  %s38 = scalar_lea.smem %s0, 19
  %s39 = sld [smem:[%s38]]
  %s40 = scalar_lea.smem %s0, 20
  %s41 = sld [smem:[%s40]]
  %s42 = scalar_lea.smem %s0, 21
  %s43 = sld [smem:[%s42]]
  %s44 = scalar_lea.smem %s0, 22
  %s45 = sld [smem:[%s44]]
  %s46 = scalar_lea.smem %s0, 23
  %s47 = sld [smem:[%s46]]
  %s48 = scalar_lea.smem %s0, 24
  %s49 = sld [smem:[%s48]]
  %s50 = scalar_lea.smem %s0, 25
  %s51 = sld [smem:[%s50]]
  %s52 = scalar_lea.smem %s0, 26
  %s53 = sld [smem:[%s52]]
  %s54 = scalar_lea.smem %s0, 27
  %s55 = sld [smem:[%s54]]
  %s56 = scalar_lea.smem %s0, 28
  %s57 = sld [smem:[%s56]]
  %s58 = scalar_lea.smem %s0, 29
  %s59 = sld [smem:[%s58]]
  %s60 = scalar_lea.smem %s0, 30
  %s61 = sld [smem:[%s60]]
  %s62 = scalar_lea.smem %s0, 31
  %s63 = sld [smem:[%s62]]
  %s64 = scalar_lea.smem %s0, 32
  %s65 = sld [smem:[%s64]]
  %s66 = sld [smem:[#allocation0]]
  $region198: #{tpu_custom_call.1} parent=0
    _
  %s68 = ssub.s32 1, %s66
  %s69 = scalar_select 0, %s68, %s66
  $region1: #{tpu_custom_call.1} parent=0
    #allocation2 [shape = 'u8[32768]{0}', space=vmem, size = 0x8000, scoped, tag = 'input window, operand 0, single buffered']
    #allocation3 [shape = 's32[1]{0}', space=sflag, size = 0x4, scoped, tag = 'scoped memory for tpu_custom_call.1']
    #allocation4 [shape = 's32[1]{0}', space=sflag, size = 0x4, scoped, tag = 'scoped memory for tpu_custom_call.1']
    #allocation5 [shape = 'u8[2048]{0}', space=vmem, size = 0x800, scoped, tag = 'input window, operand 1, single buffered']
    #allocation6 [shape = 's32[1]{0}', space=sflag, size = 0x4, scoped, tag = 'scoped memory for tpu_custom_call.1']
    #allocation7 [shape = 'u8[2048]{0}', space=vmem, size = 0x800, scoped, tag = 'input window, operand 3, single buffered']
    #allocation8 [shape = 'u8[4096]{0}', space=vmem, size = 0x1000, scoped, tag = 'input window, operand 5, single buffered']
    #allocation9 [shape = 's32[1]{0}', space=sflag, size = 0x4, scoped, tag = 'scoped memory for tpu_custom_call.1']
    #allocation10 [shape = 'u8[8192]{0}', space=vmem, size = 0x2000, scoped, tag = 'input window, operand 7, single buffered']
    #allocation11 [shape = 'u8[8192]{0}', space=vmem, size = 0x2000, scoped, tag = 'input window, operand 9, single buffered']
    #allocation12 [shape = 's32[1]{0}', space=sflag, size = 0x4, scoped, tag = 'scoped memory for tpu_custom_call.1']
    #allocation13 [shape = 'u8[8192]{0}', space=vmem, size = 0x2000, scoped, tag = 'input window, operand 11, single buffered']
    #allocation14 [shape = 'u8[16384]{0}', space=vmem, size = 0x4000, scoped, tag = 'input window, operand 13, single buffered']
    #allocation15 [shape = 's32[1]{0}', space=sflag, size = 0x4, scoped, tag = 'scoped memory for tpu_custom_call.1']
    #allocation16 [shape = 'u8[24576]{0}', space=vmem, size = 0x6000, scoped, tag = 'input window, operand 15, single buffered']
    #allocation17 [shape = 'u8[24576]{0}', space=vmem, size = 0x6000, scoped, tag = 'input window, operand 17, single buffered']
    #allocation18 [shape = 's32[1]{0}', space=sflag, size = 0x4, scoped, tag = 'scoped memory for tpu_custom_call.1']
    #allocation19 [shape = 'u8[24576]{0}', space=vmem, size = 0x6000, scoped, tag = 'input window, operand 19, single buffered']
    #allocation20 [shape = 'u8[2097152]{0}', space=vmem, size = 0x200000, scoped, tag = 'input window, operand 21, single buffered']
    #allocation21 [shape = 's32[1]{0}', space=sflag, size = 0x4, scoped, tag = 'scoped memory for tpu_custom_call.1']
    #allocation22 [shape = 'u8[131072]{0}', space=vmem, size = 0x20000, scoped, tag = 'input window, operand 22, single buffered']
    #allocation23 [shape = 'u8[32768]{0}', space=vmem, size = 0x8000, scoped, tag = 'input window, operand 28, single buffered']
    #allocation24 [shape = 's32[1]{0}', space=sflag, size = 0x4, scoped, tag = 'scoped memory for tpu_custom_call.1']
    #allocation25 [shape = 'u8[1024]{0}', space=vmem, size = 0x400, scoped, tag = 'input window, operand 30, single buffered']
    #allocation26 [shape = 'u8[1024]{0}', space=vmem, size = 0x400, scoped, tag = 'output window, operand 0, single buffered']
    %70 = vsyncpa [#allocation3], 0
    %71 = vsyncpa [#allocation6], 0
    %72 = vsyncpa [#allocation9], 0
    %73 = vsyncpa [#allocation12], 0
    %74 = vsyncpa [#allocation15], 0
    %75 = vsyncpa [#allocation18], 0
    %76 = vsyncpa [#allocation21], 0
    %77 = vsyncpa [#allocation24], 0
    %78 = vsyncpa [#allocation4], 0
    // Predicated region
    $region2: #{tpu_custom_call.1} parent=1 // pred_check
      _
    $region3: #{tpu_custom_call.1} parent=1 // pred_check_branch
      %80 = sbr.rel (0) target = $region5
    $region4: #{tpu_custom_call.1} parent=1 // pred_region
      %s82 = ssub.s32 1024, 1024
      %83 = vsyncadd [#allocation3], %s82
      %s85 = sshll.u32 [#allocation2], 4
      %s86 = int_to_ptr.vmem [resolvable:$true] %s85
      %88 = dma.hbm_to_vmem [thread:$0]  %s1, 1024, %s86, [#allocation3]
    $region5: #{tpu_custom_call.1} parent=1 // pred_fallthru
      _
    // Predicated region
    $region6: #{tpu_custom_call.1} parent=1 // pred_check
      _
    $region7: #{tpu_custom_call.1} parent=1 // pred_check_branch
      %90 = sbr.rel (0) target = $region9
    $region8: #{tpu_custom_call.1} parent=1 // pred_region
      %s92 = ssub.s32 64, 64
      %93 = vsyncadd [#allocation6], %s92
      %s95 = sshll.u32 [#allocation5], 4
      %s96 = int_to_ptr.vmem [resolvable:$true] %s95
      %98 = dma.hbm_to_vmem [thread:$0]  %s3, 64, %s96, [#allocation6]
    $region9: #{tpu_custom_call.1} parent=1 // pred_fallthru
      _
    // Predicated region
    $region10: #{tpu_custom_call.1} parent=1 // pred_check
      _
    $region11: #{tpu_custom_call.1} parent=1 // pred_check_branch
      %100 = sbr.rel (0) target = $region13
    $region12: #{tpu_custom_call.1} parent=1 // pred_region
      _
    $region13: #{tpu_custom_call.1} parent=1 // pred_fallthru
      _
    // Predicated region
    $region14: #{tpu_custom_call.1} parent=1 // pred_check
      _
    $region15: #{tpu_custom_call.1} parent=1 // pred_check_branch
      %102 = sbr.rel (0) target = $region17
    $region16: #{tpu_custom_call.1} parent=1 // pred_region
      %s104 = ssub.s32 64, 64
      %105 = vsyncadd [#allocation6], %s104
      %s107 = sshll.u32 [#allocation7], 4
      %s108 = int_to_ptr.vmem [resolvable:$true] %s107
      %110 = dma.hbm_to_vmem [thread:$0]  %s7, 64, %s108, [#allocation6]
    $region17: #{tpu_custom_call.1} parent=1 // pred_fallthru
      _
    // Predicated region
    $region18: #{tpu_custom_call.1} parent=1 // pred_check
      _
    $region19: #{tpu_custom_call.1} parent=1 // pred_check_branch
      %112 = sbr.rel (0) target = $region21
    $region20: #{tpu_custom_call.1} parent=1 // pred_region
      _
    $region21: #{tpu_custom_call.1} parent=1 // pred_fallthru
      _
    // Predicated region
    $region22: #{tpu_custom_call.1} parent=1 // pred_check
      _
    $region23: #{tpu_custom_call.1} parent=1 // pred_check_branch
      %114 = sbr.rel (0) target = $region25
    $region24: #{tpu_custom_call.1} parent=1 // pred_region
      %s116 = ssub.s32 128, 128
      %117 = vsyncadd [#allocation9], %s116
      %s118 = sshll.u32 [#allocation8], 4
      %s119 = int_to_ptr.vmem [resolvable:$true] %s118
      %124 = dma.hbm_to_vmem [thread:$0]  %s11, 128, %s119, [#allocation9], 64, 64, 4
    $region25: #{tpu_custom_call.1} parent=1 // pred_fallthru
      _
    // Predicated region
    $region26: #{tpu_custom_call.1} parent=1 // pred_check
      _
    $region27: #{tpu_custom_call.1} parent=1 // pred_check_branch
      %126 = sbr.rel (0) target = $region29
    $region28: #{tpu_custom_call.1} parent=1 // pred_region
      _
    $region29: #{tpu_custom_call.1} parent=1 // pred_fallthru
      _
    // Predicated region
    $region30: #{tpu_custom_call.1} parent=1 // pred_check
      _
    $region31: #{tpu_custom_call.1} parent=1 // pred_check_branch
      %128 = sbr.rel (0) target = $region33
    $region32: #{tpu_custom_call.1} parent=1 // pred_region
      %s130 = ssub.s32 256, 256
      %131 = vsyncadd [#allocation9], %s130
      %s132 = sshll.u32 [#allocation10], 4
      %s133 = int_to_ptr.vmem [resolvable:$true] %s132
      %138 = dma.hbm_to_vmem [thread:$0]  %s15, 256, %s133, [#allocation9], 128, 128, 8
    $region33: #{tpu_custom_call.1} parent=1 // pred_fallthru
      _
    // Predicated region
    $region34: #{tpu_custom_call.1} parent=1 // pred_check
      _
    $region35: #{tpu_custom_call.1} parent=1 // pred_check_branch
      %140 = sbr.rel (0) target = $region37
    $region36: #{tpu_custom_call.1} parent=1 // pred_region
      _
    $region37: #{tpu_custom_call.1} parent=1 // pred_fallthru
      _
    // Predicated region
    $region38: #{tpu_custom_call.1} parent=1 // pred_check
      _
    $region39: #{tpu_custom_call.1} parent=1 // pred_check_branch
      %142 = sbr.rel (0) target = $region41
    $region40: #{tpu_custom_call.1} parent=1 // pred_region
      %s144 = ssub.s32 256, 256
      %145 = vsyncadd [#allocation12], %s144
      %s146 = sshll.u32 [#allocation11], 4
      %s147 = int_to_ptr.vmem [resolvable:$true] %s146
      %152 = dma.hbm_to_vmem [thread:$0]  %s19, 256, %s147, [#allocation12], 128, 128, 8
    $region41: #{tpu_custom_call.1} parent=1 // pred_fallthru
      _
    // Predicated region
    $region42: #{tpu_custom_call.1} parent=1 // pred_check
      _
    $region43: #{tpu_custom_call.1} parent=1 // pred_check_branch
      %154 = sbr.rel (0) target = $region45
    $region44: #{tpu_custom_call.1} parent=1 // pred_region
      _
    $region45: #{tpu_custom_call.1} parent=1 // pred_fallthru
      _
    // Predicated region
    $region46: #{tpu_custom_call.1} parent=1 // pred_check
      _
    $region47: #{tpu_custom_call.1} parent=1 // pred_check_branch
      %156 = sbr.rel (0) target = $region49
    $region48: #{tpu_custom_call.1} parent=1 // pred_region
      %s158 = ssub.s32 256, 256
      %159 = vsyncadd [#allocation12], %s158
      %s160 = sshll.u32 [#allocation13], 4
      %s161 = int_to_ptr.vmem [resolvable:$true] %s160
      %166 = dma.hbm_to_vmem [thread:$0]  %s23, 256, %s161, [#allocation12], 128, 128, 8
    $region49: #{tpu_custom_call.1} parent=1 // pred_fallthru
      _
    // Predicated region
    $region50: #{tpu_custom_call.1} parent=1 // pred_check
      _
    $region51: #{tpu_custom_call.1} parent=1 // pred_check_branch
      %168 = sbr.rel (0) target = $region53
    $region52: #{tpu_custom_call.1} parent=1 // pred_region
      _
    $region53: #{tpu_custom_call.1} parent=1 // pred_fallthru
      _
    // Predicated region
    $region54: #{tpu_custom_call.1} parent=1 // pred_check
      _
    $region55: #{tpu_custom_call.1} parent=1 // pred_check_branch
      %170 = sbr.rel (0) target = $region57
    $region56: #{tpu_custom_call.1} parent=1 // pred_region
      %s172 = ssub.s32 512, 512
      %173 = vsyncadd [#allocation15], %s172
      %s174 = sshll.u32 [#allocation14], 4
      %s175 = int_to_ptr.vmem [resolvable:$true] %s174
      %180 = dma.hbm_to_vmem [thread:$0]  %s27, 512, %s175, [#allocation15], 128, 128, 8
    $region57: #{tpu_custom_call.1} parent=1 // pred_fallthru
      _
    // Predicated region
    $region58: #{tpu_custom_call.1} parent=1 // pred_check
      _
    $region59: #{tpu_custom_call.1} parent=1 // pred_check_branch
      %182 = sbr.rel (0) target = $region61
    $region60: #{tpu_custom_call.1} parent=1 // pred_region
      _
    $region61: #{tpu_custom_call.1} parent=1 // pred_fallthru
      _
    // Predicated region
    $region62: #{tpu_custom_call.1} parent=1 // pred_check
      _
    $region63: #{tpu_custom_call.1} parent=1 // pred_check_branch
      %184 = sbr.rel (0) target = $region65
    $region64: #{tpu_custom_call.1} parent=1 // pred_region
      %s186 = ssub.s32 768, 768
      %187 = vsyncadd [#allocation15], %s186
      %s188 = sshll.u32 [#allocation16], 4
      %s189 = int_to_ptr.vmem [resolvable:$true] %s188
      %194 = dma.hbm_to_vmem [thread:$0]  %s31, 768, %s189, [#allocation15], 192, 192, 12
    $region65: #{tpu_custom_call.1} parent=1 // pred_fallthru
      _
    // Predicated region
    $region66: #{tpu_custom_call.1} parent=1 // pred_check
      _
    $region67: #{tpu_custom_call.1} parent=1 // pred_check_branch
      %196 = sbr.rel (0) target = $region69
    $region68: #{tpu_custom_call.1} parent=1 // pred_region
      _
    $region69: #{tpu_custom_call.1} parent=1 // pred_fallthru
      _
    // Predicated region
    $region70: #{tpu_custom_call.1} parent=1 // pred_check
      _
    $region71: #{tpu_custom_call.1} parent=1 // pred_check_branch
      %198 = sbr.rel (0) target = $region73
    $region72: #{tpu_custom_call.1} parent=1 // pred_region
      %s200 = ssub.s32 768, 768
      %201 = vsyncadd [#allocation18], %s200
      %s202 = sshll.u32 [#allocation17], 4
      %s203 = int_to_ptr.vmem [resolvable:$true] %s202
      %208 = dma.hbm_to_vmem [thread:$0]  %s35, 768, %s203, [#allocation18], 192, 192, 12
    $region73: #{tpu_custom_call.1} parent=1 // pred_fallthru
      _
    // Predicated region
    $region74: #{tpu_custom_call.1} parent=1 // pred_check
      _
    $region75: #{tpu_custom_call.1} parent=1 // pred_check_branch
      %210 = sbr.rel (0) target = $region77
    $region76: #{tpu_custom_call.1} parent=1 // pred_region
      _
    $region77: #{tpu_custom_call.1} parent=1 // pred_fallthru
      _
    // Predicated region
    $region78: #{tpu_custom_call.1} parent=1 // pred_check
      _
    $region79: #{tpu_custom_call.1} parent=1 // pred_check_branch
      %212 = sbr.rel (0) target = $region81
    $region80: #{tpu_custom_call.1} parent=1 // pred_region
      %s214 = ssub.s32 768, 768
      %215 = vsyncadd [#allocation18], %s214
      %s216 = sshll.u32 [#allocation19], 4
      %s217 = int_to_ptr.vmem [resolvable:$true] %s216
      %222 = dma.hbm_to_vmem [thread:$0]  %s39, 768, %s217, [#allocation18], 192, 192, 12
    $region81: #{tpu_custom_call.1} parent=1 // pred_fallthru
      _
    // Predicated region
    $region82: #{tpu_custom_call.1} parent=1 // pred_check
      _
    $region83: #{tpu_custom_call.1} parent=1 // pred_check_branch
      %224 = sbr.rel (0) target = $region85
    $region84: #{tpu_custom_call.1} parent=1 // pred_region
      _
    $region85: #{tpu_custom_call.1} parent=1 // pred_fallthru
      _
    // Predicated region
    $region86: #{tpu_custom_call.1} parent=1 // pred_check
      _
    $region87: #{tpu_custom_call.1} parent=1 // pred_check_branch
      %226 = sbr.rel (0) target = $region89
    $region88: #{tpu_custom_call.1} parent=1 // pred_region
      %s228 = ssub.s32 65536, 65536
      %229 = vsyncadd [#allocation21], %s228
      %s230 = sshll.u32 [#allocation20], 4
      %s231 = int_to_ptr.vmem [resolvable:$true] %s230
      %236 = dma.hbm_to_vmem [thread:$0]  %s43, 65536, %s231, [#allocation21], 256, 256, 16
    $region89: #{tpu_custom_call.1} parent=1 // pred_fallthru
      _
    // Predicated region
    $region90: #{tpu_custom_call.1} parent=1 // pred_check
      _
    $region91: #{tpu_custom_call.1} parent=1 // pred_check_branch
      %238 = sbr.rel (0) target = $region93
    $region92: #{tpu_custom_call.1} parent=1 // pred_region
      %s240 = ssub.s32 4096, 4096
      %241 = vsyncadd [#allocation21], %s240
      %s242 = sshll.u32 [#allocation22], 4
      %s243 = int_to_ptr.vmem [resolvable:$true] %s242
      %248 = dma.hbm_to_vmem [thread:$0]  %s45, 4096, %s243, [#allocation21], 64, 64, 4
    $region93: #{tpu_custom_call.1} parent=1 // pred_fallthru
      _
    // Predicated region
    $region94: #{tpu_custom_call.1} parent=1 // pred_check
      _
    $region95: #{tpu_custom_call.1} parent=1 // pred_check_branch
      %250 = sbr.rel (0) target = $region97
    $region96: #{tpu_custom_call.1} parent=1 // pred_region
      _
    $region97: #{tpu_custom_call.1} parent=1 // pred_fallthru
      _
    // Predicated region
    $region98: #{tpu_custom_call.1} parent=1 // pred_check
      _
    $region99: #{tpu_custom_call.1} parent=1 // pred_check_branch
      %252 = sbr.rel (0) target = $region101
    $region100: #{tpu_custom_call.1} parent=1 // pred_region
      _
    $region101: #{tpu_custom_call.1} parent=1 // pred_fallthru
      _
    // Predicated region
    $region102: #{tpu_custom_call.1} parent=1 // pred_check
      _
    $region103: #{tpu_custom_call.1} parent=1 // pred_check_branch
      %254 = sbr.rel (0) target = $region105
    $region104: #{tpu_custom_call.1} parent=1 // pred_region
      _
    $region105: #{tpu_custom_call.1} parent=1 // pred_fallthru
      _
    // Predicated region
    $region106: #{tpu_custom_call.1} parent=1 // pred_check
      _
    $region107: #{tpu_custom_call.1} parent=1 // pred_check_branch
      %256 = sbr.rel (0) target = $region109
    $region108: #{tpu_custom_call.1} parent=1 // pred_region
      _
    $region109: #{tpu_custom_call.1} parent=1 // pred_fallthru
      _
    // Predicated region
    $region110: #{tpu_custom_call.1} parent=1 // pred_check
      _
    $region111: #{tpu_custom_call.1} parent=1 // pred_check_branch
      %258 = sbr.rel (0) target = $region113
    $region112: #{tpu_custom_call.1} parent=1 // pred_region
      _
    $region113: #{tpu_custom_call.1} parent=1 // pred_fallthru
      _
    // Predicated region
    $region114: #{tpu_custom_call.1} parent=1 // pred_check
      _
    $region115: #{tpu_custom_call.1} parent=1 // pred_check_branch
      %260 = sbr.rel (0) target = $region117
    $region116: #{tpu_custom_call.1} parent=1 // pred_region
      %s262 = ssub.s32 1024, 1024
      %263 = vsyncadd [#allocation24], %s262
      %s264 = sshll.u32 [#allocation23], 4
      %s265 = int_to_ptr.vmem [resolvable:$true] %s264
      %270 = dma.hbm_to_vmem [thread:$0]  %s57, 1024, %s265, [#allocation24], 128, 128, 8
    $region117: #{tpu_custom_call.1} parent=1 // pred_fallthru
      _
    // Predicated region
    $region118: #{tpu_custom_call.1} parent=1 // pred_check
      _
    $region119: #{tpu_custom_call.1} parent=1 // pred_check_branch
      %272 = sbr.rel (0) target = $region121
    $region120: #{tpu_custom_call.1} parent=1 // pred_region
      _
    $region121: #{tpu_custom_call.1} parent=1 // pred_fallthru
      _
    // Predicated region
    $region122: #{tpu_custom_call.1} parent=1 // pred_check
      _
    $region123: #{tpu_custom_call.1} parent=1 // pred_check_branch
      %274 = sbr.rel (0) target = $region125
    $region124: #{tpu_custom_call.1} parent=1 // pred_region
      %s276 = ssub.s32 32, 32
      %277 = vsyncadd [#allocation24], %s276
      %s279 = sshll.u32 [#allocation25], 4
      %s280 = int_to_ptr.vmem [resolvable:$true] %s279
      %282 = dma.hbm_to_vmem [thread:$0]  %s61, 32, %s280, [#allocation24]
    $region125: #{tpu_custom_call.1} parent=1 // pred_fallthru
      _
    // Predicated region
    $region126: #{tpu_custom_call.1} parent=1 // pred_check
      _
    $region127: #{tpu_custom_call.1} parent=1 // pred_check_branch
      %284 = sbr.rel (0) target = $region129
    $region128: #{tpu_custom_call.1} parent=1 // pred_region
      _
    $region129: #{tpu_custom_call.1} parent=1 // pred_fallthru
      _
    // Predicated region
    $region130: #{tpu_custom_call.1} parent=1 // pred_check
      _
    $region131: #{tpu_custom_call.1} parent=1 // pred_check_branch
      %286 = sbr.rel (0) target = $region133
    $region132: #{tpu_custom_call.1} parent=1 // pred_region
      %287 = dma.done [#allocation3], 1024
    $region133: #{tpu_custom_call.1} parent=1 // pred_fallthru
      _
    // Predicated region
    $region134: #{tpu_custom_call.1} parent=1 // pred_check
      _
    $region135: #{tpu_custom_call.1} parent=1 // pred_check_branch
      %289 = sbr.rel (0) target = $region137
    $region136: #{tpu_custom_call.1} parent=1 // pred_region
      %290 = dma.done [#allocation6], 64
    $region137: #{tpu_custom_call.1} parent=1 // pred_fallthru
      _
    // Predicated region
    $region138: #{tpu_custom_call.1} parent=1 // pred_check
      _
    $region139: #{tpu_custom_call.1} parent=1 // pred_check_branch
      %292 = sbr.rel (0) target = $region141
    $region140: #{tpu_custom_call.1} parent=1 // pred_region
      %293 = dma.done [#allocation6], 64
    $region141: #{tpu_custom_call.1} parent=1 // pred_fallthru
      _
    // Predicated region
    $region142: #{tpu_custom_call.1} parent=1 // pred_check
      _
    $region143: #{tpu_custom_call.1} parent=1 // pred_check_branch
      %295 = sbr.rel (0) target = $region145
    $region144: #{tpu_custom_call.1} parent=1 // pred_region
      %296 = dma.done [#allocation9], 128
    $region145: #{tpu_custom_call.1} parent=1 // pred_fallthru
      _
    // Predicated region
    $region146: #{tpu_custom_call.1} parent=1 // pred_check
      _
    $region147: #{tpu_custom_call.1} parent=1 // pred_check_branch
      %298 = sbr.rel (0) target = $region149
    $region148: #{tpu_custom_call.1} parent=1 // pred_region
      %299 = dma.done [#allocation9], 256
    $region149: #{tpu_custom_call.1} parent=1 // pred_fallthru
      _
    // Predicated region
    $region150: #{tpu_custom_call.1} parent=1 // pred_check
      _
    $region151: #{tpu_custom_call.1} parent=1 // pred_check_branch
      %301 = sbr.rel (0) target = $region153
    $region152: #{tpu_custom_call.1} parent=1 // pred_region
      %302 = dma.done [#allocation12], 256
    $region153: #{tpu_custom_call.1} parent=1 // pred_fallthru
      _
    // Predicated region
    $region154: #{tpu_custom_call.1} parent=1 // pred_check
      _
    $region155: #{tpu_custom_call.1} parent=1 // pred_check_branch
      %304 = sbr.rel (0) target = $region157
    $region156: #{tpu_custom_call.1} parent=1 // pred_region
      %305 = dma.done [#allocation12], 256
    $region157: #{tpu_custom_call.1} parent=1 // pred_fallthru
      _
    // Predicated region
    $region158: #{tpu_custom_call.1} parent=1 // pred_check
      _
    $region159: #{tpu_custom_call.1} parent=1 // pred_check_branch
      %307 = sbr.rel (0) target = $region161
    $region160: #{tpu_custom_call.1} parent=1 // pred_region
      %308 = dma.done [#allocation15], 512
    $region161: #{tpu_custom_call.1} parent=1 // pred_fallthru
      _
    // Predicated region
    $region162: #{tpu_custom_call.1} parent=1 // pred_check
      _
    $region163: #{tpu_custom_call.1} parent=1 // pred_check_branch
      %310 = sbr.rel (0) target = $region165
    $region164: #{tpu_custom_call.1} parent=1 // pred_region
      %311 = dma.done [#allocation15], 768
    $region165: #{tpu_custom_call.1} parent=1 // pred_fallthru
      _
    // Predicated region
    $region166: #{tpu_custom_call.1} parent=1 // pred_check
      _
    $region167: #{tpu_custom_call.1} parent=1 // pred_check_branch
      %313 = sbr.rel (0) target = $region169
    $region168: #{tpu_custom_call.1} parent=1 // pred_region
      %314 = dma.done [#allocation18], 768
    $region169: #{tpu_custom_call.1} parent=1 // pred_fallthru
      _
    // Predicated region
    $region170: #{tpu_custom_call.1} parent=1 // pred_check
      _
    $region171: #{tpu_custom_call.1} parent=1 // pred_check_branch
      %316 = sbr.rel (0) target = $region173
    $region172: #{tpu_custom_call.1} parent=1 // pred_region
      %317 = dma.done [#allocation18], 768
    $region173: #{tpu_custom_call.1} parent=1 // pred_fallthru
      _
    // Predicated region
    $region174: #{tpu_custom_call.1} parent=1 // pred_check
      _
    $region175: #{tpu_custom_call.1} parent=1 // pred_check_branch
      %319 = sbr.rel (0) target = $region177
    $region176: #{tpu_custom_call.1} parent=1 // pred_region
      %320 = dma.done [#allocation21], 65536
    $region177: #{tpu_custom_call.1} parent=1 // pred_fallthru
      _
    // Predicated region
    $region178: #{tpu_custom_call.1} parent=1 // pred_check
      _
    $region179: #{tpu_custom_call.1} parent=1 // pred_check_branch
      %322 = sbr.rel (0) target = $region181
    $region180: #{tpu_custom_call.1} parent=1 // pred_region
      %323 = dma.done [#allocation21], 4096
    $region181: #{tpu_custom_call.1} parent=1 // pred_fallthru
      _
    // Predicated region
    $region182: #{tpu_custom_call.1} parent=1 // pred_check
      _
    $region183: #{tpu_custom_call.1} parent=1 // pred_check_branch
      %325 = sbr.rel (0) target = $region185
    $region184: #{tpu_custom_call.1} parent=1 // pred_region
      %326 = dma.done [#allocation24], 1024
    $region185: #{tpu_custom_call.1} parent=1 // pred_fallthru
      _
    // Predicated region
    $region186: #{tpu_custom_call.1} parent=1 // pred_check
      _
    $region187: #{tpu_custom_call.1} parent=1 // pred_check_branch
      %328 = sbr.rel (0) target = $region189
    $region188: #{tpu_custom_call.1} parent=1 // pred_region
      %329 = dma.done [#allocation24], 32
    $region189: #{tpu_custom_call.1} parent=1 // pred_fallthru
      _
    %v331 = vld [vmem:[#allocation2] sm:$0xff]
    %v332 = vld [vmem:[#allocation2 + $0x8] sm:$0xff]
    %v333 = vld [vmem:[#allocation2 + $0x10] sm:$0xff]
    %v334 = vld [vmem:[#allocation2 + $0x18] sm:$0xff]
    %v335 = vld [vmem:[#allocation2 + $0x20] sm:$0xff]
    %v336 = vld [vmem:[#allocation2 + $0x28] sm:$0xff]
    %v337 = vld [vmem:[#allocation2 + $0x30] sm:$0xff]
    %v338 = vld [vmem:[#allocation2 + $0x38] sm:$0xff]
    %v339 = vunpack.c.l.bf16 %v331
    %v340 = vunpack.c.h.bf16 %v331
    %v341 = vunpack.c.l.bf16 %v332
    %v342 = vunpack.c.h.bf16 %v332
    %v343 = vunpack.c.l.bf16 %v333
    %v344 = vunpack.c.h.bf16 %v333
    %v345 = vunpack.c.l.bf16 %v334
    %v346 = vunpack.c.h.bf16 %v334
    %v347 = vunpack.c.l.bf16 %v335
    %v348 = vunpack.c.h.bf16 %v335
    %v349 = vunpack.c.l.bf16 %v336
    %v350 = vunpack.c.h.bf16 %v336
    %v351 = vunpack.c.l.bf16 %v337
    %v352 = vunpack.c.h.bf16 %v337
    %v353 = vunpack.c.l.bf16 %v338
    %v354 = vunpack.c.h.bf16 %v338
    %v355 = vlaneseq
    %v356 = vand.u32 %v355, 127
    %v357 = vadd.s32 %v356, 128
    %v358 = vadd.s32 %v356, 256
    %v359 = vadd.s32 %v356, 384
    %v360 = vadd.s32 %v356, 512
    %v361 = vadd.s32 %v356, 640
    %v362 = vadd.s32 %v356, 768
    %v363 = vadd.s32 %v356, 896
    %v364 = vadd.s32 %v356, 1024
    %v365 = vadd.s32 %v356, 1152
    %v366 = vadd.s32 %v356, 1280
    %v367 = vadd.s32 %v356, 1408
    %v368 = vadd.s32 %v356, 1536
    %v369 = vadd.s32 %v356, 1664
    %v370 = vadd.s32 %v356, 1792
    %v371 = vadd.s32 %v356, 1920
    %v372 = vand.u32 %v356, 1023
    %v373 = vand.u32 %v357, 1023
    %v374 = vand.u32 %v358, 1023
    %v375 = vand.u32 %v359, 1023
    %v376 = vand.u32 %v360, 1023
    %v377 = vand.u32 %v361, 1023
    %v378 = vand.u32 %v362, 1023
    %v379 = vand.u32 %v363, 1023
    %v380 = vand.u32 %v364, 1023
    %v381 = vand.u32 %v365, 1023
    %v382 = vand.u32 %v366, 1023
    %v383 = vand.u32 %v367, 1023
    %v384 = vand.u32 %v368, 1023
    %v385 = vand.u32 %v369, 1023
    %v386 = vand.u32 %v370, 1023
    %v387 = vand.u32 %v371, 1023
    %v388 = vand.u32 %v372, 31
    %v389 = vand.u32 %v373, 31
    %v390 = vand.u32 %v374, 31
    %v391 = vand.u32 %v375, 31
    %v392 = vand.u32 %v376, 31
    %v393 = vand.u32 %v377, 31
    %v394 = vand.u32 %v378, 31
    %v395 = vand.u32 %v379, 31
    %v396 = vand.u32 %v380, 31
    %v397 = vand.u32 %v381, 31
    %v398 = vand.u32 %v382, 31
    %v399 = vand.u32 %v383, 31
    %v400 = vand.u32 %v384, 31
    %v401 = vand.u32 %v385, 31
    %v402 = vand.u32 %v386, 31
    %v403 = vand.u32 %v387, 31
    %v404 = vshra.s32 %v372, 5
    %v405 = vshra.s32 %v373, 5
    %v406 = vshra.s32 %v374, 5
    %v407 = vshra.s32 %v375, 5
    %v408 = vshra.s32 %v376, 5
    %v409 = vshra.s32 %v377, 5
    %v410 = vshra.s32 %v378, 5
    %v411 = vshra.s32 %v379, 5
    %v412 = vshra.s32 %v380, 5
    %v413 = vshra.s32 %v381, 5
    %v414 = vshra.s32 %v382, 5
    %v415 = vshra.s32 %v383, 5
    %v416 = vshra.s32 %v384, 5
    %v417 = vshra.s32 %v385, 5
    %v418 = vshra.s32 %v386, 5
    %v419 = vshra.s32 %v387, 5
    %vm420 = vcmp.ge.s32.totalorder %v388, 1
    %vm421 = vcmp.ge.s32.totalorder %v389, 1
    %vm422 = vcmp.ge.s32.totalorder %v390, 1
    %vm423 = vcmp.ge.s32.totalorder %v391, 1
    %vm424 = vcmp.ge.s32.totalorder %v392, 1
    %vm425 = vcmp.ge.s32.totalorder %v393, 1
    %vm426 = vcmp.ge.s32.totalorder %v394, 1
    %vm427 = vcmp.ge.s32.totalorder %v395, 1
    %vm428 = vcmp.ge.s32.totalorder %v396, 1
    %vm429 = vcmp.ge.s32.totalorder %v397, 1
    %vm430 = vcmp.ge.s32.totalorder %v398, 1
    %vm431 = vcmp.ge.s32.totalorder %v399, 1
    %vm432 = vcmp.ge.s32.totalorder %v400, 1
    %vm433 = vcmp.ge.s32.totalorder %v401, 1
    %vm434 = vcmp.ge.s32.totalorder %v402, 1
    %vm435 = vcmp.ge.s32.totalorder %v403, 1
    %vm436 = vcmp.le.s32.totalorder %v388, 30
    %vm437 = vcmp.le.s32.totalorder %v389, 30
    %vm438 = vcmp.le.s32.totalorder %v390, 30
    %vm439 = vcmp.le.s32.totalorder %v391, 30
    %vm440 = vcmp.le.s32.totalorder %v392, 30
    %vm441 = vcmp.le.s32.totalorder %v393, 30
    %vm442 = vcmp.le.s32.totalorder %v394, 30
    %vm443 = vcmp.le.s32.totalorder %v395, 30
    %vm444 = vcmp.le.s32.totalorder %v396, 30
    %vm445 = vcmp.le.s32.totalorder %v397, 30
    %vm446 = vcmp.le.s32.totalorder %v398, 30
    %vm447 = vcmp.le.s32.totalorder %v399, 30
    %vm448 = vcmp.le.s32.totalorder %v400, 30
    %vm449 = vcmp.le.s32.totalorder %v401, 30
    %vm450 = vcmp.le.s32.totalorder %v402, 30
    %vm451 = vcmp.le.s32.totalorder %v403, 30
    %vm452 = vcmp.ge.s32.totalorder %v404, 1
    %vm453 = vcmp.ge.s32.totalorder %v405, 1
    %vm454 = vcmp.ge.s32.totalorder %v406, 1
    %vm455 = vcmp.ge.s32.totalorder %v407, 1
    %vm456 = vcmp.ge.s32.totalorder %v408, 1
    %vm457 = vcmp.ge.s32.totalorder %v409, 1
    %vm458 = vcmp.ge.s32.totalorder %v410, 1
    %vm459 = vcmp.ge.s32.totalorder %v411, 1
    %vm460 = vcmp.ge.s32.totalorder %v412, 1
    %vm461 = vcmp.ge.s32.totalorder %v413, 1
    %vm462 = vcmp.ge.s32.totalorder %v414, 1
    %vm463 = vcmp.ge.s32.totalorder %v415, 1
    %vm464 = vcmp.ge.s32.totalorder %v416, 1
    %vm465 = vcmp.ge.s32.totalorder %v417, 1
    %vm466 = vcmp.ge.s32.totalorder %v418, 1
    %vm467 = vcmp.ge.s32.totalorder %v419, 1
    %vm468 = vcmp.le.s32.totalorder %v404, 30
    %vm469 = vcmp.le.s32.totalorder %v405, 30
    %vm470 = vcmp.le.s32.totalorder %v406, 30
    %vm471 = vcmp.le.s32.totalorder %v407, 30
    %vm472 = vcmp.le.s32.totalorder %v408, 30
    %vm473 = vcmp.le.s32.totalorder %v409, 30
    %vm474 = vcmp.le.s32.totalorder %v410, 30
    %vm475 = vcmp.le.s32.totalorder %v411, 30
    %vm476 = vcmp.le.s32.totalorder %v412, 30
    %vm477 = vcmp.le.s32.totalorder %v413, 30
    %vm478 = vcmp.le.s32.totalorder %v414, 30
    %vm479 = vcmp.le.s32.totalorder %v415, 30
    %vm480 = vcmp.le.s32.totalorder %v416, 30
    %vm481 = vcmp.le.s32.totalorder %v417, 30
    %vm482 = vcmp.le.s32.totalorder %v418, 30
    %vm483 = vcmp.le.s32.totalorder %v419, 30
    %vm484 = vmand %vm452, %vm420
    %vm485 = vmand %vm453, %vm421
    %vm486 = vmand %vm454, %vm422
    %vm487 = vmand %vm455, %vm423
    %vm488 = vmand %vm456, %vm424
    %vm489 = vmand %vm457, %vm425
    %vm490 = vmand %vm458, %vm426
    %vm491 = vmand %vm459, %vm427
    %vm492 = vmand %vm460, %vm428
    %vm493 = vmand %vm461, %vm429
    %vm494 = vmand %vm462, %vm430
    %vm495 = vmand %vm463, %vm431
    %vm496 = vmand %vm464, %vm432
    %vm497 = vmand %vm465, %vm433
    %vm498 = vmand %vm466, %vm434
    %vm499 = vmand %vm467, %vm435
    %vm500 = vmand %vm452, %vm436
    %vm501 = vmand %vm453, %vm437
    %vm502 = vmand %vm454, %vm438
    %vm503 = vmand %vm455, %vm439
    %vm504 = vmand %vm456, %vm440
    %vm505 = vmand %vm457, %vm441
    %vm506 = vmand %vm458, %vm442
    %vm507 = vmand %vm459, %vm443
    %vm508 = vmand %vm460, %vm444
    %vm509 = vmand %vm461, %vm445
    %vm510 = vmand %vm462, %vm446
    %vm511 = vmand %vm463, %vm447
    %vm512 = vmand %vm464, %vm448
    %vm513 = vmand %vm465, %vm449
    %vm514 = vmand %vm466, %vm450
    %vm515 = vmand %vm467, %vm451
    %vm516 = vmand %vm468, %vm420
    %vm517 = vmand %vm469, %vm421
    %vm518 = vmand %vm470, %vm422
    %vm519 = vmand %vm471, %vm423
    %vm520 = vmand %vm472, %vm424
    %vm521 = vmand %vm473, %vm425
    %vm522 = vmand %vm474, %vm426
    %vm523 = vmand %vm475, %vm427
    %vm524 = vmand %vm476, %vm428
    %vm525 = vmand %vm477, %vm429
    %vm526 = vmand %vm478, %vm430
    %vm527 = vmand %vm479, %vm431
    %vm528 = vmand %vm480, %vm432
    %vm529 = vmand %vm481, %vm433
    %vm530 = vmand %vm482, %vm434
    %vm531 = vmand %vm483, %vm435
    %vm532 = vmand %vm468, %vm436
    %vm533 = vmand %vm469, %vm437
    %vm534 = vmand %vm470, %vm438
    %vm535 = vmand %vm471, %vm439
    %vm536 = vmand %vm472, %vm440
    %vm537 = vmand %vm473, %vm441
    %vm538 = vmand %vm474, %vm442
    %vm539 = vmand %vm475, %vm443
    %vm540 = vmand %vm476, %vm444
    %vm541 = vmand %vm477, %vm445
    %vm542 = vmand %vm478, %vm446
    %vm543 = vmand %vm479, %vm447
    %vm544 = vmand %vm480, %vm448
    %vm545 = vmand %vm481, %vm449
    %vm546 = vmand %vm482, %vm450
    %vm547 = vmand %vm483, %vm451
    %v548 = vsel %vm484, 1, 0
    %v549 = vsel %vm485, 1, 0
    %v550 = vsel %vm486, 1, 0
    %v551 = vsel %vm487, 1, 0
    %v552 = vsel %vm488, 1, 0
    %v553 = vsel %vm489, 1, 0
    %v554 = vsel %vm490, 1, 0
    %v555 = vsel %vm491, 1, 0
    %v556 = vsel %vm492, 1, 0
    %v557 = vsel %vm493, 1, 0
    %v558 = vsel %vm494, 1, 0
    %v559 = vsel %vm495, 1, 0
    %v560 = vsel %vm496, 1, 0
    %v561 = vsel %vm497, 1, 0
    %v562 = vsel %vm498, 1, 0
    %v563 = vsel %vm499, 1, 0
    %vm564 = vcmp.eq.s32.totalorder %v548, 1
    %vm565 = vcmp.eq.s32.totalorder %v549, 1
    %vm566 = vcmp.eq.s32.totalorder %v550, 1
    %vm567 = vcmp.eq.s32.totalorder %v551, 1
    %vm568 = vcmp.eq.s32.totalorder %v552, 1
    %vm569 = vcmp.eq.s32.totalorder %v553, 1
    %vm570 = vcmp.eq.s32.totalorder %v554, 1
    %vm571 = vcmp.eq.s32.totalorder %v555, 1
    %vm572 = vcmp.eq.s32.totalorder %v556, 1
    %vm573 = vcmp.eq.s32.totalorder %v557, 1
    %vm574 = vcmp.eq.s32.totalorder %v558, 1
    %vm575 = vcmp.eq.s32.totalorder %v559, 1
    %vm576 = vcmp.eq.s32.totalorder %v560, 1
    %vm577 = vcmp.eq.s32.totalorder %v561, 1
    %vm578 = vcmp.eq.s32.totalorder %v562, 1
    %vm579 = vcmp.eq.s32.totalorder %v563, 1
    %597 = vrot.lane.b32.xlu0 0.0, 33
    %v598 = vpop.permute.xlu0 %597
    %599 = vrot.lane.b32.xlu0 %v339, 33
    %v600 = vpop.permute.xlu0 %599
    %601 = vrot.lane.b32.xlu0 %v340, 33
    %v602 = vpop.permute.xlu0 %601
    %603 = vrot.lane.b32.xlu0 %v341, 33
    %v604 = vpop.permute.xlu0 %603
    %605 = vrot.lane.b32.xlu0 %v342, 33
    %v606 = vpop.permute.xlu0 %605
    %607 = vrot.lane.b32.xlu0 %v343, 33
    %v608 = vpop.permute.xlu0 %607
    %609 = vrot.lane.b32.xlu0 %v344, 33
    %v610 = vpop.permute.xlu0 %609
    %611 = vrot.lane.b32.xlu0 %v345, 33
    %v612 = vpop.permute.xlu0 %611
    %613 = vrot.lane.b32.xlu0 %v346, 33
    %v614 = vpop.permute.xlu0 %613
    %615 = vrot.lane.b32.xlu0 %v347, 33
    %v616 = vpop.permute.xlu0 %615
    %617 = vrot.lane.b32.xlu0 %v348, 33
    %v618 = vpop.permute.xlu0 %617
    %619 = vrot.lane.b32.xlu0 %v349, 33
    %v620 = vpop.permute.xlu0 %619
    %621 = vrot.lane.b32.xlu0 %v350, 33
    %v622 = vpop.permute.xlu0 %621
    %623 = vrot.lane.b32.xlu0 %v351, 33
    %v624 = vpop.permute.xlu0 %623
    %625 = vrot.lane.b32.xlu0 %v352, 33
    %v626 = vpop.permute.xlu0 %625
    %627 = vrot.lane.b32.xlu0 %v353, 33
    %v628 = vpop.permute.xlu0 %627
    %629 = vrot.lane.b32.xlu0 %v354, 33
    %v630 = vpop.permute.xlu0 %629
    %vm631 = vcmask 269312
    %v632 = vsel %vm631, %v598, %v600
    %v633 = vsel %vm631, %v600, %v602
    %v634 = vsel %vm631, %v602, %v604
    %v635 = vsel %vm631, %v604, %v606
    %v636 = vsel %vm631, %v606, %v608
    %v637 = vsel %vm631, %v608, %v610
    %v638 = vsel %vm631, %v610, %v612
    %v639 = vsel %vm631, %v612, %v614
    %v640 = vsel %vm631, %v614, %v616
    %v641 = vsel %vm631, %v616, %v618
    %v642 = vsel %vm631, %v618, %v620
    %v643 = vsel %vm631, %v620, %v622
    %v644 = vsel %vm631, %v622, %v624
    %v645 = vsel %vm631, %v624, %v626
    %v646 = vsel %vm631, %v626, %v628
    %v647 = vsel %vm631, %v628, %v630
    %v664 = vsel %vm564, %v632, 0.0
    %v665 = vsel %vm565, %v633, 0.0
    %v666 = vsel %vm566, %v634, 0.0
    %v667 = vsel %vm567, %v635, 0.0
    %v668 = vsel %vm568, %v636, 0.0
    %v669 = vsel %vm569, %v637, 0.0
    %v670 = vsel %vm570, %v638, 0.0
    %v671 = vsel %vm571, %v639, 0.0
    %v672 = vsel %vm572, %v640, 0.0
    %v673 = vsel %vm573, %v641, 0.0
    %v674 = vsel %vm574, %v642, 0.0
    %v675 = vsel %vm575, %v643, 0.0
    %v676 = vsel %vm576, %v644, 0.0
    %v677 = vsel %vm577, %v645, 0.0
    %v678 = vsel %vm578, %v646, 0.0
    %v679 = vsel %vm579, %v647, 0.0
    %v680 = vsel %vm452, 1, 0
    %v681 = vsel %vm453, 1, 0
    %v682 = vsel %vm454, 1, 0
    %v683 = vsel %vm455, 1, 0
    %v684 = vsel %vm456, 1, 0
    %v685 = vsel %vm457, 1, 0
    %v686 = vsel %vm458, 1, 0
    %v687 = vsel %vm459, 1, 0
    %v688 = vsel %vm460, 1, 0
    %v689 = vsel %vm461, 1, 0
    %v690 = vsel %vm462, 1, 0
    %v691 = vsel %vm463, 1, 0
    %v692 = vsel %vm464, 1, 0
    %v693 = vsel %vm465, 1, 0
    %v694 = vsel %vm466, 1, 0
    %v695 = vsel %vm467, 1, 0
    %vm696 = vcmp.eq.s32.totalorder %v680, 1
    %vm697 = vcmp.eq.s32.totalorder %v681, 1
    %vm698 = vcmp.eq.s32.totalorder %v682, 1
    %vm699 = vcmp.eq.s32.totalorder %v683, 1
    %vm700 = vcmp.eq.s32.totalorder %v684, 1
    %vm701 = vcmp.eq.s32.totalorder %v685, 1
    %vm702 = vcmp.eq.s32.totalorder %v686, 1
    %vm703 = vcmp.eq.s32.totalorder %v687, 1
    %vm704 = vcmp.eq.s32.totalorder %v688, 1
    %vm705 = vcmp.eq.s32.totalorder %v689, 1
    %vm706 = vcmp.eq.s32.totalorder %v690, 1
    %vm707 = vcmp.eq.s32.totalorder %v691, 1
    %vm708 = vcmp.eq.s32.totalorder %v692, 1
    %vm709 = vcmp.eq.s32.totalorder %v693, 1
    %vm710 = vcmp.eq.s32.totalorder %v694, 1
    %vm711 = vcmp.eq.s32.totalorder %v695, 1
    %712 = vrot.lane.b32.xlu0 0.0, 32
    %v713 = vpop.permute.xlu0 %712
    %714 = vrot.lane.b32.xlu0 %v339, 32
    %v715 = vpop.permute.xlu0 %714
    %716 = vrot.lane.b32.xlu0 %v340, 32
    %v717 = vpop.permute.xlu0 %716
    %718 = vrot.lane.b32.xlu0 %v341, 32
    %v719 = vpop.permute.xlu0 %718
    %720 = vrot.lane.b32.xlu0 %v342, 32
    %v721 = vpop.permute.xlu0 %720
    %722 = vrot.lane.b32.xlu0 %v343, 32
    %v723 = vpop.permute.xlu0 %722
    %724 = vrot.lane.b32.xlu0 %v344, 32
    %v725 = vpop.permute.xlu0 %724
    %726 = vrot.lane.b32.xlu0 %v345, 32
    %v727 = vpop.permute.xlu0 %726
    %728 = vrot.lane.b32.xlu0 %v346, 32
    %v729 = vpop.permute.xlu0 %728
    %730 = vrot.lane.b32.xlu0 %v347, 32
    %v731 = vpop.permute.xlu0 %730
    %732 = vrot.lane.b32.xlu0 %v348, 32
    %v733 = vpop.permute.xlu0 %732
    %734 = vrot.lane.b32.xlu0 %v349, 32
    %v735 = vpop.permute.xlu0 %734
    %736 = vrot.lane.b32.xlu0 %v350, 32
    %v737 = vpop.permute.xlu0 %736
    %738 = vrot.lane.b32.xlu0 %v351, 32
    %v739 = vpop.permute.xlu0 %738
    %740 = vrot.lane.b32.xlu0 %v352, 32
    %v741 = vpop.permute.xlu0 %740
    %742 = vrot.lane.b32.xlu0 %v353, 32
    %v743 = vpop.permute.xlu0 %742
    %744 = vrot.lane.b32.xlu0 %v354, 32
    %v745 = vpop.permute.xlu0 %744
    %vm746 = vcmask 261120
    %v747 = vsel %vm746, %v713, %v715
    %v748 = vsel %vm746, %v715, %v717
    %v749 = vsel %vm746, %v717, %v719
    %v750 = vsel %vm746, %v719, %v721
    %v751 = vsel %vm746, %v721, %v723
    %v752 = vsel %vm746, %v723, %v725
    %v753 = vsel %vm746, %v725, %v727
    %v754 = vsel %vm746, %v727, %v729
    %v755 = vsel %vm746, %v729, %v731
    %v756 = vsel %vm746, %v731, %v733
    %v757 = vsel %vm746, %v733, %v735
    %v758 = vsel %vm746, %v735, %v737
    %v759 = vsel %vm746, %v737, %v739
    %v760 = vsel %vm746, %v739, %v741
    %v761 = vsel %vm746, %v741, %v743
    %v762 = vsel %vm746, %v743, %v745
    %v779 = vsel %vm696, %v747, 0.0
    %v780 = vsel %vm697, %v748, 0.0
    %v781 = vsel %vm698, %v749, 0.0
    %v782 = vsel %vm699, %v750, 0.0
    %v783 = vsel %vm700, %v751, 0.0
    %v784 = vsel %vm701, %v752, 0.0
    %v785 = vsel %vm702, %v753, 0.0
    %v786 = vsel %vm703, %v754, 0.0
    %v787 = vsel %vm704, %v755, 0.0
    %v788 = vsel %vm705, %v756, 0.0
    %v789 = vsel %vm706, %v757, 0.0
    %v790 = vsel %vm707, %v758, 0.0
    %v791 = vsel %vm708, %v759, 0.0
    %v792 = vsel %vm709, %v760, 0.0
    %v793 = vsel %vm710, %v761, 0.0
    %v794 = vsel %vm711, %v762, 0.0
    %v795 = vsel %vm500, 1, 0
    %v796 = vsel %vm501, 1, 0
    %v797 = vsel %vm502, 1, 0
    %v798 = vsel %vm503, 1, 0
    %v799 = vsel %vm504, 1, 0
    %v800 = vsel %vm505, 1, 0
    %v801 = vsel %vm506, 1, 0
    %v802 = vsel %vm507, 1, 0
    %v803 = vsel %vm508, 1, 0
    %v804 = vsel %vm509, 1, 0
    %v805 = vsel %vm510, 1, 0
    %v806 = vsel %vm511, 1, 0
    %v807 = vsel %vm512, 1, 0
    %v808 = vsel %vm513, 1, 0
    %v809 = vsel %vm514, 1, 0
    %v810 = vsel %vm515, 1, 0
    %vm811 = vcmp.eq.s32.totalorder %v795, 1
    %vm812 = vcmp.eq.s32.totalorder %v796, 1
    %vm813 = vcmp.eq.s32.totalorder %v797, 1
    %vm814 = vcmp.eq.s32.totalorder %v798, 1
    %vm815 = vcmp.eq.s32.totalorder %v799, 1
    %vm816 = vcmp.eq.s32.totalorder %v800, 1
    %vm817 = vcmp.eq.s32.totalorder %v801, 1
    %vm818 = vcmp.eq.s32.totalorder %v802, 1
    %vm819 = vcmp.eq.s32.totalorder %v803, 1
    %vm820 = vcmp.eq.s32.totalorder %v804, 1
    %vm821 = vcmp.eq.s32.totalorder %v805, 1
    %vm822 = vcmp.eq.s32.totalorder %v806, 1
    %vm823 = vcmp.eq.s32.totalorder %v807, 1
    %vm824 = vcmp.eq.s32.totalorder %v808, 1
    %vm825 = vcmp.eq.s32.totalorder %v809, 1
    %vm826 = vcmp.eq.s32.totalorder %v810, 1
    %827 = vrot.lane.b32.xlu0 0.0, 31
    %v828 = vpop.permute.xlu0 %827
    %829 = vrot.lane.b32.xlu0 %v339, 31
    %v830 = vpop.permute.xlu0 %829
    %831 = vrot.lane.b32.xlu0 %v340, 31
    %v832 = vpop.permute.xlu0 %831
    %833 = vrot.lane.b32.xlu0 %v341, 31
    %v834 = vpop.permute.xlu0 %833
    %835 = vrot.lane.b32.xlu0 %v342, 31
    %v836 = vpop.permute.xlu0 %835
    %837 = vrot.lane.b32.xlu0 %v343, 31
    %v838 = vpop.permute.xlu0 %837
    %839 = vrot.lane.b32.xlu0 %v344, 31
    %v840 = vpop.permute.xlu0 %839
    %841 = vrot.lane.b32.xlu0 %v345, 31
    %v842 = vpop.permute.xlu0 %841
    %843 = vrot.lane.b32.xlu0 %v346, 31
    %v844 = vpop.permute.xlu0 %843
    %845 = vrot.lane.b32.xlu0 %v347, 31
    %v846 = vpop.permute.xlu0 %845
    %847 = vrot.lane.b32.xlu0 %v348, 31
    %v848 = vpop.permute.xlu0 %847
    %849 = vrot.lane.b32.xlu0 %v349, 31
    %v850 = vpop.permute.xlu0 %849
    %851 = vrot.lane.b32.xlu0 %v350, 31
    %v852 = vpop.permute.xlu0 %851
    %853 = vrot.lane.b32.xlu0 %v351, 31
    %v854 = vpop.permute.xlu0 %853
    %855 = vrot.lane.b32.xlu0 %v352, 31
    %v856 = vpop.permute.xlu0 %855
    %857 = vrot.lane.b32.xlu0 %v353, 31
    %v858 = vpop.permute.xlu0 %857
    %859 = vrot.lane.b32.xlu0 %v354, 31
    %v860 = vpop.permute.xlu0 %859
    %vm861 = vcmask 252928
    %v862 = vsel %vm861, %v828, %v830
    %v863 = vsel %vm861, %v830, %v832
    %v864 = vsel %vm861, %v832, %v834
    %v865 = vsel %vm861, %v834, %v836
    %v866 = vsel %vm861, %v836, %v838
    %v867 = vsel %vm861, %v838, %v840
    %v868 = vsel %vm861, %v840, %v842
    %v869 = vsel %vm861, %v842, %v844
    %v870 = vsel %vm861, %v844, %v846
    %v871 = vsel %vm861, %v846, %v848
    %v872 = vsel %vm861, %v848, %v850
    %v873 = vsel %vm861, %v850, %v852
    %v874 = vsel %vm861, %v852, %v854
    %v875 = vsel %vm861, %v854, %v856
    %v876 = vsel %vm861, %v856, %v858
    %v877 = vsel %vm861, %v858, %v860
    %v894 = vsel %vm811, %v862, 0.0
    %v895 = vsel %vm812, %v863, 0.0
    %v896 = vsel %vm813, %v864, 0.0
    %v897 = vsel %vm814, %v865, 0.0
    %v898 = vsel %vm815, %v866, 0.0
    %v899 = vsel %vm816, %v867, 0.0
    %v900 = vsel %vm817, %v868, 0.0
    %v901 = vsel %vm818, %v869, 0.0
    %v902 = vsel %vm819, %v870, 0.0
    %v903 = vsel %vm820, %v871, 0.0
    %v904 = vsel %vm821, %v872, 0.0
    %v905 = vsel %vm822, %v873, 0.0
    %v906 = vsel %vm823, %v874, 0.0
    %v907 = vsel %vm824, %v875, 0.0
    %v908 = vsel %vm825, %v876, 0.0
    %v909 = vsel %vm826, %v877, 0.0
    %v910 = vsel %vm420, 1, 0
    %v911 = vsel %vm421, 1, 0
    %v912 = vsel %vm422, 1, 0
    %v913 = vsel %vm423, 1, 0
    %v914 = vsel %vm424, 1, 0
    %v915 = vsel %vm425, 1, 0
    %v916 = vsel %vm426, 1, 0
    %v917 = vsel %vm427, 1, 0
    %v918 = vsel %vm428, 1, 0
    %v919 = vsel %vm429, 1, 0
    %v920 = vsel %vm430, 1, 0
    %v921 = vsel %vm431, 1, 0
    %v922 = vsel %vm432, 1, 0
    %v923 = vsel %vm433, 1, 0
    %v924 = vsel %vm434, 1, 0
    %v925 = vsel %vm435, 1, 0
    %vm926 = vcmp.eq.s32.totalorder %v910, 1
    %vm927 = vcmp.eq.s32.totalorder %v911, 1
    %vm928 = vcmp.eq.s32.totalorder %v912, 1
    %vm929 = vcmp.eq.s32.totalorder %v913, 1
    %vm930 = vcmp.eq.s32.totalorder %v914, 1
    %vm931 = vcmp.eq.s32.totalorder %v915, 1
    %vm932 = vcmp.eq.s32.totalorder %v916, 1
    %vm933 = vcmp.eq.s32.totalorder %v917, 1
    %vm934 = vcmp.eq.s32.totalorder %v918, 1
    %vm935 = vcmp.eq.s32.totalorder %v919, 1
    %vm936 = vcmp.eq.s32.totalorder %v920, 1
    %vm937 = vcmp.eq.s32.totalorder %v921, 1
    %vm938 = vcmp.eq.s32.totalorder %v922, 1
    %vm939 = vcmp.eq.s32.totalorder %v923, 1
    %vm940 = vcmp.eq.s32.totalorder %v924, 1
    %vm941 = vcmp.eq.s32.totalorder %v925, 1
    %942 = vrot.lane.b32.xlu0 0.0, 1
    %v943 = vpop.permute.xlu0 %942
    %944 = vrot.lane.b32.xlu0 %v339, 1
    %v945 = vpop.permute.xlu0 %944
    %946 = vrot.lane.b32.xlu0 %v340, 1
    %v947 = vpop.permute.xlu0 %946
    %948 = vrot.lane.b32.xlu0 %v341, 1
    %v949 = vpop.permute.xlu0 %948
    %950 = vrot.lane.b32.xlu0 %v342, 1
    %v951 = vpop.permute.xlu0 %950
    %952 = vrot.lane.b32.xlu0 %v343, 1
    %v953 = vpop.permute.xlu0 %952
    %954 = vrot.lane.b32.xlu0 %v344, 1
    %v955 = vpop.permute.xlu0 %954
    %956 = vrot.lane.b32.xlu0 %v345, 1
    %v957 = vpop.permute.xlu0 %956
    %958 = vrot.lane.b32.xlu0 %v346, 1
    %v959 = vpop.permute.xlu0 %958
    %960 = vrot.lane.b32.xlu0 %v347, 1
    %v961 = vpop.permute.xlu0 %960
    %962 = vrot.lane.b32.xlu0 %v348, 1
    %v963 = vpop.permute.xlu0 %962
    %964 = vrot.lane.b32.xlu0 %v349, 1
    %v965 = vpop.permute.xlu0 %964
    %966 = vrot.lane.b32.xlu0 %v350, 1
    %v967 = vpop.permute.xlu0 %966
    %968 = vrot.lane.b32.xlu0 %v351, 1
    %v969 = vpop.permute.xlu0 %968
    %970 = vrot.lane.b32.xlu0 %v352, 1
    %v971 = vpop.permute.xlu0 %970
    %972 = vrot.lane.b32.xlu0 %v353, 1
    %v973 = vpop.permute.xlu0 %972
    %974 = vrot.lane.b32.xlu0 %v354, 1
    %v975 = vpop.permute.xlu0 %974
    %vm976 = vcmask 7168
    %v977 = vsel %vm976, %v943, %v945
    %v978 = vsel %vm976, %v945, %v947
    %v979 = vsel %vm976, %v947, %v949
    %v980 = vsel %vm976, %v949, %v951
    %v981 = vsel %vm976, %v951, %v953
    %v982 = vsel %vm976, %v953, %v955
    %v983 = vsel %vm976, %v955, %v957
    %v984 = vsel %vm976, %v957, %v959
    %v985 = vsel %vm976, %v959, %v961
    %v986 = vsel %vm976, %v961, %v963
    %v987 = vsel %vm976, %v963, %v965
    %v988 = vsel %vm976, %v965, %v967
    %v989 = vsel %vm976, %v967, %v969
    %v990 = vsel %vm976, %v969, %v971
    %v991 = vsel %vm976, %v971, %v973
    %v992 = vsel %vm976, %v973, %v975
    %v1009 = vsel %vm926, %v977, 0.0
    %v1010 = vsel %vm927, %v978, 0.0
    %v1011 = vsel %vm928, %v979, 0.0
    %v1012 = vsel %vm929, %v980, 0.0
    %v1013 = vsel %vm930, %v981, 0.0
    %v1014 = vsel %vm931, %v982, 0.0
    %v1015 = vsel %vm932, %v983, 0.0
    %v1016 = vsel %vm933, %v984, 0.0
    %v1017 = vsel %vm934, %v985, 0.0
    %v1018 = vsel %vm935, %v986, 0.0
    %v1019 = vsel %vm936, %v987, 0.0
    %v1020 = vsel %vm937, %v988, 0.0
    %v1021 = vsel %vm938, %v989, 0.0
    %v1022 = vsel %vm939, %v990, 0.0
    %v1023 = vsel %vm940, %v991, 0.0
    %v1024 = vsel %vm941, %v992, 0.0
    %v1025 = vsel %vm436, 1, 0
    %v1026 = vsel %vm437, 1, 0
    %v1027 = vsel %vm438, 1, 0
    %v1028 = vsel %vm439, 1, 0
    %v1029 = vsel %vm440, 1, 0
    %v1030 = vsel %vm441, 1, 0
    %v1031 = vsel %vm442, 1, 0
    %v1032 = vsel %vm443, 1, 0
    %v1033 = vsel %vm444, 1, 0
    %v1034 = vsel %vm445, 1, 0
    %v1035 = vsel %vm446, 1, 0
    %v1036 = vsel %vm447, 1, 0
    %v1037 = vsel %vm448, 1, 0
    %v1038 = vsel %vm449, 1, 0
    %v1039 = vsel %vm450, 1, 0
    %v1040 = vsel %vm451, 1, 0
    %vm1041 = vcmp.eq.s32.totalorder %v1025, 1
    %vm1042 = vcmp.eq.s32.totalorder %v1026, 1
    %vm1043 = vcmp.eq.s32.totalorder %v1027, 1
    %vm1044 = vcmp.eq.s32.totalorder %v1028, 1
    %vm1045 = vcmp.eq.s32.totalorder %v1029, 1
    %vm1046 = vcmp.eq.s32.totalorder %v1030, 1
    %vm1047 = vcmp.eq.s32.totalorder %v1031, 1
    %vm1048 = vcmp.eq.s32.totalorder %v1032, 1
    %vm1049 = vcmp.eq.s32.totalorder %v1033, 1
    %vm1050 = vcmp.eq.s32.totalorder %v1034, 1
    %vm1051 = vcmp.eq.s32.totalorder %v1035, 1
    %vm1052 = vcmp.eq.s32.totalorder %v1036, 1
    %vm1053 = vcmp.eq.s32.totalorder %v1037, 1
    %vm1054 = vcmp.eq.s32.totalorder %v1038, 1
    %vm1055 = vcmp.eq.s32.totalorder %v1039, 1
    %vm1056 = vcmp.eq.s32.totalorder %v1040, 1
    %1057 = vrot.lane.b32.xlu0 %v339, 127
    %v1058 = vpop.permute.xlu0 %1057
    %1059 = vrot.lane.b32.xlu0 %v340, 127
    %v1060 = vpop.permute.xlu0 %1059
    %1061 = vrot.lane.b32.xlu0 %v341, 127
    %v1062 = vpop.permute.xlu0 %1061
    %1063 = vrot.lane.b32.xlu0 %v342, 127
    %v1064 = vpop.permute.xlu0 %1063
    %1065 = vrot.lane.b32.xlu0 %v343, 127
    %v1066 = vpop.permute.xlu0 %1065
    %1067 = vrot.lane.b32.xlu0 %v344, 127
    %v1068 = vpop.permute.xlu0 %1067
    %1069 = vrot.lane.b32.xlu0 %v345, 127
    %v1070 = vpop.permute.xlu0 %1069
    %1071 = vrot.lane.b32.xlu0 %v346, 127
    %v1072 = vpop.permute.xlu0 %1071
    %1073 = vrot.lane.b32.xlu0 %v347, 127
    %v1074 = vpop.permute.xlu0 %1073
    %1075 = vrot.lane.b32.xlu0 %v348, 127
    %v1076 = vpop.permute.xlu0 %1075
    %1077 = vrot.lane.b32.xlu0 %v349, 127
    %v1078 = vpop.permute.xlu0 %1077
    %1079 = vrot.lane.b32.xlu0 %v350, 127
    %v1080 = vpop.permute.xlu0 %1079
    %1081 = vrot.lane.b32.xlu0 %v351, 127
    %v1082 = vpop.permute.xlu0 %1081
    %1083 = vrot.lane.b32.xlu0 %v352, 127
    %v1084 = vpop.permute.xlu0 %1083
    %1085 = vrot.lane.b32.xlu0 %v353, 127
    %v1086 = vpop.permute.xlu0 %1085
    %1087 = vrot.lane.b32.xlu0 %v354, 127
    %v1088 = vpop.permute.xlu0 %1087
    %1089 = vrot.lane.b32.xlu0 0.0, 127
    %v1090 = vpop.permute.xlu0 %1089
    %vm1091 = vcmask 1039360
    %v1092 = vsel %vm1091, %v1058, %v1060
    %v1093 = vsel %vm1091, %v1060, %v1062
    %v1094 = vsel %vm1091, %v1062, %v1064
    %v1095 = vsel %vm1091, %v1064, %v1066
    %v1096 = vsel %vm1091, %v1066, %v1068
    %v1097 = vsel %vm1091, %v1068, %v1070
    %v1098 = vsel %vm1091, %v1070, %v1072
    %v1099 = vsel %vm1091, %v1072, %v1074
    %v1100 = vsel %vm1091, %v1074, %v1076
    %v1101 = vsel %vm1091, %v1076, %v1078
    %v1102 = vsel %vm1091, %v1078, %v1080
    %v1103 = vsel %vm1091, %v1080, %v1082
    %v1104 = vsel %vm1091, %v1082, %v1084
    %v1105 = vsel %vm1091, %v1084, %v1086
    %v1106 = vsel %vm1091, %v1086, %v1088
    %v1107 = vsel %vm1091, %v1088, %v1090
    %v1124 = vsel %vm1041, %v1092, 0.0
    %v1125 = vsel %vm1042, %v1093, 0.0
    %v1126 = vsel %vm1043, %v1094, 0.0
    %v1127 = vsel %vm1044, %v1095, 0.0
    %v1128 = vsel %vm1045, %v1096, 0.0
    %v1129 = vsel %vm1046, %v1097, 0.0
    %v1130 = vsel %vm1047, %v1098, 0.0
    %v1131 = vsel %vm1048, %v1099, 0.0
    %v1132 = vsel %vm1049, %v1100, 0.0
    %v1133 = vsel %vm1050, %v1101, 0.0
    %v1134 = vsel %vm1051, %v1102, 0.0
    %v1135 = vsel %vm1052, %v1103, 0.0
    %v1136 = vsel %vm1053, %v1104, 0.0
    %v1137 = vsel %vm1054, %v1105, 0.0
    %v1138 = vsel %vm1055, %v1106, 0.0
    %v1139 = vsel %vm1056, %v1107, 0.0
    %v1140 = vsel %vm516, 1, 0
    %v1141 = vsel %vm517, 1, 0
    %v1142 = vsel %vm518, 1, 0
    %v1143 = vsel %vm519, 1, 0
    %v1144 = vsel %vm520, 1, 0
    %v1145 = vsel %vm521, 1, 0
    %v1146 = vsel %vm522, 1, 0
    %v1147 = vsel %vm523, 1, 0
    %v1148 = vsel %vm524, 1, 0
    %v1149 = vsel %vm525, 1, 0
    %v1150 = vsel %vm526, 1, 0
    %v1151 = vsel %vm527, 1, 0
    %v1152 = vsel %vm528, 1, 0
    %v1153 = vsel %vm529, 1, 0
    %v1154 = vsel %vm530, 1, 0
    %v1155 = vsel %vm531, 1, 0
    %vm1156 = vcmp.eq.s32.totalorder %v1140, 1
    %vm1157 = vcmp.eq.s32.totalorder %v1141, 1
    %vm1158 = vcmp.eq.s32.totalorder %v1142, 1
    %vm1159 = vcmp.eq.s32.totalorder %v1143, 1
    %vm1160 = vcmp.eq.s32.totalorder %v1144, 1
    %vm1161 = vcmp.eq.s32.totalorder %v1145, 1
    %vm1162 = vcmp.eq.s32.totalorder %v1146, 1
    %vm1163 = vcmp.eq.s32.totalorder %v1147, 1
    %vm1164 = vcmp.eq.s32.totalorder %v1148, 1
    %vm1165 = vcmp.eq.s32.totalorder %v1149, 1
    %vm1166 = vcmp.eq.s32.totalorder %v1150, 1
    %vm1167 = vcmp.eq.s32.totalorder %v1151, 1
    %vm1168 = vcmp.eq.s32.totalorder %v1152, 1
    %vm1169 = vcmp.eq.s32.totalorder %v1153, 1
    %vm1170 = vcmp.eq.s32.totalorder %v1154, 1
    %vm1171 = vcmp.eq.s32.totalorder %v1155, 1
    %1172 = vrot.lane.b32.xlu0 %v339, 97
    %v1173 = vpop.permute.xlu0 %1172
    %1174 = vrot.lane.b32.xlu0 %v340, 97
    %v1175 = vpop.permute.xlu0 %1174
    %1176 = vrot.lane.b32.xlu0 %v341, 97
    %v1177 = vpop.permute.xlu0 %1176
    %1178 = vrot.lane.b32.xlu0 %v342, 97
    %v1179 = vpop.permute.xlu0 %1178
    %1180 = vrot.lane.b32.xlu0 %v343, 97
    %v1181 = vpop.permute.xlu0 %1180
    %1182 = vrot.lane.b32.xlu0 %v344, 97
    %v1183 = vpop.permute.xlu0 %1182
    %1184 = vrot.lane.b32.xlu0 %v345, 97
    %v1185 = vpop.permute.xlu0 %1184
    %1186 = vrot.lane.b32.xlu0 %v346, 97
    %v1187 = vpop.permute.xlu0 %1186
    %1188 = vrot.lane.b32.xlu0 %v347, 97
    %v1189 = vpop.permute.xlu0 %1188
    %1190 = vrot.lane.b32.xlu0 %v348, 97
    %v1191 = vpop.permute.xlu0 %1190
    %1192 = vrot.lane.b32.xlu0 %v349, 97
    %v1193 = vpop.permute.xlu0 %1192
    %1194 = vrot.lane.b32.xlu0 %v350, 97
    %v1195 = vpop.permute.xlu0 %1194
    %1196 = vrot.lane.b32.xlu0 %v351, 97
    %v1197 = vpop.permute.xlu0 %1196
    %1198 = vrot.lane.b32.xlu0 %v352, 97
    %v1199 = vpop.permute.xlu0 %1198
    %1200 = vrot.lane.b32.xlu0 %v353, 97
    %v1201 = vpop.permute.xlu0 %1200
    %1202 = vrot.lane.b32.xlu0 %v354, 97
    %v1203 = vpop.permute.xlu0 %1202
    %1204 = vrot.lane.b32.xlu0 0.0, 97
    %v1205 = vpop.permute.xlu0 %1204
    %vm1206 = vcmask 793600
    %v1207 = vsel %vm1206, %v1173, %v1175
    %v1208 = vsel %vm1206, %v1175, %v1177
    %v1209 = vsel %vm1206, %v1177, %v1179
    %v1210 = vsel %vm1206, %v1179, %v1181
    %v1211 = vsel %vm1206, %v1181, %v1183
    %v1212 = vsel %vm1206, %v1183, %v1185
    %v1213 = vsel %vm1206, %v1185, %v1187
    %v1214 = vsel %vm1206, %v1187, %v1189
    %v1215 = vsel %vm1206, %v1189, %v1191
    %v1216 = vsel %vm1206, %v1191, %v1193
    %v1217 = vsel %vm1206, %v1193, %v1195
    %v1218 = vsel %vm1206, %v1195, %v1197
    %v1219 = vsel %vm1206, %v1197, %v1199
    %v1220 = vsel %vm1206, %v1199, %v1201
    %v1221 = vsel %vm1206, %v1201, %v1203
    %v1222 = vsel %vm1206, %v1203, %v1205
    %v1239 = vsel %vm1156, %v1207, 0.0
    %v1240 = vsel %vm1157, %v1208, 0.0
    %v1241 = vsel %vm1158, %v1209, 0.0
    %v1242 = vsel %vm1159, %v1210, 0.0
    %v1243 = vsel %vm1160, %v1211, 0.0
    %v1244 = vsel %vm1161, %v1212, 0.0
    %v1245 = vsel %vm1162, %v1213, 0.0
    %v1246 = vsel %vm1163, %v1214, 0.0
    %v1247 = vsel %vm1164, %v1215, 0.0
    %v1248 = vsel %vm1165, %v1216, 0.0
    %v1249 = vsel %vm1166, %v1217, 0.0
    %v1250 = vsel %vm1167, %v1218, 0.0
    %v1251 = vsel %vm1168, %v1219, 0.0
    %v1252 = vsel %vm1169, %v1220, 0.0
    %v1253 = vsel %vm1170, %v1221, 0.0
    %v1254 = vsel %vm1171, %v1222, 0.0
    %v1255 = vsel %vm468, 1, 0
    %v1256 = vsel %vm469, 1, 0
    %v1257 = vsel %vm470, 1, 0
    %v1258 = vsel %vm471, 1, 0
    %v1259 = vsel %vm472, 1, 0
    %v1260 = vsel %vm473, 1, 0
    %v1261 = vsel %vm474, 1, 0
    %v1262 = vsel %vm475, 1, 0
    %v1263 = vsel %vm476, 1, 0
    %v1264 = vsel %vm477, 1, 0
    %v1265 = vsel %vm478, 1, 0
    %v1266 = vsel %vm479, 1, 0
    %v1267 = vsel %vm480, 1, 0
    %v1268 = vsel %vm481, 1, 0
    %v1269 = vsel %vm482, 1, 0
    %v1270 = vsel %vm483, 1, 0
    %vm1271 = vcmp.eq.s32.totalorder %v1255, 1
    %vm1272 = vcmp.eq.s32.totalorder %v1256, 1
    %vm1273 = vcmp.eq.s32.totalorder %v1257, 1
    %vm1274 = vcmp.eq.s32.totalorder %v1258, 1
    %vm1275 = vcmp.eq.s32.totalorder %v1259, 1
    %vm1276 = vcmp.eq.s32.totalorder %v1260, 1
    %vm1277 = vcmp.eq.s32.totalorder %v1261, 1
    %vm1278 = vcmp.eq.s32.totalorder %v1262, 1
    %vm1279 = vcmp.eq.s32.totalorder %v1263, 1
    %vm1280 = vcmp.eq.s32.totalorder %v1264, 1
    %vm1281 = vcmp.eq.s32.totalorder %v1265, 1
    %vm1282 = vcmp.eq.s32.totalorder %v1266, 1
    %vm1283 = vcmp.eq.s32.totalorder %v1267, 1
    %vm1284 = vcmp.eq.s32.totalorder %v1268, 1
    %vm1285 = vcmp.eq.s32.totalorder %v1269, 1
    %vm1286 = vcmp.eq.s32.totalorder %v1270, 1
    %1287 = vrot.lane.b32.xlu0 %v339, 96
    %v1288 = vpop.permute.xlu0 %1287
    %1289 = vrot.lane.b32.xlu0 %v340, 96
    %v1290 = vpop.permute.xlu0 %1289
    %1291 = vrot.lane.b32.xlu0 %v341, 96
    %v1292 = vpop.permute.xlu0 %1291
    %1293 = vrot.lane.b32.xlu0 %v342, 96
    %v1294 = vpop.permute.xlu0 %1293
    %1295 = vrot.lane.b32.xlu0 %v343, 96
    %v1296 = vpop.permute.xlu0 %1295
    %1297 = vrot.lane.b32.xlu0 %v344, 96
    %v1298 = vpop.permute.xlu0 %1297
    %1299 = vrot.lane.b32.xlu0 %v345, 96
    %v1300 = vpop.permute.xlu0 %1299
    %1301 = vrot.lane.b32.xlu0 %v346, 96
    %v1302 = vpop.permute.xlu0 %1301
    %1303 = vrot.lane.b32.xlu0 %v347, 96
    %v1304 = vpop.permute.xlu0 %1303
    %1305 = vrot.lane.b32.xlu0 %v348, 96
    %v1306 = vpop.permute.xlu0 %1305
    %1307 = vrot.lane.b32.xlu0 %v349, 96
    %v1308 = vpop.permute.xlu0 %1307
    %1309 = vrot.lane.b32.xlu0 %v350, 96
    %v1310 = vpop.permute.xlu0 %1309
    %1311 = vrot.lane.b32.xlu0 %v351, 96
    %v1312 = vpop.permute.xlu0 %1311
    %1313 = vrot.lane.b32.xlu0 %v352, 96
    %v1314 = vpop.permute.xlu0 %1313
    %1315 = vrot.lane.b32.xlu0 %v353, 96
    %v1316 = vpop.permute.xlu0 %1315
    %1317 = vrot.lane.b32.xlu0 %v354, 96
    %v1318 = vpop.permute.xlu0 %1317
    %1319 = vrot.lane.b32.xlu0 0.0, 96
    %v1320 = vpop.permute.xlu0 %1319
    %vm1321 = vcmask 785408
    %v1322 = vsel %vm1321, %v1288, %v1290
    %v1323 = vsel %vm1321, %v1290, %v1292
    %v1324 = vsel %vm1321, %v1292, %v1294
    %v1325 = vsel %vm1321, %v1294, %v1296
    %v1326 = vsel %vm1321, %v1296, %v1298
    %v1327 = vsel %vm1321, %v1298, %v1300
    %v1328 = vsel %vm1321, %v1300, %v1302
    %v1329 = vsel %vm1321, %v1302, %v1304
    %v1330 = vsel %vm1321, %v1304, %v1306
    %v1331 = vsel %vm1321, %v1306, %v1308
    %v1332 = vsel %vm1321, %v1308, %v1310
    %v1333 = vsel %vm1321, %v1310, %v1312
    %v1334 = vsel %vm1321, %v1312, %v1314
    %v1335 = vsel %vm1321, %v1314, %v1316
    %v1336 = vsel %vm1321, %v1316, %v1318
    %v1337 = vsel %vm1321, %v1318, %v1320
    %v1354 = vsel %vm1271, %v1322, 0.0
    %v1355 = vsel %vm1272, %v1323, 0.0
    %v1356 = vsel %vm1273, %v1324, 0.0
    %v1357 = vsel %vm1274, %v1325, 0.0
    %v1358 = vsel %vm1275, %v1326, 0.0
    %v1359 = vsel %vm1276, %v1327, 0.0
    %v1360 = vsel %vm1277, %v1328, 0.0
    %v1361 = vsel %vm1278, %v1329, 0.0
    %v1362 = vsel %vm1279, %v1330, 0.0
    %v1363 = vsel %vm1280, %v1331, 0.0
    %v1364 = vsel %vm1281, %v1332, 0.0
    %v1365 = vsel %vm1282, %v1333, 0.0
    %v1366 = vsel %vm1283, %v1334, 0.0
    %v1367 = vsel %vm1284, %v1335, 0.0
    %v1368 = vsel %vm1285, %v1336, 0.0
    %v1369 = vsel %vm1286, %v1337, 0.0
    %v1370 = vsel %vm532, 1, 0
    %v1371 = vsel %vm533, 1, 0
    %v1372 = vsel %vm534, 1, 0
    %v1373 = vsel %vm535, 1, 0
    %v1374 = vsel %vm536, 1, 0
    %v1375 = vsel %vm537, 1, 0
    %v1376 = vsel %vm538, 1, 0
    %v1377 = vsel %vm539, 1, 0
    %v1378 = vsel %vm540, 1, 0
    %v1379 = vsel %vm541, 1, 0
    %v1380 = vsel %vm542, 1, 0
    %v1381 = vsel %vm543, 1, 0
    %v1382 = vsel %vm544, 1, 0
    %v1383 = vsel %vm545, 1, 0
    %v1384 = vsel %vm546, 1, 0
    %v1385 = vsel %vm547, 1, 0
    %vm1386 = vcmp.eq.s32.totalorder %v1370, 1
    %vm1387 = vcmp.eq.s32.totalorder %v1371, 1
    %vm1388 = vcmp.eq.s32.totalorder %v1372, 1
    %vm1389 = vcmp.eq.s32.totalorder %v1373, 1
    %vm1390 = vcmp.eq.s32.totalorder %v1374, 1
    %vm1391 = vcmp.eq.s32.totalorder %v1375, 1
    %vm1392 = vcmp.eq.s32.totalorder %v1376, 1
    %vm1393 = vcmp.eq.s32.totalorder %v1377, 1
    %vm1394 = vcmp.eq.s32.totalorder %v1378, 1
    %vm1395 = vcmp.eq.s32.totalorder %v1379, 1
    %vm1396 = vcmp.eq.s32.totalorder %v1380, 1
    %vm1397 = vcmp.eq.s32.totalorder %v1381, 1
    %vm1398 = vcmp.eq.s32.totalorder %v1382, 1
    %vm1399 = vcmp.eq.s32.totalorder %v1383, 1
    %vm1400 = vcmp.eq.s32.totalorder %v1384, 1
    %vm1401 = vcmp.eq.s32.totalorder %v1385, 1
    %1402 = vrot.lane.b32.xlu0 %v339, 95
    %v1403 = vpop.permute.xlu0 %1402
    %1404 = vrot.lane.b32.xlu0 %v340, 95
    %v1405 = vpop.permute.xlu0 %1404
    %1406 = vrot.lane.b32.xlu0 %v341, 95
    %v1407 = vpop.permute.xlu0 %1406
    %1408 = vrot.lane.b32.xlu0 %v342, 95
    %v1409 = vpop.permute.xlu0 %1408
    %1410 = vrot.lane.b32.xlu0 %v343, 95
    %v1411 = vpop.permute.xlu0 %1410
    %1412 = vrot.lane.b32.xlu0 %v344, 95
    %v1413 = vpop.permute.xlu0 %1412
    %1414 = vrot.lane.b32.xlu0 %v345, 95
    %v1415 = vpop.permute.xlu0 %1414
    %1416 = vrot.lane.b32.xlu0 %v346, 95
    %v1417 = vpop.permute.xlu0 %1416
    %1418 = vrot.lane.b32.xlu0 %v347, 95
    %v1419 = vpop.permute.xlu0 %1418
    %1420 = vrot.lane.b32.xlu0 %v348, 95
    %v1421 = vpop.permute.xlu0 %1420
    %1422 = vrot.lane.b32.xlu0 %v349, 95
    %v1423 = vpop.permute.xlu0 %1422
    %1424 = vrot.lane.b32.xlu0 %v350, 95
    %v1425 = vpop.permute.xlu0 %1424
    %1426 = vrot.lane.b32.xlu0 %v351, 95
    %v1427 = vpop.permute.xlu0 %1426
    %1428 = vrot.lane.b32.xlu0 %v352, 95
    %v1429 = vpop.permute.xlu0 %1428
    %1430 = vrot.lane.b32.xlu0 %v353, 95
    %v1431 = vpop.permute.xlu0 %1430
    %1432 = vrot.lane.b32.xlu0 %v354, 95
    %v1433 = vpop.permute.xlu0 %1432
    %1434 = vrot.lane.b32.xlu0 0.0, 95
    %v1435 = vpop.permute.xlu0 %1434
    %vm1436 = vcmask 777216
    %v1437 = vsel %vm1436, %v1403, %v1405
    %v1438 = vsel %vm1436, %v1405, %v1407
    %v1439 = vsel %vm1436, %v1407, %v1409
    %v1440 = vsel %vm1436, %v1409, %v1411
    %v1441 = vsel %vm1436, %v1411, %v1413
    %v1442 = vsel %vm1436, %v1413, %v1415
    %v1443 = vsel %vm1436, %v1415, %v1417
    %v1444 = vsel %vm1436, %v1417, %v1419
    %v1445 = vsel %vm1436, %v1419, %v1421
    %v1446 = vsel %vm1436, %v1421, %v1423
    %v1447 = vsel %vm1436, %v1423, %v1425
    %v1448 = vsel %vm1436, %v1425, %v1427
    %v1449 = vsel %vm1436, %v1427, %v1429
    %v1450 = vsel %vm1436, %v1429, %v1431
    %v1451 = vsel %vm1436, %v1431, %v1433
    %v1452 = vsel %vm1436, %v1433, %v1435
    %v1469 = vsel %vm1386, %v1437, 0.0
    %v1470 = vsel %vm1387, %v1438, 0.0
    %v1471 = vsel %vm1388, %v1439, 0.0
    %v1472 = vsel %vm1389, %v1440, 0.0
    %v1473 = vsel %vm1390, %v1441, 0.0
    %v1474 = vsel %vm1391, %v1442, 0.0
    %v1475 = vsel %vm1392, %v1443, 0.0
    %v1476 = vsel %vm1393, %v1444, 0.0
    %v1477 = vsel %vm1394, %v1445, 0.0
    %v1478 = vsel %vm1395, %v1446, 0.0
    %v1479 = vsel %vm1396, %v1447, 0.0
    %v1480 = vsel %vm1397, %v1448, 0.0
    %v1481 = vsel %vm1398, %v1449, 0.0
    %v1482 = vsel %vm1399, %v1450, 0.0
    %v1483 = vsel %vm1400, %v1451, 0.0
    %v1484 = vsel %vm1401, %v1452, 0.0
    %v1485 = vpack.c.bf16 %v779, %v664
    %v1486 = vpack.c.bf16 %v780, %v665
    %v1487 = vpack.c.bf16 %v781, %v666
    %v1488 = vpack.c.bf16 %v782, %v667
    %v1489 = vpack.c.bf16 %v783, %v668
    %v1490 = vpack.c.bf16 %v784, %v669
    %v1491 = vpack.c.bf16 %v785, %v670
    %v1492 = vpack.c.bf16 %v786, %v671
    %v1493 = vpack.c.bf16 %v787, %v672
    %v1494 = vpack.c.bf16 %v788, %v673
    %v1495 = vpack.c.bf16 %v789, %v674
    %v1496 = vpack.c.bf16 %v790, %v675
    %v1497 = vpack.c.bf16 %v791, %v676
    %v1498 = vpack.c.bf16 %v792, %v677
    %v1499 = vpack.c.bf16 %v793, %v678
    %v1500 = vpack.c.bf16 %v794, %v679
    %v1501 = vpack.c.bf16 %v1009, %v894
    %v1502 = vpack.c.bf16 %v1010, %v895
    %v1503 = vpack.c.bf16 %v1011, %v896
    %v1504 = vpack.c.bf16 %v1012, %v897
    %v1505 = vpack.c.bf16 %v1013, %v898
    %v1506 = vpack.c.bf16 %v1014, %v899
    %v1507 = vpack.c.bf16 %v1015, %v900
    %v1508 = vpack.c.bf16 %v1016, %v901
    %v1509 = vpack.c.bf16 %v1017, %v902
    %v1510 = vpack.c.bf16 %v1018, %v903
    %v1511 = vpack.c.bf16 %v1019, %v904
    %v1512 = vpack.c.bf16 %v1020, %v905
    %v1513 = vpack.c.bf16 %v1021, %v906
    %v1514 = vpack.c.bf16 %v1022, %v907
    %v1515 = vpack.c.bf16 %v1023, %v908
    %v1516 = vpack.c.bf16 %v1024, %v909
    %v1517 = vpack.c.bf16 %v1124, %v339
    %v1518 = vpack.c.bf16 %v1125, %v340
    %v1519 = vpack.c.bf16 %v1126, %v341
    %v1520 = vpack.c.bf16 %v1127, %v342
    %v1521 = vpack.c.bf16 %v1128, %v343
    %v1522 = vpack.c.bf16 %v1129, %v344
    %v1523 = vpack.c.bf16 %v1130, %v345
    %v1524 = vpack.c.bf16 %v1131, %v346
    %v1525 = vpack.c.bf16 %v1132, %v347
    %v1526 = vpack.c.bf16 %v1133, %v348
    %v1527 = vpack.c.bf16 %v1134, %v349
    %v1528 = vpack.c.bf16 %v1135, %v350
    %v1529 = vpack.c.bf16 %v1136, %v351
    %v1530 = vpack.c.bf16 %v1137, %v352
    %v1531 = vpack.c.bf16 %v1138, %v353
    %v1532 = vpack.c.bf16 %v1139, %v354
    %v1533 = vpack.c.bf16 %v1354, %v1239
    %v1534 = vpack.c.bf16 %v1355, %v1240
    %v1535 = vpack.c.bf16 %v1356, %v1241
    %v1536 = vpack.c.bf16 %v1357, %v1242
    %v1537 = vpack.c.bf16 %v1358, %v1243
    %v1538 = vpack.c.bf16 %v1359, %v1244
    %v1539 = vpack.c.bf16 %v1360, %v1245
    %v1540 = vpack.c.bf16 %v1361, %v1246
    %v1541 = vpack.c.bf16 %v1362, %v1247
    %v1542 = vpack.c.bf16 %v1363, %v1248
    %v1543 = vpack.c.bf16 %v1364, %v1249
    %v1544 = vpack.c.bf16 %v1365, %v1250
    %v1545 = vpack.c.bf16 %v1366, %v1251
    %v1546 = vpack.c.bf16 %v1367, %v1252
    %v1547 = vpack.c.bf16 %v1368, %v1253
    %v1548 = vpack.c.bf16 %v1369, %v1254
    %v1549 = vpack.c.bf16 %v1469, %v1469
    %v1550 = vpack.c.bf16 %v1470, %v1470
    %v1551 = vpack.c.bf16 %v1471, %v1471
    %v1552 = vpack.c.bf16 %v1472, %v1472
    %v1553 = vpack.c.bf16 %v1473, %v1473
    %v1554 = vpack.c.bf16 %v1474, %v1474
    %v1555 = vpack.c.bf16 %v1475, %v1475
    %v1556 = vpack.c.bf16 %v1476, %v1476
    %v1557 = vpack.c.bf16 %v1477, %v1477
    %v1558 = vpack.c.bf16 %v1478, %v1478
    %v1559 = vpack.c.bf16 %v1479, %v1479
    %v1560 = vpack.c.bf16 %v1480, %v1480
    %v1561 = vpack.c.bf16 %v1481, %v1481
    %v1562 = vpack.c.bf16 %v1482, %v1482
    %v1563 = vpack.c.bf16 %v1483, %v1483
    %v1564 = vpack.c.bf16 %v1484, %v1484
    %v1565 = vld [vmem:[#allocation5] sm:$0xf]
    %v1566 = vld [vmem:[%s5] sm:$0xff]
    %1568 = vset.pattern.permute.xlu0 0
    %1569 = vperm.xlu0 %1568, %v1566
    %v1570 = vpop.permute.xlu0 %1569
    %vm1572 = vcmask 588800
    %v1574 = vsel %vm1572, %v1565, 0
    %vm1576 = vcmask 1043456
    %v1578 = vsel %vm1576, %v1549, 0
    %v1581 = vsel %vm1576, %v1550, 0
    %v1584 = vsel %vm1576, %v1551, 0
    %v1587 = vsel %vm1576, %v1552, 0
    %v1590 = vsel %vm1576, %v1553, 0
    %v1593 = vsel %vm1576, %v1554, 0
    %v1596 = vsel %vm1576, %v1555, 0
    %v1599 = vsel %vm1576, %v1556, 0
    %v1602 = vsel %vm1576, %v1557, 0
    %v1605 = vsel %vm1576, %v1558, 0
    %v1608 = vsel %vm1576, %v1559, 0
    %v1611 = vsel %vm1576, %v1560, 0
    %v1614 = vsel %vm1576, %v1561, 0
    %v1617 = vsel %vm1576, %v1562, 0
    %v1620 = vsel %vm1576, %v1563, 0
    %v1623 = vsel %vm1576, %v1564, 0
    %1625 = vmatprep.subr.bf16.mxu0 %v1486
    %1626 = vmatpush1.bf16.msra.mxu0 %v1485
    %1627 = vmatprep.subr.bf16.mxu0 %v1502
    %1628 = vmatpush1.bf16.msra.mxu0 %v1501
    %1629 = vmatprep.subr.bf16.mxu0 %v1518
    %1630 = vmatpush1.bf16.msra.mxu0 %v1517
    %1631 = vmatprep.subr.bf16.mxu0 %v1534
    %1632 = vmatpush1.bf16.msra.mxu0 %v1533
    %1633 = vmatprep.subr.bf16.mxu0 %v1581
    %1634 = vmatpush1.bf16.msra.mxu0 %v1578
    %1635 = vmatprep.subr.bf16.mxu0 0
    %1636 = vmatpush1.bf16.msra.mxu0 0
    %1637 = vmatprep.subr.bf16.mxu0 0
    %1638 = vmatpush1.bf16.msra.mxu0 0
    %1639 = vmatprep.subr.bf16.mxu0 0
    %1640 = vmatpush1.bf16.msra.mxu0 0
    %1641 = vmatprep.subr.bf16.mxu0 0
    %1642 = vmatpush1.bf16.msra.mxu0 0
    %1643 = vmatprep.subr.bf16.mxu0 0
    %1644 = vmatpush1.bf16.msra.mxu0 0
    %1645 = vmatprep.subr.bf16.mxu0 0
    %1646 = vmatpush1.bf16.msra.mxu0 0
    %1647 = vmatprep.subr.bf16.mxu0 0
    %1648 = vmatpush1.bf16.msra.mxu0 0
    %1649 = vmatprep.subr.bf16.mxu0 0
    %1650 = vmatpush1.bf16.msra.mxu0 0
    %1651 = vmatprep.subr.bf16.mxu0 0
    %1652 = vmatpush1.bf16.msra.mxu0 0
    %1653 = vmatprep.subr.bf16.mxu0 0
    %1654 = vmatpush1.bf16.msra.mxu0 0
    %1655 = vmatprep.subr.bf16.mxu0 0
    %1656 = vmatpush1.bf16.msra.mxu0 0
    %1657 = vmatprep.mubr.bf16.mxu0 0
    %1658 = vmatmul.mubr.bf16.gmra.mrb[0].mxu0 %v1574
    %v1659 = vpop.f32.mrb[0].mxu0
    %v1660 = vadd.f32 %v1570, %v1659
    %v1661 = vpop.f32.mrb[0].mxu0
    %v1662 = vadd.f32 %v1570, %v1661
    %v1663 = vpop.f32.mrb[0].mxu0
    %v1664 = vpop.f32.mrb[0].mxu0
    %1665 = vdwg.mxu0
    %1666 = vmatprep.subr.bf16.mxu0 %v1488
    %1667 = vmatpush1.bf16.msra.mxu0 %v1487
    %1668 = vmatprep.subr.bf16.mxu0 %v1504
    %1669 = vmatpush1.bf16.msra.mxu0 %v1503
    %1670 = vmatprep.subr.bf16.mxu0 %v1520
    %1671 = vmatpush1.bf16.msra.mxu0 %v1519
    %1672 = vmatprep.subr.bf16.mxu0 %v1536
    %1673 = vmatpush1.bf16.msra.mxu0 %v1535
    %1674 = vmatprep.subr.bf16.mxu0 %v1587
    %1675 = vmatpush1.bf16.msra.mxu0 %v1584
    %1676 = vmatprep.subr.bf16.mxu0 0
    %1677 = vmatpush1.bf16.msra.mxu0 0
    %1678 = vmatprep.subr.bf16.mxu0 0
    %1679 = vmatpush1.bf16.msra.mxu0 0
    %1680 = vmatprep.subr.bf16.mxu0 0
    %1681 = vmatpush1.bf16.msra.mxu0 0
    %1682 = vmatprep.subr.bf16.mxu0 0
    %1683 = vmatpush1.bf16.msra.mxu0 0
    %1684 = vmatprep.subr.bf16.mxu0 0
    %1685 = vmatpush1.bf16.msra.mxu0 0
    %1686 = vmatprep.subr.bf16.mxu0 0
    %1687 = vmatpush1.bf16.msra.mxu0 0
    %1688 = vmatprep.subr.bf16.mxu0 0
    %1689 = vmatpush1.bf16.msra.mxu0 0
    %1690 = vmatprep.subr.bf16.mxu0 0
    %1691 = vmatpush1.bf16.msra.mxu0 0
    %1692 = vmatprep.subr.bf16.mxu0 0
    %1693 = vmatpush1.bf16.msra.mxu0 0
    %1694 = vmatprep.subr.bf16.mxu0 0
    %1695 = vmatpush1.bf16.msra.mxu0 0
    %1696 = vmatprep.subr.bf16.mxu0 0
    %1697 = vmatpush1.bf16.msra.mxu0 0
    %1698 = vmatprep.mubr.bf16.mxu0 0
    %1699 = vmatmul.mubr.bf16.gmra.mrb[0].mxu0 %v1574
    %v1700 = vpop.f32.mrb[0].mxu0
    %v1701 = vadd.f32 %v1570, %v1700
    %v1702 = vpop.f32.mrb[0].mxu0
    %v1703 = vadd.f32 %v1570, %v1702
    %v1704 = vpop.f32.mrb[0].mxu0
    %v1705 = vpop.f32.mrb[0].mxu0
    %1706 = vdwg.mxu0
    %1707 = vmatprep.subr.bf16.mxu0 %v1490
    %1708 = vmatpush1.bf16.msra.mxu0 %v1489
    %1709 = vmatprep.subr.bf16.mxu0 %v1506
    %1710 = vmatpush1.bf16.msra.mxu0 %v1505
    %1711 = vmatprep.subr.bf16.mxu0 %v1522
    %1712 = vmatpush1.bf16.msra.mxu0 %v1521
    %1713 = vmatprep.subr.bf16.mxu0 %v1538
    %1714 = vmatpush1.bf16.msra.mxu0 %v1537
    %1715 = vmatprep.subr.bf16.mxu0 %v1593
    %1716 = vmatpush1.bf16.msra.mxu0 %v1590
    %1717 = vmatprep.subr.bf16.mxu0 0
    %1718 = vmatpush1.bf16.msra.mxu0 0
    %1719 = vmatprep.subr.bf16.mxu0 0
    %1720 = vmatpush1.bf16.msra.mxu0 0
    %1721 = vmatprep.subr.bf16.mxu0 0
    %1722 = vmatpush1.bf16.msra.mxu0 0
    %1723 = vmatprep.subr.bf16.mxu0 0
    %1724 = vmatpush1.bf16.msra.mxu0 0
    %1725 = vmatprep.subr.bf16.mxu0 0
    %1726 = vmatpush1.bf16.msra.mxu0 0
    %1727 = vmatprep.subr.bf16.mxu0 0
    %1728 = vmatpush1.bf16.msra.mxu0 0
    %1729 = vmatprep.subr.bf16.mxu0 0
    %1730 = vmatpush1.bf16.msra.mxu0 0
    %1731 = vmatprep.subr.bf16.mxu0 0
    %1732 = vmatpush1.bf16.msra.mxu0 0
    %1733 = vmatprep.subr.bf16.mxu0 0
    %1734 = vmatpush1.bf16.msra.mxu0 0
    %1735 = vmatprep.subr.bf16.mxu0 0
    %1736 = vmatpush1.bf16.msra.mxu0 0
    %1737 = vmatprep.subr.bf16.mxu0 0
    %1738 = vmatpush1.bf16.msra.mxu0 0
    %1739 = vmatprep.mubr.bf16.mxu0 0
    %1740 = vmatmul.mubr.bf16.gmra.mrb[0].mxu0 %v1574
    %v1741 = vpop.f32.mrb[0].mxu0
    %v1742 = vadd.f32 %v1570, %v1741
    %v1743 = vpop.f32.mrb[0].mxu0
    %v1744 = vadd.f32 %v1570, %v1743
    %v1745 = vpop.f32.mrb[0].mxu0
    %v1746 = vpop.f32.mrb[0].mxu0
    %1747 = vdwg.mxu0
    %1748 = vmatprep.subr.bf16.mxu0 %v1492
    %1749 = vmatpush1.bf16.msra.mxu0 %v1491
    %1750 = vmatprep.subr.bf16.mxu0 %v1508
    %1751 = vmatpush1.bf16.msra.mxu0 %v1507
    %1752 = vmatprep.subr.bf16.mxu0 %v1524
    %1753 = vmatpush1.bf16.msra.mxu0 %v1523
    %1754 = vmatprep.subr.bf16.mxu0 %v1540
    %1755 = vmatpush1.bf16.msra.mxu0 %v1539
    %1756 = vmatprep.subr.bf16.mxu0 %v1599
    %1757 = vmatpush1.bf16.msra.mxu0 %v1596
    %1758 = vmatprep.subr.bf16.mxu0 0
    %1759 = vmatpush1.bf16.msra.mxu0 0
    %1760 = vmatprep.subr.bf16.mxu0 0
    %1761 = vmatpush1.bf16.msra.mxu0 0
    %1762 = vmatprep.subr.bf16.mxu0 0
    %1763 = vmatpush1.bf16.msra.mxu0 0
    %1764 = vmatprep.subr.bf16.mxu0 0
    %1765 = vmatpush1.bf16.msra.mxu0 0
    %1766 = vmatprep.subr.bf16.mxu0 0
    %1767 = vmatpush1.bf16.msra.mxu0 0
    %1768 = vmatprep.subr.bf16.mxu0 0
    %1769 = vmatpush1.bf16.msra.mxu0 0
    %1770 = vmatprep.subr.bf16.mxu0 0
    %1771 = vmatpush1.bf16.msra.mxu0 0
    %1772 = vmatprep.subr.bf16.mxu0 0
    %1773 = vmatpush1.bf16.msra.mxu0 0
    %1774 = vmatprep.subr.bf16.mxu0 0
    %1775 = vmatpush1.bf16.msra.mxu0 0
    %1776 = vmatprep.subr.bf16.mxu0 0
    %1777 = vmatpush1.bf16.msra.mxu0 0
    %1778 = vmatprep.subr.bf16.mxu0 0
    %1779 = vmatpush1.bf16.msra.mxu0 0
    %1780 = vmatprep.mubr.bf16.mxu0 0
    %1781 = vmatmul.mubr.bf16.gmra.mrb[0].mxu0 %v1574
    %v1782 = vpop.f32.mrb[0].mxu0
    %v1783 = vadd.f32 %v1570, %v1782
    %v1784 = vpop.f32.mrb[0].mxu0
    %v1785 = vadd.f32 %v1570, %v1784
    %v1786 = vpop.f32.mrb[0].mxu0
    %v1787 = vpop.f32.mrb[0].mxu0
    %1788 = vdwg.mxu0
    %1789 = vmatprep.subr.bf16.mxu0 %v1494
    %1790 = vmatpush1.bf16.msra.mxu0 %v1493
    %1791 = vmatprep.subr.bf16.mxu0 %v1510
    %1792 = vmatpush1.bf16.msra.mxu0 %v1509
    %1793 = vmatprep.subr.bf16.mxu0 %v1526
    %1794 = vmatpush1.bf16.msra.mxu0 %v1525
    %1795 = vmatprep.subr.bf16.mxu0 %v1542
    %1796 = vmatpush1.bf16.msra.mxu0 %v1541
    %1797 = vmatprep.subr.bf16.mxu0 %v1605
    %1798 = vmatpush1.bf16.msra.mxu0 %v1602
    %1799 = vmatprep.subr.bf16.mxu0 0
    %1800 = vmatpush1.bf16.msra.mxu0 0
    %1801 = vmatprep.subr.bf16.mxu0 0
    %1802 = vmatpush1.bf16.msra.mxu0 0
    %1803 = vmatprep.subr.bf16.mxu0 0
    %1804 = vmatpush1.bf16.msra.mxu0 0
    %1805 = vmatprep.subr.bf16.mxu0 0
    %1806 = vmatpush1.bf16.msra.mxu0 0
    %1807 = vmatprep.subr.bf16.mxu0 0
    %1808 = vmatpush1.bf16.msra.mxu0 0
    %1809 = vmatprep.subr.bf16.mxu0 0
    %1810 = vmatpush1.bf16.msra.mxu0 0
    %1811 = vmatprep.subr.bf16.mxu0 0
    %1812 = vmatpush1.bf16.msra.mxu0 0
    %1813 = vmatprep.subr.bf16.mxu0 0
    %1814 = vmatpush1.bf16.msra.mxu0 0
    %1815 = vmatprep.subr.bf16.mxu0 0
    %1816 = vmatpush1.bf16.msra.mxu0 0
    %1817 = vmatprep.subr.bf16.mxu0 0
    %1818 = vmatpush1.bf16.msra.mxu0 0
    %1819 = vmatprep.subr.bf16.mxu0 0
    %1820 = vmatpush1.bf16.msra.mxu0 0
    %1821 = vmatprep.mubr.bf16.mxu0 0
    %1822 = vmatmul.mubr.bf16.gmra.mrb[0].mxu0 %v1574
    %v1823 = vpop.f32.mrb[0].mxu0
    %v1824 = vadd.f32 %v1570, %v1823
    %v1825 = vpop.f32.mrb[0].mxu0
    %v1826 = vadd.f32 %v1570, %v1825
    %v1827 = vpop.f32.mrb[0].mxu0
    %v1828 = vpop.f32.mrb[0].mxu0
    %1829 = vdwg.mxu0
    %1830 = vmatprep.subr.bf16.mxu0 %v1496
    %1831 = vmatpush1.bf16.msra.mxu0 %v1495
    %1832 = vmatprep.subr.bf16.mxu0 %v1512
    %1833 = vmatpush1.bf16.msra.mxu0 %v1511
    %1834 = vmatprep.subr.bf16.mxu0 %v1528
    %1835 = vmatpush1.bf16.msra.mxu0 %v1527
    %1836 = vmatprep.subr.bf16.mxu0 %v1544
    %1837 = vmatpush1.bf16.msra.mxu0 %v1543
    %1838 = vmatprep.subr.bf16.mxu0 %v1611
    %1839 = vmatpush1.bf16.msra.mxu0 %v1608
    %1840 = vmatprep.subr.bf16.mxu0 0
    %1841 = vmatpush1.bf16.msra.mxu0 0
    %1842 = vmatprep.subr.bf16.mxu0 0
    %1843 = vmatpush1.bf16.msra.mxu0 0
    %1844 = vmatprep.subr.bf16.mxu0 0
    %1845 = vmatpush1.bf16.msra.mxu0 0
    %1846 = vmatprep.subr.bf16.mxu0 0
    %1847 = vmatpush1.bf16.msra.mxu0 0
    %1848 = vmatprep.subr.bf16.mxu0 0
    %1849 = vmatpush1.bf16.msra.mxu0 0
    %1850 = vmatprep.subr.bf16.mxu0 0
    %1851 = vmatpush1.bf16.msra.mxu0 0
    %1852 = vmatprep.subr.bf16.mxu0 0
    %1853 = vmatpush1.bf16.msra.mxu0 0
    %1854 = vmatprep.subr.bf16.mxu0 0
    %1855 = vmatpush1.bf16.msra.mxu0 0
    %1856 = vmatprep.subr.bf16.mxu0 0
    %1857 = vmatpush1.bf16.msra.mxu0 0
    %1858 = vmatprep.subr.bf16.mxu0 0
    %1859 = vmatpush1.bf16.msra.mxu0 0
    %1860 = vmatprep.subr.bf16.mxu0 0
    %1861 = vmatpush1.bf16.msra.mxu0 0
    %1862 = vmatprep.mubr.bf16.mxu0 0
    %1863 = vmatmul.mubr.bf16.gmra.mrb[0].mxu0 %v1574
    %v1864 = vpop.f32.mrb[0].mxu0
    %v1865 = vadd.f32 %v1570, %v1864
    %v1866 = vpop.f32.mrb[0].mxu0
    %v1867 = vadd.f32 %v1570, %v1866
    %v1868 = vpop.f32.mrb[0].mxu0
    %v1869 = vpop.f32.mrb[0].mxu0
    %1870 = vdwg.mxu0
    %1871 = vmatprep.subr.bf16.mxu0 %v1498
    %1872 = vmatpush1.bf16.msra.mxu0 %v1497
    %1873 = vmatprep.subr.bf16.mxu0 %v1514
    %1874 = vmatpush1.bf16.msra.mxu0 %v1513
    %1875 = vmatprep.subr.bf16.mxu0 %v1530
    %1876 = vmatpush1.bf16.msra.mxu0 %v1529
    %1877 = vmatprep.subr.bf16.mxu0 %v1546
    %1878 = vmatpush1.bf16.msra.mxu0 %v1545
    %1879 = vmatprep.subr.bf16.mxu0 %v1617
    %1880 = vmatpush1.bf16.msra.mxu0 %v1614
    %1881 = vmatprep.subr.bf16.mxu0 0
    %1882 = vmatpush1.bf16.msra.mxu0 0
    %1883 = vmatprep.subr.bf16.mxu0 0
    %1884 = vmatpush1.bf16.msra.mxu0 0
    %1885 = vmatprep.subr.bf16.mxu0 0
    %1886 = vmatpush1.bf16.msra.mxu0 0
    %1887 = vmatprep.subr.bf16.mxu0 0
    %1888 = vmatpush1.bf16.msra.mxu0 0
    %1889 = vmatprep.subr.bf16.mxu0 0
    %1890 = vmatpush1.bf16.msra.mxu0 0
    %1891 = vmatprep.subr.bf16.mxu0 0
    %1892 = vmatpush1.bf16.msra.mxu0 0
    %1893 = vmatprep.subr.bf16.mxu0 0
    %1894 = vmatpush1.bf16.msra.mxu0 0
    %1895 = vmatprep.subr.bf16.mxu0 0
    %1896 = vmatpush1.bf16.msra.mxu0 0
    %1897 = vmatprep.subr.bf16.mxu0 0
    %1898 = vmatpush1.bf16.msra.mxu0 0
    %1899 = vmatprep.subr.bf16.mxu0 0
    %1900 = vmatpush1.bf16.msra.mxu0 0
    %1901 = vmatprep.subr.bf16.mxu0 0
    %1902 = vmatpush1.bf16.msra.mxu0 0
    %1903 = vmatprep.mubr.bf16.mxu0 0
    %1904 = vmatmul.mubr.bf16.gmra.mrb[0].mxu0 %v1574
    %v1905 = vpop.f32.mrb[0].mxu0
    %v1906 = vadd.f32 %v1570, %v1905
    %v1907 = vpop.f32.mrb[0].mxu0
    %v1908 = vadd.f32 %v1570, %v1907
    %v1909 = vpop.f32.mrb[0].mxu0
    %v1910 = vpop.f32.mrb[0].mxu0
    %1911 = vdwg.mxu0
    %1912 = vmatprep.subr.bf16.mxu0 %v1500
    %1913 = vmatpush1.bf16.msra.mxu0 %v1499
    %1914 = vmatprep.subr.bf16.mxu0 %v1516
    %1915 = vmatpush1.bf16.msra.mxu0 %v1515
    %1916 = vmatprep.subr.bf16.mxu0 %v1532
    %1917 = vmatpush1.bf16.msra.mxu0 %v1531
    %1918 = vmatprep.subr.bf16.mxu0 %v1548
    %1919 = vmatpush1.bf16.msra.mxu0 %v1547
    %1920 = vmatprep.subr.bf16.mxu0 %v1623
    %1921 = vmatpush1.bf16.msra.mxu0 %v1620
    %1922 = vmatprep.subr.bf16.mxu0 0
    %1923 = vmatpush1.bf16.msra.mxu0 0
    %1924 = vmatprep.subr.bf16.mxu0 0
    %1925 = vmatpush1.bf16.msra.mxu0 0
    %1926 = vmatprep.subr.bf16.mxu0 0
    %1927 = vmatpush1.bf16.msra.mxu0 0
    %1928 = vmatprep.subr.bf16.mxu0 0
    %1929 = vmatpush1.bf16.msra.mxu0 0
    %1930 = vmatprep.subr.bf16.mxu0 0
    %1931 = vmatpush1.bf16.msra.mxu0 0
    %1932 = vmatprep.subr.bf16.mxu0 0
    %1933 = vmatpush1.bf16.msra.mxu0 0
    %1934 = vmatprep.subr.bf16.mxu0 0
    %1935 = vmatpush1.bf16.msra.mxu0 0
    %1936 = vmatprep.subr.bf16.mxu0 0
    %1937 = vmatpush1.bf16.msra.mxu0 0
    %1938 = vmatprep.subr.bf16.mxu0 0
    %1939 = vmatpush1.bf16.msra.mxu0 0
    %1940 = vmatprep.subr.bf16.mxu0 0
    %1941 = vmatpush1.bf16.msra.mxu0 0
    %1942 = vmatprep.subr.bf16.mxu0 0
    %1943 = vmatpush1.bf16.msra.mxu0 0
    %1944 = vmatprep.mubr.bf16.mxu0 0
    %1945 = vmatmul.mubr.bf16.gmra.mrb[0].mxu0 %v1574
    %v1946 = vpop.f32.mrb[0].mxu0
    %v1947 = vadd.f32 %v1570, %v1946
    %v1948 = vpop.f32.mrb[0].mxu0
    %v1949 = vadd.f32 %v1570, %v1948
    %v1950 = vpop.f32.mrb[0].mxu0
    %v1951 = vpop.f32.mrb[0].mxu0
    %1952 = vdwg.mxu0
    %v1953 = vmax.f32 %v1660, 0.0
    %v1954 = vmax.f32 %v1662, 0.0
    %v1955 = vmax.f32 %v1701, 0.0
    %v1956 = vmax.f32 %v1703, 0.0
    %v1957 = vmax.f32 %v1742, 0.0
    %v1958 = vmax.f32 %v1744, 0.0
    %v1959 = vmax.f32 %v1783, 0.0
    %v1960 = vmax.f32 %v1785, 0.0
    %v1961 = vmax.f32 %v1824, 0.0
    %v1962 = vmax.f32 %v1826, 0.0
    %v1963 = vmax.f32 %v1865, 0.0
    %v1964 = vmax.f32 %v1867, 0.0
    %v1965 = vmax.f32 %v1906, 0.0
    %v1966 = vmax.f32 %v1908, 0.0
    %v1967 = vmax.f32 %v1947, 0.0
    %v1968 = vmax.f32 %v1949, 0.0
    %1985 = vrot.lane.b32.xlu0 %v1953, 33
    %v1986 = vpop.permute.xlu0 %1985
    %1987 = vrot.lane.b32.xlu0 %v1954, 33
    %v1988 = vpop.permute.xlu0 %1987
    %1989 = vrot.lane.b32.xlu0 %v1955, 33
    %v1990 = vpop.permute.xlu0 %1989
    %1991 = vrot.lane.b32.xlu0 %v1956, 33
    %v1992 = vpop.permute.xlu0 %1991
    %1993 = vrot.lane.b32.xlu0 %v1957, 33
    %v1994 = vpop.permute.xlu0 %1993
    %1995 = vrot.lane.b32.xlu0 %v1958, 33
    %v1996 = vpop.permute.xlu0 %1995
    %1997 = vrot.lane.b32.xlu0 %v1959, 33
    %v1998 = vpop.permute.xlu0 %1997
    %1999 = vrot.lane.b32.xlu0 %v1960, 33
    %v2000 = vpop.permute.xlu0 %1999
    %2001 = vrot.lane.b32.xlu0 %v1961, 33
    %v2002 = vpop.permute.xlu0 %2001
    %2003 = vrot.lane.b32.xlu0 %v1962, 33
    %v2004 = vpop.permute.xlu0 %2003
    %2005 = vrot.lane.b32.xlu0 %v1963, 33
    %v2006 = vpop.permute.xlu0 %2005
    %2007 = vrot.lane.b32.xlu0 %v1964, 33
    %v2008 = vpop.permute.xlu0 %2007
    %2009 = vrot.lane.b32.xlu0 %v1965, 33
    %v2010 = vpop.permute.xlu0 %2009
    %2011 = vrot.lane.b32.xlu0 %v1966, 33
    %v2012 = vpop.permute.xlu0 %2011
    %2013 = vrot.lane.b32.xlu0 %v1967, 33
    %v2014 = vpop.permute.xlu0 %2013
    %2015 = vrot.lane.b32.xlu0 %v1968, 33
    %v2016 = vpop.permute.xlu0 %2015
    %v2017 = vsel %vm631, %v598, %v1986
    %v2018 = vsel %vm631, %v1986, %v1988
    %v2019 = vsel %vm631, %v1988, %v1990
    %v2020 = vsel %vm631, %v1990, %v1992
    %v2021 = vsel %vm631, %v1992, %v1994
    %v2022 = vsel %vm631, %v1994, %v1996
    %v2023 = vsel %vm631, %v1996, %v1998
    %v2024 = vsel %vm631, %v1998, %v2000
    %v2025 = vsel %vm631, %v2000, %v2002
    %v2026 = vsel %vm631, %v2002, %v2004
    %v2027 = vsel %vm631, %v2004, %v2006
    %v2028 = vsel %vm631, %v2006, %v2008
    %v2029 = vsel %vm631, %v2008, %v2010
    %v2030 = vsel %vm631, %v2010, %v2012
    %v2031 = vsel %vm631, %v2012, %v2014
    %v2032 = vsel %vm631, %v2014, %v2016
    %v2049 = vsel %vm564, %v2017, 0.0
    %v2050 = vsel %vm565, %v2018, 0.0
    %v2051 = vsel %vm566, %v2019, 0.0
    %v2052 = vsel %vm567, %v2020, 0.0
    %v2053 = vsel %vm568, %v2021, 0.0
    %v2054 = vsel %vm569, %v2022, 0.0
    %v2055 = vsel %vm570, %v2023, 0.0
    %v2056 = vsel %vm571, %v2024, 0.0
    %v2057 = vsel %vm572, %v2025, 0.0
    %v2058 = vsel %vm573, %v2026, 0.0
    %v2059 = vsel %vm574, %v2027, 0.0
    %v2060 = vsel %vm575, %v2028, 0.0
    %v2061 = vsel %vm576, %v2029, 0.0
    %v2062 = vsel %vm577, %v2030, 0.0
    %v2063 = vsel %vm578, %v2031, 0.0
    %v2064 = vsel %vm579, %v2032, 0.0
    %2065 = vrot.lane.b32.xlu0 %v1953, 32
    %v2066 = vpop.permute.xlu0 %2065
    %2067 = vrot.lane.b32.xlu0 %v1954, 32
    %v2068 = vpop.permute.xlu0 %2067
    %2069 = vrot.lane.b32.xlu0 %v1955, 32
    %v2070 = vpop.permute.xlu0 %2069
    %2071 = vrot.lane.b32.xlu0 %v1956, 32
    %v2072 = vpop.permute.xlu0 %2071
    %2073 = vrot.lane.b32.xlu0 %v1957, 32
    %v2074 = vpop.permute.xlu0 %2073
    %2075 = vrot.lane.b32.xlu0 %v1958, 32
    %v2076 = vpop.permute.xlu0 %2075
    %2077 = vrot.lane.b32.xlu0 %v1959, 32
    %v2078 = vpop.permute.xlu0 %2077
    %2079 = vrot.lane.b32.xlu0 %v1960, 32
    %v2080 = vpop.permute.xlu0 %2079
    %2081 = vrot.lane.b32.xlu0 %v1961, 32
    %v2082 = vpop.permute.xlu0 %2081
    %2083 = vrot.lane.b32.xlu0 %v1962, 32
    %v2084 = vpop.permute.xlu0 %2083
    %2085 = vrot.lane.b32.xlu0 %v1963, 32
    %v2086 = vpop.permute.xlu0 %2085
    %2087 = vrot.lane.b32.xlu0 %v1964, 32
    %v2088 = vpop.permute.xlu0 %2087
    %2089 = vrot.lane.b32.xlu0 %v1965, 32
    %v2090 = vpop.permute.xlu0 %2089
    %2091 = vrot.lane.b32.xlu0 %v1966, 32
    %v2092 = vpop.permute.xlu0 %2091
    %2093 = vrot.lane.b32.xlu0 %v1967, 32
    %v2094 = vpop.permute.xlu0 %2093
    %2095 = vrot.lane.b32.xlu0 %v1968, 32
    %v2096 = vpop.permute.xlu0 %2095
    %v2097 = vsel %vm746, %v713, %v2066
    %v2098 = vsel %vm746, %v2066, %v2068
    %v2099 = vsel %vm746, %v2068, %v2070
    %v2100 = vsel %vm746, %v2070, %v2072
    %v2101 = vsel %vm746, %v2072, %v2074
    %v2102 = vsel %vm746, %v2074, %v2076
    %v2103 = vsel %vm746, %v2076, %v2078
    %v2104 = vsel %vm746, %v2078, %v2080
    %v2105 = vsel %vm746, %v2080, %v2082
    %v2106 = vsel %vm746, %v2082, %v2084
    %v2107 = vsel %vm746, %v2084, %v2086
    %v2108 = vsel %vm746, %v2086, %v2088
    %v2109 = vsel %vm746, %v2088, %v2090
    %v2110 = vsel %vm746, %v2090, %v2092
    %v2111 = vsel %vm746, %v2092, %v2094
    %v2112 = vsel %vm746, %v2094, %v2096
    %v2129 = vsel %vm696, %v2097, 0.0
    %v2130 = vsel %vm697, %v2098, 0.0
    %v2131 = vsel %vm698, %v2099, 0.0
    %v2132 = vsel %vm699, %v2100, 0.0
    %v2133 = vsel %vm700, %v2101, 0.0
    %v2134 = vsel %vm701, %v2102, 0.0
    %v2135 = vsel %vm702, %v2103, 0.0
    %v2136 = vsel %vm703, %v2104, 0.0
    %v2137 = vsel %vm704, %v2105, 0.0
    %v2138 = vsel %vm705, %v2106, 0.0
    %v2139 = vsel %vm706, %v2107, 0.0
    %v2140 = vsel %vm707, %v2108, 0.0
    %v2141 = vsel %vm708, %v2109, 0.0
    %v2142 = vsel %vm709, %v2110, 0.0
    %v2143 = vsel %vm710, %v2111, 0.0
    %v2144 = vsel %vm711, %v2112, 0.0
    %2145 = vrot.lane.b32.xlu0 %v1953, 31
    %v2146 = vpop.permute.xlu0 %2145
    %2147 = vrot.lane.b32.xlu0 %v1954, 31
    %v2148 = vpop.permute.xlu0 %2147
    %2149 = vrot.lane.b32.xlu0 %v1955, 31
    %v2150 = vpop.permute.xlu0 %2149
    %2151 = vrot.lane.b32.xlu0 %v1956, 31
    %v2152 = vpop.permute.xlu0 %2151
    %2153 = vrot.lane.b32.xlu0 %v1957, 31
    %v2154 = vpop.permute.xlu0 %2153
    %2155 = vrot.lane.b32.xlu0 %v1958, 31
    %v2156 = vpop.permute.xlu0 %2155
    %2157 = vrot.lane.b32.xlu0 %v1959, 31
    %v2158 = vpop.permute.xlu0 %2157
    %2159 = vrot.lane.b32.xlu0 %v1960, 31
    %v2160 = vpop.permute.xlu0 %2159
    %2161 = vrot.lane.b32.xlu0 %v1961, 31
    %v2162 = vpop.permute.xlu0 %2161
    %2163 = vrot.lane.b32.xlu0 %v1962, 31
    %v2164 = vpop.permute.xlu0 %2163
    %2165 = vrot.lane.b32.xlu0 %v1963, 31
    %v2166 = vpop.permute.xlu0 %2165
    %2167 = vrot.lane.b32.xlu0 %v1964, 31
    %v2168 = vpop.permute.xlu0 %2167
    %2169 = vrot.lane.b32.xlu0 %v1965, 31
    %v2170 = vpop.permute.xlu0 %2169
    %2171 = vrot.lane.b32.xlu0 %v1966, 31
    %v2172 = vpop.permute.xlu0 %2171
    %2173 = vrot.lane.b32.xlu0 %v1967, 31
    %v2174 = vpop.permute.xlu0 %2173
    %2175 = vrot.lane.b32.xlu0 %v1968, 31
    %v2176 = vpop.permute.xlu0 %2175
    %v2177 = vsel %vm861, %v828, %v2146
    %v2178 = vsel %vm861, %v2146, %v2148
    %v2179 = vsel %vm861, %v2148, %v2150
    %v2180 = vsel %vm861, %v2150, %v2152
    %v2181 = vsel %vm861, %v2152, %v2154
    %v2182 = vsel %vm861, %v2154, %v2156
    %v2183 = vsel %vm861, %v2156, %v2158
    %v2184 = vsel %vm861, %v2158, %v2160
    %v2185 = vsel %vm861, %v2160, %v2162
    %v2186 = vsel %vm861, %v2162, %v2164
    %v2187 = vsel %vm861, %v2164, %v2166
    %v2188 = vsel %vm861, %v2166, %v2168
    %v2189 = vsel %vm861, %v2168, %v2170
    %v2190 = vsel %vm861, %v2170, %v2172
    %v2191 = vsel %vm861, %v2172, %v2174
    %v2192 = vsel %vm861, %v2174, %v2176
    %v2209 = vsel %vm811, %v2177, 0.0
    %v2210 = vsel %vm812, %v2178, 0.0
    %v2211 = vsel %vm813, %v2179, 0.0
    %v2212 = vsel %vm814, %v2180, 0.0
    %v2213 = vsel %vm815, %v2181, 0.0
    %v2214 = vsel %vm816, %v2182, 0.0
    %v2215 = vsel %vm817, %v2183, 0.0
    %v2216 = vsel %vm818, %v2184, 0.0
    %v2217 = vsel %vm819, %v2185, 0.0
    %v2218 = vsel %vm820, %v2186, 0.0
    %v2219 = vsel %vm821, %v2187, 0.0
    %v2220 = vsel %vm822, %v2188, 0.0
    %v2221 = vsel %vm823, %v2189, 0.0
    %v2222 = vsel %vm824, %v2190, 0.0
    %v2223 = vsel %vm825, %v2191, 0.0
    %v2224 = vsel %vm826, %v2192, 0.0
    %2225 = vrot.lane.b32.xlu0 %v1953, 1
    %v2226 = vpop.permute.xlu0 %2225
    %2227 = vrot.lane.b32.xlu0 %v1954, 1
    %v2228 = vpop.permute.xlu0 %2227
    %2229 = vrot.lane.b32.xlu0 %v1955, 1
    %v2230 = vpop.permute.xlu0 %2229
    %2231 = vrot.lane.b32.xlu0 %v1956, 1
    %v2232 = vpop.permute.xlu0 %2231
    %2233 = vrot.lane.b32.xlu0 %v1957, 1
    %v2234 = vpop.permute.xlu0 %2233
    %2235 = vrot.lane.b32.xlu0 %v1958, 1
    %v2236 = vpop.permute.xlu0 %2235
    %2237 = vrot.lane.b32.xlu0 %v1959, 1
    %v2238 = vpop.permute.xlu0 %2237
    %2239 = vrot.lane.b32.xlu0 %v1960, 1
    %v2240 = vpop.permute.xlu0 %2239
    %2241 = vrot.lane.b32.xlu0 %v1961, 1
    %v2242 = vpop.permute.xlu0 %2241
    %2243 = vrot.lane.b32.xlu0 %v1962, 1
    %v2244 = vpop.permute.xlu0 %2243
    %2245 = vrot.lane.b32.xlu0 %v1963, 1
    %v2246 = vpop.permute.xlu0 %2245
    %2247 = vrot.lane.b32.xlu0 %v1964, 1
    %v2248 = vpop.permute.xlu0 %2247
    %2249 = vrot.lane.b32.xlu0 %v1965, 1
    %v2250 = vpop.permute.xlu0 %2249
    %2251 = vrot.lane.b32.xlu0 %v1966, 1
    %v2252 = vpop.permute.xlu0 %2251
    %2253 = vrot.lane.b32.xlu0 %v1967, 1
    %v2254 = vpop.permute.xlu0 %2253
    %2255 = vrot.lane.b32.xlu0 %v1968, 1
    %v2256 = vpop.permute.xlu0 %2255
    %v2257 = vsel %vm976, %v943, %v2226
    %v2258 = vsel %vm976, %v2226, %v2228
    %v2259 = vsel %vm976, %v2228, %v2230
    %v2260 = vsel %vm976, %v2230, %v2232
    %v2261 = vsel %vm976, %v2232, %v2234
    %v2262 = vsel %vm976, %v2234, %v2236
    %v2263 = vsel %vm976, %v2236, %v2238
    %v2264 = vsel %vm976, %v2238, %v2240
    %v2265 = vsel %vm976, %v2240, %v2242
    %v2266 = vsel %vm976, %v2242, %v2244
    %v2267 = vsel %vm976, %v2244, %v2246
    %v2268 = vsel %vm976, %v2246, %v2248
    %v2269 = vsel %vm976, %v2248, %v2250
    %v2270 = vsel %vm976, %v2250, %v2252
    %v2271 = vsel %vm976, %v2252, %v2254
    %v2272 = vsel %vm976, %v2254, %v2256
    %v2289 = vsel %vm926, %v2257, 0.0
    %v2290 = vsel %vm927, %v2258, 0.0
    %v2291 = vsel %vm928, %v2259, 0.0
    %v2292 = vsel %vm929, %v2260, 0.0
    %v2293 = vsel %vm930, %v2261, 0.0
    %v2294 = vsel %vm931, %v2262, 0.0
    %v2295 = vsel %vm932, %v2263, 0.0
    %v2296 = vsel %vm933, %v2264, 0.0
    %v2297 = vsel %vm934, %v2265, 0.0
    %v2298 = vsel %vm935, %v2266, 0.0
    %v2299 = vsel %vm936, %v2267, 0.0
    %v2300 = vsel %vm937, %v2268, 0.0
    %v2301 = vsel %vm938, %v2269, 0.0
    %v2302 = vsel %vm939, %v2270, 0.0
    %v2303 = vsel %vm940, %v2271, 0.0
    %v2304 = vsel %vm941, %v2272, 0.0
    %2305 = vrot.lane.b32.xlu0 %v1953, 127
    %v2306 = vpop.permute.xlu0 %2305
    %2307 = vrot.lane.b32.xlu0 %v1954, 127
    %v2308 = vpop.permute.xlu0 %2307
    %2309 = vrot.lane.b32.xlu0 %v1955, 127
    %v2310 = vpop.permute.xlu0 %2309
    %2311 = vrot.lane.b32.xlu0 %v1956, 127
    %v2312 = vpop.permute.xlu0 %2311
    %2313 = vrot.lane.b32.xlu0 %v1957, 127
    %v2314 = vpop.permute.xlu0 %2313
    %2315 = vrot.lane.b32.xlu0 %v1958, 127
    %v2316 = vpop.permute.xlu0 %2315
    %2317 = vrot.lane.b32.xlu0 %v1959, 127
    %v2318 = vpop.permute.xlu0 %2317
    %2319 = vrot.lane.b32.xlu0 %v1960, 127
    %v2320 = vpop.permute.xlu0 %2319
    %2321 = vrot.lane.b32.xlu0 %v1961, 127
    %v2322 = vpop.permute.xlu0 %2321
    %2323 = vrot.lane.b32.xlu0 %v1962, 127
    %v2324 = vpop.permute.xlu0 %2323
    %2325 = vrot.lane.b32.xlu0 %v1963, 127
    %v2326 = vpop.permute.xlu0 %2325
    %2327 = vrot.lane.b32.xlu0 %v1964, 127
    %v2328 = vpop.permute.xlu0 %2327
    %2329 = vrot.lane.b32.xlu0 %v1965, 127
    %v2330 = vpop.permute.xlu0 %2329
    %2331 = vrot.lane.b32.xlu0 %v1966, 127
    %v2332 = vpop.permute.xlu0 %2331
    %2333 = vrot.lane.b32.xlu0 %v1967, 127
    %v2334 = vpop.permute.xlu0 %2333
    %2335 = vrot.lane.b32.xlu0 %v1968, 127
    %v2336 = vpop.permute.xlu0 %2335
    %v2337 = vsel %vm1091, %v2306, %v2308
    %v2338 = vsel %vm1091, %v2308, %v2310
    %v2339 = vsel %vm1091, %v2310, %v2312
    %v2340 = vsel %vm1091, %v2312, %v2314
    %v2341 = vsel %vm1091, %v2314, %v2316
    %v2342 = vsel %vm1091, %v2316, %v2318
    %v2343 = vsel %vm1091, %v2318, %v2320
    %v2344 = vsel %vm1091, %v2320, %v2322
    %v2345 = vsel %vm1091, %v2322, %v2324
    %v2346 = vsel %vm1091, %v2324, %v2326
    %v2347 = vsel %vm1091, %v2326, %v2328
    %v2348 = vsel %vm1091, %v2328, %v2330
    %v2349 = vsel %vm1091, %v2330, %v2332
    %v2350 = vsel %vm1091, %v2332, %v2334
    %v2351 = vsel %vm1091, %v2334, %v2336
    %v2352 = vsel %vm1091, %v2336, %v1090
    %v2369 = vsel %vm1041, %v2337, 0.0
    %v2370 = vsel %vm1042, %v2338, 0.0
    %v2371 = vsel %vm1043, %v2339, 0.0
    %v2372 = vsel %vm1044, %v2340, 0.0
    %v2373 = vsel %vm1045, %v2341, 0.0
    %v2374 = vsel %vm1046, %v2342, 0.0
    %v2375 = vsel %vm1047, %v2343, 0.0
    %v2376 = vsel %vm1048, %v2344, 0.0
    %v2377 = vsel %vm1049, %v2345, 0.0
    %v2378 = vsel %vm1050, %v2346, 0.0
    %v2379 = vsel %vm1051, %v2347, 0.0
    %v2380 = vsel %vm1052, %v2348, 0.0
    %v2381 = vsel %vm1053, %v2349, 0.0
    %v2382 = vsel %vm1054, %v2350, 0.0
    %v2383 = vsel %vm1055, %v2351, 0.0
    %v2384 = vsel %vm1056, %v2352, 0.0
    %2385 = vrot.lane.b32.xlu0 %v1953, 97
    %v2386 = vpop.permute.xlu0 %2385
    %2387 = vrot.lane.b32.xlu0 %v1954, 97
    %v2388 = vpop.permute.xlu0 %2387
    %2389 = vrot.lane.b32.xlu0 %v1955, 97
    %v2390 = vpop.permute.xlu0 %2389
    %2391 = vrot.lane.b32.xlu0 %v1956, 97
    %v2392 = vpop.permute.xlu0 %2391
    %2393 = vrot.lane.b32.xlu0 %v1957, 97
    %v2394 = vpop.permute.xlu0 %2393
    %2395 = vrot.lane.b32.xlu0 %v1958, 97
    %v2396 = vpop.permute.xlu0 %2395
    %2397 = vrot.lane.b32.xlu0 %v1959, 97
    %v2398 = vpop.permute.xlu0 %2397
    %2399 = vrot.lane.b32.xlu0 %v1960, 97
    %v2400 = vpop.permute.xlu0 %2399
    %2401 = vrot.lane.b32.xlu0 %v1961, 97
    %v2402 = vpop.permute.xlu0 %2401
    %2403 = vrot.lane.b32.xlu0 %v1962, 97
    %v2404 = vpop.permute.xlu0 %2403
    %2405 = vrot.lane.b32.xlu0 %v1963, 97
    %v2406 = vpop.permute.xlu0 %2405
    %2407 = vrot.lane.b32.xlu0 %v1964, 97
    %v2408 = vpop.permute.xlu0 %2407
    %2409 = vrot.lane.b32.xlu0 %v1965, 97
    %v2410 = vpop.permute.xlu0 %2409
    %2411 = vrot.lane.b32.xlu0 %v1966, 97
    %v2412 = vpop.permute.xlu0 %2411
    %2413 = vrot.lane.b32.xlu0 %v1967, 97
    %v2414 = vpop.permute.xlu0 %2413
    %2415 = vrot.lane.b32.xlu0 %v1968, 97
    %v2416 = vpop.permute.xlu0 %2415
    %v2417 = vsel %vm1206, %v2386, %v2388
    %v2418 = vsel %vm1206, %v2388, %v2390
    %v2419 = vsel %vm1206, %v2390, %v2392
    %v2420 = vsel %vm1206, %v2392, %v2394
    %v2421 = vsel %vm1206, %v2394, %v2396
    %v2422 = vsel %vm1206, %v2396, %v2398
    %v2423 = vsel %vm1206, %v2398, %v2400
    %v2424 = vsel %vm1206, %v2400, %v2402
    %v2425 = vsel %vm1206, %v2402, %v2404
    %v2426 = vsel %vm1206, %v2404, %v2406
    %v2427 = vsel %vm1206, %v2406, %v2408
    %v2428 = vsel %vm1206, %v2408, %v2410
    %v2429 = vsel %vm1206, %v2410, %v2412
    %v2430 = vsel %vm1206, %v2412, %v2414
    %v2431 = vsel %vm1206, %v2414, %v2416
    %v2432 = vsel %vm1206, %v2416, %v1205
    %v2449 = vsel %vm1156, %v2417, 0.0
    %v2450 = vsel %vm1157, %v2418, 0.0
    %v2451 = vsel %vm1158, %v2419, 0.0
    %v2452 = vsel %vm1159, %v2420, 0.0
    %v2453 = vsel %vm1160, %v2421, 0.0
    %v2454 = vsel %vm1161, %v2422, 0.0
    %v2455 = vsel %vm1162, %v2423, 0.0
    %v2456 = vsel %vm1163, %v2424, 0.0
    %v2457 = vsel %vm1164, %v2425, 0.0
    %v2458 = vsel %vm1165, %v2426, 0.0
    %v2459 = vsel %vm1166, %v2427, 0.0
    %v2460 = vsel %vm1167, %v2428, 0.0
    %v2461 = vsel %vm1168, %v2429, 0.0
    %v2462 = vsel %vm1169, %v2430, 0.0
    %v2463 = vsel %vm1170, %v2431, 0.0
    %v2464 = vsel %vm1171, %v2432, 0.0
    %2465 = vrot.lane.b32.xlu0 %v1953, 96
    %v2466 = vpop.permute.xlu0 %2465
    %2467 = vrot.lane.b32.xlu0 %v1954, 96
    %v2468 = vpop.permute.xlu0 %2467
    %2469 = vrot.lane.b32.xlu0 %v1955, 96
    %v2470 = vpop.permute.xlu0 %2469
    %2471 = vrot.lane.b32.xlu0 %v1956, 96
    %v2472 = vpop.permute.xlu0 %2471
    %2473 = vrot.lane.b32.xlu0 %v1957, 96
    %v2474 = vpop.permute.xlu0 %2473
    %2475 = vrot.lane.b32.xlu0 %v1958, 96
    %v2476 = vpop.permute.xlu0 %2475
    %2477 = vrot.lane.b32.xlu0 %v1959, 96
    %v2478 = vpop.permute.xlu0 %2477
    %2479 = vrot.lane.b32.xlu0 %v1960, 96
    %v2480 = vpop.permute.xlu0 %2479
    %2481 = vrot.lane.b32.xlu0 %v1961, 96
    %v2482 = vpop.permute.xlu0 %2481
    %2483 = vrot.lane.b32.xlu0 %v1962, 96
    %v2484 = vpop.permute.xlu0 %2483
    %2485 = vrot.lane.b32.xlu0 %v1963, 96
    %v2486 = vpop.permute.xlu0 %2485
    %2487 = vrot.lane.b32.xlu0 %v1964, 96
    %v2488 = vpop.permute.xlu0 %2487
    %2489 = vrot.lane.b32.xlu0 %v1965, 96
    %v2490 = vpop.permute.xlu0 %2489
    %2491 = vrot.lane.b32.xlu0 %v1966, 96
    %v2492 = vpop.permute.xlu0 %2491
    %2493 = vrot.lane.b32.xlu0 %v1967, 96
    %v2494 = vpop.permute.xlu0 %2493
    %2495 = vrot.lane.b32.xlu0 %v1968, 96
    %v2496 = vpop.permute.xlu0 %2495
    %v2497 = vsel %vm1321, %v2466, %v2468
    %v2498 = vsel %vm1321, %v2468, %v2470
    %v2499 = vsel %vm1321, %v2470, %v2472
    %v2500 = vsel %vm1321, %v2472, %v2474
    %v2501 = vsel %vm1321, %v2474, %v2476
    %v2502 = vsel %vm1321, %v2476, %v2478
    %v2503 = vsel %vm1321, %v2478, %v2480
    %v2504 = vsel %vm1321, %v2480, %v2482
    %v2505 = vsel %vm1321, %v2482, %v2484
    %v2506 = vsel %vm1321, %v2484, %v2486
    %v2507 = vsel %vm1321, %v2486, %v2488
    %v2508 = vsel %vm1321, %v2488, %v2490
    %v2509 = vsel %vm1321, %v2490, %v2492
    %v2510 = vsel %vm1321, %v2492, %v2494
    %v2511 = vsel %vm1321, %v2494, %v2496
    %v2512 = vsel %vm1321, %v2496, %v1320
    %v2529 = vsel %vm1271, %v2497, 0.0
    %v2530 = vsel %vm1272, %v2498, 0.0
    %v2531 = vsel %vm1273, %v2499, 0.0
    %v2532 = vsel %vm1274, %v2500, 0.0
    %v2533 = vsel %vm1275, %v2501, 0.0
    %v2534 = vsel %vm1276, %v2502, 0.0
    %v2535 = vsel %vm1277, %v2503, 0.0
    %v2536 = vsel %vm1278, %v2504, 0.0
    %v2537 = vsel %vm1279, %v2505, 0.0
    %v2538 = vsel %vm1280, %v2506, 0.0
    %v2539 = vsel %vm1281, %v2507, 0.0
    %v2540 = vsel %vm1282, %v2508, 0.0
    %v2541 = vsel %vm1283, %v2509, 0.0
    %v2542 = vsel %vm1284, %v2510, 0.0
    %v2543 = vsel %vm1285, %v2511, 0.0
    %v2544 = vsel %vm1286, %v2512, 0.0
    %2545 = vrot.lane.b32.xlu0 %v1953, 95
    %v2546 = vpop.permute.xlu0 %2545
    %2547 = vrot.lane.b32.xlu0 %v1954, 95
    %v2548 = vpop.permute.xlu0 %2547
    %2549 = vrot.lane.b32.xlu0 %v1955, 95
    %v2550 = vpop.permute.xlu0 %2549
    %2551 = vrot.lane.b32.xlu0 %v1956, 95
    %v2552 = vpop.permute.xlu0 %2551
    %2553 = vrot.lane.b32.xlu0 %v1957, 95
    %v2554 = vpop.permute.xlu0 %2553
    %2555 = vrot.lane.b32.xlu0 %v1958, 95
    %v2556 = vpop.permute.xlu0 %2555
    %2557 = vrot.lane.b32.xlu0 %v1959, 95
    %v2558 = vpop.permute.xlu0 %2557
    %2559 = vrot.lane.b32.xlu0 %v1960, 95
    %v2560 = vpop.permute.xlu0 %2559
    %2561 = vrot.lane.b32.xlu0 %v1961, 95
    %v2562 = vpop.permute.xlu0 %2561
    %2563 = vrot.lane.b32.xlu0 %v1962, 95
    %v2564 = vpop.permute.xlu0 %2563
    %2565 = vrot.lane.b32.xlu0 %v1963, 95
    %v2566 = vpop.permute.xlu0 %2565
    %2567 = vrot.lane.b32.xlu0 %v1964, 95
    %v2568 = vpop.permute.xlu0 %2567
    %2569 = vrot.lane.b32.xlu0 %v1965, 95
    %v2570 = vpop.permute.xlu0 %2569
    %2571 = vrot.lane.b32.xlu0 %v1966, 95
    %v2572 = vpop.permute.xlu0 %2571
    %2573 = vrot.lane.b32.xlu0 %v1967, 95
    %v2574 = vpop.permute.xlu0 %2573
    %2575 = vrot.lane.b32.xlu0 %v1968, 95
    %v2576 = vpop.permute.xlu0 %2575
    %v2577 = vsel %vm1436, %v2546, %v2548
    %v2578 = vsel %vm1436, %v2548, %v2550
    %v2579 = vsel %vm1436, %v2550, %v2552
    %v2580 = vsel %vm1436, %v2552, %v2554
    %v2581 = vsel %vm1436, %v2554, %v2556
    %v2582 = vsel %vm1436, %v2556, %v2558
    %v2583 = vsel %vm1436, %v2558, %v2560
    %v2584 = vsel %vm1436, %v2560, %v2562
    %v2585 = vsel %vm1436, %v2562, %v2564
    %v2586 = vsel %vm1436, %v2564, %v2566
    %v2587 = vsel %vm1436, %v2566, %v2568
    %v2588 = vsel %vm1436, %v2568, %v2570
    %v2589 = vsel %vm1436, %v2570, %v2572
    %v2590 = vsel %vm1436, %v2572, %v2574
    %v2591 = vsel %vm1436, %v2574, %v2576
    %v2592 = vsel %vm1436, %v2576, %v1435
    %v2609 = vsel %vm1386, %v2577, 0.0
    %v2610 = vsel %vm1387, %v2578, 0.0
    %v2611 = vsel %vm1388, %v2579, 0.0
    %v2612 = vsel %vm1389, %v2580, 0.0
    %v2613 = vsel %vm1390, %v2581, 0.0
    %v2614 = vsel %vm1391, %v2582, 0.0
    %v2615 = vsel %vm1392, %v2583, 0.0
    %v2616 = vsel %vm1393, %v2584, 0.0
    %v2617 = vsel %vm1394, %v2585, 0.0
    %v2618 = vsel %vm1395, %v2586, 0.0
    %v2619 = vsel %vm1396, %v2587, 0.0
    %v2620 = vsel %vm1397, %v2588, 0.0
    %v2621 = vsel %vm1398, %v2589, 0.0
    %v2622 = vsel %vm1399, %v2590, 0.0
    %v2623 = vsel %vm1400, %v2591, 0.0
    %v2624 = vsel %vm1401, %v2592, 0.0
    %v2625 = vpack.c.bf16 %v2129, %v2049
    %v2626 = vpack.c.bf16 %v2130, %v2050
    %v2627 = vpack.c.bf16 %v2131, %v2051
    %v2628 = vpack.c.bf16 %v2132, %v2052
    %v2629 = vpack.c.bf16 %v2133, %v2053
    %v2630 = vpack.c.bf16 %v2134, %v2054
    %v2631 = vpack.c.bf16 %v2135, %v2055
    %v2632 = vpack.c.bf16 %v2136, %v2056
    %v2633 = vpack.c.bf16 %v2137, %v2057
    %v2634 = vpack.c.bf16 %v2138, %v2058
    %v2635 = vpack.c.bf16 %v2139, %v2059
    %v2636 = vpack.c.bf16 %v2140, %v2060
    %v2637 = vpack.c.bf16 %v2141, %v2061
    %v2638 = vpack.c.bf16 %v2142, %v2062
    %v2639 = vpack.c.bf16 %v2143, %v2063
    %v2640 = vpack.c.bf16 %v2144, %v2064
    %v2641 = vpack.c.bf16 %v2289, %v2209
    %v2642 = vpack.c.bf16 %v2290, %v2210
    %v2643 = vpack.c.bf16 %v2291, %v2211
    %v2644 = vpack.c.bf16 %v2292, %v2212
    %v2645 = vpack.c.bf16 %v2293, %v2213
    %v2646 = vpack.c.bf16 %v2294, %v2214
    %v2647 = vpack.c.bf16 %v2295, %v2215
    %v2648 = vpack.c.bf16 %v2296, %v2216
    %v2649 = vpack.c.bf16 %v2297, %v2217
    %v2650 = vpack.c.bf16 %v2298, %v2218
    %v2651 = vpack.c.bf16 %v2299, %v2219
    %v2652 = vpack.c.bf16 %v2300, %v2220
    %v2653 = vpack.c.bf16 %v2301, %v2221
    %v2654 = vpack.c.bf16 %v2302, %v2222
    %v2655 = vpack.c.bf16 %v2303, %v2223
    %v2656 = vpack.c.bf16 %v2304, %v2224
    %v2657 = vpack.c.bf16 %v2369, %v1953
    %v2658 = vpack.c.bf16 %v2370, %v1954
    %v2659 = vpack.c.bf16 %v2371, %v1955
    %v2660 = vpack.c.bf16 %v2372, %v1956
    %v2661 = vpack.c.bf16 %v2373, %v1957
    %v2662 = vpack.c.bf16 %v2374, %v1958
    %v2663 = vpack.c.bf16 %v2375, %v1959
    %v2664 = vpack.c.bf16 %v2376, %v1960
    %v2665 = vpack.c.bf16 %v2377, %v1961
    %v2666 = vpack.c.bf16 %v2378, %v1962
    %v2667 = vpack.c.bf16 %v2379, %v1963
    %v2668 = vpack.c.bf16 %v2380, %v1964
    %v2669 = vpack.c.bf16 %v2381, %v1965
    %v2670 = vpack.c.bf16 %v2382, %v1966
    %v2671 = vpack.c.bf16 %v2383, %v1967
    %v2672 = vpack.c.bf16 %v2384, %v1968
    %v2673 = vpack.c.bf16 %v2529, %v2449
    %v2674 = vpack.c.bf16 %v2530, %v2450
    %v2675 = vpack.c.bf16 %v2531, %v2451
    %v2676 = vpack.c.bf16 %v2532, %v2452
    %v2677 = vpack.c.bf16 %v2533, %v2453
    %v2678 = vpack.c.bf16 %v2534, %v2454
    %v2679 = vpack.c.bf16 %v2535, %v2455
    %v2680 = vpack.c.bf16 %v2536, %v2456
    %v2681 = vpack.c.bf16 %v2537, %v2457
    %v2682 = vpack.c.bf16 %v2538, %v2458
    %v2683 = vpack.c.bf16 %v2539, %v2459
    %v2684 = vpack.c.bf16 %v2540, %v2460
    %v2685 = vpack.c.bf16 %v2541, %v2461
    %v2686 = vpack.c.bf16 %v2542, %v2462
    %v2687 = vpack.c.bf16 %v2543, %v2463
    %v2688 = vpack.c.bf16 %v2544, %v2464
    %v2689 = vpack.c.bf16 %v2609, %v2609
    %v2690 = vpack.c.bf16 %v2610, %v2610
    %v2691 = vpack.c.bf16 %v2611, %v2611
    %v2692 = vpack.c.bf16 %v2612, %v2612
    %v2693 = vpack.c.bf16 %v2613, %v2613
    %v2694 = vpack.c.bf16 %v2614, %v2614
    %v2695 = vpack.c.bf16 %v2615, %v2615
    %v2696 = vpack.c.bf16 %v2616, %v2616
    %v2697 = vpack.c.bf16 %v2617, %v2617
    %v2698 = vpack.c.bf16 %v2618, %v2618
    %v2699 = vpack.c.bf16 %v2619, %v2619
    %v2700 = vpack.c.bf16 %v2620, %v2620
    %v2701 = vpack.c.bf16 %v2621, %v2621
    %v2702 = vpack.c.bf16 %v2622, %v2622
    %v2703 = vpack.c.bf16 %v2623, %v2623
    %v2704 = vpack.c.bf16 %v2624, %v2624
    %v2705 = vld [vmem:[#allocation7] sm:$0xf]
    %v2706 = vld [vmem:[%s9] sm:$0xff]
    %2708 = vset.pattern.permute.xlu0 0
    %2709 = vperm.xlu0 %2708, %v2706
    %v2710 = vpop.permute.xlu0 %2709
    %v2713 = vsel %vm1572, %v2705, 0
    %v2716 = vsel %vm1576, %v2689, 0
    %v2719 = vsel %vm1576, %v2690, 0
    %v2722 = vsel %vm1576, %v2691, 0
    %v2725 = vsel %vm1576, %v2692, 0
    %v2728 = vsel %vm1576, %v2693, 0
    %v2731 = vsel %vm1576, %v2694, 0
    %v2734 = vsel %vm1576, %v2695, 0
    %v2737 = vsel %vm1576, %v2696, 0
    %v2740 = vsel %vm1576, %v2697, 0
    %v2743 = vsel %vm1576, %v2698, 0
    %v2746 = vsel %vm1576, %v2699, 0
    %v2749 = vsel %vm1576, %v2700, 0
    %v2752 = vsel %vm1576, %v2701, 0
    %v2755 = vsel %vm1576, %v2702, 0
    %v2758 = vsel %vm1576, %v2703, 0
    %v2761 = vsel %vm1576, %v2704, 0
    %2763 = vmatprep.subr.bf16.mxu0 %v2626
    %2764 = vmatpush1.bf16.msra.mxu0 %v2625
    %2765 = vmatprep.subr.bf16.mxu0 %v2642
    %2766 = vmatpush1.bf16.msra.mxu0 %v2641
    %2767 = vmatprep.subr.bf16.mxu0 %v2658
    %2768 = vmatpush1.bf16.msra.mxu0 %v2657
    %2769 = vmatprep.subr.bf16.mxu0 %v2674
    %2770 = vmatpush1.bf16.msra.mxu0 %v2673
    %2771 = vmatprep.subr.bf16.mxu0 %v2719
    %2772 = vmatpush1.bf16.msra.mxu0 %v2716
    %2773 = vmatprep.subr.bf16.mxu0 0
    %2774 = vmatpush1.bf16.msra.mxu0 0
    %2775 = vmatprep.subr.bf16.mxu0 0
    %2776 = vmatpush1.bf16.msra.mxu0 0
    %2777 = vmatprep.subr.bf16.mxu0 0
    %2778 = vmatpush1.bf16.msra.mxu0 0
    %2779 = vmatprep.subr.bf16.mxu0 0
    %2780 = vmatpush1.bf16.msra.mxu0 0
    %2781 = vmatprep.subr.bf16.mxu0 0
    %2782 = vmatpush1.bf16.msra.mxu0 0
    %2783 = vmatprep.subr.bf16.mxu0 0
    %2784 = vmatpush1.bf16.msra.mxu0 0
    %2785 = vmatprep.subr.bf16.mxu0 0
    %2786 = vmatpush1.bf16.msra.mxu0 0
    %2787 = vmatprep.subr.bf16.mxu0 0
    %2788 = vmatpush1.bf16.msra.mxu0 0
    %2789 = vmatprep.subr.bf16.mxu0 0
    %2790 = vmatpush1.bf16.msra.mxu0 0
    %2791 = vmatprep.subr.bf16.mxu0 0
    %2792 = vmatpush1.bf16.msra.mxu0 0
    %2793 = vmatprep.subr.bf16.mxu0 0
    %2794 = vmatpush1.bf16.msra.mxu0 0
    %2795 = vmatprep.mubr.bf16.mxu0 0
    %2796 = vmatmul.mubr.bf16.gmra.mrb[0].mxu0 %v2713
    %v2797 = vpop.f32.mrb[0].mxu0
    %v2798 = vadd.f32 %v2710, %v2797
    %v2799 = vpop.f32.mrb[0].mxu0
    %v2800 = vadd.f32 %v2710, %v2799
    %v2801 = vpop.f32.mrb[0].mxu0
    %v2802 = vpop.f32.mrb[0].mxu0
    %2803 = vdwg.mxu0
    %2804 = vmatprep.subr.bf16.mxu0 %v2628
    %2805 = vmatpush1.bf16.msra.mxu0 %v2627
    %2806 = vmatprep.subr.bf16.mxu0 %v2644
    %2807 = vmatpush1.bf16.msra.mxu0 %v2643
    %2808 = vmatprep.subr.bf16.mxu0 %v2660
    %2809 = vmatpush1.bf16.msra.mxu0 %v2659
    %2810 = vmatprep.subr.bf16.mxu0 %v2676
    %2811 = vmatpush1.bf16.msra.mxu0 %v2675
    %2812 = vmatprep.subr.bf16.mxu0 %v2725
    %2813 = vmatpush1.bf16.msra.mxu0 %v2722
    %2814 = vmatprep.subr.bf16.mxu0 0
    %2815 = vmatpush1.bf16.msra.mxu0 0
    %2816 = vmatprep.subr.bf16.mxu0 0
    %2817 = vmatpush1.bf16.msra.mxu0 0
    %2818 = vmatprep.subr.bf16.mxu0 0
    %2819 = vmatpush1.bf16.msra.mxu0 0
    %2820 = vmatprep.subr.bf16.mxu0 0
    %2821 = vmatpush1.bf16.msra.mxu0 0
    %2822 = vmatprep.subr.bf16.mxu0 0
    %2823 = vmatpush1.bf16.msra.mxu0 0
    %2824 = vmatprep.subr.bf16.mxu0 0
    %2825 = vmatpush1.bf16.msra.mxu0 0
    %2826 = vmatprep.subr.bf16.mxu0 0
    %2827 = vmatpush1.bf16.msra.mxu0 0
    %2828 = vmatprep.subr.bf16.mxu0 0
    %2829 = vmatpush1.bf16.msra.mxu0 0
    %2830 = vmatprep.subr.bf16.mxu0 0
    %2831 = vmatpush1.bf16.msra.mxu0 0
    %2832 = vmatprep.subr.bf16.mxu0 0
    %2833 = vmatpush1.bf16.msra.mxu0 0
    %2834 = vmatprep.subr.bf16.mxu0 0
    %2835 = vmatpush1.bf16.msra.mxu0 0
    %2836 = vmatprep.mubr.bf16.mxu0 0
    %2837 = vmatmul.mubr.bf16.gmra.mrb[0].mxu0 %v2713
    %v2838 = vpop.f32.mrb[0].mxu0
    %v2839 = vadd.f32 %v2710, %v2838
    %v2840 = vpop.f32.mrb[0].mxu0
    %v2841 = vadd.f32 %v2710, %v2840
    %v2842 = vpop.f32.mrb[0].mxu0
    %v2843 = vpop.f32.mrb[0].mxu0
    %2844 = vdwg.mxu0
    %2845 = vmatprep.subr.bf16.mxu0 %v2630
    %2846 = vmatpush1.bf16.msra.mxu0 %v2629
    %2847 = vmatprep.subr.bf16.mxu0 %v2646
    %2848 = vmatpush1.bf16.msra.mxu0 %v2645
    %2849 = vmatprep.subr.bf16.mxu0 %v2662
    %2850 = vmatpush1.bf16.msra.mxu0 %v2661
    %2851 = vmatprep.subr.bf16.mxu0 %v2678
    %2852 = vmatpush1.bf16.msra.mxu0 %v2677
    %2853 = vmatprep.subr.bf16.mxu0 %v2731
    %2854 = vmatpush1.bf16.msra.mxu0 %v2728
    %2855 = vmatprep.subr.bf16.mxu0 0
    %2856 = vmatpush1.bf16.msra.mxu0 0
    %2857 = vmatprep.subr.bf16.mxu0 0
    %2858 = vmatpush1.bf16.msra.mxu0 0
    %2859 = vmatprep.subr.bf16.mxu0 0
    %2860 = vmatpush1.bf16.msra.mxu0 0
    %2861 = vmatprep.subr.bf16.mxu0 0
    %2862 = vmatpush1.bf16.msra.mxu0 0
    %2863 = vmatprep.subr.bf16.mxu0 0
    %2864 = vmatpush1.bf16.msra.mxu0 0
    %2865 = vmatprep.subr.bf16.mxu0 0
    %2866 = vmatpush1.bf16.msra.mxu0 0
    %2867 = vmatprep.subr.bf16.mxu0 0
    %2868 = vmatpush1.bf16.msra.mxu0 0
    %2869 = vmatprep.subr.bf16.mxu0 0
    %2870 = vmatpush1.bf16.msra.mxu0 0
    %2871 = vmatprep.subr.bf16.mxu0 0
    %2872 = vmatpush1.bf16.msra.mxu0 0
    %2873 = vmatprep.subr.bf16.mxu0 0
    %2874 = vmatpush1.bf16.msra.mxu0 0
    %2875 = vmatprep.subr.bf16.mxu0 0
    %2876 = vmatpush1.bf16.msra.mxu0 0
    %2877 = vmatprep.mubr.bf16.mxu0 0
    %2878 = vmatmul.mubr.bf16.gmra.mrb[0].mxu0 %v2713
    %v2879 = vpop.f32.mrb[0].mxu0
    %v2880 = vadd.f32 %v2710, %v2879
    %v2881 = vpop.f32.mrb[0].mxu0
    %v2882 = vadd.f32 %v2710, %v2881
    %v2883 = vpop.f32.mrb[0].mxu0
    %v2884 = vpop.f32.mrb[0].mxu0
    %2885 = vdwg.mxu0
    %2886 = vmatprep.subr.bf16.mxu0 %v2632
    %2887 = vmatpush1.bf16.msra.mxu0 %v2631
    %2888 = vmatprep.subr.bf16.mxu0 %v2648
    %2889 = vmatpush1.bf16.msra.mxu0 %v2647
    %2890 = vmatprep.subr.bf16.mxu0 %v2664
    %2891 = vmatpush1.bf16.msra.mxu0 %v2663
    %2892 = vmatprep.subr.bf16.mxu0 %v2680
    %2893 = vmatpush1.bf16.msra.mxu0 %v2679
    %2894 = vmatprep.subr.bf16.mxu0 %v2737
    %2895 = vmatpush1.bf16.msra.mxu0 %v2734
    %2896 = vmatprep.subr.bf16.mxu0 0
    %2897 = vmatpush1.bf16.msra.mxu0 0
    %2898 = vmatprep.subr.bf16.mxu0 0
    %2899 = vmatpush1.bf16.msra.mxu0 0
    %2900 = vmatprep.subr.bf16.mxu0 0
    %2901 = vmatpush1.bf16.msra.mxu0 0
    %2902 = vmatprep.subr.bf16.mxu0 0
    %2903 = vmatpush1.bf16.msra.mxu0 0
    %2904 = vmatprep.subr.bf16.mxu0 0
    %2905 = vmatpush1.bf16.msra.mxu0 0
    %2906 = vmatprep.subr.bf16.mxu0 0
    %2907 = vmatpush1.bf16.msra.mxu0 0
    %2908 = vmatprep.subr.bf16.mxu0 0
    %2909 = vmatpush1.bf16.msra.mxu0 0
    %2910 = vmatprep.subr.bf16.mxu0 0
    %2911 = vmatpush1.bf16.msra.mxu0 0
    %2912 = vmatprep.subr.bf16.mxu0 0
    %2913 = vmatpush1.bf16.msra.mxu0 0
    %2914 = vmatprep.subr.bf16.mxu0 0
    %2915 = vmatpush1.bf16.msra.mxu0 0
    %2916 = vmatprep.subr.bf16.mxu0 0
    %2917 = vmatpush1.bf16.msra.mxu0 0
    %2918 = vmatprep.mubr.bf16.mxu0 0
    %2919 = vmatmul.mubr.bf16.gmra.mrb[0].mxu0 %v2713
    %v2920 = vpop.f32.mrb[0].mxu0
    %v2921 = vadd.f32 %v2710, %v2920
    %v2922 = vpop.f32.mrb[0].mxu0
    %v2923 = vadd.f32 %v2710, %v2922
    %v2924 = vpop.f32.mrb[0].mxu0
    %v2925 = vpop.f32.mrb[0].mxu0
    %2926 = vdwg.mxu0
    %2927 = vmatprep.subr.bf16.mxu0 %v2634
    %2928 = vmatpush1.bf16.msra.mxu0 %v2633
    %2929 = vmatprep.subr.bf16.mxu0 %v2650
    %2930 = vmatpush1.bf16.msra.mxu0 %v2649
    %2931 = vmatprep.subr.bf16.mxu0 %v2666
    %2932 = vmatpush1.bf16.msra.mxu0 %v2665
    %2933 = vmatprep.subr.bf16.mxu0 %v2682
    %2934 = vmatpush1.bf16.msra.mxu0 %v2681
    %2935 = vmatprep.subr.bf16.mxu0 %v2743
    %2936 = vmatpush1.bf16.msra.mxu0 %v2740
    %2937 = vmatprep.subr.bf16.mxu0 0
    %2938 = vmatpush1.bf16.msra.mxu0 0
    %2939 = vmatprep.subr.bf16.mxu0 0
    %2940 = vmatpush1.bf16.msra.mxu0 0
    %2941 = vmatprep.subr.bf16.mxu0 0
    %2942 = vmatpush1.bf16.msra.mxu0 0
    %2943 = vmatprep.subr.bf16.mxu0 0
    %2944 = vmatpush1.bf16.msra.mxu0 0
    %2945 = vmatprep.subr.bf16.mxu0 0
    %2946 = vmatpush1.bf16.msra.mxu0 0
    %2947 = vmatprep.subr.bf16.mxu0 0
    %2948 = vmatpush1.bf16.msra.mxu0 0
    %2949 = vmatprep.subr.bf16.mxu0 0
    %2950 = vmatpush1.bf16.msra.mxu0 0
    %2951 = vmatprep.subr.bf16.mxu0 0
    %2952 = vmatpush1.bf16.msra.mxu0 0
    %2953 = vmatprep.subr.bf16.mxu0 0
    %2954 = vmatpush1.bf16.msra.mxu0 0
    %2955 = vmatprep.subr.bf16.mxu0 0
    %2956 = vmatpush1.bf16.msra.mxu0 0
    %2957 = vmatprep.subr.bf16.mxu0 0
    %2958 = vmatpush1.bf16.msra.mxu0 0
    %2959 = vmatprep.mubr.bf16.mxu0 0
    %2960 = vmatmul.mubr.bf16.gmra.mrb[0].mxu0 %v2713
    %v2961 = vpop.f32.mrb[0].mxu0
    %v2962 = vadd.f32 %v2710, %v2961
    %v2963 = vpop.f32.mrb[0].mxu0
    %v2964 = vadd.f32 %v2710, %v2963
    %v2965 = vpop.f32.mrb[0].mxu0
    %v2966 = vpop.f32.mrb[0].mxu0
    %2967 = vdwg.mxu0
    %2968 = vmatprep.subr.bf16.mxu0 %v2636
    %2969 = vmatpush1.bf16.msra.mxu0 %v2635
    %2970 = vmatprep.subr.bf16.mxu0 %v2652
    %2971 = vmatpush1.bf16.msra.mxu0 %v2651
    %2972 = vmatprep.subr.bf16.mxu0 %v2668
    %2973 = vmatpush1.bf16.msra.mxu0 %v2667
    %2974 = vmatprep.subr.bf16.mxu0 %v2684
    %2975 = vmatpush1.bf16.msra.mxu0 %v2683
    %2976 = vmatprep.subr.bf16.mxu0 %v2749
    %2977 = vmatpush1.bf16.msra.mxu0 %v2746
    %2978 = vmatprep.subr.bf16.mxu0 0
    %2979 = vmatpush1.bf16.msra.mxu0 0
    %2980 = vmatprep.subr.bf16.mxu0 0
    %2981 = vmatpush1.bf16.msra.mxu0 0
    %2982 = vmatprep.subr.bf16.mxu0 0
    %2983 = vmatpush1.bf16.msra.mxu0 0
    %2984 = vmatprep.subr.bf16.mxu0 0
    %2985 = vmatpush1.bf16.msra.mxu0 0
    %2986 = vmatprep.subr.bf16.mxu0 0
    %2987 = vmatpush1.bf16.msra.mxu0 0
    %2988 = vmatprep.subr.bf16.mxu0 0
    %2989 = vmatpush1.bf16.msra.mxu0 0
    %2990 = vmatprep.subr.bf16.mxu0 0
    %2991 = vmatpush1.bf16.msra.mxu0 0
    %2992 = vmatprep.subr.bf16.mxu0 0
    %2993 = vmatpush1.bf16.msra.mxu0 0
    %2994 = vmatprep.subr.bf16.mxu0 0
    %2995 = vmatpush1.bf16.msra.mxu0 0
    %2996 = vmatprep.subr.bf16.mxu0 0
    %2997 = vmatpush1.bf16.msra.mxu0 0
    %2998 = vmatprep.subr.bf16.mxu0 0
    %2999 = vmatpush1.bf16.msra.mxu0 0
    %3000 = vmatprep.mubr.bf16.mxu0 0
    %3001 = vmatmul.mubr.bf16.gmra.mrb[0].mxu0 %v2713
    %v3002 = vpop.f32.mrb[0].mxu0
    %v3003 = vadd.f32 %v2710, %v3002
    %v3004 = vpop.f32.mrb[0].mxu0
    %v3005 = vadd.f32 %v2710, %v3004
    %v3006 = vpop.f32.mrb[0].mxu0
    %v3007 = vpop.f32.mrb[0].mxu0
    %3008 = vdwg.mxu0
    %3009 = vmatprep.subr.bf16.mxu0 %v2638
    %3010 = vmatpush1.bf16.msra.mxu0 %v2637
    %3011 = vmatprep.subr.bf16.mxu0 %v2654
    %3012 = vmatpush1.bf16.msra.mxu0 %v2653
    %3013 = vmatprep.subr.bf16.mxu0 %v2670
    %3014 = vmatpush1.bf16.msra.mxu0 %v2669
    %3015 = vmatprep.subr.bf16.mxu0 %v2686
    %3016 = vmatpush1.bf16.msra.mxu0 %v2685
    %3017 = vmatprep.subr.bf16.mxu0 %v2755
    %3018 = vmatpush1.bf16.msra.mxu0 %v2752
    %3019 = vmatprep.subr.bf16.mxu0 0
    %3020 = vmatpush1.bf16.msra.mxu0 0
    %3021 = vmatprep.subr.bf16.mxu0 0
    %3022 = vmatpush1.bf16.msra.mxu0 0
    %3023 = vmatprep.subr.bf16.mxu0 0
    %3024 = vmatpush1.bf16.msra.mxu0 0
    %3025 = vmatprep.subr.bf16.mxu0 0
    %3026 = vmatpush1.bf16.msra.mxu0 0
    %3027 = vmatprep.subr.bf16.mxu0 0
    %3028 = vmatpush1.bf16.msra.mxu0 0
    %3029 = vmatprep.subr.bf16.mxu0 0
    %3030 = vmatpush1.bf16.msra.mxu0 0
    %3031 = vmatprep.subr.bf16.mxu0 0
    %3032 = vmatpush1.bf16.msra.mxu0 0
    %3033 = vmatprep.subr.bf16.mxu0 0
    %3034 = vmatpush1.bf16.msra.mxu0 0
    %3035 = vmatprep.subr.bf16.mxu0 0
    %3036 = vmatpush1.bf16.msra.mxu0 0
    %3037 = vmatprep.subr.bf16.mxu0 0
    %3038 = vmatpush1.bf16.msra.mxu0 0
    %3039 = vmatprep.subr.bf16.mxu0 0
    %3040 = vmatpush1.bf16.msra.mxu0 0
    %3041 = vmatprep.mubr.bf16.mxu0 0
    %3042 = vmatmul.mubr.bf16.gmra.mrb[0].mxu0 %v2713
    %v3043 = vpop.f32.mrb[0].mxu0
    %v3044 = vadd.f32 %v2710, %v3043
    %v3045 = vpop.f32.mrb[0].mxu0
    %v3046 = vadd.f32 %v2710, %v3045
    %v3047 = vpop.f32.mrb[0].mxu0
    %v3048 = vpop.f32.mrb[0].mxu0
    %3049 = vdwg.mxu0
    %3050 = vmatprep.subr.bf16.mxu0 %v2640
    %3051 = vmatpush1.bf16.msra.mxu0 %v2639
    %3052 = vmatprep.subr.bf16.mxu0 %v2656
    %3053 = vmatpush1.bf16.msra.mxu0 %v2655
    %3054 = vmatprep.subr.bf16.mxu0 %v2672
    %3055 = vmatpush1.bf16.msra.mxu0 %v2671
    %3056 = vmatprep.subr.bf16.mxu0 %v2688
    %3057 = vmatpush1.bf16.msra.mxu0 %v2687
    %3058 = vmatprep.subr.bf16.mxu0 %v2761
    %3059 = vmatpush1.bf16.msra.mxu0 %v2758
    %3060 = vmatprep.subr.bf16.mxu0 0
    %3061 = vmatpush1.bf16.msra.mxu0 0
    %3062 = vmatprep.subr.bf16.mxu0 0
    %3063 = vmatpush1.bf16.msra.mxu0 0
    %3064 = vmatprep.subr.bf16.mxu0 0
    %3065 = vmatpush1.bf16.msra.mxu0 0
    %3066 = vmatprep.subr.bf16.mxu0 0
    %3067 = vmatpush1.bf16.msra.mxu0 0
    %3068 = vmatprep.subr.bf16.mxu0 0
    %3069 = vmatpush1.bf16.msra.mxu0 0
    %3070 = vmatprep.subr.bf16.mxu0 0
    %3071 = vmatpush1.bf16.msra.mxu0 0
    %3072 = vmatprep.subr.bf16.mxu0 0
    %3073 = vmatpush1.bf16.msra.mxu0 0
    %3074 = vmatprep.subr.bf16.mxu0 0
    %3075 = vmatpush1.bf16.msra.mxu0 0
    %3076 = vmatprep.subr.bf16.mxu0 0
    %3077 = vmatpush1.bf16.msra.mxu0 0
    %3078 = vmatprep.subr.bf16.mxu0 0
    %3079 = vmatpush1.bf16.msra.mxu0 0
    %3080 = vmatprep.subr.bf16.mxu0 0
    %3081 = vmatpush1.bf16.msra.mxu0 0
    %3082 = vmatprep.mubr.bf16.mxu0 0
    %3083 = vmatmul.mubr.bf16.gmra.mrb[0].mxu0 %v2713
    %v3084 = vpop.f32.mrb[0].mxu0
    %v3085 = vadd.f32 %v2710, %v3084
    %v3086 = vpop.f32.mrb[0].mxu0
    %v3087 = vadd.f32 %v2710, %v3086
    %v3088 = vpop.f32.mrb[0].mxu0
    %v3089 = vpop.f32.mrb[0].mxu0
    %3090 = vdwg.mxu0
    %v3091 = vmax.f32 %v2798, 0.0
    %v3092 = vmax.f32 %v2800, 0.0
    %v3093 = vmax.f32 %v2839, 0.0
    %v3094 = vmax.f32 %v2841, 0.0
    %v3095 = vmax.f32 %v2880, 0.0
    %v3096 = vmax.f32 %v2882, 0.0
    %v3097 = vmax.f32 %v2921, 0.0
    %v3098 = vmax.f32 %v2923, 0.0
    %v3099 = vmax.f32 %v2962, 0.0
    %v3100 = vmax.f32 %v2964, 0.0
    %v3101 = vmax.f32 %v3003, 0.0
    %v3102 = vmax.f32 %v3005, 0.0
    %v3103 = vmax.f32 %v3044, 0.0
    %v3104 = vmax.f32 %v3046, 0.0
    %v3105 = vmax.f32 %v3085, 0.0
    %v3106 = vmax.f32 %v3087, 0.0
    %3123 = vrot.lane.b32.xlu0 %v3091, 127
    %v3124 = vpop.permute.xlu0 %3123
    %3125 = vrot.lane.b32.xlu0 %v3092, 127
    %v3126 = vpop.permute.xlu0 %3125
    %3127 = vrot.lane.b32.xlu0 %v3093, 127
    %v3128 = vpop.permute.xlu0 %3127
    %3129 = vrot.lane.b32.xlu0 %v3094, 127
    %v3130 = vpop.permute.xlu0 %3129
    %3131 = vrot.lane.b32.xlu0 %v3095, 127
    %v3132 = vpop.permute.xlu0 %3131
    %3133 = vrot.lane.b32.xlu0 %v3096, 127
    %v3134 = vpop.permute.xlu0 %3133
    %3135 = vrot.lane.b32.xlu0 %v3097, 127
    %v3136 = vpop.permute.xlu0 %3135
    %3137 = vrot.lane.b32.xlu0 %v3098, 127
    %v3138 = vpop.permute.xlu0 %3137
    %3139 = vrot.lane.b32.xlu0 %v3099, 127
    %v3140 = vpop.permute.xlu0 %3139
    %3141 = vrot.lane.b32.xlu0 %v3100, 127
    %v3142 = vpop.permute.xlu0 %3141
    %3143 = vrot.lane.b32.xlu0 %v3101, 127
    %v3144 = vpop.permute.xlu0 %3143
    %3145 = vrot.lane.b32.xlu0 %v3102, 127
    %v3146 = vpop.permute.xlu0 %3145
    %3147 = vrot.lane.b32.xlu0 %v3103, 127
    %v3148 = vpop.permute.xlu0 %3147
    %3149 = vrot.lane.b32.xlu0 %v3104, 127
    %v3150 = vpop.permute.xlu0 %3149
    %3151 = vrot.lane.b32.xlu0 %v3105, 127
    %v3152 = vpop.permute.xlu0 %3151
    %3153 = vrot.lane.b32.xlu0 %v3106, 127
    %v3154 = vpop.permute.xlu0 %3153
    %v3155 = vsel %vm1091, %v3124, %v3126
    %v3156 = vsel %vm1091, %v3126, %v3128
    %v3157 = vsel %vm1091, %v3128, %v3130
    %v3158 = vsel %vm1091, %v3130, %v3132
    %v3159 = vsel %vm1091, %v3132, %v3134
    %v3160 = vsel %vm1091, %v3134, %v3136
    %v3161 = vsel %vm1091, %v3136, %v3138
    %v3162 = vsel %vm1091, %v3138, %v3140
    %v3163 = vsel %vm1091, %v3140, %v3142
    %v3164 = vsel %vm1091, %v3142, %v3144
    %v3165 = vsel %vm1091, %v3144, %v3146
    %v3166 = vsel %vm1091, %v3146, %v3148
    %v3167 = vsel %vm1091, %v3148, %v3150
    %v3168 = vsel %vm1091, %v3150, %v3152
    %v3169 = vsel %vm1091, %v3152, %v3154
    %v3170 = vsel %vm1091, %v3154, %v1090
    %v3187 = vmax.f32 %v3091, %v3155
    %v3188 = vmax.f32 %v3092, %v3156
    %v3189 = vmax.f32 %v3093, %v3157
    %v3190 = vmax.f32 %v3094, %v3158
    %v3191 = vmax.f32 %v3095, %v3159
    %v3192 = vmax.f32 %v3096, %v3160
    %v3193 = vmax.f32 %v3097, %v3161
    %v3194 = vmax.f32 %v3098, %v3162
    %v3195 = vmax.f32 %v3099, %v3163
    %v3196 = vmax.f32 %v3100, %v3164
    %v3197 = vmax.f32 %v3101, %v3165
    %v3198 = vmax.f32 %v3102, %v3166
    %v3199 = vmax.f32 %v3103, %v3167
    %v3200 = vmax.f32 %v3104, %v3168
    %v3201 = vmax.f32 %v3105, %v3169
    %v3202 = vmax.f32 %v3106, %v3170
    %v3204 = vmax.f32 %v1090, 0.0
    %3222 = vrot.lane.b32.xlu0 %v3187, 96
    %v3223 = vpop.permute.xlu0 %3222
    %3224 = vrot.lane.b32.xlu0 %v3188, 96
    %v3225 = vpop.permute.xlu0 %3224
    %3226 = vrot.lane.b32.xlu0 %v3189, 96
    %v3227 = vpop.permute.xlu0 %3226
    %3228 = vrot.lane.b32.xlu0 %v3190, 96
    %v3229 = vpop.permute.xlu0 %3228
    %3230 = vrot.lane.b32.xlu0 %v3191, 96
    %v3231 = vpop.permute.xlu0 %3230
    %3232 = vrot.lane.b32.xlu0 %v3192, 96
    %v3233 = vpop.permute.xlu0 %3232
    %3234 = vrot.lane.b32.xlu0 %v3193, 96
    %v3235 = vpop.permute.xlu0 %3234
    %3236 = vrot.lane.b32.xlu0 %v3194, 96
    %v3237 = vpop.permute.xlu0 %3236
    %3238 = vrot.lane.b32.xlu0 %v3195, 96
    %v3239 = vpop.permute.xlu0 %3238
    %3240 = vrot.lane.b32.xlu0 %v3196, 96
    %v3241 = vpop.permute.xlu0 %3240
    %3242 = vrot.lane.b32.xlu0 %v3197, 96
    %v3243 = vpop.permute.xlu0 %3242
    %3244 = vrot.lane.b32.xlu0 %v3198, 96
    %v3245 = vpop.permute.xlu0 %3244
    %3246 = vrot.lane.b32.xlu0 %v3199, 96
    %v3247 = vpop.permute.xlu0 %3246
    %3248 = vrot.lane.b32.xlu0 %v3200, 96
    %v3249 = vpop.permute.xlu0 %3248
    %3250 = vrot.lane.b32.xlu0 %v3201, 96
    %v3251 = vpop.permute.xlu0 %3250
    %3252 = vrot.lane.b32.xlu0 %v3202, 96
    %v3253 = vpop.permute.xlu0 %3252
    %3254 = vrot.lane.b32.xlu0 %v3204, 96
    %v3255 = vpop.permute.xlu0 %3254
    %v3256 = vsel %vm1321, %v3223, %v3225
    %v3257 = vsel %vm1321, %v3225, %v3227
    %v3258 = vsel %vm1321, %v3227, %v3229
    %v3259 = vsel %vm1321, %v3229, %v3231
    %v3260 = vsel %vm1321, %v3231, %v3233
    %v3261 = vsel %vm1321, %v3233, %v3235
    %v3262 = vsel %vm1321, %v3235, %v3237
    %v3263 = vsel %vm1321, %v3237, %v3239
    %v3264 = vsel %vm1321, %v3239, %v3241
    %v3265 = vsel %vm1321, %v3241, %v3243
    %v3266 = vsel %vm1321, %v3243, %v3245
    %v3267 = vsel %vm1321, %v3245, %v3247
    %v3268 = vsel %vm1321, %v3247, %v3249
    %v3269 = vsel %vm1321, %v3249, %v3251
    %v3270 = vsel %vm1321, %v3251, %v3253
    %v3271 = vsel %vm1321, %v3253, %v3255
    %v3288 = vmax.f32 %v3187, %v3256
    %v3289 = vmax.f32 %v3188, %v3257
    %v3290 = vmax.f32 %v3189, %v3258
    %v3291 = vmax.f32 %v3190, %v3259
    %v3292 = vmax.f32 %v3191, %v3260
    %v3293 = vmax.f32 %v3192, %v3261
    %v3294 = vmax.f32 %v3193, %v3262
    %v3295 = vmax.f32 %v3194, %v3263
    %v3296 = vmax.f32 %v3195, %v3264
    %v3297 = vmax.f32 %v3196, %v3265
    %v3298 = vmax.f32 %v3197, %v3266
    %v3299 = vmax.f32 %v3198, %v3267
    %v3300 = vmax.f32 %v3199, %v3268
    %v3301 = vmax.f32 %v3200, %v3269
    %v3302 = vmax.f32 %v3201, %v3270
    %v3303 = vmax.f32 %v3202, %v3271
    %v3304 = vpack.c.bf16 %v3288, %v3288
    %v3305 = vpack.c.bf16 %v3289, %v3289
    %v3306 = vpack.c.bf16 %v3290, %v3290
    %v3307 = vpack.c.bf16 %v3291, %v3291
    %v3308 = vpack.c.bf16 %v3292, %v3292
    %v3309 = vpack.c.bf16 %v3293, %v3293
    %v3310 = vpack.c.bf16 %v3294, %v3294
    %v3311 = vpack.c.bf16 %v3295, %v3295
    %v3312 = vpack.c.bf16 %v3296, %v3296
    %v3313 = vpack.c.bf16 %v3297, %v3297
    %v3314 = vpack.c.bf16 %v3298, %v3298
    %v3315 = vpack.c.bf16 %v3299, %v3299
    %v3316 = vpack.c.bf16 %v3300, %v3300
    %v3317 = vpack.c.bf16 %v3301, %v3301
    %v3318 = vpack.c.bf16 %v3302, %v3302
    %v3319 = vpack.c.bf16 %v3303, %v3303
    %v3320 = vld [vmem:[#allocation20] sm:$0xff]
    %v3321 = vld [vmem:[#allocation20 + $0x8] sm:$0xff]
    %v3322 = vld [vmem:[#allocation20 + $0x10] sm:$0xff]
    %v3323 = vld [vmem:[#allocation20 + $0x18] sm:$0xff]
    %v3324 = vld [vmem:[#allocation20 + $0x20] sm:$0xff]
    %v3325 = vld [vmem:[#allocation20 + $0x28] sm:$0xff]
    %v3326 = vld [vmem:[#allocation20 + $0x30] sm:$0xff]
    %v3327 = vld [vmem:[#allocation20 + $0x38] sm:$0xff]
    %v3328 = vld [vmem:[#allocation20 + $0x40] sm:$0xff]
    %v3329 = vld [vmem:[#allocation20 + $0x48] sm:$0xff]
    %v3330 = vld [vmem:[#allocation20 + $0x50] sm:$0xff]
    %v3331 = vld [vmem:[#allocation20 + $0x58] sm:$0xff]
    %v3332 = vld [vmem:[#allocation20 + $0x60] sm:$0xff]
    %v3333 = vld [vmem:[#allocation20 + $0x68] sm:$0xff]
    %v3334 = vld [vmem:[#allocation20 + $0x70] sm:$0xff]
    %v3335 = vld [vmem:[#allocation20 + $0x78] sm:$0xff]
    %v3336 = vld [vmem:[#allocation20 + $0x80] sm:$0xff]
    %v3337 = vld [vmem:[#allocation20 + $0x88] sm:$0xff]
    %v3338 = vld [vmem:[#allocation20 + $0x90] sm:$0xff]
    %v3339 = vld [vmem:[#allocation20 + $0x98] sm:$0xff]
    %v3340 = vld [vmem:[#allocation20 + $0xa0] sm:$0xff]
    %v3341 = vld [vmem:[#allocation20 + $0xa8] sm:$0xff]
    %v3342 = vld [vmem:[#allocation20 + $0xb0] sm:$0xff]
    %v3343 = vld [vmem:[#allocation20 + $0xb8] sm:$0xff]
    %v3344 = vld [vmem:[#allocation20 + $0xc0] sm:$0xff]
    %v3345 = vld [vmem:[#allocation20 + $0xc8] sm:$0xff]
    %v3346 = vld [vmem:[#allocation20 + $0xd0] sm:$0xff]
    %v3347 = vld [vmem:[#allocation20 + $0xd8] sm:$0xff]
    %v3348 = vld [vmem:[#allocation20 + $0xe0] sm:$0xff]
    %v3349 = vld [vmem:[#allocation20 + $0xe8] sm:$0xff]
    %v3350 = vld [vmem:[#allocation20 + $0xf0] sm:$0xff]
    %v3351 = vld [vmem:[#allocation20 + $0xf8] sm:$0xff]
    %v3352 = vld [vmem:[#allocation20 + $0x100] sm:$0xff]
    %v3353 = vld [vmem:[#allocation20 + $0x108] sm:$0xff]
    %v3354 = vld [vmem:[#allocation20 + $0x110] sm:$0xff]
    %v3355 = vld [vmem:[#allocation20 + $0x118] sm:$0xff]
    %v3356 = vld [vmem:[#allocation20 + $0x120] sm:$0xff]
    %v3357 = vld [vmem:[#allocation20 + $0x128] sm:$0xff]
    %v3358 = vld [vmem:[#allocation20 + $0x130] sm:$0xff]
    %v3359 = vld [vmem:[#allocation20 + $0x138] sm:$0xff]
    %v3360 = vld [vmem:[#allocation20 + $0x140] sm:$0xff]
    %v3361 = vld [vmem:[#allocation20 + $0x148] sm:$0xff]
    %v3362 = vld [vmem:[#allocation20 + $0x150] sm:$0xff]
    %v3363 = vld [vmem:[#allocation20 + $0x158] sm:$0xff]
    %v3364 = vld [vmem:[#allocation20 + $0x160] sm:$0xff]
    %v3365 = vld [vmem:[#allocation20 + $0x168] sm:$0xff]
    %v3366 = vld [vmem:[#allocation20 + $0x170] sm:$0xff]
    %v3367 = vld [vmem:[#allocation20 + $0x178] sm:$0xff]
    %v3368 = vld [vmem:[#allocation20 + $0x180] sm:$0xff]
    %v3369 = vld [vmem:[#allocation20 + $0x188] sm:$0xff]
    %v3370 = vld [vmem:[#allocation20 + $0x190] sm:$0xff]
    %v3371 = vld [vmem:[#allocation20 + $0x198] sm:$0xff]
    %v3372 = vld [vmem:[#allocation20 + $0x1a0] sm:$0xff]
    %v3373 = vld [vmem:[#allocation20 + $0x1a8] sm:$0xff]
    %v3374 = vld [vmem:[#allocation20 + $0x1b0] sm:$0xff]
    %v3375 = vld [vmem:[#allocation20 + $0x1b8] sm:$0xff]
    %v3376 = vld [vmem:[#allocation20 + $0x1c0] sm:$0xff]
    %v3377 = vld [vmem:[#allocation20 + $0x1c8] sm:$0xff]
    %v3378 = vld [vmem:[#allocation20 + $0x1d0] sm:$0xff]
    %v3379 = vld [vmem:[#allocation20 + $0x1d8] sm:$0xff]
    %v3380 = vld [vmem:[#allocation20 + $0x1e0] sm:$0xff]
    %v3381 = vld [vmem:[#allocation20 + $0x1e8] sm:$0xff]
    %v3382 = vld [vmem:[#allocation20 + $0x1f0] sm:$0xff]
    %v3383 = vld [vmem:[#allocation20 + $0x1f8] sm:$0xff]
    %v3384 = vld [vmem:[#allocation20 + $0x200] sm:$0xff]
    %v3385 = vld [vmem:[#allocation20 + $0x208] sm:$0xff]
    %v3386 = vld [vmem:[#allocation20 + $0x210] sm:$0xff]
    %v3387 = vld [vmem:[#allocation20 + $0x218] sm:$0xff]
    %v3388 = vld [vmem:[#allocation20 + $0x220] sm:$0xff]
    %v3389 = vld [vmem:[#allocation20 + $0x228] sm:$0xff]
    %v3390 = vld [vmem:[#allocation20 + $0x230] sm:$0xff]
    %v3391 = vld [vmem:[#allocation20 + $0x238] sm:$0xff]
    %v3392 = vld [vmem:[#allocation20 + $0x240] sm:$0xff]
    %v3393 = vld [vmem:[#allocation20 + $0x248] sm:$0xff]
    %v3394 = vld [vmem:[#allocation20 + $0x250] sm:$0xff]
    %v3395 = vld [vmem:[#allocation20 + $0x258] sm:$0xff]
    %v3396 = vld [vmem:[#allocation20 + $0x260] sm:$0xff]
    %v3397 = vld [vmem:[#allocation20 + $0x268] sm:$0xff]
    %v3398 = vld [vmem:[#allocation20 + $0x270] sm:$0xff]
    %v3399 = vld [vmem:[#allocation20 + $0x278] sm:$0xff]
    %v3400 = vld [vmem:[#allocation20 + $0x280] sm:$0xff]
    %v3401 = vld [vmem:[#allocation20 + $0x288] sm:$0xff]
    %v3402 = vld [vmem:[#allocation20 + $0x290] sm:$0xff]
    %v3403 = vld [vmem:[#allocation20 + $0x298] sm:$0xff]
    %v3404 = vld [vmem:[#allocation20 + $0x2a0] sm:$0xff]
    %v3405 = vld [vmem:[#allocation20 + $0x2a8] sm:$0xff]
    %v3406 = vld [vmem:[#allocation20 + $0x2b0] sm:$0xff]
    %v3407 = vld [vmem:[#allocation20 + $0x2b8] sm:$0xff]
    %v3408 = vld [vmem:[#allocation20 + $0x2c0] sm:$0xff]
    %v3409 = vld [vmem:[#allocation20 + $0x2c8] sm:$0xff]
    %v3410 = vld [vmem:[#allocation20 + $0x2d0] sm:$0xff]
    %v3411 = vld [vmem:[#allocation20 + $0x2d8] sm:$0xff]
    %v3412 = vld [vmem:[#allocation20 + $0x2e0] sm:$0xff]
    %v3413 = vld [vmem:[#allocation20 + $0x2e8] sm:$0xff]
    %v3414 = vld [vmem:[#allocation20 + $0x2f0] sm:$0xff]
    %v3415 = vld [vmem:[#allocation20 + $0x2f8] sm:$0xff]
    %v3416 = vld [vmem:[#allocation20 + $0x300] sm:$0xff]
    %v3417 = vld [vmem:[#allocation20 + $0x308] sm:$0xff]
    %v3418 = vld [vmem:[#allocation20 + $0x310] sm:$0xff]
    %v3419 = vld [vmem:[#allocation20 + $0x318] sm:$0xff]
    %v3420 = vld [vmem:[#allocation20 + $0x320] sm:$0xff]
    %v3421 = vld [vmem:[#allocation20 + $0x328] sm:$0xff]
    %v3422 = vld [vmem:[#allocation20 + $0x330] sm:$0xff]
    %v3423 = vld [vmem:[#allocation20 + $0x338] sm:$0xff]
    %v3424 = vld [vmem:[#allocation20 + $0x340] sm:$0xff]
    %v3425 = vld [vmem:[#allocation20 + $0x348] sm:$0xff]
    %v3426 = vld [vmem:[#allocation20 + $0x350] sm:$0xff]
    %v3427 = vld [vmem:[#allocation20 + $0x358] sm:$0xff]
    %v3428 = vld [vmem:[#allocation20 + $0x360] sm:$0xff]
    %v3429 = vld [vmem:[#allocation20 + $0x368] sm:$0xff]
    %v3430 = vld [vmem:[#allocation20 + $0x370] sm:$0xff]
    %v3431 = vld [vmem:[#allocation20 + $0x378] sm:$0xff]
    %v3432 = vld [vmem:[#allocation20 + $0x380] sm:$0xff]
    %v3433 = vld [vmem:[#allocation20 + $0x388] sm:$0xff]
    %v3434 = vld [vmem:[#allocation20 + $0x390] sm:$0xff]
    %v3435 = vld [vmem:[#allocation20 + $0x398] sm:$0xff]
    %v3436 = vld [vmem:[#allocation20 + $0x3a0] sm:$0xff]
    %v3437 = vld [vmem:[#allocation20 + $0x3a8] sm:$0xff]
    %v3438 = vld [vmem:[#allocation20 + $0x3b0] sm:$0xff]
    %v3439 = vld [vmem:[#allocation20 + $0x3b8] sm:$0xff]
    %v3440 = vld [vmem:[#allocation20 + $0x3c0] sm:$0xff]
    %v3441 = vld [vmem:[#allocation20 + $0x3c8] sm:$0xff]
    %v3442 = vld [vmem:[#allocation20 + $0x3d0] sm:$0xff]
    %v3443 = vld [vmem:[#allocation20 + $0x3d8] sm:$0xff]
    %v3444 = vld [vmem:[#allocation20 + $0x3e0] sm:$0xff]
    %v3445 = vld [vmem:[#allocation20 + $0x3e8] sm:$0xff]
    %v3446 = vld [vmem:[#allocation20 + $0x3f0] sm:$0xff]
    %v3447 = vld [vmem:[#allocation20 + $0x3f8] sm:$0xff]
    %v3448 = vld [vmem:[#allocation20 + $0x400] sm:$0xff]
    %v3449 = vld [vmem:[#allocation20 + $0x408] sm:$0xff]
    %v3450 = vld [vmem:[#allocation20 + $0x410] sm:$0xff]
    %v3451 = vld [vmem:[#allocation20 + $0x418] sm:$0xff]
    %v3452 = vld [vmem:[#allocation20 + $0x420] sm:$0xff]
    %v3453 = vld [vmem:[#allocation20 + $0x428] sm:$0xff]
    %v3454 = vld [vmem:[#allocation20 + $0x430] sm:$0xff]
    %v3455 = vld [vmem:[#allocation20 + $0x438] sm:$0xff]
    %v3456 = vld [vmem:[#allocation20 + $0x440] sm:$0xff]
    %v3457 = vld [vmem:[#allocation20 + $0x448] sm:$0xff]
    %v3458 = vld [vmem:[#allocation20 + $0x450] sm:$0xff]
    %v3459 = vld [vmem:[#allocation20 + $0x458] sm:$0xff]
    %v3460 = vld [vmem:[#allocation20 + $0x460] sm:$0xff]
    %v3461 = vld [vmem:[#allocation20 + $0x468] sm:$0xff]
    %v3462 = vld [vmem:[#allocation20 + $0x470] sm:$0xff]
    %v3463 = vld [vmem:[#allocation20 + $0x478] sm:$0xff]
    %v3464 = vld [vmem:[#allocation20 + $0x480] sm:$0xff]
    %v3465 = vld [vmem:[#allocation20 + $0x488] sm:$0xff]
    %v3466 = vld [vmem:[#allocation20 + $0x490] sm:$0xff]
    %v3467 = vld [vmem:[#allocation20 + $0x498] sm:$0xff]
    %v3468 = vld [vmem:[#allocation20 + $0x4a0] sm:$0xff]
    %v3469 = vld [vmem:[#allocation20 + $0x4a8] sm:$0xff]
    %v3470 = vld [vmem:[#allocation20 + $0x4b0] sm:$0xff]
    %v3471 = vld [vmem:[#allocation20 + $0x4b8] sm:$0xff]
    %v3472 = vld [vmem:[#allocation20 + $0x4c0] sm:$0xff]
    %v3473 = vld [vmem:[#allocation20 + $0x4c8] sm:$0xff]
    %v3474 = vld [vmem:[#allocation20 + $0x4d0] sm:$0xff]
    %v3475 = vld [vmem:[#allocation20 + $0x4d8] sm:$0xff]
    %v3476 = vld [vmem:[#allocation20 + $0x4e0] sm:$0xff]
    %v3477 = vld [vmem:[#allocation20 + $0x4e8] sm:$0xff]
    %v3478 = vld [vmem:[#allocation20 + $0x4f0] sm:$0xff]
    %v3479 = vld [vmem:[#allocation20 + $0x4f8] sm:$0xff]
    %v3480 = vld [vmem:[#allocation20 + $0x500] sm:$0xff]
    %v3481 = vld [vmem:[#allocation20 + $0x508] sm:$0xff]
    %v3482 = vld [vmem:[#allocation20 + $0x510] sm:$0xff]
    %v3483 = vld [vmem:[#allocation20 + $0x518] sm:$0xff]
    %v3484 = vld [vmem:[#allocation20 + $0x520] sm:$0xff]
    %v3485 = vld [vmem:[#allocation20 + $0x528] sm:$0xff]
    %v3486 = vld [vmem:[#allocation20 + $0x530] sm:$0xff]
    %v3487 = vld [vmem:[#allocation20 + $0x538] sm:$0xff]
    %v3488 = vld [vmem:[#allocation20 + $0x540] sm:$0xff]
    %v3489 = vld [vmem:[#allocation20 + $0x548] sm:$0xff]
    %v3490 = vld [vmem:[#allocation20 + $0x550] sm:$0xff]
    %v3491 = vld [vmem:[#allocation20 + $0x558] sm:$0xff]
    %v3492 = vld [vmem:[#allocation20 + $0x560] sm:$0xff]
    %v3493 = vld [vmem:[#allocation20 + $0x568] sm:$0xff]
    %v3494 = vld [vmem:[#allocation20 + $0x570] sm:$0xff]
    %v3495 = vld [vmem:[#allocation20 + $0x578] sm:$0xff]
    %v3496 = vld [vmem:[#allocation20 + $0x580] sm:$0xff]
    %v3497 = vld [vmem:[#allocation20 + $0x588] sm:$0xff]
    %v3498 = vld [vmem:[#allocation20 + $0x590] sm:$0xff]
    %v3499 = vld [vmem:[#allocation20 + $0x598] sm:$0xff]
    %v3500 = vld [vmem:[#allocation20 + $0x5a0] sm:$0xff]
    %v3501 = vld [vmem:[#allocation20 + $0x5a8] sm:$0xff]
    %v3502 = vld [vmem:[#allocation20 + $0x5b0] sm:$0xff]
    %v3503 = vld [vmem:[#allocation20 + $0x5b8] sm:$0xff]
    %v3504 = vld [vmem:[#allocation20 + $0x5c0] sm:$0xff]
    %v3505 = vld [vmem:[#allocation20 + $0x5c8] sm:$0xff]
    %v3506 = vld [vmem:[#allocation20 + $0x5d0] sm:$0xff]
    %v3507 = vld [vmem:[#allocation20 + $0x5d8] sm:$0xff]
    %v3508 = vld [vmem:[#allocation20 + $0x5e0] sm:$0xff]
    %v3509 = vld [vmem:[#allocation20 + $0x5e8] sm:$0xff]
    %v3510 = vld [vmem:[#allocation20 + $0x5f0] sm:$0xff]
    %v3511 = vld [vmem:[#allocation20 + $0x5f8] sm:$0xff]
    %v3512 = vld [vmem:[#allocation20 + $0x600] sm:$0xff]
    %v3513 = vld [vmem:[#allocation20 + $0x608] sm:$0xff]
    %v3514 = vld [vmem:[#allocation20 + $0x610] sm:$0xff]
    %v3515 = vld [vmem:[#allocation20 + $0x618] sm:$0xff]
    %v3516 = vld [vmem:[#allocation20 + $0x620] sm:$0xff]
    %v3517 = vld [vmem:[#allocation20 + $0x628] sm:$0xff]
    %v3518 = vld [vmem:[#allocation20 + $0x630] sm:$0xff]
    %v3519 = vld [vmem:[#allocation20 + $0x638] sm:$0xff]
    %v3520 = vld [vmem:[#allocation20 + $0x640] sm:$0xff]
    %v3521 = vld [vmem:[#allocation20 + $0x648] sm:$0xff]
    %v3522 = vld [vmem:[#allocation20 + $0x650] sm:$0xff]
    %v3523 = vld [vmem:[#allocation20 + $0x658] sm:$0xff]
    %v3524 = vld [vmem:[#allocation20 + $0x660] sm:$0xff]
    %v3525 = vld [vmem:[#allocation20 + $0x668] sm:$0xff]
    %v3526 = vld [vmem:[#allocation20 + $0x670] sm:$0xff]
    %v3527 = vld [vmem:[#allocation20 + $0x678] sm:$0xff]
    %v3528 = vld [vmem:[#allocation20 + $0x680] sm:$0xff]
    %v3529 = vld [vmem:[#allocation20 + $0x688] sm:$0xff]
    %v3530 = vld [vmem:[#allocation20 + $0x690] sm:$0xff]
    %v3531 = vld [vmem:[#allocation20 + $0x698] sm:$0xff]
    %v3532 = vld [vmem:[#allocation20 + $0x6a0] sm:$0xff]
    %v3533 = vld [vmem:[#allocation20 + $0x6a8] sm:$0xff]
    %v3534 = vld [vmem:[#allocation20 + $0x6b0] sm:$0xff]
    %v3535 = vld [vmem:[#allocation20 + $0x6b8] sm:$0xff]
    %v3536 = vld [vmem:[#allocation20 + $0x6c0] sm:$0xff]
    %v3537 = vld [vmem:[#allocation20 + $0x6c8] sm:$0xff]
    %v3538 = vld [vmem:[#allocation20 + $0x6d0] sm:$0xff]
    %v3539 = vld [vmem:[#allocation20 + $0x6d8] sm:$0xff]
    %v3540 = vld [vmem:[#allocation20 + $0x6e0] sm:$0xff]
    %v3541 = vld [vmem:[#allocation20 + $0x6e8] sm:$0xff]
    %v3542 = vld [vmem:[#allocation20 + $0x6f0] sm:$0xff]
    %v3543 = vld [vmem:[#allocation20 + $0x6f8] sm:$0xff]
    %v3544 = vld [vmem:[#allocation20 + $0x700] sm:$0xff]
    %v3545 = vld [vmem:[#allocation20 + $0x708] sm:$0xff]
    %v3546 = vld [vmem:[#allocation20 + $0x710] sm:$0xff]
    %v3547 = vld [vmem:[#allocation20 + $0x718] sm:$0xff]
    %v3548 = vld [vmem:[#allocation20 + $0x720] sm:$0xff]
    %v3549 = vld [vmem:[#allocation20 + $0x728] sm:$0xff]
    %v3550 = vld [vmem:[#allocation20 + $0x730] sm:$0xff]
    %v3551 = vld [vmem:[#allocation20 + $0x738] sm:$0xff]
    %v3552 = vld [vmem:[#allocation20 + $0x740] sm:$0xff]
    %v3553 = vld [vmem:[#allocation20 + $0x748] sm:$0xff]
    %v3554 = vld [vmem:[#allocation20 + $0x750] sm:$0xff]
    %v3555 = vld [vmem:[#allocation20 + $0x758] sm:$0xff]
    %v3556 = vld [vmem:[#allocation20 + $0x760] sm:$0xff]
    %v3557 = vld [vmem:[#allocation20 + $0x768] sm:$0xff]
    %v3558 = vld [vmem:[#allocation20 + $0x770] sm:$0xff]
    %v3559 = vld [vmem:[#allocation20 + $0x778] sm:$0xff]
    %v3560 = vld [vmem:[#allocation20 + $0x780] sm:$0xff]
    %v3561 = vld [vmem:[#allocation20 + $0x788] sm:$0xff]
    %v3562 = vld [vmem:[#allocation20 + $0x790] sm:$0xff]
    %v3563 = vld [vmem:[#allocation20 + $0x798] sm:$0xff]
    %v3564 = vld [vmem:[#allocation20 + $0x7a0] sm:$0xff]
    %v3565 = vld [vmem:[#allocation20 + $0x7a8] sm:$0xff]
    %v3566 = vld [vmem:[#allocation20 + $0x7b0] sm:$0xff]
    %v3567 = vld [vmem:[#allocation20 + $0x7b8] sm:$0xff]
    %v3568 = vld [vmem:[#allocation20 + $0x7c0] sm:$0xff]
    %v3569 = vld [vmem:[#allocation20 + $0x7c8] sm:$0xff]
    %v3570 = vld [vmem:[#allocation20 + $0x7d0] sm:$0xff]
    %v3571 = vld [vmem:[#allocation20 + $0x7d8] sm:$0xff]
    %v3572 = vld [vmem:[#allocation20 + $0x7e0] sm:$0xff]
    %v3573 = vld [vmem:[#allocation20 + $0x7e8] sm:$0xff]
    %v3574 = vld [vmem:[#allocation20 + $0x7f0] sm:$0xff]
    %v3575 = vld [vmem:[#allocation20 + $0x7f8] sm:$0xff]
    %v3576 = vld [vmem:[#allocation20 + $0x800] sm:$0xff]
    %v3577 = vld [vmem:[#allocation20 + $0x808] sm:$0xff]
    %v3578 = vld [vmem:[#allocation20 + $0x810] sm:$0xff]
    %v3579 = vld [vmem:[#allocation20 + $0x818] sm:$0xff]
    %v3580 = vld [vmem:[#allocation20 + $0x820] sm:$0xff]
    %v3581 = vld [vmem:[#allocation20 + $0x828] sm:$0xff]
    %v3582 = vld [vmem:[#allocation20 + $0x830] sm:$0xff]
    %v3583 = vld [vmem:[#allocation20 + $0x838] sm:$0xff]
    %v3584 = vld [vmem:[#allocation20 + $0x840] sm:$0xff]
    %v3585 = vld [vmem:[#allocation20 + $0x848] sm:$0xff]
    %v3586 = vld [vmem:[#allocation20 + $0x850] sm:$0xff]
    %v3587 = vld [vmem:[#allocation20 + $0x858] sm:$0xff]
    %v3588 = vld [vmem:[#allocation20 + $0x860] sm:$0xff]
    %v3589 = vld [vmem:[#allocation20 + $0x868] sm:$0xff]
    %v3590 = vld [vmem:[#allocation20 + $0x870] sm:$0xff]
    %v3591 = vld [vmem:[#allocation20 + $0x878] sm:$0xff]
    %v3592 = vld [vmem:[#allocation20 + $0x880] sm:$0xff]
    %v3593 = vld [vmem:[#allocation20 + $0x888] sm:$0xff]
    %v3594 = vld [vmem:[#allocation20 + $0x890] sm:$0xff]
    %v3595 = vld [vmem:[#allocation20 + $0x898] sm:$0xff]
    %v3596 = vld [vmem:[#allocation20 + $0x8a0] sm:$0xff]
    %v3597 = vld [vmem:[#allocation20 + $0x8a8] sm:$0xff]
    %v3598 = vld [vmem:[#allocation20 + $0x8b0] sm:$0xff]
    %v3599 = vld [vmem:[#allocation20 + $0x8b8] sm:$0xff]
    %v3600 = vld [vmem:[#allocation20 + $0x8c0] sm:$0xff]
    %v3601 = vld [vmem:[#allocation20 + $0x8c8] sm:$0xff]
    %v3602 = vld [vmem:[#allocation20 + $0x8d0] sm:$0xff]
    %v3603 = vld [vmem:[#allocation20 + $0x8d8] sm:$0xff]
    %v3604 = vld [vmem:[#allocation20 + $0x8e0] sm:$0xff]
    %v3605 = vld [vmem:[#allocation20 + $0x8e8] sm:$0xff]
    %v3606 = vld [vmem:[#allocation20 + $0x8f0] sm:$0xff]
    %v3607 = vld [vmem:[#allocation20 + $0x8f8] sm:$0xff]
    %v3608 = vld [vmem:[#allocation20 + $0x900] sm:$0xff]
    %v3609 = vld [vmem:[#allocation20 + $0x908] sm:$0xff]
    %v3610 = vld [vmem:[#allocation20 + $0x910] sm:$0xff]
    %v3611 = vld [vmem:[#allocation20 + $0x918] sm:$0xff]
    %v3612 = vld [vmem:[#allocation20 + $0x920] sm:$0xff]
    %v3613 = vld [vmem:[#allocation20 + $0x928] sm:$0xff]
    %v3614 = vld [vmem:[#allocation20 + $0x930] sm:$0xff]
    %v3615 = vld [vmem:[#allocation20 + $0x938] sm:$0xff]
    %v3616 = vld [vmem:[#allocation20 + $0x940] sm:$0xff]
    %v3617 = vld [vmem:[#allocation20 + $0x948] sm:$0xff]
    %v3618 = vld [vmem:[#allocation20 + $0x950] sm:$0xff]
    %v3619 = vld [vmem:[#allocation20 + $0x958] sm:$0xff]
    %v3620 = vld [vmem:[#allocation20 + $0x960] sm:$0xff]
    %v3621 = vld [vmem:[#allocation20 + $0x968] sm:$0xff]
    %v3622 = vld [vmem:[#allocation20 + $0x970] sm:$0xff]
    %v3623 = vld [vmem:[#allocation20 + $0x978] sm:$0xff]
    %v3624 = vld [vmem:[#allocation20 + $0x980] sm:$0xff]
    %v3625 = vld [vmem:[#allocation20 + $0x988] sm:$0xff]
    %v3626 = vld [vmem:[#allocation20 + $0x990] sm:$0xff]
    %v3627 = vld [vmem:[#allocation20 + $0x998] sm:$0xff]
    %v3628 = vld [vmem:[#allocation20 + $0x9a0] sm:$0xff]
    %v3629 = vld [vmem:[#allocation20 + $0x9a8] sm:$0xff]
    %v3630 = vld [vmem:[#allocation20 + $0x9b0] sm:$0xff]
    %v3631 = vld [vmem:[#allocation20 + $0x9b8] sm:$0xff]
    %v3632 = vld [vmem:[#allocation20 + $0x9c0] sm:$0xff]
    %v3633 = vld [vmem:[#allocation20 + $0x9c8] sm:$0xff]
    %v3634 = vld [vmem:[#allocation20 + $0x9d0] sm:$0xff]
    %v3635 = vld [vmem:[#allocation20 + $0x9d8] sm:$0xff]
    %v3636 = vld [vmem:[#allocation20 + $0x9e0] sm:$0xff]
    %v3637 = vld [vmem:[#allocation20 + $0x9e8] sm:$0xff]
    %v3638 = vld [vmem:[#allocation20 + $0x9f0] sm:$0xff]
    %v3639 = vld [vmem:[#allocation20 + $0x9f8] sm:$0xff]
    %v3640 = vld [vmem:[#allocation20 + $0xa00] sm:$0xff]
    %v3641 = vld [vmem:[#allocation20 + $0xa08] sm:$0xff]
    %v3642 = vld [vmem:[#allocation20 + $0xa10] sm:$0xff]
    %v3643 = vld [vmem:[#allocation20 + $0xa18] sm:$0xff]
    %v3644 = vld [vmem:[#allocation20 + $0xa20] sm:$0xff]
    %v3645 = vld [vmem:[#allocation20 + $0xa28] sm:$0xff]
    %v3646 = vld [vmem:[#allocation20 + $0xa30] sm:$0xff]
    %v3647 = vld [vmem:[#allocation20 + $0xa38] sm:$0xff]
    %v3648 = vld [vmem:[#allocation20 + $0xa40] sm:$0xff]
    %v3649 = vld [vmem:[#allocation20 + $0xa48] sm:$0xff]
    %v3650 = vld [vmem:[#allocation20 + $0xa50] sm:$0xff]
    %v3651 = vld [vmem:[#allocation20 + $0xa58] sm:$0xff]
    %v3652 = vld [vmem:[#allocation20 + $0xa60] sm:$0xff]
    %v3653 = vld [vmem:[#allocation20 + $0xa68] sm:$0xff]
    %v3654 = vld [vmem:[#allocation20 + $0xa70] sm:$0xff]
    %v3655 = vld [vmem:[#allocation20 + $0xa78] sm:$0xff]
    %v3656 = vld [vmem:[#allocation20 + $0xa80] sm:$0xff]
    %v3657 = vld [vmem:[#allocation20 + $0xa88] sm:$0xff]
    %v3658 = vld [vmem:[#allocation20 + $0xa90] sm:$0xff]
    %v3659 = vld [vmem:[#allocation20 + $0xa98] sm:$0xff]
    %v3660 = vld [vmem:[#allocation20 + $0xaa0] sm:$0xff]
    %v3661 = vld [vmem:[#allocation20 + $0xaa8] sm:$0xff]
    %v3662 = vld [vmem:[#allocation20 + $0xab0] sm:$0xff]
    %v3663 = vld [vmem:[#allocation20 + $0xab8] sm:$0xff]
    %v3664 = vld [vmem:[#allocation20 + $0xac0] sm:$0xff]
    %v3665 = vld [vmem:[#allocation20 + $0xac8] sm:$0xff]
    %v3666 = vld [vmem:[#allocation20 + $0xad0] sm:$0xff]
    %v3667 = vld [vmem:[#allocation20 + $0xad8] sm:$0xff]
    %v3668 = vld [vmem:[#allocation20 + $0xae0] sm:$0xff]
    %v3669 = vld [vmem:[#allocation20 + $0xae8] sm:$0xff]
    %v3670 = vld [vmem:[#allocation20 + $0xaf0] sm:$0xff]
    %v3671 = vld [vmem:[#allocation20 + $0xaf8] sm:$0xff]
    %v3672 = vld [vmem:[#allocation20 + $0xb00] sm:$0xff]
    %v3673 = vld [vmem:[#allocation20 + $0xb08] sm:$0xff]
    %v3674 = vld [vmem:[#allocation20 + $0xb10] sm:$0xff]
    %v3675 = vld [vmem:[#allocation20 + $0xb18] sm:$0xff]
    %v3676 = vld [vmem:[#allocation20 + $0xb20] sm:$0xff]
    %v3677 = vld [vmem:[#allocation20 + $0xb28] sm:$0xff]
    %v3678 = vld [vmem:[#allocation20 + $0xb30] sm:$0xff]
    %v3679 = vld [vmem:[#allocation20 + $0xb38] sm:$0xff]
    %v3680 = vld [vmem:[#allocation20 + $0xb40] sm:$0xff]
    %v3681 = vld [vmem:[#allocation20 + $0xb48] sm:$0xff]
    %v3682 = vld [vmem:[#allocation20 + $0xb50] sm:$0xff]
    %v3683 = vld [vmem:[#allocation20 + $0xb58] sm:$0xff]
    %v3684 = vld [vmem:[#allocation20 + $0xb60] sm:$0xff]
    %v3685 = vld [vmem:[#allocation20 + $0xb68] sm:$0xff]
    %v3686 = vld [vmem:[#allocation20 + $0xb70] sm:$0xff]
    %v3687 = vld [vmem:[#allocation20 + $0xb78] sm:$0xff]
    %v3688 = vld [vmem:[#allocation20 + $0xb80] sm:$0xff]
    %v3689 = vld [vmem:[#allocation20 + $0xb88] sm:$0xff]
    %v3690 = vld [vmem:[#allocation20 + $0xb90] sm:$0xff]
    %v3691 = vld [vmem:[#allocation20 + $0xb98] sm:$0xff]
    %v3692 = vld [vmem:[#allocation20 + $0xba0] sm:$0xff]
    %v3693 = vld [vmem:[#allocation20 + $0xba8] sm:$0xff]
    %v3694 = vld [vmem:[#allocation20 + $0xbb0] sm:$0xff]
    %v3695 = vld [vmem:[#allocation20 + $0xbb8] sm:$0xff]
    %v3696 = vld [vmem:[#allocation20 + $0xbc0] sm:$0xff]
    %v3697 = vld [vmem:[#allocation20 + $0xbc8] sm:$0xff]
    %v3698 = vld [vmem:[#allocation20 + $0xbd0] sm:$0xff]
    %v3699 = vld [vmem:[#allocation20 + $0xbd8] sm:$0xff]
    %v3700 = vld [vmem:[#allocation20 + $0xbe0] sm:$0xff]
    %v3701 = vld [vmem:[#allocation20 + $0xbe8] sm:$0xff]
    %v3702 = vld [vmem:[#allocation20 + $0xbf0] sm:$0xff]
    %v3703 = vld [vmem:[#allocation20 + $0xbf8] sm:$0xff]
    %v3704 = vld [vmem:[#allocation20 + $0xc00] sm:$0xff]
    %v3705 = vld [vmem:[#allocation20 + $0xc08] sm:$0xff]
    %v3706 = vld [vmem:[#allocation20 + $0xc10] sm:$0xff]
    %v3707 = vld [vmem:[#allocation20 + $0xc18] sm:$0xff]
    %v3708 = vld [vmem:[#allocation20 + $0xc20] sm:$0xff]
    %v3709 = vld [vmem:[#allocation20 + $0xc28] sm:$0xff]
    %v3710 = vld [vmem:[#allocation20 + $0xc30] sm:$0xff]
    %v3711 = vld [vmem:[#allocation20 + $0xc38] sm:$0xff]
    %v3712 = vld [vmem:[#allocation20 + $0xc40] sm:$0xff]
    %v3713 = vld [vmem:[#allocation20 + $0xc48] sm:$0xff]
    %v3714 = vld [vmem:[#allocation20 + $0xc50] sm:$0xff]
    %v3715 = vld [vmem:[#allocation20 + $0xc58] sm:$0xff]
    %v3716 = vld [vmem:[#allocation20 + $0xc60] sm:$0xff]
    %v3717 = vld [vmem:[#allocation20 + $0xc68] sm:$0xff]
    %v3718 = vld [vmem:[#allocation20 + $0xc70] sm:$0xff]
    %v3719 = vld [vmem:[#allocation20 + $0xc78] sm:$0xff]
    %v3720 = vld [vmem:[#allocation20 + $0xc80] sm:$0xff]
    %v3721 = vld [vmem:[#allocation20 + $0xc88] sm:$0xff]
    %v3722 = vld [vmem:[#allocation20 + $0xc90] sm:$0xff]
    %v3723 = vld [vmem:[#allocation20 + $0xc98] sm:$0xff]
    %v3724 = vld [vmem:[#allocation20 + $0xca0] sm:$0xff]
    %v3725 = vld [vmem:[#allocation20 + $0xca8] sm:$0xff]
    %v3726 = vld [vmem:[#allocation20 + $0xcb0] sm:$0xff]
    %v3727 = vld [vmem:[#allocation20 + $0xcb8] sm:$0xff]
    %v3728 = vld [vmem:[#allocation20 + $0xcc0] sm:$0xff]
    %v3729 = vld [vmem:[#allocation20 + $0xcc8] sm:$0xff]
    %v3730 = vld [vmem:[#allocation20 + $0xcd0] sm:$0xff]
    %v3731 = vld [vmem:[#allocation20 + $0xcd8] sm:$0xff]
    %v3732 = vld [vmem:[#allocation20 + $0xce0] sm:$0xff]
    %v3733 = vld [vmem:[#allocation20 + $0xce8] sm:$0xff]
    %v3734 = vld [vmem:[#allocation20 + $0xcf0] sm:$0xff]
    %v3735 = vld [vmem:[#allocation20 + $0xcf8] sm:$0xff]
    %v3736 = vld [vmem:[#allocation20 + $0xd00] sm:$0xff]
    %v3737 = vld [vmem:[#allocation20 + $0xd08] sm:$0xff]
    %v3738 = vld [vmem:[#allocation20 + $0xd10] sm:$0xff]
    %v3739 = vld [vmem:[#allocation20 + $0xd18] sm:$0xff]
    %v3740 = vld [vmem:[#allocation20 + $0xd20] sm:$0xff]
    %v3741 = vld [vmem:[#allocation20 + $0xd28] sm:$0xff]
    %v3742 = vld [vmem:[#allocation20 + $0xd30] sm:$0xff]
    %v3743 = vld [vmem:[#allocation20 + $0xd38] sm:$0xff]
    %v3744 = vld [vmem:[#allocation20 + $0xd40] sm:$0xff]
    %v3745 = vld [vmem:[#allocation20 + $0xd48] sm:$0xff]
    %v3746 = vld [vmem:[#allocation20 + $0xd50] sm:$0xff]
    %v3747 = vld [vmem:[#allocation20 + $0xd58] sm:$0xff]
    %v3748 = vld [vmem:[#allocation20 + $0xd60] sm:$0xff]
    %v3749 = vld [vmem:[#allocation20 + $0xd68] sm:$0xff]
    %v3750 = vld [vmem:[#allocation20 + $0xd70] sm:$0xff]
    %v3751 = vld [vmem:[#allocation20 + $0xd78] sm:$0xff]
    %v3752 = vld [vmem:[#allocation20 + $0xd80] sm:$0xff]
    %v3753 = vld [vmem:[#allocation20 + $0xd88] sm:$0xff]
    %v3754 = vld [vmem:[#allocation20 + $0xd90] sm:$0xff]
    %v3755 = vld [vmem:[#allocation20 + $0xd98] sm:$0xff]
    %v3756 = vld [vmem:[#allocation20 + $0xda0] sm:$0xff]
    %v3757 = vld [vmem:[#allocation20 + $0xda8] sm:$0xff]
    %v3758 = vld [vmem:[#allocation20 + $0xdb0] sm:$0xff]
    %v3759 = vld [vmem:[#allocation20 + $0xdb8] sm:$0xff]
    %v3760 = vld [vmem:[#allocation20 + $0xdc0] sm:$0xff]
    %v3761 = vld [vmem:[#allocation20 + $0xdc8] sm:$0xff]
    %v3762 = vld [vmem:[#allocation20 + $0xdd0] sm:$0xff]
    %v3763 = vld [vmem:[#allocation20 + $0xdd8] sm:$0xff]
    %v3764 = vld [vmem:[#allocation20 + $0xde0] sm:$0xff]
    %v3765 = vld [vmem:[#allocation20 + $0xde8] sm:$0xff]
    %v3766 = vld [vmem:[#allocation20 + $0xdf0] sm:$0xff]
    %v3767 = vld [vmem:[#allocation20 + $0xdf8] sm:$0xff]
    %v3768 = vld [vmem:[#allocation20 + $0xe00] sm:$0xff]
    %v3769 = vld [vmem:[#allocation20 + $0xe08] sm:$0xff]
    %v3770 = vld [vmem:[#allocation20 + $0xe10] sm:$0xff]
    %v3771 = vld [vmem:[#allocation20 + $0xe18] sm:$0xff]
    %v3772 = vld [vmem:[#allocation20 + $0xe20] sm:$0xff]
    %v3773 = vld [vmem:[#allocation20 + $0xe28] sm:$0xff]
    %v3774 = vld [vmem:[#allocation20 + $0xe30] sm:$0xff]
    %v3775 = vld [vmem:[#allocation20 + $0xe38] sm:$0xff]
    %v3776 = vld [vmem:[#allocation20 + $0xe40] sm:$0xff]
    %v3777 = vld [vmem:[#allocation20 + $0xe48] sm:$0xff]
    %v3778 = vld [vmem:[#allocation20 + $0xe50] sm:$0xff]
    %v3779 = vld [vmem:[#allocation20 + $0xe58] sm:$0xff]
    %v3780 = vld [vmem:[#allocation20 + $0xe60] sm:$0xff]
    %v3781 = vld [vmem:[#allocation20 + $0xe68] sm:$0xff]
    %v3782 = vld [vmem:[#allocation20 + $0xe70] sm:$0xff]
    %v3783 = vld [vmem:[#allocation20 + $0xe78] sm:$0xff]
    %v3784 = vld [vmem:[#allocation20 + $0xe80] sm:$0xff]
    %v3785 = vld [vmem:[#allocation20 + $0xe88] sm:$0xff]
    %v3786 = vld [vmem:[#allocation20 + $0xe90] sm:$0xff]
    %v3787 = vld [vmem:[#allocation20 + $0xe98] sm:$0xff]
    %v3788 = vld [vmem:[#allocation20 + $0xea0] sm:$0xff]
    %v3789 = vld [vmem:[#allocation20 + $0xea8] sm:$0xff]
    %v3790 = vld [vmem:[#allocation20 + $0xeb0] sm:$0xff]
    %v3791 = vld [vmem:[#allocation20 + $0xeb8] sm:$0xff]
    %v3792 = vld [vmem:[#allocation20 + $0xec0] sm:$0xff]
    %v3793 = vld [vmem:[#allocation20 + $0xec8] sm:$0xff]
    %v3794 = vld [vmem:[#allocation20 + $0xed0] sm:$0xff]
    %v3795 = vld [vmem:[#allocation20 + $0xed8] sm:$0xff]
    %v3796 = vld [vmem:[#allocation20 + $0xee0] sm:$0xff]
    %v3797 = vld [vmem:[#allocation20 + $0xee8] sm:$0xff]
    %v3798 = vld [vmem:[#allocation20 + $0xef0] sm:$0xff]
    %v3799 = vld [vmem:[#allocation20 + $0xef8] sm:$0xff]
    %v3800 = vld [vmem:[#allocation20 + $0xf00] sm:$0xff]
    %v3801 = vld [vmem:[#allocation20 + $0xf08] sm:$0xff]
    %v3802 = vld [vmem:[#allocation20 + $0xf10] sm:$0xff]
    %v3803 = vld [vmem:[#allocation20 + $0xf18] sm:$0xff]
    %v3804 = vld [vmem:[#allocation20 + $0xf20] sm:$0xff]
    %v3805 = vld [vmem:[#allocation20 + $0xf28] sm:$0xff]
    %v3806 = vld [vmem:[#allocation20 + $0xf30] sm:$0xff]
    %v3807 = vld [vmem:[#allocation20 + $0xf38] sm:$0xff]
    %v3808 = vld [vmem:[#allocation20 + $0xf40] sm:$0xff]
    %v3809 = vld [vmem:[#allocation20 + $0xf48] sm:$0xff]
    %v3810 = vld [vmem:[#allocation20 + $0xf50] sm:$0xff]
    %v3811 = vld [vmem:[#allocation20 + $0xf58] sm:$0xff]
    %v3812 = vld [vmem:[#allocation20 + $0xf60] sm:$0xff]
    %v3813 = vld [vmem:[#allocation20 + $0xf68] sm:$0xff]
    %v3814 = vld [vmem:[#allocation20 + $0xf70] sm:$0xff]
    %v3815 = vld [vmem:[#allocation20 + $0xf78] sm:$0xff]
    %v3816 = vld [vmem:[#allocation20 + $0xf80] sm:$0xff]
    %v3817 = vld [vmem:[#allocation20 + $0xf88] sm:$0xff]
    %v3818 = vld [vmem:[#allocation20 + $0xf90] sm:$0xff]
    %v3819 = vld [vmem:[#allocation20 + $0xf98] sm:$0xff]
    %v3820 = vld [vmem:[#allocation20 + $0xfa0] sm:$0xff]
    %v3821 = vld [vmem:[#allocation20 + $0xfa8] sm:$0xff]
    %v3822 = vld [vmem:[#allocation20 + $0xfb0] sm:$0xff]
    %v3823 = vld [vmem:[#allocation20 + $0xfb8] sm:$0xff]
    %v3824 = vld [vmem:[#allocation20 + $0xfc0] sm:$0xff]
    %v3825 = vld [vmem:[#allocation20 + $0xfc8] sm:$0xff]
    %v3826 = vld [vmem:[#allocation20 + $0xfd0] sm:$0xff]
    %v3827 = vld [vmem:[#allocation20 + $0xfd8] sm:$0xff]
    %v3828 = vld [vmem:[#allocation20 + $0xfe0] sm:$0xff]
    %v3829 = vld [vmem:[#allocation20 + $0xfe8] sm:$0xff]
    %v3830 = vld [vmem:[#allocation20 + $0xff0] sm:$0xff]
    %v3831 = vld [vmem:[#allocation20 + $0xff8] sm:$0xff]
    %v4344 = vunpack.c.l.b16 %v3320
    %v4345 = vunpack.c.h.b16 %v3320
    %v4346 = vunpack.c.l.b16 %v3321
    %v4347 = vunpack.c.h.b16 %v3321
    %v4348 = vunpack.c.l.b16 %v3322
    %v4349 = vunpack.c.h.b16 %v3322
    %v4350 = vunpack.c.l.b16 %v3323
    %v4351 = vunpack.c.h.b16 %v3323
    %v4352 = vunpack.c.l.b16 %v3324
    %v4353 = vunpack.c.h.b16 %v3324
    %v4354 = vunpack.c.l.b16 %v3325
    %v4355 = vunpack.c.h.b16 %v3325
    %v4356 = vunpack.c.l.b16 %v3326
    %v4357 = vunpack.c.h.b16 %v3326
    %v4358 = vunpack.c.l.b16 %v3327
    %v4359 = vunpack.c.h.b16 %v3327
    %v4360 = vunpack.c.l.b16 %v3328
    %v4361 = vunpack.c.h.b16 %v3328
    %v4362 = vunpack.c.l.b16 %v3329
    %v4363 = vunpack.c.h.b16 %v3329
    %v4364 = vunpack.c.l.b16 %v3330
    %v4365 = vunpack.c.h.b16 %v3330
    %v4366 = vunpack.c.l.b16 %v3331
    %v4367 = vunpack.c.h.b16 %v3331
    %v4368 = vunpack.c.l.b16 %v3332
    %v4369 = vunpack.c.h.b16 %v3332
    %v4370 = vunpack.c.l.b16 %v3333
    %v4371 = vunpack.c.h.b16 %v3333
    %v4372 = vunpack.c.l.b16 %v3334
    %v4373 = vunpack.c.h.b16 %v3334
    %v4374 = vunpack.c.l.b16 %v3335
    %v4375 = vunpack.c.h.b16 %v3335
    %v4376 = vunpack.c.l.b16 %v3336
    %v4377 = vunpack.c.h.b16 %v3336
    %v4378 = vunpack.c.l.b16 %v3337
    %v4379 = vunpack.c.h.b16 %v3337
    %v4380 = vunpack.c.l.b16 %v3338
    %v4381 = vunpack.c.h.b16 %v3338
    %v4382 = vunpack.c.l.b16 %v3339
    %v4383 = vunpack.c.h.b16 %v3339
    %v4384 = vunpack.c.l.b16 %v3340
    %v4385 = vunpack.c.h.b16 %v3340
    %v4386 = vunpack.c.l.b16 %v3341
    %v4387 = vunpack.c.h.b16 %v3341
    %v4388 = vunpack.c.l.b16 %v3342
    %v4389 = vunpack.c.h.b16 %v3342
    %v4390 = vunpack.c.l.b16 %v3343
    %v4391 = vunpack.c.h.b16 %v3343
    %v4392 = vunpack.c.l.b16 %v3344
    %v4393 = vunpack.c.h.b16 %v3344
    %v4394 = vunpack.c.l.b16 %v3345
    %v4395 = vunpack.c.h.b16 %v3345
    %v4396 = vunpack.c.l.b16 %v3346
    %v4397 = vunpack.c.h.b16 %v3346
    %v4398 = vunpack.c.l.b16 %v3347
    %v4399 = vunpack.c.h.b16 %v3347
    %v4400 = vunpack.c.l.b16 %v3348
    %v4401 = vunpack.c.h.b16 %v3348
    %v4402 = vunpack.c.l.b16 %v3349
    %v4403 = vunpack.c.h.b16 %v3349
    %v4404 = vunpack.c.l.b16 %v3350
    %v4405 = vunpack.c.h.b16 %v3350
    %v4406 = vunpack.c.l.b16 %v3351
    %v4407 = vunpack.c.h.b16 %v3351
    %v4408 = vunpack.c.l.b16 %v3352
    %v4409 = vunpack.c.h.b16 %v3352
    %v4410 = vunpack.c.l.b16 %v3353
    %v4411 = vunpack.c.h.b16 %v3353
    %v4412 = vunpack.c.l.b16 %v3354
    %v4413 = vunpack.c.h.b16 %v3354
    %v4414 = vunpack.c.l.b16 %v3355
    %v4415 = vunpack.c.h.b16 %v3355
    %v4416 = vunpack.c.l.b16 %v3356
    %v4417 = vunpack.c.h.b16 %v3356
    %v4418 = vunpack.c.l.b16 %v3357
    %v4419 = vunpack.c.h.b16 %v3357
    %v4420 = vunpack.c.l.b16 %v3358
    %v4421 = vunpack.c.h.b16 %v3358
    %v4422 = vunpack.c.l.b16 %v3359
    %v4423 = vunpack.c.h.b16 %v3359
    %v4424 = vunpack.c.l.b16 %v3360
    %v4425 = vunpack.c.h.b16 %v3360
    %v4426 = vunpack.c.l.b16 %v3361
    %v4427 = vunpack.c.h.b16 %v3361
    %v4428 = vunpack.c.l.b16 %v3362
    %v4429 = vunpack.c.h.b16 %v3362
    %v4430 = vunpack.c.l.b16 %v3363
    %v4431 = vunpack.c.h.b16 %v3363
    %v4432 = vunpack.c.l.b16 %v3364
    %v4433 = vunpack.c.h.b16 %v3364
    %v4434 = vunpack.c.l.b16 %v3365
    %v4435 = vunpack.c.h.b16 %v3365
    %v4436 = vunpack.c.l.b16 %v3366
    %v4437 = vunpack.c.h.b16 %v3366
    %v4438 = vunpack.c.l.b16 %v3367
    %v4439 = vunpack.c.h.b16 %v3367
    %v4440 = vunpack.c.l.b16 %v3368
    %v4441 = vunpack.c.h.b16 %v3368
    %v4442 = vunpack.c.l.b16 %v3369
    %v4443 = vunpack.c.h.b16 %v3369
    %v4444 = vunpack.c.l.b16 %v3370
    %v4445 = vunpack.c.h.b16 %v3370
    %v4446 = vunpack.c.l.b16 %v3371
    %v4447 = vunpack.c.h.b16 %v3371
    %v4448 = vunpack.c.l.b16 %v3372
    %v4449 = vunpack.c.h.b16 %v3372
    %v4450 = vunpack.c.l.b16 %v3373
    %v4451 = vunpack.c.h.b16 %v3373
    %v4452 = vunpack.c.l.b16 %v3374
    %v4453 = vunpack.c.h.b16 %v3374
    %v4454 = vunpack.c.l.b16 %v3375
    %v4455 = vunpack.c.h.b16 %v3375
    %v4456 = vunpack.c.l.b16 %v3376
    %v4457 = vunpack.c.h.b16 %v3376
    %v4458 = vunpack.c.l.b16 %v3377
    %v4459 = vunpack.c.h.b16 %v3377
    %v4460 = vunpack.c.l.b16 %v3378
    %v4461 = vunpack.c.h.b16 %v3378
    %v4462 = vunpack.c.l.b16 %v3379
    %v4463 = vunpack.c.h.b16 %v3379
    %v4464 = vunpack.c.l.b16 %v3380
    %v4465 = vunpack.c.h.b16 %v3380
    %v4466 = vunpack.c.l.b16 %v3381
    %v4467 = vunpack.c.h.b16 %v3381
    %v4468 = vunpack.c.l.b16 %v3382
    %v4469 = vunpack.c.h.b16 %v3382
    %v4470 = vunpack.c.l.b16 %v3383
    %v4471 = vunpack.c.h.b16 %v3383
    %v4472 = vunpack.c.l.b16 %v3384
    %v4473 = vunpack.c.h.b16 %v3384
    %v4474 = vunpack.c.l.b16 %v3385
    %v4475 = vunpack.c.h.b16 %v3385
    %v4476 = vunpack.c.l.b16 %v3386
    %v4477 = vunpack.c.h.b16 %v3386
    %v4478 = vunpack.c.l.b16 %v3387
    %v4479 = vunpack.c.h.b16 %v3387
    %v4480 = vunpack.c.l.b16 %v3388
    %v4481 = vunpack.c.h.b16 %v3388
    %v4482 = vunpack.c.l.b16 %v3389
    %v4483 = vunpack.c.h.b16 %v3389
    %v4484 = vunpack.c.l.b16 %v3390
    %v4485 = vunpack.c.h.b16 %v3390
    %v4486 = vunpack.c.l.b16 %v3391
    %v4487 = vunpack.c.h.b16 %v3391
    %v4488 = vunpack.c.l.b16 %v3392
    %v4489 = vunpack.c.h.b16 %v3392
    %v4490 = vunpack.c.l.b16 %v3393
    %v4491 = vunpack.c.h.b16 %v3393
    %v4492 = vunpack.c.l.b16 %v3394
    %v4493 = vunpack.c.h.b16 %v3394
    %v4494 = vunpack.c.l.b16 %v3395
    %v4495 = vunpack.c.h.b16 %v3395
    %v4496 = vunpack.c.l.b16 %v3396
    %v4497 = vunpack.c.h.b16 %v3396
    %v4498 = vunpack.c.l.b16 %v3397
    %v4499 = vunpack.c.h.b16 %v3397
    %v4500 = vunpack.c.l.b16 %v3398
    %v4501 = vunpack.c.h.b16 %v3398
    %v4502 = vunpack.c.l.b16 %v3399
    %v4503 = vunpack.c.h.b16 %v3399
    %v4504 = vunpack.c.l.b16 %v3400
    %v4505 = vunpack.c.h.b16 %v3400
    %v4506 = vunpack.c.l.b16 %v3401
    %v4507 = vunpack.c.h.b16 %v3401
    %v4508 = vunpack.c.l.b16 %v3402
    %v4509 = vunpack.c.h.b16 %v3402
    %v4510 = vunpack.c.l.b16 %v3403
    %v4511 = vunpack.c.h.b16 %v3403
    %v4512 = vunpack.c.l.b16 %v3404
    %v4513 = vunpack.c.h.b16 %v3404
    %v4514 = vunpack.c.l.b16 %v3405
    %v4515 = vunpack.c.h.b16 %v3405
    %v4516 = vunpack.c.l.b16 %v3406
    %v4517 = vunpack.c.h.b16 %v3406
    %v4518 = vunpack.c.l.b16 %v3407
    %v4519 = vunpack.c.h.b16 %v3407
    %v4520 = vunpack.c.l.b16 %v3408
    %v4521 = vunpack.c.h.b16 %v3408
    %v4522 = vunpack.c.l.b16 %v3409
    %v4523 = vunpack.c.h.b16 %v3409
    %v4524 = vunpack.c.l.b16 %v3410
    %v4525 = vunpack.c.h.b16 %v3410
    %v4526 = vunpack.c.l.b16 %v3411
    %v4527 = vunpack.c.h.b16 %v3411
    %v4528 = vunpack.c.l.b16 %v3412
    %v4529 = vunpack.c.h.b16 %v3412
    %v4530 = vunpack.c.l.b16 %v3413
    %v4531 = vunpack.c.h.b16 %v3413
    %v4532 = vunpack.c.l.b16 %v3414
    %v4533 = vunpack.c.h.b16 %v3414
    %v4534 = vunpack.c.l.b16 %v3415
    %v4535 = vunpack.c.h.b16 %v3415
    %v4536 = vunpack.c.l.b16 %v3416
    %v4537 = vunpack.c.h.b16 %v3416
    %v4538 = vunpack.c.l.b16 %v3417
    %v4539 = vunpack.c.h.b16 %v3417
    %v4540 = vunpack.c.l.b16 %v3418
    %v4541 = vunpack.c.h.b16 %v3418
    %v4542 = vunpack.c.l.b16 %v3419
    %v4543 = vunpack.c.h.b16 %v3419
    %v4544 = vunpack.c.l.b16 %v3420
    %v4545 = vunpack.c.h.b16 %v3420
    %v4546 = vunpack.c.l.b16 %v3421
    %v4547 = vunpack.c.h.b16 %v3421
    %v4548 = vunpack.c.l.b16 %v3422
    %v4549 = vunpack.c.h.b16 %v3422
    %v4550 = vunpack.c.l.b16 %v3423
    %v4551 = vunpack.c.h.b16 %v3423
    %v4552 = vunpack.c.l.b16 %v3424
    %v4553 = vunpack.c.h.b16 %v3424
    %v4554 = vunpack.c.l.b16 %v3425
    %v4555 = vunpack.c.h.b16 %v3425
    %v4556 = vunpack.c.l.b16 %v3426
    %v4557 = vunpack.c.h.b16 %v3426
    %v4558 = vunpack.c.l.b16 %v3427
    %v4559 = vunpack.c.h.b16 %v3427
    %v4560 = vunpack.c.l.b16 %v3428
    %v4561 = vunpack.c.h.b16 %v3428
    %v4562 = vunpack.c.l.b16 %v3429
    %v4563 = vunpack.c.h.b16 %v3429
    %v4564 = vunpack.c.l.b16 %v3430
    %v4565 = vunpack.c.h.b16 %v3430
    %v4566 = vunpack.c.l.b16 %v3431
    %v4567 = vunpack.c.h.b16 %v3431
    %v4568 = vunpack.c.l.b16 %v3432
    %v4569 = vunpack.c.h.b16 %v3432
    %v4570 = vunpack.c.l.b16 %v3433
    %v4571 = vunpack.c.h.b16 %v3433
    %v4572 = vunpack.c.l.b16 %v3434
    %v4573 = vunpack.c.h.b16 %v3434
    %v4574 = vunpack.c.l.b16 %v3435
    %v4575 = vunpack.c.h.b16 %v3435
    %v4576 = vunpack.c.l.b16 %v3436
    %v4577 = vunpack.c.h.b16 %v3436
    %v4578 = vunpack.c.l.b16 %v3437
    %v4579 = vunpack.c.h.b16 %v3437
    %v4580 = vunpack.c.l.b16 %v3438
    %v4581 = vunpack.c.h.b16 %v3438
    %v4582 = vunpack.c.l.b16 %v3439
    %v4583 = vunpack.c.h.b16 %v3439
    %v4584 = vunpack.c.l.b16 %v3440
    %v4585 = vunpack.c.h.b16 %v3440
    %v4586 = vunpack.c.l.b16 %v3441
    %v4587 = vunpack.c.h.b16 %v3441
    %v4588 = vunpack.c.l.b16 %v3442
    %v4589 = vunpack.c.h.b16 %v3442
    %v4590 = vunpack.c.l.b16 %v3443
    %v4591 = vunpack.c.h.b16 %v3443
    %v4592 = vunpack.c.l.b16 %v3444
    %v4593 = vunpack.c.h.b16 %v3444
    %v4594 = vunpack.c.l.b16 %v3445
    %v4595 = vunpack.c.h.b16 %v3445
    %v4596 = vunpack.c.l.b16 %v3446
    %v4597 = vunpack.c.h.b16 %v3446
    %v4598 = vunpack.c.l.b16 %v3447
    %v4599 = vunpack.c.h.b16 %v3447
    %v4600 = vunpack.c.l.b16 %v3448
    %v4601 = vunpack.c.h.b16 %v3448
    %v4602 = vunpack.c.l.b16 %v3449
    %v4603 = vunpack.c.h.b16 %v3449
    %v4604 = vunpack.c.l.b16 %v3450
    %v4605 = vunpack.c.h.b16 %v3450
    %v4606 = vunpack.c.l.b16 %v3451
    %v4607 = vunpack.c.h.b16 %v3451
    %v4608 = vunpack.c.l.b16 %v3452
    %v4609 = vunpack.c.h.b16 %v3452
    %v4610 = vunpack.c.l.b16 %v3453
    %v4611 = vunpack.c.h.b16 %v3453
    %v4612 = vunpack.c.l.b16 %v3454
    %v4613 = vunpack.c.h.b16 %v3454
    %v4614 = vunpack.c.l.b16 %v3455
    %v4615 = vunpack.c.h.b16 %v3455
    %v4616 = vunpack.c.l.b16 %v3456
    %v4617 = vunpack.c.h.b16 %v3456
    %v4618 = vunpack.c.l.b16 %v3457
    %v4619 = vunpack.c.h.b16 %v3457
    %v4620 = vunpack.c.l.b16 %v3458
    %v4621 = vunpack.c.h.b16 %v3458
    %v4622 = vunpack.c.l.b16 %v3459
    %v4623 = vunpack.c.h.b16 %v3459
    %v4624 = vunpack.c.l.b16 %v3460
    %v4625 = vunpack.c.h.b16 %v3460
    %v4626 = vunpack.c.l.b16 %v3461
    %v4627 = vunpack.c.h.b16 %v3461
    %v4628 = vunpack.c.l.b16 %v3462
    %v4629 = vunpack.c.h.b16 %v3462
    %v4630 = vunpack.c.l.b16 %v3463
    %v4631 = vunpack.c.h.b16 %v3463
    %v4632 = vunpack.c.l.b16 %v3464
    %v4633 = vunpack.c.h.b16 %v3464
    %v4634 = vunpack.c.l.b16 %v3465
    %v4635 = vunpack.c.h.b16 %v3465
    %v4636 = vunpack.c.l.b16 %v3466
    %v4637 = vunpack.c.h.b16 %v3466
    %v4638 = vunpack.c.l.b16 %v3467
    %v4639 = vunpack.c.h.b16 %v3467
    %v4640 = vunpack.c.l.b16 %v3468
    %v4641 = vunpack.c.h.b16 %v3468
    %v4642 = vunpack.c.l.b16 %v3469
    %v4643 = vunpack.c.h.b16 %v3469
    %v4644 = vunpack.c.l.b16 %v3470
    %v4645 = vunpack.c.h.b16 %v3470
    %v4646 = vunpack.c.l.b16 %v3471
    %v4647 = vunpack.c.h.b16 %v3471
    %v4648 = vunpack.c.l.b16 %v3472
    %v4649 = vunpack.c.h.b16 %v3472
    %v4650 = vunpack.c.l.b16 %v3473
    %v4651 = vunpack.c.h.b16 %v3473
    %v4652 = vunpack.c.l.b16 %v3474
    %v4653 = vunpack.c.h.b16 %v3474
    %v4654 = vunpack.c.l.b16 %v3475
    %v4655 = vunpack.c.h.b16 %v3475
    %v4656 = vunpack.c.l.b16 %v3476
    %v4657 = vunpack.c.h.b16 %v3476
    %v4658 = vunpack.c.l.b16 %v3477
    %v4659 = vunpack.c.h.b16 %v3477
    %v4660 = vunpack.c.l.b16 %v3478
    %v4661 = vunpack.c.h.b16 %v3478
    %v4662 = vunpack.c.l.b16 %v3479
    %v4663 = vunpack.c.h.b16 %v3479
    %v4664 = vunpack.c.l.b16 %v3480
    %v4665 = vunpack.c.h.b16 %v3480
    %v4666 = vunpack.c.l.b16 %v3481
    %v4667 = vunpack.c.h.b16 %v3481
    %v4668 = vunpack.c.l.b16 %v3482
    %v4669 = vunpack.c.h.b16 %v3482
    %v4670 = vunpack.c.l.b16 %v3483
    %v4671 = vunpack.c.h.b16 %v3483
    %v4672 = vunpack.c.l.b16 %v3484
    %v4673 = vunpack.c.h.b16 %v3484
    %v4674 = vunpack.c.l.b16 %v3485
    %v4675 = vunpack.c.h.b16 %v3485
    %v4676 = vunpack.c.l.b16 %v3486
    %v4677 = vunpack.c.h.b16 %v3486
    %v4678 = vunpack.c.l.b16 %v3487
    %v4679 = vunpack.c.h.b16 %v3487
    %v4680 = vunpack.c.l.b16 %v3488
    %v4681 = vunpack.c.h.b16 %v3488
    %v4682 = vunpack.c.l.b16 %v3489
    %v4683 = vunpack.c.h.b16 %v3489
    %v4684 = vunpack.c.l.b16 %v3490
    %v4685 = vunpack.c.h.b16 %v3490
    %v4686 = vunpack.c.l.b16 %v3491
    %v4687 = vunpack.c.h.b16 %v3491
    %v4688 = vunpack.c.l.b16 %v3492
    %v4689 = vunpack.c.h.b16 %v3492
    %v4690 = vunpack.c.l.b16 %v3493
    %v4691 = vunpack.c.h.b16 %v3493
    %v4692 = vunpack.c.l.b16 %v3494
    %v4693 = vunpack.c.h.b16 %v3494
    %v4694 = vunpack.c.l.b16 %v3495
    %v4695 = vunpack.c.h.b16 %v3495
    %v4696 = vunpack.c.l.b16 %v3496
    %v4697 = vunpack.c.h.b16 %v3496
    %v4698 = vunpack.c.l.b16 %v3497
    %v4699 = vunpack.c.h.b16 %v3497
    %v4700 = vunpack.c.l.b16 %v3498
    %v4701 = vunpack.c.h.b16 %v3498
    %v4702 = vunpack.c.l.b16 %v3499
    %v4703 = vunpack.c.h.b16 %v3499
    %v4704 = vunpack.c.l.b16 %v3500
    %v4705 = vunpack.c.h.b16 %v3500
    %v4706 = vunpack.c.l.b16 %v3501
    %v4707 = vunpack.c.h.b16 %v3501
    %v4708 = vunpack.c.l.b16 %v3502
    %v4709 = vunpack.c.h.b16 %v3502
    %v4710 = vunpack.c.l.b16 %v3503
    %v4711 = vunpack.c.h.b16 %v3503
    %v4712 = vunpack.c.l.b16 %v3504
    %v4713 = vunpack.c.h.b16 %v3504
    %v4714 = vunpack.c.l.b16 %v3505
    %v4715 = vunpack.c.h.b16 %v3505
    %v4716 = vunpack.c.l.b16 %v3506
    %v4717 = vunpack.c.h.b16 %v3506
    %v4718 = vunpack.c.l.b16 %v3507
    %v4719 = vunpack.c.h.b16 %v3507
    %v4720 = vunpack.c.l.b16 %v3508
    %v4721 = vunpack.c.h.b16 %v3508
    %v4722 = vunpack.c.l.b16 %v3509
    %v4723 = vunpack.c.h.b16 %v3509
    %v4724 = vunpack.c.l.b16 %v3510
    %v4725 = vunpack.c.h.b16 %v3510
    %v4726 = vunpack.c.l.b16 %v3511
    %v4727 = vunpack.c.h.b16 %v3511
    %v4728 = vunpack.c.l.b16 %v3512
    %v4729 = vunpack.c.h.b16 %v3512
    %v4730 = vunpack.c.l.b16 %v3513
    %v4731 = vunpack.c.h.b16 %v3513
    %v4732 = vunpack.c.l.b16 %v3514
    %v4733 = vunpack.c.h.b16 %v3514
    %v4734 = vunpack.c.l.b16 %v3515
    %v4735 = vunpack.c.h.b16 %v3515
    %v4736 = vunpack.c.l.b16 %v3516
    %v4737 = vunpack.c.h.b16 %v3516
    %v4738 = vunpack.c.l.b16 %v3517
    %v4739 = vunpack.c.h.b16 %v3517
    %v4740 = vunpack.c.l.b16 %v3518
    %v4741 = vunpack.c.h.b16 %v3518
    %v4742 = vunpack.c.l.b16 %v3519
    %v4743 = vunpack.c.h.b16 %v3519
    %v4744 = vunpack.c.l.b16 %v3520
    %v4745 = vunpack.c.h.b16 %v3520
    %v4746 = vunpack.c.l.b16 %v3521
    %v4747 = vunpack.c.h.b16 %v3521
    %v4748 = vunpack.c.l.b16 %v3522
    %v4749 = vunpack.c.h.b16 %v3522
    %v4750 = vunpack.c.l.b16 %v3523
    %v4751 = vunpack.c.h.b16 %v3523
    %v4752 = vunpack.c.l.b16 %v3524
    %v4753 = vunpack.c.h.b16 %v3524
    %v4754 = vunpack.c.l.b16 %v3525
    %v4755 = vunpack.c.h.b16 %v3525
    %v4756 = vunpack.c.l.b16 %v3526
    %v4757 = vunpack.c.h.b16 %v3526
    %v4758 = vunpack.c.l.b16 %v3527
    %v4759 = vunpack.c.h.b16 %v3527
    %v4760 = vunpack.c.l.b16 %v3528
    %v4761 = vunpack.c.h.b16 %v3528
    %v4762 = vunpack.c.l.b16 %v3529
    %v4763 = vunpack.c.h.b16 %v3529
    %v4764 = vunpack.c.l.b16 %v3530
    %v4765 = vunpack.c.h.b16 %v3530
    %v4766 = vunpack.c.l.b16 %v3531
    %v4767 = vunpack.c.h.b16 %v3531
    %v4768 = vunpack.c.l.b16 %v3532
    %v4769 = vunpack.c.h.b16 %v3532
    %v4770 = vunpack.c.l.b16 %v3533
    %v4771 = vunpack.c.h.b16 %v3533
    %v4772 = vunpack.c.l.b16 %v3534
    %v4773 = vunpack.c.h.b16 %v3534
    %v4774 = vunpack.c.l.b16 %v3535
    %v4775 = vunpack.c.h.b16 %v3535
    %v4776 = vunpack.c.l.b16 %v3536
    %v4777 = vunpack.c.h.b16 %v3536
    %v4778 = vunpack.c.l.b16 %v3537
    %v4779 = vunpack.c.h.b16 %v3537
    %v4780 = vunpack.c.l.b16 %v3538
    %v4781 = vunpack.c.h.b16 %v3538
    %v4782 = vunpack.c.l.b16 %v3539
    %v4783 = vunpack.c.h.b16 %v3539
    %v4784 = vunpack.c.l.b16 %v3540
    %v4785 = vunpack.c.h.b16 %v3540
    %v4786 = vunpack.c.l.b16 %v3541
    %v4787 = vunpack.c.h.b16 %v3541
    %v4788 = vunpack.c.l.b16 %v3542
    %v4789 = vunpack.c.h.b16 %v3542
    %v4790 = vunpack.c.l.b16 %v3543
    %v4791 = vunpack.c.h.b16 %v3543
    %v4792 = vunpack.c.l.b16 %v3544
    %v4793 = vunpack.c.h.b16 %v3544
    %v4794 = vunpack.c.l.b16 %v3545
    %v4795 = vunpack.c.h.b16 %v3545
    %v4796 = vunpack.c.l.b16 %v3546
    %v4797 = vunpack.c.h.b16 %v3546
    %v4798 = vunpack.c.l.b16 %v3547
    %v4799 = vunpack.c.h.b16 %v3547
    %v4800 = vunpack.c.l.b16 %v3548
    %v4801 = vunpack.c.h.b16 %v3548
    %v4802 = vunpack.c.l.b16 %v3549
    %v4803 = vunpack.c.h.b16 %v3549
    %v4804 = vunpack.c.l.b16 %v3550
    %v4805 = vunpack.c.h.b16 %v3550
    %v4806 = vunpack.c.l.b16 %v3551
    %v4807 = vunpack.c.h.b16 %v3551
    %v4808 = vunpack.c.l.b16 %v3552
    %v4809 = vunpack.c.h.b16 %v3552
    %v4810 = vunpack.c.l.b16 %v3553
    %v4811 = vunpack.c.h.b16 %v3553
    %v4812 = vunpack.c.l.b16 %v3554
    %v4813 = vunpack.c.h.b16 %v3554
    %v4814 = vunpack.c.l.b16 %v3555
    %v4815 = vunpack.c.h.b16 %v3555
    %v4816 = vunpack.c.l.b16 %v3556
    %v4817 = vunpack.c.h.b16 %v3556
    %v4818 = vunpack.c.l.b16 %v3557
    %v4819 = vunpack.c.h.b16 %v3557
    %v4820 = vunpack.c.l.b16 %v3558
    %v4821 = vunpack.c.h.b16 %v3558
    %v4822 = vunpack.c.l.b16 %v3559
    %v4823 = vunpack.c.h.b16 %v3559
    %v4824 = vunpack.c.l.b16 %v3560
    %v4825 = vunpack.c.h.b16 %v3560
    %v4826 = vunpack.c.l.b16 %v3561
    %v4827 = vunpack.c.h.b16 %v3561
    %v4828 = vunpack.c.l.b16 %v3562
    %v4829 = vunpack.c.h.b16 %v3562
    %v4830 = vunpack.c.l.b16 %v3563
    %v4831 = vunpack.c.h.b16 %v3563
    %v4832 = vunpack.c.l.b16 %v3564
    %v4833 = vunpack.c.h.b16 %v3564
    %v4834 = vunpack.c.l.b16 %v3565
    %v4835 = vunpack.c.h.b16 %v3565
    %v4836 = vunpack.c.l.b16 %v3566
    %v4837 = vunpack.c.h.b16 %v3566
    %v4838 = vunpack.c.l.b16 %v3567
    %v4839 = vunpack.c.h.b16 %v3567
    %v4840 = vunpack.c.l.b16 %v3568
    %v4841 = vunpack.c.h.b16 %v3568
    %v4842 = vunpack.c.l.b16 %v3569
    %v4843 = vunpack.c.h.b16 %v3569
    %v4844 = vunpack.c.l.b16 %v3570
    %v4845 = vunpack.c.h.b16 %v3570
    %v4846 = vunpack.c.l.b16 %v3571
    %v4847 = vunpack.c.h.b16 %v3571
    %v4848 = vunpack.c.l.b16 %v3572
    %v4849 = vunpack.c.h.b16 %v3572
    %v4850 = vunpack.c.l.b16 %v3573
    %v4851 = vunpack.c.h.b16 %v3573
    %v4852 = vunpack.c.l.b16 %v3574
    %v4853 = vunpack.c.h.b16 %v3574
    %v4854 = vunpack.c.l.b16 %v3575
    %v4855 = vunpack.c.h.b16 %v3575
    %v4856 = vunpack.c.l.b16 %v3576
    %v4857 = vunpack.c.h.b16 %v3576
    %v4858 = vunpack.c.l.b16 %v3577
    %v4859 = vunpack.c.h.b16 %v3577
    %v4860 = vunpack.c.l.b16 %v3578
    %v4861 = vunpack.c.h.b16 %v3578
    %v4862 = vunpack.c.l.b16 %v3579
    %v4863 = vunpack.c.h.b16 %v3579
    %v4864 = vunpack.c.l.b16 %v3580
    %v4865 = vunpack.c.h.b16 %v3580
    %v4866 = vunpack.c.l.b16 %v3581
    %v4867 = vunpack.c.h.b16 %v3581
    %v4868 = vunpack.c.l.b16 %v3582
    %v4869 = vunpack.c.h.b16 %v3582
    %v4870 = vunpack.c.l.b16 %v3583
    %v4871 = vunpack.c.h.b16 %v3583
    %v4872 = vunpack.c.l.b16 %v3584
    %v4873 = vunpack.c.h.b16 %v3584
    %v4874 = vunpack.c.l.b16 %v3585
    %v4875 = vunpack.c.h.b16 %v3585
    %v4876 = vunpack.c.l.b16 %v3586
    %v4877 = vunpack.c.h.b16 %v3586
    %v4878 = vunpack.c.l.b16 %v3587
    %v4879 = vunpack.c.h.b16 %v3587
    %v4880 = vunpack.c.l.b16 %v3588
    %v4881 = vunpack.c.h.b16 %v3588
    %v4882 = vunpack.c.l.b16 %v3589
    %v4883 = vunpack.c.h.b16 %v3589
    %v4884 = vunpack.c.l.b16 %v3590
    %v4885 = vunpack.c.h.b16 %v3590
    %v4886 = vunpack.c.l.b16 %v3591
    %v4887 = vunpack.c.h.b16 %v3591
    %v4888 = vunpack.c.l.b16 %v3592
    %v4889 = vunpack.c.h.b16 %v3592
    %v4890 = vunpack.c.l.b16 %v3593
    %v4891 = vunpack.c.h.b16 %v3593
    %v4892 = vunpack.c.l.b16 %v3594
    %v4893 = vunpack.c.h.b16 %v3594
    %v4894 = vunpack.c.l.b16 %v3595
    %v4895 = vunpack.c.h.b16 %v3595
    %v4896 = vunpack.c.l.b16 %v3596
    %v4897 = vunpack.c.h.b16 %v3596
    %v4898 = vunpack.c.l.b16 %v3597
    %v4899 = vunpack.c.h.b16 %v3597
    %v4900 = vunpack.c.l.b16 %v3598
    %v4901 = vunpack.c.h.b16 %v3598
    %v4902 = vunpack.c.l.b16 %v3599
    %v4903 = vunpack.c.h.b16 %v3599
    %v4904 = vunpack.c.l.b16 %v3600
    %v4905 = vunpack.c.h.b16 %v3600
    %v4906 = vunpack.c.l.b16 %v3601
    %v4907 = vunpack.c.h.b16 %v3601
    %v4908 = vunpack.c.l.b16 %v3602
    %v4909 = vunpack.c.h.b16 %v3602
    %v4910 = vunpack.c.l.b16 %v3603
    %v4911 = vunpack.c.h.b16 %v3603
    %v4912 = vunpack.c.l.b16 %v3604
    %v4913 = vunpack.c.h.b16 %v3604
    %v4914 = vunpack.c.l.b16 %v3605
    %v4915 = vunpack.c.h.b16 %v3605
    %v4916 = vunpack.c.l.b16 %v3606
    %v4917 = vunpack.c.h.b16 %v3606
    %v4918 = vunpack.c.l.b16 %v3607
    %v4919 = vunpack.c.h.b16 %v3607
    %v4920 = vunpack.c.l.b16 %v3608
    %v4921 = vunpack.c.h.b16 %v3608
    %v4922 = vunpack.c.l.b16 %v3609
    %v4923 = vunpack.c.h.b16 %v3609
    %v4924 = vunpack.c.l.b16 %v3610
    %v4925 = vunpack.c.h.b16 %v3610
    %v4926 = vunpack.c.l.b16 %v3611
    %v4927 = vunpack.c.h.b16 %v3611
    %v4928 = vunpack.c.l.b16 %v3612
    %v4929 = vunpack.c.h.b16 %v3612
    %v4930 = vunpack.c.l.b16 %v3613
    %v4931 = vunpack.c.h.b16 %v3613
    %v4932 = vunpack.c.l.b16 %v3614
    %v4933 = vunpack.c.h.b16 %v3614
    %v4934 = vunpack.c.l.b16 %v3615
    %v4935 = vunpack.c.h.b16 %v3615
    %v4936 = vunpack.c.l.b16 %v3616
    %v4937 = vunpack.c.h.b16 %v3616
    %v4938 = vunpack.c.l.b16 %v3617
    %v4939 = vunpack.c.h.b16 %v3617
    %v4940 = vunpack.c.l.b16 %v3618
    %v4941 = vunpack.c.h.b16 %v3618
    %v4942 = vunpack.c.l.b16 %v3619
    %v4943 = vunpack.c.h.b16 %v3619
    %v4944 = vunpack.c.l.b16 %v3620
    %v4945 = vunpack.c.h.b16 %v3620
    %v4946 = vunpack.c.l.b16 %v3621
    %v4947 = vunpack.c.h.b16 %v3621
    %v4948 = vunpack.c.l.b16 %v3622
    %v4949 = vunpack.c.h.b16 %v3622
    %v4950 = vunpack.c.l.b16 %v3623
    %v4951 = vunpack.c.h.b16 %v3623
    %v4952 = vunpack.c.l.b16 %v3624
    %v4953 = vunpack.c.h.b16 %v3624
    %v4954 = vunpack.c.l.b16 %v3625
    %v4955 = vunpack.c.h.b16 %v3625
    %v4956 = vunpack.c.l.b16 %v3626
    %v4957 = vunpack.c.h.b16 %v3626
    %v4958 = vunpack.c.l.b16 %v3627
    %v4959 = vunpack.c.h.b16 %v3627
    %v4960 = vunpack.c.l.b16 %v3628
    %v4961 = vunpack.c.h.b16 %v3628
    %v4962 = vunpack.c.l.b16 %v3629
    %v4963 = vunpack.c.h.b16 %v3629
    %v4964 = vunpack.c.l.b16 %v3630
    %v4965 = vunpack.c.h.b16 %v3630
    %v4966 = vunpack.c.l.b16 %v3631
    %v4967 = vunpack.c.h.b16 %v3631
    %v4968 = vunpack.c.l.b16 %v3632
    %v4969 = vunpack.c.h.b16 %v3632
    %v4970 = vunpack.c.l.b16 %v3633
    %v4971 = vunpack.c.h.b16 %v3633
    %v4972 = vunpack.c.l.b16 %v3634
    %v4973 = vunpack.c.h.b16 %v3634
    %v4974 = vunpack.c.l.b16 %v3635
    %v4975 = vunpack.c.h.b16 %v3635
    %v4976 = vunpack.c.l.b16 %v3636
    %v4977 = vunpack.c.h.b16 %v3636
    %v4978 = vunpack.c.l.b16 %v3637
    %v4979 = vunpack.c.h.b16 %v3637
    %v4980 = vunpack.c.l.b16 %v3638
    %v4981 = vunpack.c.h.b16 %v3638
    %v4982 = vunpack.c.l.b16 %v3639
    %v4983 = vunpack.c.h.b16 %v3639
    %v4984 = vunpack.c.l.b16 %v3640
    %v4985 = vunpack.c.h.b16 %v3640
    %v4986 = vunpack.c.l.b16 %v3641
    %v4987 = vunpack.c.h.b16 %v3641
    %v4988 = vunpack.c.l.b16 %v3642
    %v4989 = vunpack.c.h.b16 %v3642
    %v4990 = vunpack.c.l.b16 %v3643
    %v4991 = vunpack.c.h.b16 %v3643
    %v4992 = vunpack.c.l.b16 %v3644
    %v4993 = vunpack.c.h.b16 %v3644
    %v4994 = vunpack.c.l.b16 %v3645
    %v4995 = vunpack.c.h.b16 %v3645
    %v4996 = vunpack.c.l.b16 %v3646
    %v4997 = vunpack.c.h.b16 %v3646
    %v4998 = vunpack.c.l.b16 %v3647
    %v4999 = vunpack.c.h.b16 %v3647
    %v5000 = vunpack.c.l.b16 %v3648
    %v5001 = vunpack.c.h.b16 %v3648
    %v5002 = vunpack.c.l.b16 %v3649
    %v5003 = vunpack.c.h.b16 %v3649
    %v5004 = vunpack.c.l.b16 %v3650
    %v5005 = vunpack.c.h.b16 %v3650
    %v5006 = vunpack.c.l.b16 %v3651
    %v5007 = vunpack.c.h.b16 %v3651
    %v5008 = vunpack.c.l.b16 %v3652
    %v5009 = vunpack.c.h.b16 %v3652
    %v5010 = vunpack.c.l.b16 %v3653
    %v5011 = vunpack.c.h.b16 %v3653
    %v5012 = vunpack.c.l.b16 %v3654
    %v5013 = vunpack.c.h.b16 %v3654
    %v5014 = vunpack.c.l.b16 %v3655
    %v5015 = vunpack.c.h.b16 %v3655
    %v5016 = vunpack.c.l.b16 %v3656
    %v5017 = vunpack.c.h.b16 %v3656
    %v5018 = vunpack.c.l.b16 %v3657
    %v5019 = vunpack.c.h.b16 %v3657
    %v5020 = vunpack.c.l.b16 %v3658
    %v5021 = vunpack.c.h.b16 %v3658
    %v5022 = vunpack.c.l.b16 %v3659
    %v5023 = vunpack.c.h.b16 %v3659
    %v5024 = vunpack.c.l.b16 %v3660
    %v5025 = vunpack.c.h.b16 %v3660
    %v5026 = vunpack.c.l.b16 %v3661
    %v5027 = vunpack.c.h.b16 %v3661
    %v5028 = vunpack.c.l.b16 %v3662
    %v5029 = vunpack.c.h.b16 %v3662
    %v5030 = vunpack.c.l.b16 %v3663
    %v5031 = vunpack.c.h.b16 %v3663
    %v5032 = vunpack.c.l.b16 %v3664
    %v5033 = vunpack.c.h.b16 %v3664
    %v5034 = vunpack.c.l.b16 %v3665
    %v5035 = vunpack.c.h.b16 %v3665
    %v5036 = vunpack.c.l.b16 %v3666
    %v5037 = vunpack.c.h.b16 %v3666
    %v5038 = vunpack.c.l.b16 %v3667
    %v5039 = vunpack.c.h.b16 %v3667
    %v5040 = vunpack.c.l.b16 %v3668
    %v5041 = vunpack.c.h.b16 %v3668
    %v5042 = vunpack.c.l.b16 %v3669
    %v5043 = vunpack.c.h.b16 %v3669
    %v5044 = vunpack.c.l.b16 %v3670
    %v5045 = vunpack.c.h.b16 %v3670
    %v5046 = vunpack.c.l.b16 %v3671
    %v5047 = vunpack.c.h.b16 %v3671
    %v5048 = vunpack.c.l.b16 %v3672
    %v5049 = vunpack.c.h.b16 %v3672
    %v5050 = vunpack.c.l.b16 %v3673
    %v5051 = vunpack.c.h.b16 %v3673
    %v5052 = vunpack.c.l.b16 %v3674
    %v5053 = vunpack.c.h.b16 %v3674
    %v5054 = vunpack.c.l.b16 %v3675
    %v5055 = vunpack.c.h.b16 %v3675
    %v5056 = vunpack.c.l.b16 %v3676
    %v5057 = vunpack.c.h.b16 %v3676
    %v5058 = vunpack.c.l.b16 %v3677
    %v5059 = vunpack.c.h.b16 %v3677
    %v5060 = vunpack.c.l.b16 %v3678
    %v5061 = vunpack.c.h.b16 %v3678
    %v5062 = vunpack.c.l.b16 %v3679
    %v5063 = vunpack.c.h.b16 %v3679
    %v5064 = vunpack.c.l.b16 %v3680
    %v5065 = vunpack.c.h.b16 %v3680
    %v5066 = vunpack.c.l.b16 %v3681
    %v5067 = vunpack.c.h.b16 %v3681
    %v5068 = vunpack.c.l.b16 %v3682
    %v5069 = vunpack.c.h.b16 %v3682
    %v5070 = vunpack.c.l.b16 %v3683
    %v5071 = vunpack.c.h.b16 %v3683
    %v5072 = vunpack.c.l.b16 %v3684
    %v5073 = vunpack.c.h.b16 %v3684
    %v5074 = vunpack.c.l.b16 %v3685
    %v5075 = vunpack.c.h.b16 %v3685
    %v5076 = vunpack.c.l.b16 %v3686
    %v5077 = vunpack.c.h.b16 %v3686
    %v5078 = vunpack.c.l.b16 %v3687
    %v5079 = vunpack.c.h.b16 %v3687
    %v5080 = vunpack.c.l.b16 %v3688
    %v5081 = vunpack.c.h.b16 %v3688
    %v5082 = vunpack.c.l.b16 %v3689
    %v5083 = vunpack.c.h.b16 %v3689
    %v5084 = vunpack.c.l.b16 %v3690
    %v5085 = vunpack.c.h.b16 %v3690
    %v5086 = vunpack.c.l.b16 %v3691
    %v5087 = vunpack.c.h.b16 %v3691
    %v5088 = vunpack.c.l.b16 %v3692
    %v5089 = vunpack.c.h.b16 %v3692
    %v5090 = vunpack.c.l.b16 %v3693
    %v5091 = vunpack.c.h.b16 %v3693
    %v5092 = vunpack.c.l.b16 %v3694
    %v5093 = vunpack.c.h.b16 %v3694
    %v5094 = vunpack.c.l.b16 %v3695
    %v5095 = vunpack.c.h.b16 %v3695
    %v5096 = vunpack.c.l.b16 %v3696
    %v5097 = vunpack.c.h.b16 %v3696
    %v5098 = vunpack.c.l.b16 %v3697
    %v5099 = vunpack.c.h.b16 %v3697
    %v5100 = vunpack.c.l.b16 %v3698
    %v5101 = vunpack.c.h.b16 %v3698
    %v5102 = vunpack.c.l.b16 %v3699
    %v5103 = vunpack.c.h.b16 %v3699
    %v5104 = vunpack.c.l.b16 %v3700
    %v5105 = vunpack.c.h.b16 %v3700
    %v5106 = vunpack.c.l.b16 %v3701
    %v5107 = vunpack.c.h.b16 %v3701
    %v5108 = vunpack.c.l.b16 %v3702
    %v5109 = vunpack.c.h.b16 %v3702
    %v5110 = vunpack.c.l.b16 %v3703
    %v5111 = vunpack.c.h.b16 %v3703
    %v5112 = vunpack.c.l.b16 %v3704
    %v5113 = vunpack.c.h.b16 %v3704
    %v5114 = vunpack.c.l.b16 %v3705
    %v5115 = vunpack.c.h.b16 %v3705
    %v5116 = vunpack.c.l.b16 %v3706
    %v5117 = vunpack.c.h.b16 %v3706
    %v5118 = vunpack.c.l.b16 %v3707
    %v5119 = vunpack.c.h.b16 %v3707
    %v5120 = vunpack.c.l.b16 %v3708
    %v5121 = vunpack.c.h.b16 %v3708
    %v5122 = vunpack.c.l.b16 %v3709
    %v5123 = vunpack.c.h.b16 %v3709
    %v5124 = vunpack.c.l.b16 %v3710
    %v5125 = vunpack.c.h.b16 %v3710
    %v5126 = vunpack.c.l.b16 %v3711
    %v5127 = vunpack.c.h.b16 %v3711
    %v5128 = vunpack.c.l.b16 %v3712
    %v5129 = vunpack.c.h.b16 %v3712
    %v5130 = vunpack.c.l.b16 %v3713
    %v5131 = vunpack.c.h.b16 %v3713
    %v5132 = vunpack.c.l.b16 %v3714
    %v5133 = vunpack.c.h.b16 %v3714
    %v5134 = vunpack.c.l.b16 %v3715
    %v5135 = vunpack.c.h.b16 %v3715
    %v5136 = vunpack.c.l.b16 %v3716
    %v5137 = vunpack.c.h.b16 %v3716
    %v5138 = vunpack.c.l.b16 %v3717
    %v5139 = vunpack.c.h.b16 %v3717
    %v5140 = vunpack.c.l.b16 %v3718
    %v5141 = vunpack.c.h.b16 %v3718
    %v5142 = vunpack.c.l.b16 %v3719
    %v5143 = vunpack.c.h.b16 %v3719
    %v5144 = vunpack.c.l.b16 %v3720
    %v5145 = vunpack.c.h.b16 %v3720
    %v5146 = vunpack.c.l.b16 %v3721
    %v5147 = vunpack.c.h.b16 %v3721
    %v5148 = vunpack.c.l.b16 %v3722
    %v5149 = vunpack.c.h.b16 %v3722
    %v5150 = vunpack.c.l.b16 %v3723
    %v5151 = vunpack.c.h.b16 %v3723
    %v5152 = vunpack.c.l.b16 %v3724
    %v5153 = vunpack.c.h.b16 %v3724
    %v5154 = vunpack.c.l.b16 %v3725
    %v5155 = vunpack.c.h.b16 %v3725
    %v5156 = vunpack.c.l.b16 %v3726
    %v5157 = vunpack.c.h.b16 %v3726
    %v5158 = vunpack.c.l.b16 %v3727
    %v5159 = vunpack.c.h.b16 %v3727
    %v5160 = vunpack.c.l.b16 %v3728
    %v5161 = vunpack.c.h.b16 %v3728
    %v5162 = vunpack.c.l.b16 %v3729
    %v5163 = vunpack.c.h.b16 %v3729
    %v5164 = vunpack.c.l.b16 %v3730
    %v5165 = vunpack.c.h.b16 %v3730
    %v5166 = vunpack.c.l.b16 %v3731
    %v5167 = vunpack.c.h.b16 %v3731
    %v5168 = vunpack.c.l.b16 %v3732
    %v5169 = vunpack.c.h.b16 %v3732
    %v5170 = vunpack.c.l.b16 %v3733
    %v5171 = vunpack.c.h.b16 %v3733
    %v5172 = vunpack.c.l.b16 %v3734
    %v5173 = vunpack.c.h.b16 %v3734
    %v5174 = vunpack.c.l.b16 %v3735
    %v5175 = vunpack.c.h.b16 %v3735
    %v5176 = vunpack.c.l.b16 %v3736
    %v5177 = vunpack.c.h.b16 %v3736
    %v5178 = vunpack.c.l.b16 %v3737
    %v5179 = vunpack.c.h.b16 %v3737
    %v5180 = vunpack.c.l.b16 %v3738
    %v5181 = vunpack.c.h.b16 %v3738
    %v5182 = vunpack.c.l.b16 %v3739
    %v5183 = vunpack.c.h.b16 %v3739
    %v5184 = vunpack.c.l.b16 %v3740
    %v5185 = vunpack.c.h.b16 %v3740
    %v5186 = vunpack.c.l.b16 %v3741
    %v5187 = vunpack.c.h.b16 %v3741
    %v5188 = vunpack.c.l.b16 %v3742
    %v5189 = vunpack.c.h.b16 %v3742
    %v5190 = vunpack.c.l.b16 %v3743
    %v5191 = vunpack.c.h.b16 %v3743
    %v5192 = vunpack.c.l.b16 %v3744
    %v5193 = vunpack.c.h.b16 %v3744
    %v5194 = vunpack.c.l.b16 %v3745
    %v5195 = vunpack.c.h.b16 %v3745
    %v5196 = vunpack.c.l.b16 %v3746
    %v5197 = vunpack.c.h.b16 %v3746
    %v5198 = vunpack.c.l.b16 %v3747
    %v5199 = vunpack.c.h.b16 %v3747
    %v5200 = vunpack.c.l.b16 %v3748
    %v5201 = vunpack.c.h.b16 %v3748
    %v5202 = vunpack.c.l.b16 %v3749
    %v5203 = vunpack.c.h.b16 %v3749
    %v5204 = vunpack.c.l.b16 %v3750
    %v5205 = vunpack.c.h.b16 %v3750
    %v5206 = vunpack.c.l.b16 %v3751
    %v5207 = vunpack.c.h.b16 %v3751
    %v5208 = vunpack.c.l.b16 %v3752
    %v5209 = vunpack.c.h.b16 %v3752
    %v5210 = vunpack.c.l.b16 %v3753
    %v5211 = vunpack.c.h.b16 %v3753
    %v5212 = vunpack.c.l.b16 %v3754
    %v5213 = vunpack.c.h.b16 %v3754
    %v5214 = vunpack.c.l.b16 %v3755
    %v5215 = vunpack.c.h.b16 %v3755
    %v5216 = vunpack.c.l.b16 %v3756
    %v5217 = vunpack.c.h.b16 %v3756
    %v5218 = vunpack.c.l.b16 %v3757
    %v5219 = vunpack.c.h.b16 %v3757
    %v5220 = vunpack.c.l.b16 %v3758
    %v5221 = vunpack.c.h.b16 %v3758
    %v5222 = vunpack.c.l.b16 %v3759
    %v5223 = vunpack.c.h.b16 %v3759
    %v5224 = vunpack.c.l.b16 %v3760
    %v5225 = vunpack.c.h.b16 %v3760
    %v5226 = vunpack.c.l.b16 %v3761
    %v5227 = vunpack.c.h.b16 %v3761
    %v5228 = vunpack.c.l.b16 %v3762
    %v5229 = vunpack.c.h.b16 %v3762
    %v5230 = vunpack.c.l.b16 %v3763
    %v5231 = vunpack.c.h.b16 %v3763
    %v5232 = vunpack.c.l.b16 %v3764
    %v5233 = vunpack.c.h.b16 %v3764
    %v5234 = vunpack.c.l.b16 %v3765
    %v5235 = vunpack.c.h.b16 %v3765
    %v5236 = vunpack.c.l.b16 %v3766
    %v5237 = vunpack.c.h.b16 %v3766
    %v5238 = vunpack.c.l.b16 %v3767
    %v5239 = vunpack.c.h.b16 %v3767
    %v5240 = vunpack.c.l.b16 %v3768
    %v5241 = vunpack.c.h.b16 %v3768
    %v5242 = vunpack.c.l.b16 %v3769
    %v5243 = vunpack.c.h.b16 %v3769
    %v5244 = vunpack.c.l.b16 %v3770
    %v5245 = vunpack.c.h.b16 %v3770
    %v5246 = vunpack.c.l.b16 %v3771
    %v5247 = vunpack.c.h.b16 %v3771
    %v5248 = vunpack.c.l.b16 %v3772
    %v5249 = vunpack.c.h.b16 %v3772
    %v5250 = vunpack.c.l.b16 %v3773
    %v5251 = vunpack.c.h.b16 %v3773
    %v5252 = vunpack.c.l.b16 %v3774
    %v5253 = vunpack.c.h.b16 %v3774
    %v5254 = vunpack.c.l.b16 %v3775
    %v5255 = vunpack.c.h.b16 %v3775
    %v5256 = vunpack.c.l.b16 %v3776
    %v5257 = vunpack.c.h.b16 %v3776
    %v5258 = vunpack.c.l.b16 %v3777
    %v5259 = vunpack.c.h.b16 %v3777
    %v5260 = vunpack.c.l.b16 %v3778
    %v5261 = vunpack.c.h.b16 %v3778
    %v5262 = vunpack.c.l.b16 %v3779
    %v5263 = vunpack.c.h.b16 %v3779
    %v5264 = vunpack.c.l.b16 %v3780
    %v5265 = vunpack.c.h.b16 %v3780
    %v5266 = vunpack.c.l.b16 %v3781
    %v5267 = vunpack.c.h.b16 %v3781
    %v5268 = vunpack.c.l.b16 %v3782
    %v5269 = vunpack.c.h.b16 %v3782
    %v5270 = vunpack.c.l.b16 %v3783
    %v5271 = vunpack.c.h.b16 %v3783
    %v5272 = vunpack.c.l.b16 %v3784
    %v5273 = vunpack.c.h.b16 %v3784
    %v5274 = vunpack.c.l.b16 %v3785
    %v5275 = vunpack.c.h.b16 %v3785
    %v5276 = vunpack.c.l.b16 %v3786
    %v5277 = vunpack.c.h.b16 %v3786
    %v5278 = vunpack.c.l.b16 %v3787
    %v5279 = vunpack.c.h.b16 %v3787
    %v5280 = vunpack.c.l.b16 %v3788
    %v5281 = vunpack.c.h.b16 %v3788
    %v5282 = vunpack.c.l.b16 %v3789
    %v5283 = vunpack.c.h.b16 %v3789
    %v5284 = vunpack.c.l.b16 %v3790
    %v5285 = vunpack.c.h.b16 %v3790
    %v5286 = vunpack.c.l.b16 %v3791
    %v5287 = vunpack.c.h.b16 %v3791
    %v5288 = vunpack.c.l.b16 %v3792
    %v5289 = vunpack.c.h.b16 %v3792
    %v5290 = vunpack.c.l.b16 %v3793
    %v5291 = vunpack.c.h.b16 %v3793
    %v5292 = vunpack.c.l.b16 %v3794
    %v5293 = vunpack.c.h.b16 %v3794
    %v5294 = vunpack.c.l.b16 %v3795
    %v5295 = vunpack.c.h.b16 %v3795
    %v5296 = vunpack.c.l.b16 %v3796
    %v5297 = vunpack.c.h.b16 %v3796
    %v5298 = vunpack.c.l.b16 %v3797
    %v5299 = vunpack.c.h.b16 %v3797
    %v5300 = vunpack.c.l.b16 %v3798
    %v5301 = vunpack.c.h.b16 %v3798
    %v5302 = vunpack.c.l.b16 %v3799
    %v5303 = vunpack.c.h.b16 %v3799
    %v5304 = vunpack.c.l.b16 %v3800
    %v5305 = vunpack.c.h.b16 %v3800
    %v5306 = vunpack.c.l.b16 %v3801
    %v5307 = vunpack.c.h.b16 %v3801
    %v5308 = vunpack.c.l.b16 %v3802
    %v5309 = vunpack.c.h.b16 %v3802
    %v5310 = vunpack.c.l.b16 %v3803
    %v5311 = vunpack.c.h.b16 %v3803
    %v5312 = vunpack.c.l.b16 %v3804
    %v5313 = vunpack.c.h.b16 %v3804
    %v5314 = vunpack.c.l.b16 %v3805
    %v5315 = vunpack.c.h.b16 %v3805
    %v5316 = vunpack.c.l.b16 %v3806
    %v5317 = vunpack.c.h.b16 %v3806
    %v5318 = vunpack.c.l.b16 %v3807
    %v5319 = vunpack.c.h.b16 %v3807
    %v5320 = vunpack.c.l.b16 %v3808
    %v5321 = vunpack.c.h.b16 %v3808
    %v5322 = vunpack.c.l.b16 %v3809
    %v5323 = vunpack.c.h.b16 %v3809
    %v5324 = vunpack.c.l.b16 %v3810
    %v5325 = vunpack.c.h.b16 %v3810
    %v5326 = vunpack.c.l.b16 %v3811
    %v5327 = vunpack.c.h.b16 %v3811
    %v5328 = vunpack.c.l.b16 %v3812
    %v5329 = vunpack.c.h.b16 %v3812
    %v5330 = vunpack.c.l.b16 %v3813
    %v5331 = vunpack.c.h.b16 %v3813
    %v5332 = vunpack.c.l.b16 %v3814
    %v5333 = vunpack.c.h.b16 %v3814
    %v5334 = vunpack.c.l.b16 %v3815
    %v5335 = vunpack.c.h.b16 %v3815
    %v5336 = vunpack.c.l.b16 %v3816
    %v5337 = vunpack.c.h.b16 %v3816
    %v5338 = vunpack.c.l.b16 %v3817
    %v5339 = vunpack.c.h.b16 %v3817
    %v5340 = vunpack.c.l.b16 %v3818
    %v5341 = vunpack.c.h.b16 %v3818
    %v5342 = vunpack.c.l.b16 %v3819
    %v5343 = vunpack.c.h.b16 %v3819
    %v5344 = vunpack.c.l.b16 %v3820
    %v5345 = vunpack.c.h.b16 %v3820
    %v5346 = vunpack.c.l.b16 %v3821
    %v5347 = vunpack.c.h.b16 %v3821
    %v5348 = vunpack.c.l.b16 %v3822
    %v5349 = vunpack.c.h.b16 %v3822
    %v5350 = vunpack.c.l.b16 %v3823
    %v5351 = vunpack.c.h.b16 %v3823
    %v5352 = vunpack.c.l.b16 %v3824
    %v5353 = vunpack.c.h.b16 %v3824
    %v5354 = vunpack.c.l.b16 %v3825
    %v5355 = vunpack.c.h.b16 %v3825
    %v5356 = vunpack.c.l.b16 %v3826
    %v5357 = vunpack.c.h.b16 %v3826
    %v5358 = vunpack.c.l.b16 %v3827
    %v5359 = vunpack.c.h.b16 %v3827
    %v5360 = vunpack.c.l.b16 %v3828
    %v5361 = vunpack.c.h.b16 %v3828
    %v5362 = vunpack.c.l.b16 %v3829
    %v5363 = vunpack.c.h.b16 %v3829
    %v5364 = vunpack.c.l.b16 %v3830
    %v5365 = vunpack.c.h.b16 %v3830
    %v5366 = vunpack.c.l.b16 %v3831
    %v5367 = vunpack.c.h.b16 %v3831
    %v5368 = vpack.c.b16 %v4348, %v4344
    %v5369 = vpack.c.b16 %v4349, %v4345
    %v5370 = vpack.c.b16 %v4350, %v4346
    %v5371 = vpack.c.b16 %v4351, %v4347
    %v5372 = vpack.c.b16 %v4356, %v4352
    %v5373 = vpack.c.b16 %v4357, %v4353
    %v5374 = vpack.c.b16 %v4358, %v4354
    %v5375 = vpack.c.b16 %v4359, %v4355
    %v5376 = vpack.c.b16 %v4364, %v4360
    %v5377 = vpack.c.b16 %v4365, %v4361
    %v5378 = vpack.c.b16 %v4366, %v4362
    %v5379 = vpack.c.b16 %v4367, %v4363
    %v5380 = vpack.c.b16 %v4372, %v4368
    %v5381 = vpack.c.b16 %v4373, %v4369
    %v5382 = vpack.c.b16 %v4374, %v4370
    %v5383 = vpack.c.b16 %v4375, %v4371
    %v5384 = vpack.c.b16 %v4380, %v4376
    %v5385 = vpack.c.b16 %v4381, %v4377
    %v5386 = vpack.c.b16 %v4382, %v4378
    %v5387 = vpack.c.b16 %v4383, %v4379
    %v5388 = vpack.c.b16 %v4388, %v4384
    %v5389 = vpack.c.b16 %v4389, %v4385
    %v5390 = vpack.c.b16 %v4390, %v4386
    %v5391 = vpack.c.b16 %v4391, %v4387
    %v5392 = vpack.c.b16 %v4396, %v4392
    %v5393 = vpack.c.b16 %v4397, %v4393
    %v5394 = vpack.c.b16 %v4398, %v4394
    %v5395 = vpack.c.b16 %v4399, %v4395
    %v5396 = vpack.c.b16 %v4404, %v4400
    %v5397 = vpack.c.b16 %v4405, %v4401
    %v5398 = vpack.c.b16 %v4406, %v4402
    %v5399 = vpack.c.b16 %v4407, %v4403
    %v5400 = vpack.c.b16 %v4412, %v4408
    %v5401 = vpack.c.b16 %v4413, %v4409
    %v5402 = vpack.c.b16 %v4414, %v4410
    %v5403 = vpack.c.b16 %v4415, %v4411
    %v5404 = vpack.c.b16 %v4420, %v4416
    %v5405 = vpack.c.b16 %v4421, %v4417
    %v5406 = vpack.c.b16 %v4422, %v4418
    %v5407 = vpack.c.b16 %v4423, %v4419
    %v5408 = vpack.c.b16 %v4428, %v4424
    %v5409 = vpack.c.b16 %v4429, %v4425
    %v5410 = vpack.c.b16 %v4430, %v4426
    %v5411 = vpack.c.b16 %v4431, %v4427
    %v5412 = vpack.c.b16 %v4436, %v4432
    %v5413 = vpack.c.b16 %v4437, %v4433
    %v5414 = vpack.c.b16 %v4438, %v4434
    %v5415 = vpack.c.b16 %v4439, %v4435
    %v5416 = vpack.c.b16 %v4444, %v4440
    %v5417 = vpack.c.b16 %v4445, %v4441
    %v5418 = vpack.c.b16 %v4446, %v4442
    %v5419 = vpack.c.b16 %v4447, %v4443
    %v5420 = vpack.c.b16 %v4452, %v4448
    %v5421 = vpack.c.b16 %v4453, %v4449
    %v5422 = vpack.c.b16 %v4454, %v4450
    %v5423 = vpack.c.b16 %v4455, %v4451
    %v5424 = vpack.c.b16 %v4460, %v4456
    %v5425 = vpack.c.b16 %v4461, %v4457
    %v5426 = vpack.c.b16 %v4462, %v4458
    %v5427 = vpack.c.b16 %v4463, %v4459
    %v5428 = vpack.c.b16 %v4468, %v4464
    %v5429 = vpack.c.b16 %v4469, %v4465
    %v5430 = vpack.c.b16 %v4470, %v4466
    %v5431 = vpack.c.b16 %v4471, %v4467
    %v5432 = vpack.c.b16 %v4476, %v4472
    %v5433 = vpack.c.b16 %v4477, %v4473
    %v5434 = vpack.c.b16 %v4478, %v4474
    %v5435 = vpack.c.b16 %v4479, %v4475
    %v5436 = vpack.c.b16 %v4484, %v4480
    %v5437 = vpack.c.b16 %v4485, %v4481
    %v5438 = vpack.c.b16 %v4486, %v4482
    %v5439 = vpack.c.b16 %v4487, %v4483
    %v5440 = vpack.c.b16 %v4492, %v4488
    %v5441 = vpack.c.b16 %v4493, %v4489
    %v5442 = vpack.c.b16 %v4494, %v4490
    %v5443 = vpack.c.b16 %v4495, %v4491
    %v5444 = vpack.c.b16 %v4500, %v4496
    %v5445 = vpack.c.b16 %v4501, %v4497
    %v5446 = vpack.c.b16 %v4502, %v4498
    %v5447 = vpack.c.b16 %v4503, %v4499
    %v5448 = vpack.c.b16 %v4508, %v4504
    %v5449 = vpack.c.b16 %v4509, %v4505
    %v5450 = vpack.c.b16 %v4510, %v4506
    %v5451 = vpack.c.b16 %v4511, %v4507
    %v5452 = vpack.c.b16 %v4516, %v4512
    %v5453 = vpack.c.b16 %v4517, %v4513
    %v5454 = vpack.c.b16 %v4518, %v4514
    %v5455 = vpack.c.b16 %v4519, %v4515
    %v5456 = vpack.c.b16 %v4524, %v4520
    %v5457 = vpack.c.b16 %v4525, %v4521
    %v5458 = vpack.c.b16 %v4526, %v4522
    %v5459 = vpack.c.b16 %v4527, %v4523
    %v5460 = vpack.c.b16 %v4532, %v4528
    %v5461 = vpack.c.b16 %v4533, %v4529
    %v5462 = vpack.c.b16 %v4534, %v4530
    %v5463 = vpack.c.b16 %v4535, %v4531
    %v5464 = vpack.c.b16 %v4540, %v4536
    %v5465 = vpack.c.b16 %v4541, %v4537
    %v5466 = vpack.c.b16 %v4542, %v4538
    %v5467 = vpack.c.b16 %v4543, %v4539
    %v5468 = vpack.c.b16 %v4548, %v4544
    %v5469 = vpack.c.b16 %v4549, %v4545
    %v5470 = vpack.c.b16 %v4550, %v4546
    %v5471 = vpack.c.b16 %v4551, %v4547
    %v5472 = vpack.c.b16 %v4556, %v4552
    %v5473 = vpack.c.b16 %v4557, %v4553
    %v5474 = vpack.c.b16 %v4558, %v4554
    %v5475 = vpack.c.b16 %v4559, %v4555
    %v5476 = vpack.c.b16 %v4564, %v4560
    %v5477 = vpack.c.b16 %v4565, %v4561
    %v5478 = vpack.c.b16 %v4566, %v4562
    %v5479 = vpack.c.b16 %v4567, %v4563
    %v5480 = vpack.c.b16 %v4572, %v4568
    %v5481 = vpack.c.b16 %v4573, %v4569
    %v5482 = vpack.c.b16 %v4574, %v4570
    %v5483 = vpack.c.b16 %v4575, %v4571
    %v5484 = vpack.c.b16 %v4580, %v4576
    %v5485 = vpack.c.b16 %v4581, %v4577
    %v5486 = vpack.c.b16 %v4582, %v4578
    %v5487 = vpack.c.b16 %v4583, %v4579
    %v5488 = vpack.c.b16 %v4588, %v4584
    %v5489 = vpack.c.b16 %v4589, %v4585
    %v5490 = vpack.c.b16 %v4590, %v4586
    %v5491 = vpack.c.b16 %v4591, %v4587
    %v5492 = vpack.c.b16 %v4596, %v4592
    %v5493 = vpack.c.b16 %v4597, %v4593
    %v5494 = vpack.c.b16 %v4598, %v4594
    %v5495 = vpack.c.b16 %v4599, %v4595
    %v5496 = vpack.c.b16 %v4604, %v4600
    %v5497 = vpack.c.b16 %v4605, %v4601
    %v5498 = vpack.c.b16 %v4606, %v4602
    %v5499 = vpack.c.b16 %v4607, %v4603
    %v5500 = vpack.c.b16 %v4612, %v4608
    %v5501 = vpack.c.b16 %v4613, %v4609
    %v5502 = vpack.c.b16 %v4614, %v4610
    %v5503 = vpack.c.b16 %v4615, %v4611
    %v5504 = vpack.c.b16 %v4620, %v4616
    %v5505 = vpack.c.b16 %v4621, %v4617
    %v5506 = vpack.c.b16 %v4622, %v4618
    %v5507 = vpack.c.b16 %v4623, %v4619
    %v5508 = vpack.c.b16 %v4628, %v4624
    %v5509 = vpack.c.b16 %v4629, %v4625
    %v5510 = vpack.c.b16 %v4630, %v4626
    %v5511 = vpack.c.b16 %v4631, %v4627
    %v5512 = vpack.c.b16 %v4636, %v4632
    %v5513 = vpack.c.b16 %v4637, %v4633
    %v5514 = vpack.c.b16 %v4638, %v4634
    %v5515 = vpack.c.b16 %v4639, %v4635
    %v5516 = vpack.c.b16 %v4644, %v4640
    %v5517 = vpack.c.b16 %v4645, %v4641
    %v5518 = vpack.c.b16 %v4646, %v4642
    %v5519 = vpack.c.b16 %v4647, %v4643
    %v5520 = vpack.c.b16 %v4652, %v4648
    %v5521 = vpack.c.b16 %v4653, %v4649
    %v5522 = vpack.c.b16 %v4654, %v4650
    %v5523 = vpack.c.b16 %v4655, %v4651
    %v5524 = vpack.c.b16 %v4660, %v4656
    %v5525 = vpack.c.b16 %v4661, %v4657
    %v5526 = vpack.c.b16 %v4662, %v4658
    %v5527 = vpack.c.b16 %v4663, %v4659
    %v5528 = vpack.c.b16 %v4668, %v4664
    %v5529 = vpack.c.b16 %v4669, %v4665
    %v5530 = vpack.c.b16 %v4670, %v4666
    %v5531 = vpack.c.b16 %v4671, %v4667
    %v5532 = vpack.c.b16 %v4676, %v4672
    %v5533 = vpack.c.b16 %v4677, %v4673
    %v5534 = vpack.c.b16 %v4678, %v4674
    %v5535 = vpack.c.b16 %v4679, %v4675
    %v5536 = vpack.c.b16 %v4684, %v4680
    %v5537 = vpack.c.b16 %v4685, %v4681
    %v5538 = vpack.c.b16 %v4686, %v4682
    %v5539 = vpack.c.b16 %v4687, %v4683
    %v5540 = vpack.c.b16 %v4692, %v4688
    %v5541 = vpack.c.b16 %v4693, %v4689
    %v5542 = vpack.c.b16 %v4694, %v4690
    %v5543 = vpack.c.b16 %v4695, %v4691
    %v5544 = vpack.c.b16 %v4700, %v4696
    %v5545 = vpack.c.b16 %v4701, %v4697
    %v5546 = vpack.c.b16 %v4702, %v4698
    %v5547 = vpack.c.b16 %v4703, %v4699
    %v5548 = vpack.c.b16 %v4708, %v4704
    %v5549 = vpack.c.b16 %v4709, %v4705
    %v5550 = vpack.c.b16 %v4710, %v4706
    %v5551 = vpack.c.b16 %v4711, %v4707
    %v5552 = vpack.c.b16 %v4716, %v4712
    %v5553 = vpack.c.b16 %v4717, %v4713
    %v5554 = vpack.c.b16 %v4718, %v4714
    %v5555 = vpack.c.b16 %v4719, %v4715
    %v5556 = vpack.c.b16 %v4724, %v4720
    %v5557 = vpack.c.b16 %v4725, %v4721
    %v5558 = vpack.c.b16 %v4726, %v4722
    %v5559 = vpack.c.b16 %v4727, %v4723
    %v5560 = vpack.c.b16 %v4732, %v4728
    %v5561 = vpack.c.b16 %v4733, %v4729
    %v5562 = vpack.c.b16 %v4734, %v4730
    %v5563 = vpack.c.b16 %v4735, %v4731
    %v5564 = vpack.c.b16 %v4740, %v4736
    %v5565 = vpack.c.b16 %v4741, %v4737
    %v5566 = vpack.c.b16 %v4742, %v4738
    %v5567 = vpack.c.b16 %v4743, %v4739
    %v5568 = vpack.c.b16 %v4748, %v4744
    %v5569 = vpack.c.b16 %v4749, %v4745
    %v5570 = vpack.c.b16 %v4750, %v4746
    %v5571 = vpack.c.b16 %v4751, %v4747
    %v5572 = vpack.c.b16 %v4756, %v4752
    %v5573 = vpack.c.b16 %v4757, %v4753
    %v5574 = vpack.c.b16 %v4758, %v4754
    %v5575 = vpack.c.b16 %v4759, %v4755
    %v5576 = vpack.c.b16 %v4764, %v4760
    %v5577 = vpack.c.b16 %v4765, %v4761
    %v5578 = vpack.c.b16 %v4766, %v4762
    %v5579 = vpack.c.b16 %v4767, %v4763
    %v5580 = vpack.c.b16 %v4772, %v4768
    %v5581 = vpack.c.b16 %v4773, %v4769
    %v5582 = vpack.c.b16 %v4774, %v4770
    %v5583 = vpack.c.b16 %v4775, %v4771
    %v5584 = vpack.c.b16 %v4780, %v4776
    %v5585 = vpack.c.b16 %v4781, %v4777
    %v5586 = vpack.c.b16 %v4782, %v4778
    %v5587 = vpack.c.b16 %v4783, %v4779
    %v5588 = vpack.c.b16 %v4788, %v4784
    %v5589 = vpack.c.b16 %v4789, %v4785
    %v5590 = vpack.c.b16 %v4790, %v4786
    %v5591 = vpack.c.b16 %v4791, %v4787
    %v5592 = vpack.c.b16 %v4796, %v4792
    %v5593 = vpack.c.b16 %v4797, %v4793
    %v5594 = vpack.c.b16 %v4798, %v4794
    %v5595 = vpack.c.b16 %v4799, %v4795
    %v5596 = vpack.c.b16 %v4804, %v4800
    %v5597 = vpack.c.b16 %v4805, %v4801
    %v5598 = vpack.c.b16 %v4806, %v4802
    %v5599 = vpack.c.b16 %v4807, %v4803
    %v5600 = vpack.c.b16 %v4812, %v4808
    %v5601 = vpack.c.b16 %v4813, %v4809
    %v5602 = vpack.c.b16 %v4814, %v4810
    %v5603 = vpack.c.b16 %v4815, %v4811
    %v5604 = vpack.c.b16 %v4820, %v4816
    %v5605 = vpack.c.b16 %v4821, %v4817
    %v5606 = vpack.c.b16 %v4822, %v4818
    %v5607 = vpack.c.b16 %v4823, %v4819
    %v5608 = vpack.c.b16 %v4828, %v4824
    %v5609 = vpack.c.b16 %v4829, %v4825
    %v5610 = vpack.c.b16 %v4830, %v4826
    %v5611 = vpack.c.b16 %v4831, %v4827
    %v5612 = vpack.c.b16 %v4836, %v4832
    %v5613 = vpack.c.b16 %v4837, %v4833
    %v5614 = vpack.c.b16 %v4838, %v4834
    %v5615 = vpack.c.b16 %v4839, %v4835
    %v5616 = vpack.c.b16 %v4844, %v4840
    %v5617 = vpack.c.b16 %v4845, %v4841
    %v5618 = vpack.c.b16 %v4846, %v4842
    %v5619 = vpack.c.b16 %v4847, %v4843
    %v5620 = vpack.c.b16 %v4852, %v4848
    %v5621 = vpack.c.b16 %v4853, %v4849
    %v5622 = vpack.c.b16 %v4854, %v4850
    %v5623 = vpack.c.b16 %v4855, %v4851
    %v5624 = vpack.c.b16 %v4860, %v4856
    %v5625 = vpack.c.b16 %v4861, %v4857
    %v5626 = vpack.c.b16 %v4862, %v4858
    %v5627 = vpack.c.b16 %v4863, %v4859
    %v5628 = vpack.c.b16 %v4868, %v4864
    %v5629 = vpack.c.b16 %v4869, %v4865
    %v5630 = vpack.c.b16 %v4870, %v4866
    %v5631 = vpack.c.b16 %v4871, %v4867
    %v5632 = vpack.c.b16 %v4876, %v4872
    %v5633 = vpack.c.b16 %v4877, %v4873
    %v5634 = vpack.c.b16 %v4878, %v4874
    %v5635 = vpack.c.b16 %v4879, %v4875
    %v5636 = vpack.c.b16 %v4884, %v4880
    %v5637 = vpack.c.b16 %v4885, %v4881
    %v5638 = vpack.c.b16 %v4886, %v4882
    %v5639 = vpack.c.b16 %v4887, %v4883
    %v5640 = vpack.c.b16 %v4892, %v4888
    %v5641 = vpack.c.b16 %v4893, %v4889
    %v5642 = vpack.c.b16 %v4894, %v4890
    %v5643 = vpack.c.b16 %v4895, %v4891
    %v5644 = vpack.c.b16 %v4900, %v4896
    %v5645 = vpack.c.b16 %v4901, %v4897
    %v5646 = vpack.c.b16 %v4902, %v4898
    %v5647 = vpack.c.b16 %v4903, %v4899
    %v5648 = vpack.c.b16 %v4908, %v4904
    %v5649 = vpack.c.b16 %v4909, %v4905
    %v5650 = vpack.c.b16 %v4910, %v4906
    %v5651 = vpack.c.b16 %v4911, %v4907
    %v5652 = vpack.c.b16 %v4916, %v4912
    %v5653 = vpack.c.b16 %v4917, %v4913
    %v5654 = vpack.c.b16 %v4918, %v4914
    %v5655 = vpack.c.b16 %v4919, %v4915
    %v5656 = vpack.c.b16 %v4924, %v4920
    %v5657 = vpack.c.b16 %v4925, %v4921
    %v5658 = vpack.c.b16 %v4926, %v4922
    %v5659 = vpack.c.b16 %v4927, %v4923
    %v5660 = vpack.c.b16 %v4932, %v4928
    %v5661 = vpack.c.b16 %v4933, %v4929
    %v5662 = vpack.c.b16 %v4934, %v4930
    %v5663 = vpack.c.b16 %v4935, %v4931
    %v5664 = vpack.c.b16 %v4940, %v4936
    %v5665 = vpack.c.b16 %v4941, %v4937
    %v5666 = vpack.c.b16 %v4942, %v4938
    %v5667 = vpack.c.b16 %v4943, %v4939
    %v5668 = vpack.c.b16 %v4948, %v4944
    %v5669 = vpack.c.b16 %v4949, %v4945
    %v5670 = vpack.c.b16 %v4950, %v4946
    %v5671 = vpack.c.b16 %v4951, %v4947
    %v5672 = vpack.c.b16 %v4956, %v4952
    %v5673 = vpack.c.b16 %v4957, %v4953
    %v5674 = vpack.c.b16 %v4958, %v4954
    %v5675 = vpack.c.b16 %v4959, %v4955
    %v5676 = vpack.c.b16 %v4964, %v4960
    %v5677 = vpack.c.b16 %v4965, %v4961
    %v5678 = vpack.c.b16 %v4966, %v4962
    %v5679 = vpack.c.b16 %v4967, %v4963
    %v5680 = vpack.c.b16 %v4972, %v4968
    %v5681 = vpack.c.b16 %v4973, %v4969
    %v5682 = vpack.c.b16 %v4974, %v4970
    %v5683 = vpack.c.b16 %v4975, %v4971
    %v5684 = vpack.c.b16 %v4980, %v4976
    %v5685 = vpack.c.b16 %v4981, %v4977
    %v5686 = vpack.c.b16 %v4982, %v4978
    %v5687 = vpack.c.b16 %v4983, %v4979
    %v5688 = vpack.c.b16 %v4988, %v4984
    %v5689 = vpack.c.b16 %v4989, %v4985
    %v5690 = vpack.c.b16 %v4990, %v4986
    %v5691 = vpack.c.b16 %v4991, %v4987
    %v5692 = vpack.c.b16 %v4996, %v4992
    %v5693 = vpack.c.b16 %v4997, %v4993
    %v5694 = vpack.c.b16 %v4998, %v4994
    %v5695 = vpack.c.b16 %v4999, %v4995
    %v5696 = vpack.c.b16 %v5004, %v5000
    %v5697 = vpack.c.b16 %v5005, %v5001
    %v5698 = vpack.c.b16 %v5006, %v5002
    %v5699 = vpack.c.b16 %v5007, %v5003
    %v5700 = vpack.c.b16 %v5012, %v5008
    %v5701 = vpack.c.b16 %v5013, %v5009
    %v5702 = vpack.c.b16 %v5014, %v5010
    %v5703 = vpack.c.b16 %v5015, %v5011
    %v5704 = vpack.c.b16 %v5020, %v5016
    %v5705 = vpack.c.b16 %v5021, %v5017
    %v5706 = vpack.c.b16 %v5022, %v5018
    %v5707 = vpack.c.b16 %v5023, %v5019
    %v5708 = vpack.c.b16 %v5028, %v5024
    %v5709 = vpack.c.b16 %v5029, %v5025
    %v5710 = vpack.c.b16 %v5030, %v5026
    %v5711 = vpack.c.b16 %v5031, %v5027
    %v5712 = vpack.c.b16 %v5036, %v5032
    %v5713 = vpack.c.b16 %v5037, %v5033
    %v5714 = vpack.c.b16 %v5038, %v5034
    %v5715 = vpack.c.b16 %v5039, %v5035
    %v5716 = vpack.c.b16 %v5044, %v5040
    %v5717 = vpack.c.b16 %v5045, %v5041
    %v5718 = vpack.c.b16 %v5046, %v5042
    %v5719 = vpack.c.b16 %v5047, %v5043
    %v5720 = vpack.c.b16 %v5052, %v5048
    %v5721 = vpack.c.b16 %v5053, %v5049
    %v5722 = vpack.c.b16 %v5054, %v5050
    %v5723 = vpack.c.b16 %v5055, %v5051
    %v5724 = vpack.c.b16 %v5060, %v5056
    %v5725 = vpack.c.b16 %v5061, %v5057
    %v5726 = vpack.c.b16 %v5062, %v5058
    %v5727 = vpack.c.b16 %v5063, %v5059
    %v5728 = vpack.c.b16 %v5068, %v5064
    %v5729 = vpack.c.b16 %v5069, %v5065
    %v5730 = vpack.c.b16 %v5070, %v5066
    %v5731 = vpack.c.b16 %v5071, %v5067
    %v5732 = vpack.c.b16 %v5076, %v5072
    %v5733 = vpack.c.b16 %v5077, %v5073
    %v5734 = vpack.c.b16 %v5078, %v5074
    %v5735 = vpack.c.b16 %v5079, %v5075
    %v5736 = vpack.c.b16 %v5084, %v5080
    %v5737 = vpack.c.b16 %v5085, %v5081
    %v5738 = vpack.c.b16 %v5086, %v5082
    %v5739 = vpack.c.b16 %v5087, %v5083
    %v5740 = vpack.c.b16 %v5092, %v5088
    %v5741 = vpack.c.b16 %v5093, %v5089
    %v5742 = vpack.c.b16 %v5094, %v5090
    %v5743 = vpack.c.b16 %v5095, %v5091
    %v5744 = vpack.c.b16 %v5100, %v5096
    %v5745 = vpack.c.b16 %v5101, %v5097
    %v5746 = vpack.c.b16 %v5102, %v5098
    %v5747 = vpack.c.b16 %v5103, %v5099
    %v5748 = vpack.c.b16 %v5108, %v5104
    %v5749 = vpack.c.b16 %v5109, %v5105
    %v5750 = vpack.c.b16 %v5110, %v5106
    %v5751 = vpack.c.b16 %v5111, %v5107
    %v5752 = vpack.c.b16 %v5116, %v5112
    %v5753 = vpack.c.b16 %v5117, %v5113
    %v5754 = vpack.c.b16 %v5118, %v5114
    %v5755 = vpack.c.b16 %v5119, %v5115
    %v5756 = vpack.c.b16 %v5124, %v5120
    %v5757 = vpack.c.b16 %v5125, %v5121
    %v5758 = vpack.c.b16 %v5126, %v5122
    %v5759 = vpack.c.b16 %v5127, %v5123
    %v5760 = vpack.c.b16 %v5132, %v5128
    %v5761 = vpack.c.b16 %v5133, %v5129
    %v5762 = vpack.c.b16 %v5134, %v5130
    %v5763 = vpack.c.b16 %v5135, %v5131
    %v5764 = vpack.c.b16 %v5140, %v5136
    %v5765 = vpack.c.b16 %v5141, %v5137
    %v5766 = vpack.c.b16 %v5142, %v5138
    %v5767 = vpack.c.b16 %v5143, %v5139
    %v5768 = vpack.c.b16 %v5148, %v5144
    %v5769 = vpack.c.b16 %v5149, %v5145
    %v5770 = vpack.c.b16 %v5150, %v5146
    %v5771 = vpack.c.b16 %v5151, %v5147
    %v5772 = vpack.c.b16 %v5156, %v5152
    %v5773 = vpack.c.b16 %v5157, %v5153
    %v5774 = vpack.c.b16 %v5158, %v5154
    %v5775 = vpack.c.b16 %v5159, %v5155
    %v5776 = vpack.c.b16 %v5164, %v5160
    %v5777 = vpack.c.b16 %v5165, %v5161
    %v5778 = vpack.c.b16 %v5166, %v5162
    %v5779 = vpack.c.b16 %v5167, %v5163
    %v5780 = vpack.c.b16 %v5172, %v5168
    %v5781 = vpack.c.b16 %v5173, %v5169
    %v5782 = vpack.c.b16 %v5174, %v5170
    %v5783 = vpack.c.b16 %v5175, %v5171
    %v5784 = vpack.c.b16 %v5180, %v5176
    %v5785 = vpack.c.b16 %v5181, %v5177
    %v5786 = vpack.c.b16 %v5182, %v5178
    %v5787 = vpack.c.b16 %v5183, %v5179
    %v5788 = vpack.c.b16 %v5188, %v5184
    %v5789 = vpack.c.b16 %v5189, %v5185
    %v5790 = vpack.c.b16 %v5190, %v5186
    %v5791 = vpack.c.b16 %v5191, %v5187
    %v5792 = vpack.c.b16 %v5196, %v5192
    %v5793 = vpack.c.b16 %v5197, %v5193
    %v5794 = vpack.c.b16 %v5198, %v5194
    %v5795 = vpack.c.b16 %v5199, %v5195
    %v5796 = vpack.c.b16 %v5204, %v5200
    %v5797 = vpack.c.b16 %v5205, %v5201
    %v5798 = vpack.c.b16 %v5206, %v5202
    %v5799 = vpack.c.b16 %v5207, %v5203
    %v5800 = vpack.c.b16 %v5212, %v5208
    %v5801 = vpack.c.b16 %v5213, %v5209
    %v5802 = vpack.c.b16 %v5214, %v5210
    %v5803 = vpack.c.b16 %v5215, %v5211
    %v5804 = vpack.c.b16 %v5220, %v5216
    %v5805 = vpack.c.b16 %v5221, %v5217
    %v5806 = vpack.c.b16 %v5222, %v5218
    %v5807 = vpack.c.b16 %v5223, %v5219
    %v5808 = vpack.c.b16 %v5228, %v5224
    %v5809 = vpack.c.b16 %v5229, %v5225
    %v5810 = vpack.c.b16 %v5230, %v5226
    %v5811 = vpack.c.b16 %v5231, %v5227
    %v5812 = vpack.c.b16 %v5236, %v5232
    %v5813 = vpack.c.b16 %v5237, %v5233
    %v5814 = vpack.c.b16 %v5238, %v5234
    %v5815 = vpack.c.b16 %v5239, %v5235
    %v5816 = vpack.c.b16 %v5244, %v5240
    %v5817 = vpack.c.b16 %v5245, %v5241
    %v5818 = vpack.c.b16 %v5246, %v5242
    %v5819 = vpack.c.b16 %v5247, %v5243
    %v5820 = vpack.c.b16 %v5252, %v5248
    %v5821 = vpack.c.b16 %v5253, %v5249
    %v5822 = vpack.c.b16 %v5254, %v5250
    %v5823 = vpack.c.b16 %v5255, %v5251
    %v5824 = vpack.c.b16 %v5260, %v5256
    %v5825 = vpack.c.b16 %v5261, %v5257
    %v5826 = vpack.c.b16 %v5262, %v5258
    %v5827 = vpack.c.b16 %v5263, %v5259
    %v5828 = vpack.c.b16 %v5268, %v5264
    %v5829 = vpack.c.b16 %v5269, %v5265
    %v5830 = vpack.c.b16 %v5270, %v5266
    %v5831 = vpack.c.b16 %v5271, %v5267
    %v5832 = vpack.c.b16 %v5276, %v5272
    %v5833 = vpack.c.b16 %v5277, %v5273
    %v5834 = vpack.c.b16 %v5278, %v5274
    %v5835 = vpack.c.b16 %v5279, %v5275
    %v5836 = vpack.c.b16 %v5284, %v5280
    %v5837 = vpack.c.b16 %v5285, %v5281
    %v5838 = vpack.c.b16 %v5286, %v5282
    %v5839 = vpack.c.b16 %v5287, %v5283
    %v5840 = vpack.c.b16 %v5292, %v5288
    %v5841 = vpack.c.b16 %v5293, %v5289
    %v5842 = vpack.c.b16 %v5294, %v5290
    %v5843 = vpack.c.b16 %v5295, %v5291
    %v5844 = vpack.c.b16 %v5300, %v5296
    %v5845 = vpack.c.b16 %v5301, %v5297
    %v5846 = vpack.c.b16 %v5302, %v5298
    %v5847 = vpack.c.b16 %v5303, %v5299
    %v5848 = vpack.c.b16 %v5308, %v5304
    %v5849 = vpack.c.b16 %v5309, %v5305
    %v5850 = vpack.c.b16 %v5310, %v5306
    %v5851 = vpack.c.b16 %v5311, %v5307
    %v5852 = vpack.c.b16 %v5316, %v5312
    %v5853 = vpack.c.b16 %v5317, %v5313
    %v5854 = vpack.c.b16 %v5318, %v5314
    %v5855 = vpack.c.b16 %v5319, %v5315
    %v5856 = vpack.c.b16 %v5324, %v5320
    %v5857 = vpack.c.b16 %v5325, %v5321
    %v5858 = vpack.c.b16 %v5326, %v5322
    %v5859 = vpack.c.b16 %v5327, %v5323
    %v5860 = vpack.c.b16 %v5332, %v5328
    %v5861 = vpack.c.b16 %v5333, %v5329
    %v5862 = vpack.c.b16 %v5334, %v5330
    %v5863 = vpack.c.b16 %v5335, %v5331
    %v5864 = vpack.c.b16 %v5340, %v5336
    %v5865 = vpack.c.b16 %v5341, %v5337
    %v5866 = vpack.c.b16 %v5342, %v5338
    %v5867 = vpack.c.b16 %v5343, %v5339
    %v5868 = vpack.c.b16 %v5348, %v5344
    %v5869 = vpack.c.b16 %v5349, %v5345
    %v5870 = vpack.c.b16 %v5350, %v5346
    %v5871 = vpack.c.b16 %v5351, %v5347
    %v5872 = vpack.c.b16 %v5356, %v5352
    %v5873 = vpack.c.b16 %v5357, %v5353
    %v5874 = vpack.c.b16 %v5358, %v5354
    %v5875 = vpack.c.b16 %v5359, %v5355
    %v5876 = vpack.c.b16 %v5364, %v5360
    %v5877 = vpack.c.b16 %v5365, %v5361
    %v5878 = vpack.c.b16 %v5366, %v5362
    %v5879 = vpack.c.b16 %v5367, %v5363
    %6392 = vmatprep.subr.bf16.mxu0 %v5369
    %6393 = vmatpush1.bf16.msra.mxu0 %v5368
    %6394 = vmatprep.subr.bf16.mxu0 %v5373
    %6395 = vmatpush1.bf16.msra.mxu0 %v5372
    %6396 = vmatprep.subr.bf16.mxu0 %v5377
    %6397 = vmatpush1.bf16.msra.mxu0 %v5376
    %6398 = vmatprep.subr.bf16.mxu0 %v5381
    %6399 = vmatpush1.bf16.msra.mxu0 %v5380
    %6400 = vmatprep.subr.bf16.mxu0 %v5385
    %6401 = vmatpush1.bf16.msra.mxu0 %v5384
    %6402 = vmatprep.subr.bf16.mxu0 %v5389
    %6403 = vmatpush1.bf16.msra.mxu0 %v5388
    %6404 = vmatprep.subr.bf16.mxu0 %v5393
    %6405 = vmatpush1.bf16.msra.mxu0 %v5392
    %6406 = vmatprep.subr.bf16.mxu0 %v5397
    %6407 = vmatpush1.bf16.msra.mxu0 %v5396
    %6408 = vmatprep.subr.bf16.mxu0 %v5401
    %6409 = vmatpush1.bf16.msra.mxu0 %v5400
    %6410 = vmatprep.subr.bf16.mxu0 %v5405
    %6411 = vmatpush1.bf16.msra.mxu0 %v5404
    %6412 = vmatprep.subr.bf16.mxu0 %v5409
    %6413 = vmatpush1.bf16.msra.mxu0 %v5408
    %6414 = vmatprep.subr.bf16.mxu0 %v5413
    %6415 = vmatpush1.bf16.msra.mxu0 %v5412
    %6416 = vmatprep.subr.bf16.mxu0 %v5417
    %6417 = vmatpush1.bf16.msra.mxu0 %v5416
    %6418 = vmatprep.subr.bf16.mxu0 %v5421
    %6419 = vmatpush1.bf16.msra.mxu0 %v5420
    %6420 = vmatprep.subr.bf16.mxu0 %v5425
    %6421 = vmatpush1.bf16.msra.mxu0 %v5424
    %6422 = vmatprep.subr.bf16.mxu0 %v5429
    %6423 = vmatpush1.bf16.msra.mxu0 %v5428
    %6424 = vmatprep.mubr.bf16.mxu0 %v3305
    %6425 = vmatmul.mubr.bf16.gmra.mrb[0].mxu0 %v3304
    %v6426 = vpop.f32.mrb[0].mxu0
    %v6427 = vadd.f32 0.0, %v6426
    %v6428 = vpop.f32.mrb[0].mxu0
    %v6429 = vadd.f32 0.0, %v6428
    %v6430 = vpop.f32.mrb[0].mxu0
    %v6431 = vpop.f32.mrb[0].mxu0
    %6432 = vdwg.mxu0
    %6433 = vmatprep.subr.bf16.mxu0 %v5433
    %6434 = vmatpush1.bf16.msra.mxu0 %v5432
    %6435 = vmatprep.subr.bf16.mxu0 %v5437
    %6436 = vmatpush1.bf16.msra.mxu0 %v5436
    %6437 = vmatprep.subr.bf16.mxu0 %v5441
    %6438 = vmatpush1.bf16.msra.mxu0 %v5440
    %6439 = vmatprep.subr.bf16.mxu0 %v5445
    %6440 = vmatpush1.bf16.msra.mxu0 %v5444
    %6441 = vmatprep.subr.bf16.mxu0 %v5449
    %6442 = vmatpush1.bf16.msra.mxu0 %v5448
    %6443 = vmatprep.subr.bf16.mxu0 %v5453
    %6444 = vmatpush1.bf16.msra.mxu0 %v5452
    %6445 = vmatprep.subr.bf16.mxu0 %v5457
    %6446 = vmatpush1.bf16.msra.mxu0 %v5456
    %6447 = vmatprep.subr.bf16.mxu0 %v5461
    %6448 = vmatpush1.bf16.msra.mxu0 %v5460
    %6449 = vmatprep.subr.bf16.mxu0 %v5465
    %6450 = vmatpush1.bf16.msra.mxu0 %v5464
    %6451 = vmatprep.subr.bf16.mxu0 %v5469
    %6452 = vmatpush1.bf16.msra.mxu0 %v5468
    %6453 = vmatprep.subr.bf16.mxu0 %v5473
    %6454 = vmatpush1.bf16.msra.mxu0 %v5472
    %6455 = vmatprep.subr.bf16.mxu0 %v5477
    %6456 = vmatpush1.bf16.msra.mxu0 %v5476
    %6457 = vmatprep.subr.bf16.mxu0 %v5481
    %6458 = vmatpush1.bf16.msra.mxu0 %v5480
    %6459 = vmatprep.subr.bf16.mxu0 %v5485
    %6460 = vmatpush1.bf16.msra.mxu0 %v5484
    %6461 = vmatprep.subr.bf16.mxu0 %v5489
    %6462 = vmatpush1.bf16.msra.mxu0 %v5488
    %6463 = vmatprep.subr.bf16.mxu0 %v5493
    %6464 = vmatpush1.bf16.msra.mxu0 %v5492
    %6465 = vmatprep.mubr.bf16.mxu0 %v3307
    %6466 = vmatmul.mubr.bf16.gmra.mrb[0].mxu0 %v3306
    %v6467 = vpop.f32.mrb[0].mxu0
    %v6468 = vadd.f32 %v6427, %v6467
    %v6469 = vpop.f32.mrb[0].mxu0
    %v6470 = vadd.f32 %v6429, %v6469
    %v6471 = vpop.f32.mrb[0].mxu0
    %v6472 = vpop.f32.mrb[0].mxu0
    %6473 = vdwg.mxu0
    %6474 = vmatprep.subr.bf16.mxu0 %v5497
    %6475 = vmatpush1.bf16.msra.mxu0 %v5496
    %6476 = vmatprep.subr.bf16.mxu0 %v5501
    %6477 = vmatpush1.bf16.msra.mxu0 %v5500
    %6478 = vmatprep.subr.bf16.mxu0 %v5505
    %6479 = vmatpush1.bf16.msra.mxu0 %v5504
    %6480 = vmatprep.subr.bf16.mxu0 %v5509
    %6481 = vmatpush1.bf16.msra.mxu0 %v5508
    %6482 = vmatprep.subr.bf16.mxu0 %v5513
    %6483 = vmatpush1.bf16.msra.mxu0 %v5512
    %6484 = vmatprep.subr.bf16.mxu0 %v5517
    %6485 = vmatpush1.bf16.msra.mxu0 %v5516
    %6486 = vmatprep.subr.bf16.mxu0 %v5521
    %6487 = vmatpush1.bf16.msra.mxu0 %v5520
    %6488 = vmatprep.subr.bf16.mxu0 %v5525
    %6489 = vmatpush1.bf16.msra.mxu0 %v5524
    %6490 = vmatprep.subr.bf16.mxu0 %v5529
    %6491 = vmatpush1.bf16.msra.mxu0 %v5528
    %6492 = vmatprep.subr.bf16.mxu0 %v5533
    %6493 = vmatpush1.bf16.msra.mxu0 %v5532
    %6494 = vmatprep.subr.bf16.mxu0 %v5537
    %6495 = vmatpush1.bf16.msra.mxu0 %v5536
    %6496 = vmatprep.subr.bf16.mxu0 %v5541
    %6497 = vmatpush1.bf16.msra.mxu0 %v5540
    %6498 = vmatprep.subr.bf16.mxu0 %v5545
    %6499 = vmatpush1.bf16.msra.mxu0 %v5544
    %6500 = vmatprep.subr.bf16.mxu0 %v5549
    %6501 = vmatpush1.bf16.msra.mxu0 %v5548
    %6502 = vmatprep.subr.bf16.mxu0 %v5553
    %6503 = vmatpush1.bf16.msra.mxu0 %v5552
    %6504 = vmatprep.subr.bf16.mxu0 %v5557
    %6505 = vmatpush1.bf16.msra.mxu0 %v5556
    %6506 = vmatprep.mubr.bf16.mxu0 %v3309
    %6507 = vmatmul.mubr.bf16.gmra.mrb[0].mxu0 %v3308
    %v6508 = vpop.f32.mrb[0].mxu0
    %v6509 = vadd.f32 %v6468, %v6508
    %v6510 = vpop.f32.mrb[0].mxu0
    %v6511 = vadd.f32 %v6470, %v6510
    %v6512 = vpop.f32.mrb[0].mxu0
    %v6513 = vpop.f32.mrb[0].mxu0
    %6514 = vdwg.mxu0
    %6515 = vmatprep.subr.bf16.mxu0 %v5561
    %6516 = vmatpush1.bf16.msra.mxu0 %v5560
    %6517 = vmatprep.subr.bf16.mxu0 %v5565
    %6518 = vmatpush1.bf16.msra.mxu0 %v5564
    %6519 = vmatprep.subr.bf16.mxu0 %v5569
    %6520 = vmatpush1.bf16.msra.mxu0 %v5568
    %6521 = vmatprep.subr.bf16.mxu0 %v5573
    %6522 = vmatpush1.bf16.msra.mxu0 %v5572
    %6523 = vmatprep.subr.bf16.mxu0 %v5577
    %6524 = vmatpush1.bf16.msra.mxu0 %v5576
    %6525 = vmatprep.subr.bf16.mxu0 %v5581
    %6526 = vmatpush1.bf16.msra.mxu0 %v5580
    %6527 = vmatprep.subr.bf16.mxu0 %v5585
    %6528 = vmatpush1.bf16.msra.mxu0 %v5584
    %6529 = vmatprep.subr.bf16.mxu0 %v5589
    %6530 = vmatpush1.bf16.msra.mxu0 %v5588
    %6531 = vmatprep.subr.bf16.mxu0 %v5593
    %6532 = vmatpush1.bf16.msra.mxu0 %v5592
    %6533 = vmatprep.subr.bf16.mxu0 %v5597
    %6534 = vmatpush1.bf16.msra.mxu0 %v5596
    %6535 = vmatprep.subr.bf16.mxu0 %v5601
    %6536 = vmatpush1.bf16.msra.mxu0 %v5600
    %6537 = vmatprep.subr.bf16.mxu0 %v5605
    %6538 = vmatpush1.bf16.msra.mxu0 %v5604
    %6539 = vmatprep.subr.bf16.mxu0 %v5609
    %6540 = vmatpush1.bf16.msra.mxu0 %v5608
    %6541 = vmatprep.subr.bf16.mxu0 %v5613
    %6542 = vmatpush1.bf16.msra.mxu0 %v5612
    %6543 = vmatprep.subr.bf16.mxu0 %v5617
    %6544 = vmatpush1.bf16.msra.mxu0 %v5616
    %6545 = vmatprep.subr.bf16.mxu0 %v5621
    %6546 = vmatpush1.bf16.msra.mxu0 %v5620
    %6547 = vmatprep.mubr.bf16.mxu0 %v3311
    %6548 = vmatmul.mubr.bf16.gmra.mrb[0].mxu0 %v3310
    %v6549 = vpop.f32.mrb[0].mxu0
    %v6550 = vadd.f32 %v6509, %v6549
    %v6551 = vpop.f32.mrb[0].mxu0
    %v6552 = vadd.f32 %v6511, %v6551
    %v6553 = vpop.f32.mrb[0].mxu0
    %v6554 = vpop.f32.mrb[0].mxu0
    %6555 = vdwg.mxu0
    %6556 = vmatprep.subr.bf16.mxu0 %v5625
    %6557 = vmatpush1.bf16.msra.mxu0 %v5624
    %6558 = vmatprep.subr.bf16.mxu0 %v5629
    %6559 = vmatpush1.bf16.msra.mxu0 %v5628
    %6560 = vmatprep.subr.bf16.mxu0 %v5633
    %6561 = vmatpush1.bf16.msra.mxu0 %v5632
    %6562 = vmatprep.subr.bf16.mxu0 %v5637
    %6563 = vmatpush1.bf16.msra.mxu0 %v5636
    %6564 = vmatprep.subr.bf16.mxu0 %v5641
    %6565 = vmatpush1.bf16.msra.mxu0 %v5640
    %6566 = vmatprep.subr.bf16.mxu0 %v5645
    %6567 = vmatpush1.bf16.msra.mxu0 %v5644
    %6568 = vmatprep.subr.bf16.mxu0 %v5649
    %6569 = vmatpush1.bf16.msra.mxu0 %v5648
    %6570 = vmatprep.subr.bf16.mxu0 %v5653
    %6571 = vmatpush1.bf16.msra.mxu0 %v5652
    %6572 = vmatprep.subr.bf16.mxu0 %v5657
    %6573 = vmatpush1.bf16.msra.mxu0 %v5656
    %6574 = vmatprep.subr.bf16.mxu0 %v5661
    %6575 = vmatpush1.bf16.msra.mxu0 %v5660
    %6576 = vmatprep.subr.bf16.mxu0 %v5665
    %6577 = vmatpush1.bf16.msra.mxu0 %v5664
    %6578 = vmatprep.subr.bf16.mxu0 %v5669
    %6579 = vmatpush1.bf16.msra.mxu0 %v5668
    %6580 = vmatprep.subr.bf16.mxu0 %v5673
    %6581 = vmatpush1.bf16.msra.mxu0 %v5672
    %6582 = vmatprep.subr.bf16.mxu0 %v5677
    %6583 = vmatpush1.bf16.msra.mxu0 %v5676
    %6584 = vmatprep.subr.bf16.mxu0 %v5681
    %6585 = vmatpush1.bf16.msra.mxu0 %v5680
    %6586 = vmatprep.subr.bf16.mxu0 %v5685
    %6587 = vmatpush1.bf16.msra.mxu0 %v5684
    %6588 = vmatprep.mubr.bf16.mxu0 %v3313
    %6589 = vmatmul.mubr.bf16.gmra.mrb[0].mxu0 %v3312
    %v6590 = vpop.f32.mrb[0].mxu0
    %v6591 = vadd.f32 %v6550, %v6590
    %v6592 = vpop.f32.mrb[0].mxu0
    %v6593 = vadd.f32 %v6552, %v6592
    %v6594 = vpop.f32.mrb[0].mxu0
    %v6595 = vpop.f32.mrb[0].mxu0
    %6596 = vdwg.mxu0
    %6597 = vmatprep.subr.bf16.mxu0 %v5689
    %6598 = vmatpush1.bf16.msra.mxu0 %v5688
    %6599 = vmatprep.subr.bf16.mxu0 %v5693
    %6600 = vmatpush1.bf16.msra.mxu0 %v5692
    %6601 = vmatprep.subr.bf16.mxu0 %v5697
    %6602 = vmatpush1.bf16.msra.mxu0 %v5696
    %6603 = vmatprep.subr.bf16.mxu0 %v5701
    %6604 = vmatpush1.bf16.msra.mxu0 %v5700
    %6605 = vmatprep.subr.bf16.mxu0 %v5705
    %6606 = vmatpush1.bf16.msra.mxu0 %v5704
    %6607 = vmatprep.subr.bf16.mxu0 %v5709
    %6608 = vmatpush1.bf16.msra.mxu0 %v5708
    %6609 = vmatprep.subr.bf16.mxu0 %v5713
    %6610 = vmatpush1.bf16.msra.mxu0 %v5712
    %6611 = vmatprep.subr.bf16.mxu0 %v5717
    %6612 = vmatpush1.bf16.msra.mxu0 %v5716
    %6613 = vmatprep.subr.bf16.mxu0 %v5721
    %6614 = vmatpush1.bf16.msra.mxu0 %v5720
    %6615 = vmatprep.subr.bf16.mxu0 %v5725
    %6616 = vmatpush1.bf16.msra.mxu0 %v5724
    %6617 = vmatprep.subr.bf16.mxu0 %v5729
    %6618 = vmatpush1.bf16.msra.mxu0 %v5728
    %6619 = vmatprep.subr.bf16.mxu0 %v5733
    %6620 = vmatpush1.bf16.msra.mxu0 %v5732
    %6621 = vmatprep.subr.bf16.mxu0 %v5737
    %6622 = vmatpush1.bf16.msra.mxu0 %v5736
    %6623 = vmatprep.subr.bf16.mxu0 %v5741
    %6624 = vmatpush1.bf16.msra.mxu0 %v5740
    %6625 = vmatprep.subr.bf16.mxu0 %v5745
    %6626 = vmatpush1.bf16.msra.mxu0 %v5744
    %6627 = vmatprep.subr.bf16.mxu0 %v5749
    %6628 = vmatpush1.bf16.msra.mxu0 %v5748
    %6629 = vmatprep.mubr.bf16.mxu0 %v3315
    %6630 = vmatmul.mubr.bf16.gmra.mrb[0].mxu0 %v3314
    %v6631 = vpop.f32.mrb[0].mxu0
    %v6632 = vadd.f32 %v6591, %v6631
    %v6633 = vpop.f32.mrb[0].mxu0
    %v6634 = vadd.f32 %v6593, %v6633
    %v6635 = vpop.f32.mrb[0].mxu0
    %v6636 = vpop.f32.mrb[0].mxu0
    %6637 = vdwg.mxu0
    %6638 = vmatprep.subr.bf16.mxu0 %v5753
    %6639 = vmatpush1.bf16.msra.mxu0 %v5752
    %6640 = vmatprep.subr.bf16.mxu0 %v5757
    %6641 = vmatpush1.bf16.msra.mxu0 %v5756
    %6642 = vmatprep.subr.bf16.mxu0 %v5761
    %6643 = vmatpush1.bf16.msra.mxu0 %v5760
    %6644 = vmatprep.subr.bf16.mxu0 %v5765
    %6645 = vmatpush1.bf16.msra.mxu0 %v5764
    %6646 = vmatprep.subr.bf16.mxu0 %v5769
    %6647 = vmatpush1.bf16.msra.mxu0 %v5768
    %6648 = vmatprep.subr.bf16.mxu0 %v5773
    %6649 = vmatpush1.bf16.msra.mxu0 %v5772
    %6650 = vmatprep.subr.bf16.mxu0 %v5777
    %6651 = vmatpush1.bf16.msra.mxu0 %v5776
    %6652 = vmatprep.subr.bf16.mxu0 %v5781
    %6653 = vmatpush1.bf16.msra.mxu0 %v5780
    %6654 = vmatprep.subr.bf16.mxu0 %v5785
    %6655 = vmatpush1.bf16.msra.mxu0 %v5784
    %6656 = vmatprep.subr.bf16.mxu0 %v5789
    %6657 = vmatpush1.bf16.msra.mxu0 %v5788
    %6658 = vmatprep.subr.bf16.mxu0 %v5793
    %6659 = vmatpush1.bf16.msra.mxu0 %v5792
    %6660 = vmatprep.subr.bf16.mxu0 %v5797
    %6661 = vmatpush1.bf16.msra.mxu0 %v5796
    %6662 = vmatprep.subr.bf16.mxu0 %v5801
    %6663 = vmatpush1.bf16.msra.mxu0 %v5800
    %6664 = vmatprep.subr.bf16.mxu0 %v5805
    %6665 = vmatpush1.bf16.msra.mxu0 %v5804
    %6666 = vmatprep.subr.bf16.mxu0 %v5809
    %6667 = vmatpush1.bf16.msra.mxu0 %v5808
    %6668 = vmatprep.subr.bf16.mxu0 %v5813
    %6669 = vmatpush1.bf16.msra.mxu0 %v5812
    %6670 = vmatprep.mubr.bf16.mxu0 %v3317
    %6671 = vmatmul.mubr.bf16.gmra.mrb[0].mxu0 %v3316
    %v6672 = vpop.f32.mrb[0].mxu0
    %v6673 = vadd.f32 %v6632, %v6672
    %v6674 = vpop.f32.mrb[0].mxu0
    %v6675 = vadd.f32 %v6634, %v6674
    %v6676 = vpop.f32.mrb[0].mxu0
    %v6677 = vpop.f32.mrb[0].mxu0
    %6678 = vdwg.mxu0
    %6679 = vmatprep.subr.bf16.mxu0 %v5817
    %6680 = vmatpush1.bf16.msra.mxu0 %v5816
    %6681 = vmatprep.subr.bf16.mxu0 %v5821
    %6682 = vmatpush1.bf16.msra.mxu0 %v5820
    %6683 = vmatprep.subr.bf16.mxu0 %v5825
    %6684 = vmatpush1.bf16.msra.mxu0 %v5824
    %6685 = vmatprep.subr.bf16.mxu0 %v5829
    %6686 = vmatpush1.bf16.msra.mxu0 %v5828
    %6687 = vmatprep.subr.bf16.mxu0 %v5833
    %6688 = vmatpush1.bf16.msra.mxu0 %v5832
    %6689 = vmatprep.subr.bf16.mxu0 %v5837
    %6690 = vmatpush1.bf16.msra.mxu0 %v5836
    %6691 = vmatprep.subr.bf16.mxu0 %v5841
    %6692 = vmatpush1.bf16.msra.mxu0 %v5840
    %6693 = vmatprep.subr.bf16.mxu0 %v5845
    %6694 = vmatpush1.bf16.msra.mxu0 %v5844
    %6695 = vmatprep.subr.bf16.mxu0 %v5849
    %6696 = vmatpush1.bf16.msra.mxu0 %v5848
    %6697 = vmatprep.subr.bf16.mxu0 %v5853
    %6698 = vmatpush1.bf16.msra.mxu0 %v5852
    %6699 = vmatprep.subr.bf16.mxu0 %v5857
    %6700 = vmatpush1.bf16.msra.mxu0 %v5856
    %6701 = vmatprep.subr.bf16.mxu0 %v5861
    %6702 = vmatpush1.bf16.msra.mxu0 %v5860
    %6703 = vmatprep.subr.bf16.mxu0 %v5865
    %6704 = vmatpush1.bf16.msra.mxu0 %v5864
    %6705 = vmatprep.subr.bf16.mxu0 %v5869
    %6706 = vmatpush1.bf16.msra.mxu0 %v5868
    %6707 = vmatprep.subr.bf16.mxu0 %v5873
    %6708 = vmatpush1.bf16.msra.mxu0 %v5872
    %6709 = vmatprep.subr.bf16.mxu0 %v5877
    %6710 = vmatpush1.bf16.msra.mxu0 %v5876
    %6711 = vmatprep.mubr.bf16.mxu0 %v3319
    %6712 = vmatmul.mubr.bf16.gmra.mrb[0].mxu0 %v3318
    %v6713 = vpop.f32.mrb[0].mxu0
    %v6714 = vadd.f32 %v6673, %v6713
    %v6715 = vpop.f32.mrb[0].mxu0
    %v6716 = vadd.f32 %v6675, %v6715
    %v6717 = vpop.f32.mrb[0].mxu0
    %v6718 = vpop.f32.mrb[0].mxu0
    %6719 = vdwg.mxu0
    %6720 = vmatprep.subr.bf16.mxu0 %v5371
    %6721 = vmatpush1.bf16.msra.mxu0 %v5370
    %6722 = vmatprep.subr.bf16.mxu0 %v5375
    %6723 = vmatpush1.bf16.msra.mxu0 %v5374
    %6724 = vmatprep.subr.bf16.mxu0 %v5379
    %6725 = vmatpush1.bf16.msra.mxu0 %v5378
    %6726 = vmatprep.subr.bf16.mxu0 %v5383
    %6727 = vmatpush1.bf16.msra.mxu0 %v5382
    %6728 = vmatprep.subr.bf16.mxu0 %v5387
    %6729 = vmatpush1.bf16.msra.mxu0 %v5386
    %6730 = vmatprep.subr.bf16.mxu0 %v5391
    %6731 = vmatpush1.bf16.msra.mxu0 %v5390
    %6732 = vmatprep.subr.bf16.mxu0 %v5395
    %6733 = vmatpush1.bf16.msra.mxu0 %v5394
    %6734 = vmatprep.subr.bf16.mxu0 %v5399
    %6735 = vmatpush1.bf16.msra.mxu0 %v5398
    %6736 = vmatprep.subr.bf16.mxu0 %v5403
    %6737 = vmatpush1.bf16.msra.mxu0 %v5402
    %6738 = vmatprep.subr.bf16.mxu0 %v5407
    %6739 = vmatpush1.bf16.msra.mxu0 %v5406
    %6740 = vmatprep.subr.bf16.mxu0 %v5411
    %6741 = vmatpush1.bf16.msra.mxu0 %v5410
    %6742 = vmatprep.subr.bf16.mxu0 %v5415
    %6743 = vmatpush1.bf16.msra.mxu0 %v5414
    %6744 = vmatprep.subr.bf16.mxu0 %v5419
    %6745 = vmatpush1.bf16.msra.mxu0 %v5418
    %6746 = vmatprep.subr.bf16.mxu0 %v5423
    %6747 = vmatpush1.bf16.msra.mxu0 %v5422
    %6748 = vmatprep.subr.bf16.mxu0 %v5427
    %6749 = vmatpush1.bf16.msra.mxu0 %v5426
    %6750 = vmatprep.subr.bf16.mxu0 %v5431
    %6751 = vmatpush1.bf16.msra.mxu0 %v5430
    %6752 = vmatprep.mubr.bf16.mxu0 %v3305
    %6753 = vmatmul.mubr.bf16.gmra.mrb[0].mxu0 %v3304
    %v6754 = vpop.f32.mrb[0].mxu0
    %v6755 = vadd.f32 0.0, %v6754
    %v6756 = vpop.f32.mrb[0].mxu0
    %v6757 = vadd.f32 0.0, %v6756
    %v6758 = vpop.f32.mrb[0].mxu0
    %v6759 = vpop.f32.mrb[0].mxu0
    %6760 = vdwg.mxu0
    %6761 = vmatprep.subr.bf16.mxu0 %v5435
    %6762 = vmatpush1.bf16.msra.mxu0 %v5434
    %6763 = vmatprep.subr.bf16.mxu0 %v5439
    %6764 = vmatpush1.bf16.msra.mxu0 %v5438
    %6765 = vmatprep.subr.bf16.mxu0 %v5443
    %6766 = vmatpush1.bf16.msra.mxu0 %v5442
    %6767 = vmatprep.subr.bf16.mxu0 %v5447
    %6768 = vmatpush1.bf16.msra.mxu0 %v5446
    %6769 = vmatprep.subr.bf16.mxu0 %v5451
    %6770 = vmatpush1.bf16.msra.mxu0 %v5450
    %6771 = vmatprep.subr.bf16.mxu0 %v5455
    %6772 = vmatpush1.bf16.msra.mxu0 %v5454
    %6773 = vmatprep.subr.bf16.mxu0 %v5459
    %6774 = vmatpush1.bf16.msra.mxu0 %v5458
    %6775 = vmatprep.subr.bf16.mxu0 %v5463
    %6776 = vmatpush1.bf16.msra.mxu0 %v5462
    %6777 = vmatprep.subr.bf16.mxu0 %v5467
    %6778 = vmatpush1.bf16.msra.mxu0 %v5466
    %6779 = vmatprep.subr.bf16.mxu0 %v5471
    %6780 = vmatpush1.bf16.msra.mxu0 %v5470
    %6781 = vmatprep.subr.bf16.mxu0 %v5475
    %6782 = vmatpush1.bf16.msra.mxu0 %v5474
    %6783 = vmatprep.subr.bf16.mxu0 %v5479
    %6784 = vmatpush1.bf16.msra.mxu0 %v5478
    %6785 = vmatprep.subr.bf16.mxu0 %v5483
    %6786 = vmatpush1.bf16.msra.mxu0 %v5482
    %6787 = vmatprep.subr.bf16.mxu0 %v5487
    %6788 = vmatpush1.bf16.msra.mxu0 %v5486
    %6789 = vmatprep.subr.bf16.mxu0 %v5491
    %6790 = vmatpush1.bf16.msra.mxu0 %v5490
    %6791 = vmatprep.subr.bf16.mxu0 %v5495
    %6792 = vmatpush1.bf16.msra.mxu0 %v5494
    %6793 = vmatprep.mubr.bf16.mxu0 %v3307
    %6794 = vmatmul.mubr.bf16.gmra.mrb[0].mxu0 %v3306
    %v6795 = vpop.f32.mrb[0].mxu0
    %v6796 = vadd.f32 %v6755, %v6795
    %v6797 = vpop.f32.mrb[0].mxu0
    %v6798 = vadd.f32 %v6757, %v6797
    %v6799 = vpop.f32.mrb[0].mxu0
    %v6800 = vpop.f32.mrb[0].mxu0
    %6801 = vdwg.mxu0
    %6802 = vmatprep.subr.bf16.mxu0 %v5499
    %6803 = vmatpush1.bf16.msra.mxu0 %v5498
    %6804 = vmatprep.subr.bf16.mxu0 %v5503
    %6805 = vmatpush1.bf16.msra.mxu0 %v5502
    %6806 = vmatprep.subr.bf16.mxu0 %v5507
    %6807 = vmatpush1.bf16.msra.mxu0 %v5506
    %6808 = vmatprep.subr.bf16.mxu0 %v5511
    %6809 = vmatpush1.bf16.msra.mxu0 %v5510
    %6810 = vmatprep.subr.bf16.mxu0 %v5515
    %6811 = vmatpush1.bf16.msra.mxu0 %v5514
    %6812 = vmatprep.subr.bf16.mxu0 %v5519
    %6813 = vmatpush1.bf16.msra.mxu0 %v5518
    %6814 = vmatprep.subr.bf16.mxu0 %v5523
    %6815 = vmatpush1.bf16.msra.mxu0 %v5522
    %6816 = vmatprep.subr.bf16.mxu0 %v5527
    %6817 = vmatpush1.bf16.msra.mxu0 %v5526
    %6818 = vmatprep.subr.bf16.mxu0 %v5531
    %6819 = vmatpush1.bf16.msra.mxu0 %v5530
    %6820 = vmatprep.subr.bf16.mxu0 %v5535
    %6821 = vmatpush1.bf16.msra.mxu0 %v5534
    %6822 = vmatprep.subr.bf16.mxu0 %v5539
    %6823 = vmatpush1.bf16.msra.mxu0 %v5538
    %6824 = vmatprep.subr.bf16.mxu0 %v5543
    %6825 = vmatpush1.bf16.msra.mxu0 %v5542
    %6826 = vmatprep.subr.bf16.mxu0 %v5547
    %6827 = vmatpush1.bf16.msra.mxu0 %v5546
    %6828 = vmatprep.subr.bf16.mxu0 %v5551
    %6829 = vmatpush1.bf16.msra.mxu0 %v5550
    %6830 = vmatprep.subr.bf16.mxu0 %v5555
    %6831 = vmatpush1.bf16.msra.mxu0 %v5554
    %6832 = vmatprep.subr.bf16.mxu0 %v5559
    %6833 = vmatpush1.bf16.msra.mxu0 %v5558
    %6834 = vmatprep.mubr.bf16.mxu0 %v3309
    %6835 = vmatmul.mubr.bf16.gmra.mrb[0].mxu0 %v3308
    %v6836 = vpop.f32.mrb[0].mxu0
    %v6837 = vadd.f32 %v6796, %v6836
    %v6838 = vpop.f32.mrb[0].mxu0
    %v6839 = vadd.f32 %v6798, %v6838
    %v6840 = vpop.f32.mrb[0].mxu0
    %v6841 = vpop.f32.mrb[0].mxu0
    %6842 = vdwg.mxu0
    %6843 = vmatprep.subr.bf16.mxu0 %v5563
    %6844 = vmatpush1.bf16.msra.mxu0 %v5562
    %6845 = vmatprep.subr.bf16.mxu0 %v5567
    %6846 = vmatpush1.bf16.msra.mxu0 %v5566
    %6847 = vmatprep.subr.bf16.mxu0 %v5571
    %6848 = vmatpush1.bf16.msra.mxu0 %v5570
    %6849 = vmatprep.subr.bf16.mxu0 %v5575
    %6850 = vmatpush1.bf16.msra.mxu0 %v5574
    %6851 = vmatprep.subr.bf16.mxu0 %v5579
    %6852 = vmatpush1.bf16.msra.mxu0 %v5578
    %6853 = vmatprep.subr.bf16.mxu0 %v5583
    %6854 = vmatpush1.bf16.msra.mxu0 %v5582
    %6855 = vmatprep.subr.bf16.mxu0 %v5587
    %6856 = vmatpush1.bf16.msra.mxu0 %v5586
    %6857 = vmatprep.subr.bf16.mxu0 %v5591
    %6858 = vmatpush1.bf16.msra.mxu0 %v5590
    %6859 = vmatprep.subr.bf16.mxu0 %v5595
    %6860 = vmatpush1.bf16.msra.mxu0 %v5594
    %6861 = vmatprep.subr.bf16.mxu0 %v5599
    %6862 = vmatpush1.bf16.msra.mxu0 %v5598
    %6863 = vmatprep.subr.bf16.mxu0 %v5603
    %6864 = vmatpush1.bf16.msra.mxu0 %v5602
    %6865 = vmatprep.subr.bf16.mxu0 %v5607
    %6866 = vmatpush1.bf16.msra.mxu0 %v5606
    %6867 = vmatprep.subr.bf16.mxu0 %v5611
    %6868 = vmatpush1.bf16.msra.mxu0 %v5610
    %6869 = vmatprep.subr.bf16.mxu0 %v5615
    %6870 = vmatpush1.bf16.msra.mxu0 %v5614
    %6871 = vmatprep.subr.bf16.mxu0 %v5619
    %6872 = vmatpush1.bf16.msra.mxu0 %v5618
    %6873 = vmatprep.subr.bf16.mxu0 %v5623
    %6874 = vmatpush1.bf16.msra.mxu0 %v5622
    %6875 = vmatprep.mubr.bf16.mxu0 %v3311
    %6876 = vmatmul.mubr.bf16.gmra.mrb[0].mxu0 %v3310
    %v6877 = vpop.f32.mrb[0].mxu0
    %v6878 = vadd.f32 %v6837, %v6877
    %v6879 = vpop.f32.mrb[0].mxu0
    %v6880 = vadd.f32 %v6839, %v6879
    %v6881 = vpop.f32.mrb[0].mxu0
    %v6882 = vpop.f32.mrb[0].mxu0
    %6883 = vdwg.mxu0
    %6884 = vmatprep.subr.bf16.mxu0 %v5627
    %6885 = vmatpush1.bf16.msra.mxu0 %v5626
    %6886 = vmatprep.subr.bf16.mxu0 %v5631
    %6887 = vmatpush1.bf16.msra.mxu0 %v5630
    %6888 = vmatprep.subr.bf16.mxu0 %v5635
    %6889 = vmatpush1.bf16.msra.mxu0 %v5634
    %6890 = vmatprep.subr.bf16.mxu0 %v5639
    %6891 = vmatpush1.bf16.msra.mxu0 %v5638
    %6892 = vmatprep.subr.bf16.mxu0 %v5643
    %6893 = vmatpush1.bf16.msra.mxu0 %v5642
    %6894 = vmatprep.subr.bf16.mxu0 %v5647
    %6895 = vmatpush1.bf16.msra.mxu0 %v5646
    %6896 = vmatprep.subr.bf16.mxu0 %v5651
    %6897 = vmatpush1.bf16.msra.mxu0 %v5650
    %6898 = vmatprep.subr.bf16.mxu0 %v5655
    %6899 = vmatpush1.bf16.msra.mxu0 %v5654
    %6900 = vmatprep.subr.bf16.mxu0 %v5659
    %6901 = vmatpush1.bf16.msra.mxu0 %v5658
    %6902 = vmatprep.subr.bf16.mxu0 %v5663
    %6903 = vmatpush1.bf16.msra.mxu0 %v5662
    %6904 = vmatprep.subr.bf16.mxu0 %v5667
    %6905 = vmatpush1.bf16.msra.mxu0 %v5666
    %6906 = vmatprep.subr.bf16.mxu0 %v5671
    %6907 = vmatpush1.bf16.msra.mxu0 %v5670
    %6908 = vmatprep.subr.bf16.mxu0 %v5675
    %6909 = vmatpush1.bf16.msra.mxu0 %v5674
    %6910 = vmatprep.subr.bf16.mxu0 %v5679
    %6911 = vmatpush1.bf16.msra.mxu0 %v5678
    %6912 = vmatprep.subr.bf16.mxu0 %v5683
    %6913 = vmatpush1.bf16.msra.mxu0 %v5682
    %6914 = vmatprep.subr.bf16.mxu0 %v5687
    %6915 = vmatpush1.bf16.msra.mxu0 %v5686
    %6916 = vmatprep.mubr.bf16.mxu0 %v3313
    %6917 = vmatmul.mubr.bf16.gmra.mrb[0].mxu0 %v3312
    %v6918 = vpop.f32.mrb[0].mxu0
    %v6919 = vadd.f32 %v6878, %v6918
    %v6920 = vpop.f32.mrb[0].mxu0
    %v6921 = vadd.f32 %v6880, %v6920
    %v6922 = vpop.f32.mrb[0].mxu0
    %v6923 = vpop.f32.mrb[0].mxu0
    %6924 = vdwg.mxu0
    %6925 = vmatprep.subr.bf16.mxu0 %v5691
    %6926 = vmatpush1.bf16.msra.mxu0 %v5690
    %6927 = vmatprep.subr.bf16.mxu0 %v5695
    %6928 = vmatpush1.bf16.msra.mxu0 %v5694
    %6929 = vmatprep.subr.bf16.mxu0 %v5699
    %6930 = vmatpush1.bf16.msra.mxu0 %v5698
    %6931 = vmatprep.subr.bf16.mxu0 %v5703
    %6932 = vmatpush1.bf16.msra.mxu0 %v5702
    %6933 = vmatprep.subr.bf16.mxu0 %v5707
    %6934 = vmatpush1.bf16.msra.mxu0 %v5706
    %6935 = vmatprep.subr.bf16.mxu0 %v5711
    %6936 = vmatpush1.bf16.msra.mxu0 %v5710
    %6937 = vmatprep.subr.bf16.mxu0 %v5715
    %6938 = vmatpush1.bf16.msra.mxu0 %v5714
    %6939 = vmatprep.subr.bf16.mxu0 %v5719
    %6940 = vmatpush1.bf16.msra.mxu0 %v5718
    %6941 = vmatprep.subr.bf16.mxu0 %v5723
    %6942 = vmatpush1.bf16.msra.mxu0 %v5722
    %6943 = vmatprep.subr.bf16.mxu0 %v5727
    %6944 = vmatpush1.bf16.msra.mxu0 %v5726
    %6945 = vmatprep.subr.bf16.mxu0 %v5731
    %6946 = vmatpush1.bf16.msra.mxu0 %v5730
    %6947 = vmatprep.subr.bf16.mxu0 %v5735
    %6948 = vmatpush1.bf16.msra.mxu0 %v5734
    %6949 = vmatprep.subr.bf16.mxu0 %v5739
    %6950 = vmatpush1.bf16.msra.mxu0 %v5738
    %6951 = vmatprep.subr.bf16.mxu0 %v5743
    %6952 = vmatpush1.bf16.msra.mxu0 %v5742
    %6953 = vmatprep.subr.bf16.mxu0 %v5747
    %6954 = vmatpush1.bf16.msra.mxu0 %v5746
    %6955 = vmatprep.subr.bf16.mxu0 %v5751
    %6956 = vmatpush1.bf16.msra.mxu0 %v5750
    %6957 = vmatprep.mubr.bf16.mxu0 %v3315
    %6958 = vmatmul.mubr.bf16.gmra.mrb[0].mxu0 %v3314
    %v6959 = vpop.f32.mrb[0].mxu0
    %v6960 = vadd.f32 %v6919, %v6959
    %v6961 = vpop.f32.mrb[0].mxu0
    %v6962 = vadd.f32 %v6921, %v6961
    %v6963 = vpop.f32.mrb[0].mxu0
    %v6964 = vpop.f32.mrb[0].mxu0
    %6965 = vdwg.mxu0
    %6966 = vmatprep.subr.bf16.mxu0 %v5755
    %6967 = vmatpush1.bf16.msra.mxu0 %v5754
    %6968 = vmatprep.subr.bf16.mxu0 %v5759
    %6969 = vmatpush1.bf16.msra.mxu0 %v5758
    %6970 = vmatprep.subr.bf16.mxu0 %v5763
    %6971 = vmatpush1.bf16.msra.mxu0 %v5762
    %6972 = vmatprep.subr.bf16.mxu0 %v5767
    %6973 = vmatpush1.bf16.msra.mxu0 %v5766
    %6974 = vmatprep.subr.bf16.mxu0 %v5771
    %6975 = vmatpush1.bf16.msra.mxu0 %v5770
    %6976 = vmatprep.subr.bf16.mxu0 %v5775
    %6977 = vmatpush1.bf16.msra.mxu0 %v5774
    %6978 = vmatprep.subr.bf16.mxu0 %v5779
    %6979 = vmatpush1.bf16.msra.mxu0 %v5778
    %6980 = vmatprep.subr.bf16.mxu0 %v5783
    %6981 = vmatpush1.bf16.msra.mxu0 %v5782
    %6982 = vmatprep.subr.bf16.mxu0 %v5787
    %6983 = vmatpush1.bf16.msra.mxu0 %v5786
    %6984 = vmatprep.subr.bf16.mxu0 %v5791
    %6985 = vmatpush1.bf16.msra.mxu0 %v5790
    %6986 = vmatprep.subr.bf16.mxu0 %v5795
    %6987 = vmatpush1.bf16.msra.mxu0 %v5794
    %6988 = vmatprep.subr.bf16.mxu0 %v5799
    %6989 = vmatpush1.bf16.msra.mxu0 %v5798
    %6990 = vmatprep.subr.bf16.mxu0 %v5803
    %6991 = vmatpush1.bf16.msra.mxu0 %v5802
    %6992 = vmatprep.subr.bf16.mxu0 %v5807
    %6993 = vmatpush1.bf16.msra.mxu0 %v5806
    %6994 = vmatprep.subr.bf16.mxu0 %v5811
    %6995 = vmatpush1.bf16.msra.mxu0 %v5810
    %6996 = vmatprep.subr.bf16.mxu0 %v5815
    %6997 = vmatpush1.bf16.msra.mxu0 %v5814
    %6998 = vmatprep.mubr.bf16.mxu0 %v3317
    %6999 = vmatmul.mubr.bf16.gmra.mrb[0].mxu0 %v3316
    %v7000 = vpop.f32.mrb[0].mxu0
    %v7001 = vadd.f32 %v6960, %v7000
    %v7002 = vpop.f32.mrb[0].mxu0
    %v7003 = vadd.f32 %v6962, %v7002
    %v7004 = vpop.f32.mrb[0].mxu0
    %v7005 = vpop.f32.mrb[0].mxu0
    %7006 = vdwg.mxu0
    %7007 = vmatprep.subr.bf16.mxu0 %v5819
    %7008 = vmatpush1.bf16.msra.mxu0 %v5818
    %7009 = vmatprep.subr.bf16.mxu0 %v5823
    %7010 = vmatpush1.bf16.msra.mxu0 %v5822
    %7011 = vmatprep.subr.bf16.mxu0 %v5827
    %7012 = vmatpush1.bf16.msra.mxu0 %v5826
    %7013 = vmatprep.subr.bf16.mxu0 %v5831
    %7014 = vmatpush1.bf16.msra.mxu0 %v5830
    %7015 = vmatprep.subr.bf16.mxu0 %v5835
    %7016 = vmatpush1.bf16.msra.mxu0 %v5834
    %7017 = vmatprep.subr.bf16.mxu0 %v5839
    %7018 = vmatpush1.bf16.msra.mxu0 %v5838
    %7019 = vmatprep.subr.bf16.mxu0 %v5843
    %7020 = vmatpush1.bf16.msra.mxu0 %v5842
    %7021 = vmatprep.subr.bf16.mxu0 %v5847
    %7022 = vmatpush1.bf16.msra.mxu0 %v5846
    %7023 = vmatprep.subr.bf16.mxu0 %v5851
    %7024 = vmatpush1.bf16.msra.mxu0 %v5850
    %7025 = vmatprep.subr.bf16.mxu0 %v5855
    %7026 = vmatpush1.bf16.msra.mxu0 %v5854
    %7027 = vmatprep.subr.bf16.mxu0 %v5859
    %7028 = vmatpush1.bf16.msra.mxu0 %v5858
    %7029 = vmatprep.subr.bf16.mxu0 %v5863
    %7030 = vmatpush1.bf16.msra.mxu0 %v5862
    %7031 = vmatprep.subr.bf16.mxu0 %v5867
    %7032 = vmatpush1.bf16.msra.mxu0 %v5866
    %7033 = vmatprep.subr.bf16.mxu0 %v5871
    %7034 = vmatpush1.bf16.msra.mxu0 %v5870
    %7035 = vmatprep.subr.bf16.mxu0 %v5875
    %7036 = vmatpush1.bf16.msra.mxu0 %v5874
    %7037 = vmatprep.subr.bf16.mxu0 %v5879
    %7038 = vmatpush1.bf16.msra.mxu0 %v5878
    %7039 = vmatprep.mubr.bf16.mxu0 %v3319
    %7040 = vmatmul.mubr.bf16.gmra.mrb[0].mxu0 %v3318
    %v7041 = vpop.f32.mrb[0].mxu0
    %v7042 = vadd.f32 %v7001, %v7041
    %v7043 = vpop.f32.mrb[0].mxu0
    %v7044 = vadd.f32 %v7003, %v7043
    %v7045 = vpop.f32.mrb[0].mxu0
    %v7046 = vpop.f32.mrb[0].mxu0
    %7047 = vdwg.mxu0
    %v7048 = vand.u32 %v356, 255
    %v7049 = vand.u32 %v357, 255
    %v7050 = vand.u32 %v358, 255
    %v7051 = vand.u32 %v359, 255
    %v7052 = vand.u32 %v7048, 15
    %v7053 = vand.u32 %v7049, 15
    %v7054 = vand.u32 %v7050, 15
    %v7055 = vand.u32 %v7051, 15
    %v7056 = vshra.s32 %v7048, 4
    %v7057 = vshra.s32 %v7049, 4
    %v7058 = vshra.s32 %v7050, 4
    %v7059 = vshra.s32 %v7051, 4
    %vm7060 = vcmp.ge.s32.totalorder %v7052, 1
    %vm7061 = vcmp.ge.s32.totalorder %v7053, 1
    %vm7062 = vcmp.ge.s32.totalorder %v7054, 1
    %vm7063 = vcmp.ge.s32.totalorder %v7055, 1
    %vm7064 = vcmp.le.s32.totalorder %v7052, 14
    %vm7065 = vcmp.le.s32.totalorder %v7053, 14
    %vm7066 = vcmp.le.s32.totalorder %v7054, 14
    %vm7067 = vcmp.le.s32.totalorder %v7055, 14
    %vm7068 = vcmp.ge.s32.totalorder %v7056, 1
    %vm7069 = vcmp.ge.s32.totalorder %v7057, 1
    %vm7070 = vcmp.ge.s32.totalorder %v7058, 1
    %vm7071 = vcmp.ge.s32.totalorder %v7059, 1
    %vm7072 = vcmp.le.s32.totalorder %v7056, 14
    %vm7073 = vcmp.le.s32.totalorder %v7057, 14
    %vm7074 = vcmp.le.s32.totalorder %v7058, 14
    %vm7075 = vcmp.le.s32.totalorder %v7059, 14
    %vm7076 = vmand %vm7068, %vm7060
    %vm7077 = vmand %vm7069, %vm7061
    %vm7078 = vmand %vm7070, %vm7062
    %vm7079 = vmand %vm7071, %vm7063
    %vm7080 = vmand %vm7068, %vm7064
    %vm7081 = vmand %vm7069, %vm7065
    %vm7082 = vmand %vm7070, %vm7066
    %vm7083 = vmand %vm7071, %vm7067
    %vm7084 = vmand %vm7072, %vm7060
    %vm7085 = vmand %vm7073, %vm7061
    %vm7086 = vmand %vm7074, %vm7062
    %vm7087 = vmand %vm7075, %vm7063
    %vm7088 = vmand %vm7072, %vm7064
    %vm7089 = vmand %vm7073, %vm7065
    %vm7090 = vmand %vm7074, %vm7066
    %vm7091 = vmand %vm7075, %vm7067
    %v7092 = vsel %vm7076, 1, 0
    %v7093 = vsel %vm7077, 1, 0
    %v7094 = vsel %vm7078, 1, 0
    %v7095 = vsel %vm7079, 1, 0
    %vm7096 = vcmp.eq.s32.totalorder %v7092, 1
    %vm7097 = vcmp.eq.s32.totalorder %v7093, 1
    %vm7098 = vcmp.eq.s32.totalorder %v7094, 1
    %vm7099 = vcmp.eq.s32.totalorder %v7095, 1
    %7104 = vrot.lane.b32.xlu0 0.0, 17
    %v7105 = vpop.permute.xlu0 %7104
    %7106 = vrot.lane.b32.xlu0 %v6714, 17
    %v7107 = vpop.permute.xlu0 %7106
    %7108 = vrot.lane.b32.xlu0 %v6716, 17
    %v7109 = vpop.permute.xlu0 %7108
    %7110 = vrot.lane.b32.xlu0 %v7042, 17
    %v7111 = vpop.permute.xlu0 %7110
    %7112 = vrot.lane.b32.xlu0 %v7044, 17
    %v7113 = vpop.permute.xlu0 %7112
    %vm7114 = vcmask 138240
    %v7115 = vsel %vm7114, %v7105, %v7107
    %v7116 = vsel %vm7114, %v7107, %v7109
    %v7117 = vsel %vm7114, %v7109, %v7111
    %v7118 = vsel %vm7114, %v7111, %v7113
    %v7123 = vsel %vm7096, %v7115, 0.0
    %v7124 = vsel %vm7097, %v7116, 0.0
    %v7125 = vsel %vm7098, %v7117, 0.0
    %v7126 = vsel %vm7099, %v7118, 0.0
    %v7127 = vsel %vm7068, 1, 0
    %v7128 = vsel %vm7069, 1, 0
    %v7129 = vsel %vm7070, 1, 0
    %v7130 = vsel %vm7071, 1, 0
    %vm7131 = vcmp.eq.s32.totalorder %v7127, 1
    %vm7132 = vcmp.eq.s32.totalorder %v7128, 1
    %vm7133 = vcmp.eq.s32.totalorder %v7129, 1
    %vm7134 = vcmp.eq.s32.totalorder %v7130, 1
    %7135 = vrot.lane.b32.xlu0 0.0, 16
    %v7136 = vpop.permute.xlu0 %7135
    %7137 = vrot.lane.b32.xlu0 %v6714, 16
    %v7138 = vpop.permute.xlu0 %7137
    %7139 = vrot.lane.b32.xlu0 %v6716, 16
    %v7140 = vpop.permute.xlu0 %7139
    %7141 = vrot.lane.b32.xlu0 %v7042, 16
    %v7142 = vpop.permute.xlu0 %7141
    %7143 = vrot.lane.b32.xlu0 %v7044, 16
    %v7144 = vpop.permute.xlu0 %7143
    %vm7145 = vcmask 130048
    %v7146 = vsel %vm7145, %v7136, %v7138
    %v7147 = vsel %vm7145, %v7138, %v7140
    %v7148 = vsel %vm7145, %v7140, %v7142
    %v7149 = vsel %vm7145, %v7142, %v7144
    %v7154 = vsel %vm7131, %v7146, 0.0
    %v7155 = vsel %vm7132, %v7147, 0.0
    %v7156 = vsel %vm7133, %v7148, 0.0
    %v7157 = vsel %vm7134, %v7149, 0.0
    %v7158 = vsel %vm7080, 1, 0
    %v7159 = vsel %vm7081, 1, 0
    %v7160 = vsel %vm7082, 1, 0
    %v7161 = vsel %vm7083, 1, 0
    %vm7162 = vcmp.eq.s32.totalorder %v7158, 1
    %vm7163 = vcmp.eq.s32.totalorder %v7159, 1
    %vm7164 = vcmp.eq.s32.totalorder %v7160, 1
    %vm7165 = vcmp.eq.s32.totalorder %v7161, 1
    %7166 = vrot.lane.b32.xlu0 0.0, 15
    %v7167 = vpop.permute.xlu0 %7166
    %7168 = vrot.lane.b32.xlu0 %v6714, 15
    %v7169 = vpop.permute.xlu0 %7168
    %7170 = vrot.lane.b32.xlu0 %v6716, 15
    %v7171 = vpop.permute.xlu0 %7170
    %7172 = vrot.lane.b32.xlu0 %v7042, 15
    %v7173 = vpop.permute.xlu0 %7172
    %7174 = vrot.lane.b32.xlu0 %v7044, 15
    %v7175 = vpop.permute.xlu0 %7174
    %vm7176 = vcmask 121856
    %v7177 = vsel %vm7176, %v7167, %v7169
    %v7178 = vsel %vm7176, %v7169, %v7171
    %v7179 = vsel %vm7176, %v7171, %v7173
    %v7180 = vsel %vm7176, %v7173, %v7175
    %v7185 = vsel %vm7162, %v7177, 0.0
    %v7186 = vsel %vm7163, %v7178, 0.0
    %v7187 = vsel %vm7164, %v7179, 0.0
    %v7188 = vsel %vm7165, %v7180, 0.0
    %v7189 = vsel %vm7060, 1, 0
    %v7190 = vsel %vm7061, 1, 0
    %v7191 = vsel %vm7062, 1, 0
    %v7192 = vsel %vm7063, 1, 0
    %vm7193 = vcmp.eq.s32.totalorder %v7189, 1
    %vm7194 = vcmp.eq.s32.totalorder %v7190, 1
    %vm7195 = vcmp.eq.s32.totalorder %v7191, 1
    %vm7196 = vcmp.eq.s32.totalorder %v7192, 1
    %7197 = vrot.lane.b32.xlu0 %v6714, 1
    %v7198 = vpop.permute.xlu0 %7197
    %7199 = vrot.lane.b32.xlu0 %v6716, 1
    %v7200 = vpop.permute.xlu0 %7199
    %7201 = vrot.lane.b32.xlu0 %v7042, 1
    %v7202 = vpop.permute.xlu0 %7201
    %7203 = vrot.lane.b32.xlu0 %v7044, 1
    %v7204 = vpop.permute.xlu0 %7203
    %v7205 = vsel %vm976, %v943, %v7198
    %v7206 = vsel %vm976, %v7198, %v7200
    %v7207 = vsel %vm976, %v7200, %v7202
    %v7208 = vsel %vm976, %v7202, %v7204
    %v7213 = vsel %vm7193, %v7205, 0.0
    %v7214 = vsel %vm7194, %v7206, 0.0
    %v7215 = vsel %vm7195, %v7207, 0.0
    %v7216 = vsel %vm7196, %v7208, 0.0
    %v7217 = vsel %vm7064, 1, 0
    %v7218 = vsel %vm7065, 1, 0
    %v7219 = vsel %vm7066, 1, 0
    %v7220 = vsel %vm7067, 1, 0
    %vm7221 = vcmp.eq.s32.totalorder %v7217, 1
    %vm7222 = vcmp.eq.s32.totalorder %v7218, 1
    %vm7223 = vcmp.eq.s32.totalorder %v7219, 1
    %vm7224 = vcmp.eq.s32.totalorder %v7220, 1
    %7225 = vrot.lane.b32.xlu0 %v6714, 127
    %v7226 = vpop.permute.xlu0 %7225
    %7227 = vrot.lane.b32.xlu0 %v6716, 127
    %v7228 = vpop.permute.xlu0 %7227
    %7229 = vrot.lane.b32.xlu0 %v7042, 127
    %v7230 = vpop.permute.xlu0 %7229
    %7231 = vrot.lane.b32.xlu0 %v7044, 127
    %v7232 = vpop.permute.xlu0 %7231
    %v7233 = vsel %vm1091, %v7226, %v7228
    %v7234 = vsel %vm1091, %v7228, %v7230
    %v7235 = vsel %vm1091, %v7230, %v7232
    %v7236 = vsel %vm1091, %v7232, %v1090
    %v7241 = vsel %vm7221, %v7233, 0.0
    %v7242 = vsel %vm7222, %v7234, 0.0
    %v7243 = vsel %vm7223, %v7235, 0.0
    %v7244 = vsel %vm7224, %v7236, 0.0
    %v7245 = vsel %vm7084, 1, 0
    %v7246 = vsel %vm7085, 1, 0
    %v7247 = vsel %vm7086, 1, 0
    %v7248 = vsel %vm7087, 1, 0
    %vm7249 = vcmp.eq.s32.totalorder %v7245, 1
    %vm7250 = vcmp.eq.s32.totalorder %v7246, 1
    %vm7251 = vcmp.eq.s32.totalorder %v7247, 1
    %vm7252 = vcmp.eq.s32.totalorder %v7248, 1
    %7253 = vrot.lane.b32.xlu0 %v6714, 113
    %v7254 = vpop.permute.xlu0 %7253
    %7255 = vrot.lane.b32.xlu0 %v6716, 113
    %v7256 = vpop.permute.xlu0 %7255
    %7257 = vrot.lane.b32.xlu0 %v7042, 113
    %v7258 = vpop.permute.xlu0 %7257
    %7259 = vrot.lane.b32.xlu0 %v7044, 113
    %v7260 = vpop.permute.xlu0 %7259
    %7261 = vrot.lane.b32.xlu0 0.0, 113
    %v7262 = vpop.permute.xlu0 %7261
    %vm7263 = vcmask 924672
    %v7264 = vsel %vm7263, %v7254, %v7256
    %v7265 = vsel %vm7263, %v7256, %v7258
    %v7266 = vsel %vm7263, %v7258, %v7260
    %v7267 = vsel %vm7263, %v7260, %v7262
    %v7272 = vsel %vm7249, %v7264, 0.0
    %v7273 = vsel %vm7250, %v7265, 0.0
    %v7274 = vsel %vm7251, %v7266, 0.0
    %v7275 = vsel %vm7252, %v7267, 0.0
    %v7276 = vsel %vm7072, 1, 0
    %v7277 = vsel %vm7073, 1, 0
    %v7278 = vsel %vm7074, 1, 0
    %v7279 = vsel %vm7075, 1, 0
    %vm7280 = vcmp.eq.s32.totalorder %v7276, 1
    %vm7281 = vcmp.eq.s32.totalorder %v7277, 1
    %vm7282 = vcmp.eq.s32.totalorder %v7278, 1
    %vm7283 = vcmp.eq.s32.totalorder %v7279, 1
    %7284 = vrot.lane.b32.xlu0 %v6714, 112
    %v7285 = vpop.permute.xlu0 %7284
    %7286 = vrot.lane.b32.xlu0 %v6716, 112
    %v7287 = vpop.permute.xlu0 %7286
    %7288 = vrot.lane.b32.xlu0 %v7042, 112
    %v7289 = vpop.permute.xlu0 %7288
    %7290 = vrot.lane.b32.xlu0 %v7044, 112
    %v7291 = vpop.permute.xlu0 %7290
    %7292 = vrot.lane.b32.xlu0 0.0, 112
    %v7293 = vpop.permute.xlu0 %7292
    %vm7294 = vcmask 916480
    %v7295 = vsel %vm7294, %v7285, %v7287
    %v7296 = vsel %vm7294, %v7287, %v7289
    %v7297 = vsel %vm7294, %v7289, %v7291
    %v7298 = vsel %vm7294, %v7291, %v7293
    %v7303 = vsel %vm7280, %v7295, 0.0
    %v7304 = vsel %vm7281, %v7296, 0.0
    %v7305 = vsel %vm7282, %v7297, 0.0
    %v7306 = vsel %vm7283, %v7298, 0.0
    %v7307 = vsel %vm7088, 1, 0
    %v7308 = vsel %vm7089, 1, 0
    %v7309 = vsel %vm7090, 1, 0
    %v7310 = vsel %vm7091, 1, 0
    %vm7311 = vcmp.eq.s32.totalorder %v7307, 1
    %vm7312 = vcmp.eq.s32.totalorder %v7308, 1
    %vm7313 = vcmp.eq.s32.totalorder %v7309, 1
    %vm7314 = vcmp.eq.s32.totalorder %v7310, 1
    %7315 = vrot.lane.b32.xlu0 %v6714, 111
    %v7316 = vpop.permute.xlu0 %7315
    %7317 = vrot.lane.b32.xlu0 %v6716, 111
    %v7318 = vpop.permute.xlu0 %7317
    %7319 = vrot.lane.b32.xlu0 %v7042, 111
    %v7320 = vpop.permute.xlu0 %7319
    %7321 = vrot.lane.b32.xlu0 %v7044, 111
    %v7322 = vpop.permute.xlu0 %7321
    %7323 = vrot.lane.b32.xlu0 0.0, 111
    %v7324 = vpop.permute.xlu0 %7323
    %vm7325 = vcmask 908288
    %v7326 = vsel %vm7325, %v7316, %v7318
    %v7327 = vsel %vm7325, %v7318, %v7320
    %v7328 = vsel %vm7325, %v7320, %v7322
    %v7329 = vsel %vm7325, %v7322, %v7324
    %v7334 = vsel %vm7311, %v7326, 0.0
    %v7335 = vsel %vm7312, %v7327, 0.0
    %v7336 = vsel %vm7313, %v7328, 0.0
    %v7337 = vsel %vm7314, %v7329, 0.0
    %v7338 = vpack.c.bf16 %v7154, %v7123
    %v7339 = vpack.c.bf16 %v7155, %v7124
    %v7340 = vpack.c.bf16 %v7156, %v7125
    %v7341 = vpack.c.bf16 %v7157, %v7126
    %v7342 = vpack.c.bf16 %v7213, %v7185
    %v7343 = vpack.c.bf16 %v7214, %v7186
    %v7344 = vpack.c.bf16 %v7215, %v7187
    %v7345 = vpack.c.bf16 %v7216, %v7188
    %v7346 = vpack.c.bf16 %v7241, %v6714
    %v7347 = vpack.c.bf16 %v7242, %v6716
    %v7348 = vpack.c.bf16 %v7243, %v7042
    %v7349 = vpack.c.bf16 %v7244, %v7044
    %v7350 = vpack.c.bf16 %v7303, %v7272
    %v7351 = vpack.c.bf16 %v7304, %v7273
    %v7352 = vpack.c.bf16 %v7305, %v7274
    %v7353 = vpack.c.bf16 %v7306, %v7275
    %v7354 = vpack.c.bf16 %v7334, %v7334
    %v7355 = vpack.c.bf16 %v7335, %v7335
    %v7356 = vpack.c.bf16 %v7336, %v7336
    %v7357 = vpack.c.bf16 %v7337, %v7337
    %v7358 = vld [vmem:[#allocation8] sm:$0xf]
    %v7359 = vld [vmem:[#allocation8 + $0x4] sm:$0xf]
    %v7360 = vld [vmem:[%s13] sm:$0xff]
    %v7361 = vld [vmem:[%s13 + $0x8] sm:$0xff]
    %7363 = vset.pattern.permute.xlu0 0
    %7364 = vperm.xlu0 %7363, %v7360
    %v7365 = vpop.permute.xlu0 %7364
    %7368 = vset.pattern.permute.xlu0 0
    %7369 = vperm.xlu0 %7368, %v7361
    %v7370 = vpop.permute.xlu0 %7369
    %v7374 = vunpack.c.l.b16 %v7358
    %v7375 = vunpack.c.l.b16 %v7359
    %v7376 = vpack.c.b16 %v7375, %v7374
    %v7378 = vsel %vm1572, %v7376, 0
    %v7381 = vsel %vm1576, %v7354, 0
    %v7384 = vsel %vm1576, %v7355, 0
    %v7387 = vsel %vm1576, %v7356, 0
    %v7390 = vsel %vm1576, %v7357, 0
    %7392 = vmatprep.subr.bf16.mxu0 %v7339
    %7393 = vmatpush1.bf16.msra.mxu0 %v7338
    %7394 = vmatprep.subr.bf16.mxu0 %v7343
    %7395 = vmatpush1.bf16.msra.mxu0 %v7342
    %7396 = vmatprep.subr.bf16.mxu0 %v7347
    %7397 = vmatpush1.bf16.msra.mxu0 %v7346
    %7398 = vmatprep.subr.bf16.mxu0 %v7351
    %7399 = vmatpush1.bf16.msra.mxu0 %v7350
    %7400 = vmatprep.subr.bf16.mxu0 %v7384
    %7401 = vmatpush1.bf16.msra.mxu0 %v7381
    %7402 = vmatprep.subr.bf16.mxu0 0
    %7403 = vmatpush1.bf16.msra.mxu0 0
    %7404 = vmatprep.subr.bf16.mxu0 0
    %7405 = vmatpush1.bf16.msra.mxu0 0
    %7406 = vmatprep.subr.bf16.mxu0 0
    %7407 = vmatpush1.bf16.msra.mxu0 0
    %7408 = vmatprep.subr.bf16.mxu0 0
    %7409 = vmatpush1.bf16.msra.mxu0 0
    %7410 = vmatprep.subr.bf16.mxu0 0
    %7411 = vmatpush1.bf16.msra.mxu0 0
    %7412 = vmatprep.subr.bf16.mxu0 0
    %7413 = vmatpush1.bf16.msra.mxu0 0
    %7414 = vmatprep.subr.bf16.mxu0 0
    %7415 = vmatpush1.bf16.msra.mxu0 0
    %7416 = vmatprep.subr.bf16.mxu0 0
    %7417 = vmatpush1.bf16.msra.mxu0 0
    %7418 = vmatprep.subr.bf16.mxu0 0
    %7419 = vmatpush1.bf16.msra.mxu0 0
    %7420 = vmatprep.subr.bf16.mxu0 0
    %7421 = vmatpush1.bf16.msra.mxu0 0
    %7422 = vmatprep.subr.bf16.mxu0 0
    %7423 = vmatpush1.bf16.msra.mxu0 0
    %7424 = vmatprep.mubr.bf16.mxu0 0
    %7425 = vmatmul.mubr.bf16.gmra.mrb[0].mxu0 %v7378
    %v7426 = vpop.f32.mrb[0].mxu0
    %v7427 = vadd.f32 %v7365, %v7426
    %v7428 = vpop.f32.mrb[0].mxu0
    %v7429 = vadd.f32 %v7365, %v7428
    %v7430 = vpop.f32.mrb[0].mxu0
    %v7431 = vadd.f32 %v7370, %v7430
    %v7432 = vpop.f32.mrb[0].mxu0
    %v7433 = vadd.f32 %v7370, %v7432
    %7434 = vdwg.mxu0
    %7435 = vmatprep.subr.bf16.mxu0 %v7341
    %7436 = vmatpush1.bf16.msra.mxu0 %v7340
    %7437 = vmatprep.subr.bf16.mxu0 %v7345
    %7438 = vmatpush1.bf16.msra.mxu0 %v7344
    %7439 = vmatprep.subr.bf16.mxu0 %v7349
    %7440 = vmatpush1.bf16.msra.mxu0 %v7348
    %7441 = vmatprep.subr.bf16.mxu0 %v7353
    %7442 = vmatpush1.bf16.msra.mxu0 %v7352
    %7443 = vmatprep.subr.bf16.mxu0 %v7390
    %7444 = vmatpush1.bf16.msra.mxu0 %v7387
    %7445 = vmatprep.subr.bf16.mxu0 0
    %7446 = vmatpush1.bf16.msra.mxu0 0
    %7447 = vmatprep.subr.bf16.mxu0 0
    %7448 = vmatpush1.bf16.msra.mxu0 0
    %7449 = vmatprep.subr.bf16.mxu0 0
    %7450 = vmatpush1.bf16.msra.mxu0 0
    %7451 = vmatprep.subr.bf16.mxu0 0
    %7452 = vmatpush1.bf16.msra.mxu0 0
    %7453 = vmatprep.subr.bf16.mxu0 0
    %7454 = vmatpush1.bf16.msra.mxu0 0
    %7455 = vmatprep.subr.bf16.mxu0 0
    %7456 = vmatpush1.bf16.msra.mxu0 0
    %7457 = vmatprep.subr.bf16.mxu0 0
    %7458 = vmatpush1.bf16.msra.mxu0 0
    %7459 = vmatprep.subr.bf16.mxu0 0
    %7460 = vmatpush1.bf16.msra.mxu0 0
    %7461 = vmatprep.subr.bf16.mxu0 0
    %7462 = vmatpush1.bf16.msra.mxu0 0
    %7463 = vmatprep.subr.bf16.mxu0 0
    %7464 = vmatpush1.bf16.msra.mxu0 0
    %7465 = vmatprep.subr.bf16.mxu0 0
    %7466 = vmatpush1.bf16.msra.mxu0 0
    %7467 = vmatprep.mubr.bf16.mxu0 0
    %7468 = vmatmul.mubr.bf16.gmra.mrb[0].mxu0 %v7378
    %v7469 = vpop.f32.mrb[0].mxu0
    %v7470 = vadd.f32 %v7365, %v7469
    %v7471 = vpop.f32.mrb[0].mxu0
    %v7472 = vadd.f32 %v7365, %v7471
    %v7473 = vpop.f32.mrb[0].mxu0
    %v7474 = vadd.f32 %v7370, %v7473
    %v7475 = vpop.f32.mrb[0].mxu0
    %v7476 = vadd.f32 %v7370, %v7475
    %7477 = vdwg.mxu0
    %v7478 = vmax.f32 %v7427, 0.0
    %v7479 = vmax.f32 %v7429, 0.0
    %v7480 = vmax.f32 %v7470, 0.0
    %v7481 = vmax.f32 %v7472, 0.0
    %v7482 = vmax.f32 %v7431, 0.0
    %v7483 = vmax.f32 %v7433, 0.0
    %v7484 = vmax.f32 %v7474, 0.0
    %v7485 = vmax.f32 %v7476, 0.0
    %7494 = vrot.lane.b32.xlu0 %v7478, 17
    %v7495 = vpop.permute.xlu0 %7494
    %7496 = vrot.lane.b32.xlu0 %v7479, 17
    %v7497 = vpop.permute.xlu0 %7496
    %7498 = vrot.lane.b32.xlu0 %v7480, 17
    %v7499 = vpop.permute.xlu0 %7498
    %7500 = vrot.lane.b32.xlu0 %v7481, 17
    %v7501 = vpop.permute.xlu0 %7500
    %7502 = vrot.lane.b32.xlu0 %v7482, 17
    %v7503 = vpop.permute.xlu0 %7502
    %7504 = vrot.lane.b32.xlu0 %v7483, 17
    %v7505 = vpop.permute.xlu0 %7504
    %7506 = vrot.lane.b32.xlu0 %v7484, 17
    %v7507 = vpop.permute.xlu0 %7506
    %7508 = vrot.lane.b32.xlu0 %v7485, 17
    %v7509 = vpop.permute.xlu0 %7508
    %v7510 = vsel %vm7114, %v7105, %v7495
    %v7511 = vsel %vm7114, %v7495, %v7497
    %v7512 = vsel %vm7114, %v7497, %v7499
    %v7513 = vsel %vm7114, %v7499, %v7501
    %v7514 = vsel %vm7114, %v7105, %v7503
    %v7515 = vsel %vm7114, %v7503, %v7505
    %v7516 = vsel %vm7114, %v7505, %v7507
    %v7517 = vsel %vm7114, %v7507, %v7509
    %v7526 = vsel %vm7096, %v7510, 0.0
    %v7527 = vsel %vm7097, %v7511, 0.0
    %v7528 = vsel %vm7098, %v7512, 0.0
    %v7529 = vsel %vm7099, %v7513, 0.0
    %v7530 = vsel %vm7096, %v7514, 0.0
    %v7531 = vsel %vm7097, %v7515, 0.0
    %v7532 = vsel %vm7098, %v7516, 0.0
    %v7533 = vsel %vm7099, %v7517, 0.0
    %7534 = vrot.lane.b32.xlu0 %v7478, 16
    %v7535 = vpop.permute.xlu0 %7534
    %7536 = vrot.lane.b32.xlu0 %v7479, 16
    %v7537 = vpop.permute.xlu0 %7536
    %7538 = vrot.lane.b32.xlu0 %v7480, 16
    %v7539 = vpop.permute.xlu0 %7538
    %7540 = vrot.lane.b32.xlu0 %v7481, 16
    %v7541 = vpop.permute.xlu0 %7540
    %7542 = vrot.lane.b32.xlu0 %v7482, 16
    %v7543 = vpop.permute.xlu0 %7542
    %7544 = vrot.lane.b32.xlu0 %v7483, 16
    %v7545 = vpop.permute.xlu0 %7544
    %7546 = vrot.lane.b32.xlu0 %v7484, 16
    %v7547 = vpop.permute.xlu0 %7546
    %7548 = vrot.lane.b32.xlu0 %v7485, 16
    %v7549 = vpop.permute.xlu0 %7548
    %v7550 = vsel %vm7145, %v7136, %v7535
    %v7551 = vsel %vm7145, %v7535, %v7537
    %v7552 = vsel %vm7145, %v7537, %v7539
    %v7553 = vsel %vm7145, %v7539, %v7541
    %v7554 = vsel %vm7145, %v7136, %v7543
    %v7555 = vsel %vm7145, %v7543, %v7545
    %v7556 = vsel %vm7145, %v7545, %v7547
    %v7557 = vsel %vm7145, %v7547, %v7549
    %v7566 = vsel %vm7131, %v7550, 0.0
    %v7567 = vsel %vm7132, %v7551, 0.0
    %v7568 = vsel %vm7133, %v7552, 0.0
    %v7569 = vsel %vm7134, %v7553, 0.0
    %v7570 = vsel %vm7131, %v7554, 0.0
    %v7571 = vsel %vm7132, %v7555, 0.0
    %v7572 = vsel %vm7133, %v7556, 0.0
    %v7573 = vsel %vm7134, %v7557, 0.0
    %7574 = vrot.lane.b32.xlu0 %v7478, 15
    %v7575 = vpop.permute.xlu0 %7574
    %7576 = vrot.lane.b32.xlu0 %v7479, 15
    %v7577 = vpop.permute.xlu0 %7576
    %7578 = vrot.lane.b32.xlu0 %v7480, 15
    %v7579 = vpop.permute.xlu0 %7578
    %7580 = vrot.lane.b32.xlu0 %v7481, 15
    %v7581 = vpop.permute.xlu0 %7580
    %7582 = vrot.lane.b32.xlu0 %v7482, 15
    %v7583 = vpop.permute.xlu0 %7582
    %7584 = vrot.lane.b32.xlu0 %v7483, 15
    %v7585 = vpop.permute.xlu0 %7584
    %7586 = vrot.lane.b32.xlu0 %v7484, 15
    %v7587 = vpop.permute.xlu0 %7586
    %7588 = vrot.lane.b32.xlu0 %v7485, 15
    %v7589 = vpop.permute.xlu0 %7588
    %v7590 = vsel %vm7176, %v7167, %v7575
    %v7591 = vsel %vm7176, %v7575, %v7577
    %v7592 = vsel %vm7176, %v7577, %v7579
    %v7593 = vsel %vm7176, %v7579, %v7581
    %v7594 = vsel %vm7176, %v7167, %v7583
    %v7595 = vsel %vm7176, %v7583, %v7585
    %v7596 = vsel %vm7176, %v7585, %v7587
    %v7597 = vsel %vm7176, %v7587, %v7589
    %v7606 = vsel %vm7162, %v7590, 0.0
    %v7607 = vsel %vm7163, %v7591, 0.0
    %v7608 = vsel %vm7164, %v7592, 0.0
    %v7609 = vsel %vm7165, %v7593, 0.0
    %v7610 = vsel %vm7162, %v7594, 0.0
    %v7611 = vsel %vm7163, %v7595, 0.0
    %v7612 = vsel %vm7164, %v7596, 0.0
    %v7613 = vsel %vm7165, %v7597, 0.0
    %7614 = vrot.lane.b32.xlu0 %v7478, 1
    %v7615 = vpop.permute.xlu0 %7614
    %7616 = vrot.lane.b32.xlu0 %v7479, 1
    %v7617 = vpop.permute.xlu0 %7616
    %7618 = vrot.lane.b32.xlu0 %v7480, 1
    %v7619 = vpop.permute.xlu0 %7618
    %7620 = vrot.lane.b32.xlu0 %v7481, 1
    %v7621 = vpop.permute.xlu0 %7620
    %7622 = vrot.lane.b32.xlu0 %v7482, 1
    %v7623 = vpop.permute.xlu0 %7622
    %7624 = vrot.lane.b32.xlu0 %v7483, 1
    %v7625 = vpop.permute.xlu0 %7624
    %7626 = vrot.lane.b32.xlu0 %v7484, 1
    %v7627 = vpop.permute.xlu0 %7626
    %7628 = vrot.lane.b32.xlu0 %v7485, 1
    %v7629 = vpop.permute.xlu0 %7628
    %v7630 = vsel %vm976, %v943, %v7615
    %v7631 = vsel %vm976, %v7615, %v7617
    %v7632 = vsel %vm976, %v7617, %v7619
    %v7633 = vsel %vm976, %v7619, %v7621
    %v7634 = vsel %vm976, %v943, %v7623
    %v7635 = vsel %vm976, %v7623, %v7625
    %v7636 = vsel %vm976, %v7625, %v7627
    %v7637 = vsel %vm976, %v7627, %v7629
    %v7646 = vsel %vm7193, %v7630, 0.0
    %v7647 = vsel %vm7194, %v7631, 0.0
    %v7648 = vsel %vm7195, %v7632, 0.0
    %v7649 = vsel %vm7196, %v7633, 0.0
    %v7650 = vsel %vm7193, %v7634, 0.0
    %v7651 = vsel %vm7194, %v7635, 0.0
    %v7652 = vsel %vm7195, %v7636, 0.0
    %v7653 = vsel %vm7196, %v7637, 0.0
    %7654 = vrot.lane.b32.xlu0 %v7478, 127
    %v7655 = vpop.permute.xlu0 %7654
    %7656 = vrot.lane.b32.xlu0 %v7479, 127
    %v7657 = vpop.permute.xlu0 %7656
    %7658 = vrot.lane.b32.xlu0 %v7480, 127
    %v7659 = vpop.permute.xlu0 %7658
    %7660 = vrot.lane.b32.xlu0 %v7481, 127
    %v7661 = vpop.permute.xlu0 %7660
    %7662 = vrot.lane.b32.xlu0 %v7482, 127
    %v7663 = vpop.permute.xlu0 %7662
    %7664 = vrot.lane.b32.xlu0 %v7483, 127
    %v7665 = vpop.permute.xlu0 %7664
    %7666 = vrot.lane.b32.xlu0 %v7484, 127
    %v7667 = vpop.permute.xlu0 %7666
    %7668 = vrot.lane.b32.xlu0 %v7485, 127
    %v7669 = vpop.permute.xlu0 %7668
    %v7670 = vsel %vm1091, %v7655, %v7657
    %v7671 = vsel %vm1091, %v7657, %v7659
    %v7672 = vsel %vm1091, %v7659, %v7661
    %v7673 = vsel %vm1091, %v7661, %v1090
    %v7674 = vsel %vm1091, %v7663, %v7665
    %v7675 = vsel %vm1091, %v7665, %v7667
    %v7676 = vsel %vm1091, %v7667, %v7669
    %v7677 = vsel %vm1091, %v7669, %v1090
    %v7686 = vsel %vm7221, %v7670, 0.0
    %v7687 = vsel %vm7222, %v7671, 0.0
    %v7688 = vsel %vm7223, %v7672, 0.0
    %v7689 = vsel %vm7224, %v7673, 0.0
    %v7690 = vsel %vm7221, %v7674, 0.0
    %v7691 = vsel %vm7222, %v7675, 0.0
    %v7692 = vsel %vm7223, %v7676, 0.0
    %v7693 = vsel %vm7224, %v7677, 0.0
    %7694 = vrot.lane.b32.xlu0 %v7478, 113
    %v7695 = vpop.permute.xlu0 %7694
    %7696 = vrot.lane.b32.xlu0 %v7479, 113
    %v7697 = vpop.permute.xlu0 %7696
    %7698 = vrot.lane.b32.xlu0 %v7480, 113
    %v7699 = vpop.permute.xlu0 %7698
    %7700 = vrot.lane.b32.xlu0 %v7481, 113
    %v7701 = vpop.permute.xlu0 %7700
    %7702 = vrot.lane.b32.xlu0 %v7482, 113
    %v7703 = vpop.permute.xlu0 %7702
    %7704 = vrot.lane.b32.xlu0 %v7483, 113
    %v7705 = vpop.permute.xlu0 %7704
    %7706 = vrot.lane.b32.xlu0 %v7484, 113
    %v7707 = vpop.permute.xlu0 %7706
    %7708 = vrot.lane.b32.xlu0 %v7485, 113
    %v7709 = vpop.permute.xlu0 %7708
    %v7710 = vsel %vm7263, %v7695, %v7697
    %v7711 = vsel %vm7263, %v7697, %v7699
    %v7712 = vsel %vm7263, %v7699, %v7701
    %v7713 = vsel %vm7263, %v7701, %v7262
    %v7714 = vsel %vm7263, %v7703, %v7705
    %v7715 = vsel %vm7263, %v7705, %v7707
    %v7716 = vsel %vm7263, %v7707, %v7709
    %v7717 = vsel %vm7263, %v7709, %v7262
    %v7726 = vsel %vm7249, %v7710, 0.0
    %v7727 = vsel %vm7250, %v7711, 0.0
    %v7728 = vsel %vm7251, %v7712, 0.0
    %v7729 = vsel %vm7252, %v7713, 0.0
    %v7730 = vsel %vm7249, %v7714, 0.0
    %v7731 = vsel %vm7250, %v7715, 0.0
    %v7732 = vsel %vm7251, %v7716, 0.0
    %v7733 = vsel %vm7252, %v7717, 0.0
    %7734 = vrot.lane.b32.xlu0 %v7478, 112
    %v7735 = vpop.permute.xlu0 %7734
    %7736 = vrot.lane.b32.xlu0 %v7479, 112
    %v7737 = vpop.permute.xlu0 %7736
    %7738 = vrot.lane.b32.xlu0 %v7480, 112
    %v7739 = vpop.permute.xlu0 %7738
    %7740 = vrot.lane.b32.xlu0 %v7481, 112
    %v7741 = vpop.permute.xlu0 %7740
    %7742 = vrot.lane.b32.xlu0 %v7482, 112
    %v7743 = vpop.permute.xlu0 %7742
    %7744 = vrot.lane.b32.xlu0 %v7483, 112
    %v7745 = vpop.permute.xlu0 %7744
    %7746 = vrot.lane.b32.xlu0 %v7484, 112
    %v7747 = vpop.permute.xlu0 %7746
    %7748 = vrot.lane.b32.xlu0 %v7485, 112
    %v7749 = vpop.permute.xlu0 %7748
    %v7750 = vsel %vm7294, %v7735, %v7737
    %v7751 = vsel %vm7294, %v7737, %v7739
    %v7752 = vsel %vm7294, %v7739, %v7741
    %v7753 = vsel %vm7294, %v7741, %v7293
    %v7754 = vsel %vm7294, %v7743, %v7745
    %v7755 = vsel %vm7294, %v7745, %v7747
    %v7756 = vsel %vm7294, %v7747, %v7749
    %v7757 = vsel %vm7294, %v7749, %v7293
    %v7766 = vsel %vm7280, %v7750, 0.0
    %v7767 = vsel %vm7281, %v7751, 0.0
    %v7768 = vsel %vm7282, %v7752, 0.0
    %v7769 = vsel %vm7283, %v7753, 0.0
    %v7770 = vsel %vm7280, %v7754, 0.0
    %v7771 = vsel %vm7281, %v7755, 0.0
    %v7772 = vsel %vm7282, %v7756, 0.0
    %v7773 = vsel %vm7283, %v7757, 0.0
    %7774 = vrot.lane.b32.xlu0 %v7478, 111
    %v7775 = vpop.permute.xlu0 %7774
    %7776 = vrot.lane.b32.xlu0 %v7479, 111
    %v7777 = vpop.permute.xlu0 %7776
    %7778 = vrot.lane.b32.xlu0 %v7480, 111
    %v7779 = vpop.permute.xlu0 %7778
    %7780 = vrot.lane.b32.xlu0 %v7481, 111
    %v7781 = vpop.permute.xlu0 %7780
    %7782 = vrot.lane.b32.xlu0 %v7482, 111
    %v7783 = vpop.permute.xlu0 %7782
    %7784 = vrot.lane.b32.xlu0 %v7483, 111
    %v7785 = vpop.permute.xlu0 %7784
    %7786 = vrot.lane.b32.xlu0 %v7484, 111
    %v7787 = vpop.permute.xlu0 %7786
    %7788 = vrot.lane.b32.xlu0 %v7485, 111
    %v7789 = vpop.permute.xlu0 %7788
    %v7790 = vsel %vm7325, %v7775, %v7777
    %v7791 = vsel %vm7325, %v7777, %v7779
    %v7792 = vsel %vm7325, %v7779, %v7781
    %v7793 = vsel %vm7325, %v7781, %v7324
    %v7794 = vsel %vm7325, %v7783, %v7785
    %v7795 = vsel %vm7325, %v7785, %v7787
    %v7796 = vsel %vm7325, %v7787, %v7789
    %v7797 = vsel %vm7325, %v7789, %v7324
    %v7806 = vsel %vm7311, %v7790, 0.0
    %v7807 = vsel %vm7312, %v7791, 0.0
    %v7808 = vsel %vm7313, %v7792, 0.0
    %v7809 = vsel %vm7314, %v7793, 0.0
    %v7810 = vsel %vm7311, %v7794, 0.0
    %v7811 = vsel %vm7312, %v7795, 0.0
    %v7812 = vsel %vm7313, %v7796, 0.0
    %v7813 = vsel %vm7314, %v7797, 0.0
    %v7814 = vpack.c.bf16 %v7530, %v7526
    %v7815 = vpack.c.bf16 %v7531, %v7527
    %v7816 = vpack.c.bf16 %v7532, %v7528
    %v7817 = vpack.c.bf16 %v7533, %v7529
    %v7818 = vpack.c.bf16 %v7570, %v7566
    %v7819 = vpack.c.bf16 %v7571, %v7567
    %v7820 = vpack.c.bf16 %v7572, %v7568
    %v7821 = vpack.c.bf16 %v7573, %v7569
    %v7822 = vpack.c.bf16 %v7610, %v7606
    %v7823 = vpack.c.bf16 %v7611, %v7607
    %v7824 = vpack.c.bf16 %v7612, %v7608
    %v7825 = vpack.c.bf16 %v7613, %v7609
    %v7826 = vpack.c.bf16 %v7650, %v7646
    %v7827 = vpack.c.bf16 %v7651, %v7647
    %v7828 = vpack.c.bf16 %v7652, %v7648
    %v7829 = vpack.c.bf16 %v7653, %v7649
    %v7830 = vpack.c.bf16 %v7482, %v7478
    %v7831 = vpack.c.bf16 %v7483, %v7479
    %v7832 = vpack.c.bf16 %v7484, %v7480
    %v7833 = vpack.c.bf16 %v7485, %v7481
    %v7834 = vpack.c.bf16 %v7690, %v7686
    %v7835 = vpack.c.bf16 %v7691, %v7687
    %v7836 = vpack.c.bf16 %v7692, %v7688
    %v7837 = vpack.c.bf16 %v7693, %v7689
    %v7838 = vpack.c.bf16 %v7730, %v7726
    %v7839 = vpack.c.bf16 %v7731, %v7727
    %v7840 = vpack.c.bf16 %v7732, %v7728
    %v7841 = vpack.c.bf16 %v7733, %v7729
    %v7842 = vpack.c.bf16 %v7770, %v7766
    %v7843 = vpack.c.bf16 %v7771, %v7767
    %v7844 = vpack.c.bf16 %v7772, %v7768
    %v7845 = vpack.c.bf16 %v7773, %v7769
    %v7846 = vpack.c.bf16 %v7810, %v7806
    %v7847 = vpack.c.bf16 %v7811, %v7807
    %v7848 = vpack.c.bf16 %v7812, %v7808
    %v7849 = vpack.c.bf16 %v7813, %v7809
    %v7850 = vld [vmem:[#allocation10] sm:$0xff]
    %v7851 = vld [vmem:[#allocation10 + $0x8] sm:$0xff]
    %v7852 = vld [vmem:[%s17] sm:$0xff]
    %v7853 = vld [vmem:[%s17 + $0x8] sm:$0xff]
    %7855 = vset.pattern.permute.xlu0 0
    %7856 = vperm.xlu0 %7855, %v7852
    %v7857 = vpop.permute.xlu0 %7856
    %7860 = vset.pattern.permute.xlu0 0
    %7861 = vperm.xlu0 %7860, %v7853
    %v7862 = vpop.permute.xlu0 %7861
    %v7866 = vunpack.c.l.b16 %v7850
    %v7867 = vunpack.c.h.b16 %v7850
    %v7868 = vunpack.c.l.b16 %v7851
    %v7869 = vunpack.c.h.b16 %v7851
    %v7870 = vpack.c.b16 %v7868, %v7866
    %v7871 = vpack.c.b16 %v7869, %v7867
    %v7874 = vsel %vm7145, %v7871, 0
    %7876 = vmatprep.subr.bf16.mxu0 %v7815
    %7877 = vmatpush1.bf16.msra.mxu0 %v7814
    %7878 = vmatprep.subr.bf16.mxu0 %v7819
    %7879 = vmatpush1.bf16.msra.mxu0 %v7818
    %7880 = vmatprep.subr.bf16.mxu0 %v7823
    %7881 = vmatpush1.bf16.msra.mxu0 %v7822
    %7882 = vmatprep.subr.bf16.mxu0 %v7827
    %7883 = vmatpush1.bf16.msra.mxu0 %v7826
    %7884 = vmatprep.subr.bf16.mxu0 %v7831
    %7885 = vmatpush1.bf16.msra.mxu0 %v7830
    %7886 = vmatprep.subr.bf16.mxu0 %v7835
    %7887 = vmatpush1.bf16.msra.mxu0 %v7834
    %7888 = vmatprep.subr.bf16.mxu0 %v7839
    %7889 = vmatpush1.bf16.msra.mxu0 %v7838
    %7890 = vmatprep.subr.bf16.mxu0 %v7843
    %7891 = vmatpush1.bf16.msra.mxu0 %v7842
    %7892 = vmatprep.subr.bf16.mxu0 %v7847
    %7893 = vmatpush1.bf16.msra.mxu0 %v7846
    %7894 = vmatprep.subr.bf16.mxu0 0
    %7895 = vmatpush1.bf16.msra.mxu0 0
    %7896 = vmatprep.subr.bf16.mxu0 0
    %7897 = vmatpush1.bf16.msra.mxu0 0
    %7898 = vmatprep.subr.bf16.mxu0 0
    %7899 = vmatpush1.bf16.msra.mxu0 0
    %7900 = vmatprep.subr.bf16.mxu0 0
    %7901 = vmatpush1.bf16.msra.mxu0 0
    %7902 = vmatprep.subr.bf16.mxu0 0
    %7903 = vmatpush1.bf16.msra.mxu0 0
    %7904 = vmatprep.subr.bf16.mxu0 0
    %7905 = vmatpush1.bf16.msra.mxu0 0
    %7906 = vmatprep.subr.bf16.mxu0 0
    %7907 = vmatpush1.bf16.msra.mxu0 0
    %7908 = vmatprep.mubr.bf16.mxu0 %v7874
    %7909 = vmatmul.mubr.bf16.gmra.mrb[0].mxu0 %v7870
    %v7910 = vpop.f32.mrb[0].mxu0
    %v7911 = vadd.f32 %v7857, %v7910
    %v7912 = vpop.f32.mrb[0].mxu0
    %v7913 = vadd.f32 %v7857, %v7912
    %v7914 = vpop.f32.mrb[0].mxu0
    %v7915 = vadd.f32 %v7862, %v7914
    %v7916 = vpop.f32.mrb[0].mxu0
    %v7917 = vadd.f32 %v7862, %v7916
    %7918 = vdwg.mxu0
    %7919 = vmatprep.subr.bf16.mxu0 %v7817
    %7920 = vmatpush1.bf16.msra.mxu0 %v7816
    %7921 = vmatprep.subr.bf16.mxu0 %v7821
    %7922 = vmatpush1.bf16.msra.mxu0 %v7820
    %7923 = vmatprep.subr.bf16.mxu0 %v7825
    %7924 = vmatpush1.bf16.msra.mxu0 %v7824
    %7925 = vmatprep.subr.bf16.mxu0 %v7829
    %7926 = vmatpush1.bf16.msra.mxu0 %v7828
    %7927 = vmatprep.subr.bf16.mxu0 %v7833
    %7928 = vmatpush1.bf16.msra.mxu0 %v7832
    %7929 = vmatprep.subr.bf16.mxu0 %v7837
    %7930 = vmatpush1.bf16.msra.mxu0 %v7836
    %7931 = vmatprep.subr.bf16.mxu0 %v7841
    %7932 = vmatpush1.bf16.msra.mxu0 %v7840
    %7933 = vmatprep.subr.bf16.mxu0 %v7845
    %7934 = vmatpush1.bf16.msra.mxu0 %v7844
    %7935 = vmatprep.subr.bf16.mxu0 %v7849
    %7936 = vmatpush1.bf16.msra.mxu0 %v7848
    %7937 = vmatprep.subr.bf16.mxu0 0
    %7938 = vmatpush1.bf16.msra.mxu0 0
    %7939 = vmatprep.subr.bf16.mxu0 0
    %7940 = vmatpush1.bf16.msra.mxu0 0
    %7941 = vmatprep.subr.bf16.mxu0 0
    %7942 = vmatpush1.bf16.msra.mxu0 0
    %7943 = vmatprep.subr.bf16.mxu0 0
    %7944 = vmatpush1.bf16.msra.mxu0 0
    %7945 = vmatprep.subr.bf16.mxu0 0
    %7946 = vmatpush1.bf16.msra.mxu0 0
    %7947 = vmatprep.subr.bf16.mxu0 0
    %7948 = vmatpush1.bf16.msra.mxu0 0
    %7949 = vmatprep.subr.bf16.mxu0 0
    %7950 = vmatpush1.bf16.msra.mxu0 0
    %7951 = vmatprep.mubr.bf16.mxu0 %v7874
    %7952 = vmatmul.mubr.bf16.gmra.mrb[0].mxu0 %v7870
    %v7953 = vpop.f32.mrb[0].mxu0
    %v7954 = vadd.f32 %v7857, %v7953
    %v7955 = vpop.f32.mrb[0].mxu0
    %v7956 = vadd.f32 %v7857, %v7955
    %v7957 = vpop.f32.mrb[0].mxu0
    %v7958 = vadd.f32 %v7862, %v7957
    %v7959 = vpop.f32.mrb[0].mxu0
    %v7960 = vadd.f32 %v7862, %v7959
    %7961 = vdwg.mxu0
    %v7962 = vmax.f32 %v7911, 0.0
    %v7963 = vmax.f32 %v7913, 0.0
    %v7964 = vmax.f32 %v7954, 0.0
    %v7965 = vmax.f32 %v7956, 0.0
    %v7966 = vmax.f32 %v7915, 0.0
    %v7967 = vmax.f32 %v7917, 0.0
    %v7968 = vmax.f32 %v7958, 0.0
    %v7969 = vmax.f32 %v7960, 0.0
    %7978 = vrot.lane.b32.xlu0 %v7962, 127
    %v7979 = vpop.permute.xlu0 %7978
    %7980 = vrot.lane.b32.xlu0 %v7963, 127
    %v7981 = vpop.permute.xlu0 %7980
    %7982 = vrot.lane.b32.xlu0 %v7964, 127
    %v7983 = vpop.permute.xlu0 %7982
    %7984 = vrot.lane.b32.xlu0 %v7965, 127
    %v7985 = vpop.permute.xlu0 %7984
    %7986 = vrot.lane.b32.xlu0 %v7966, 127
    %v7987 = vpop.permute.xlu0 %7986
    %7988 = vrot.lane.b32.xlu0 %v7967, 127
    %v7989 = vpop.permute.xlu0 %7988
    %7990 = vrot.lane.b32.xlu0 %v7968, 127
    %v7991 = vpop.permute.xlu0 %7990
    %7992 = vrot.lane.b32.xlu0 %v7969, 127
    %v7993 = vpop.permute.xlu0 %7992
    %v7994 = vsel %vm1091, %v7979, %v7981
    %v7995 = vsel %vm1091, %v7981, %v7983
    %v7996 = vsel %vm1091, %v7983, %v7985
    %v7997 = vsel %vm1091, %v7985, %v1090
    %v7998 = vsel %vm1091, %v7987, %v7989
    %v7999 = vsel %vm1091, %v7989, %v7991
    %v8000 = vsel %vm1091, %v7991, %v7993
    %v8001 = vsel %vm1091, %v7993, %v1090
    %v8010 = vmax.f32 %v7962, %v7994
    %v8011 = vmax.f32 %v7963, %v7995
    %v8012 = vmax.f32 %v7964, %v7996
    %v8013 = vmax.f32 %v7965, %v7997
    %v8014 = vmax.f32 %v7966, %v7998
    %v8015 = vmax.f32 %v7967, %v7999
    %v8016 = vmax.f32 %v7968, %v8000
    %v8017 = vmax.f32 %v7969, %v8001
    %8026 = vrot.lane.b32.xlu0 %v8010, 112
    %v8027 = vpop.permute.xlu0 %8026
    %8028 = vrot.lane.b32.xlu0 %v8011, 112
    %v8029 = vpop.permute.xlu0 %8028
    %8030 = vrot.lane.b32.xlu0 %v8012, 112
    %v8031 = vpop.permute.xlu0 %8030
    %8032 = vrot.lane.b32.xlu0 %v8013, 112
    %v8033 = vpop.permute.xlu0 %8032
    %8034 = vrot.lane.b32.xlu0 %v3204, 112
    %v8035 = vpop.permute.xlu0 %8034
    %8036 = vrot.lane.b32.xlu0 %v8014, 112
    %v8037 = vpop.permute.xlu0 %8036
    %8038 = vrot.lane.b32.xlu0 %v8015, 112
    %v8039 = vpop.permute.xlu0 %8038
    %8040 = vrot.lane.b32.xlu0 %v8016, 112
    %v8041 = vpop.permute.xlu0 %8040
    %8042 = vrot.lane.b32.xlu0 %v8017, 112
    %v8043 = vpop.permute.xlu0 %8042
    %v8044 = vsel %vm7294, %v8027, %v8029
    %v8045 = vsel %vm7294, %v8029, %v8031
    %v8046 = vsel %vm7294, %v8031, %v8033
    %v8047 = vsel %vm7294, %v8033, %v8035
    %v8048 = vsel %vm7294, %v8037, %v8039
    %v8049 = vsel %vm7294, %v8039, %v8041
    %v8050 = vsel %vm7294, %v8041, %v8043
    %v8051 = vsel %vm7294, %v8043, %v8035
    %v8060 = vmax.f32 %v8010, %v8044
    %v8061 = vmax.f32 %v8011, %v8045
    %v8062 = vmax.f32 %v8012, %v8046
    %v8063 = vmax.f32 %v8013, %v8047
    %v8064 = vmax.f32 %v8014, %v8048
    %v8065 = vmax.f32 %v8015, %v8049
    %v8066 = vmax.f32 %v8016, %v8050
    %v8067 = vmax.f32 %v8017, %v8051
    %v8068 = vpack.c.bf16 %v8064, %v8060
    %v8069 = vpack.c.bf16 %v8065, %v8061
    %v8070 = vpack.c.bf16 %v8066, %v8062
    %v8071 = vpack.c.bf16 %v8067, %v8063
    %v8072 = vld [vmem:[#allocation22] sm:$0xf]
    %v8073 = vld [vmem:[#allocation22 + $0x4] sm:$0xf]
    %v8074 = vld [vmem:[#allocation22 + $0x8] sm:$0xf]
    %v8075 = vld [vmem:[#allocation22 + $0xc] sm:$0xf]
    %v8076 = vld [vmem:[#allocation22 + $0x10] sm:$0xf]
    %v8077 = vld [vmem:[#allocation22 + $0x14] sm:$0xf]
    %v8078 = vld [vmem:[#allocation22 + $0x18] sm:$0xf]
    %v8079 = vld [vmem:[#allocation22 + $0x1c] sm:$0xf]
    %v8080 = vld [vmem:[#allocation22 + $0x20] sm:$0xf]
    %v8081 = vld [vmem:[#allocation22 + $0x24] sm:$0xf]
    %v8082 = vld [vmem:[#allocation22 + $0x28] sm:$0xf]
    %v8083 = vld [vmem:[#allocation22 + $0x2c] sm:$0xf]
    %v8084 = vld [vmem:[#allocation22 + $0x30] sm:$0xf]
    %v8085 = vld [vmem:[#allocation22 + $0x34] sm:$0xf]
    %v8086 = vld [vmem:[#allocation22 + $0x38] sm:$0xf]
    %v8087 = vld [vmem:[#allocation22 + $0x3c] sm:$0xf]
    %v8088 = vld [vmem:[#allocation22 + $0x40] sm:$0xf]
    %v8089 = vld [vmem:[#allocation22 + $0x44] sm:$0xf]
    %v8090 = vld [vmem:[#allocation22 + $0x48] sm:$0xf]
    %v8091 = vld [vmem:[#allocation22 + $0x4c] sm:$0xf]
    %v8092 = vld [vmem:[#allocation22 + $0x50] sm:$0xf]
    %v8093 = vld [vmem:[#allocation22 + $0x54] sm:$0xf]
    %v8094 = vld [vmem:[#allocation22 + $0x58] sm:$0xf]
    %v8095 = vld [vmem:[#allocation22 + $0x5c] sm:$0xf]
    %v8096 = vld [vmem:[#allocation22 + $0x60] sm:$0xf]
    %v8097 = vld [vmem:[#allocation22 + $0x64] sm:$0xf]
    %v8098 = vld [vmem:[#allocation22 + $0x68] sm:$0xf]
    %v8099 = vld [vmem:[#allocation22 + $0x6c] sm:$0xf]
    %v8100 = vld [vmem:[#allocation22 + $0x70] sm:$0xf]
    %v8101 = vld [vmem:[#allocation22 + $0x74] sm:$0xf]
    %v8102 = vld [vmem:[#allocation22 + $0x78] sm:$0xf]
    %v8103 = vld [vmem:[#allocation22 + $0x7c] sm:$0xf]
    %v8104 = vld [vmem:[#allocation22 + $0x80] sm:$0xf]
    %v8105 = vld [vmem:[#allocation22 + $0x84] sm:$0xf]
    %v8106 = vld [vmem:[#allocation22 + $0x88] sm:$0xf]
    %v8107 = vld [vmem:[#allocation22 + $0x8c] sm:$0xf]
    %v8108 = vld [vmem:[#allocation22 + $0x90] sm:$0xf]
    %v8109 = vld [vmem:[#allocation22 + $0x94] sm:$0xf]
    %v8110 = vld [vmem:[#allocation22 + $0x98] sm:$0xf]
    %v8111 = vld [vmem:[#allocation22 + $0x9c] sm:$0xf]
    %v8112 = vld [vmem:[#allocation22 + $0xa0] sm:$0xf]
    %v8113 = vld [vmem:[#allocation22 + $0xa4] sm:$0xf]
    %v8114 = vld [vmem:[#allocation22 + $0xa8] sm:$0xf]
    %v8115 = vld [vmem:[#allocation22 + $0xac] sm:$0xf]
    %v8116 = vld [vmem:[#allocation22 + $0xb0] sm:$0xf]
    %v8117 = vld [vmem:[#allocation22 + $0xb4] sm:$0xf]
    %v8118 = vld [vmem:[#allocation22 + $0xb8] sm:$0xf]
    %v8119 = vld [vmem:[#allocation22 + $0xbc] sm:$0xf]
    %v8120 = vld [vmem:[#allocation22 + $0xc0] sm:$0xf]
    %v8121 = vld [vmem:[#allocation22 + $0xc4] sm:$0xf]
    %v8122 = vld [vmem:[#allocation22 + $0xc8] sm:$0xf]
    %v8123 = vld [vmem:[#allocation22 + $0xcc] sm:$0xf]
    %v8124 = vld [vmem:[#allocation22 + $0xd0] sm:$0xf]
    %v8125 = vld [vmem:[#allocation22 + $0xd4] sm:$0xf]
    %v8126 = vld [vmem:[#allocation22 + $0xd8] sm:$0xf]
    %v8127 = vld [vmem:[#allocation22 + $0xdc] sm:$0xf]
    %v8128 = vld [vmem:[#allocation22 + $0xe0] sm:$0xf]
    %v8129 = vld [vmem:[#allocation22 + $0xe4] sm:$0xf]
    %v8130 = vld [vmem:[#allocation22 + $0xe8] sm:$0xf]
    %v8131 = vld [vmem:[#allocation22 + $0xec] sm:$0xf]
    %v8132 = vld [vmem:[#allocation22 + $0xf0] sm:$0xf]
    %v8133 = vld [vmem:[#allocation22 + $0xf4] sm:$0xf]
    %v8134 = vld [vmem:[#allocation22 + $0xf8] sm:$0xf]
    %v8135 = vld [vmem:[#allocation22 + $0xfc] sm:$0xf]
    %v8200 = vunpack.c.l.b16 %v8072
    %v8201 = vunpack.c.l.b16 %v8073
    %v8202 = vunpack.c.l.b16 %v8074
    %v8203 = vunpack.c.l.b16 %v8075
    %v8204 = vunpack.c.l.b16 %v8076
    %v8205 = vunpack.c.l.b16 %v8077
    %v8206 = vunpack.c.l.b16 %v8078
    %v8207 = vunpack.c.l.b16 %v8079
    %v8208 = vunpack.c.l.b16 %v8080
    %v8209 = vunpack.c.l.b16 %v8081
    %v8210 = vunpack.c.l.b16 %v8082
    %v8211 = vunpack.c.l.b16 %v8083
    %v8212 = vunpack.c.l.b16 %v8084
    %v8213 = vunpack.c.l.b16 %v8085
    %v8214 = vunpack.c.l.b16 %v8086
    %v8215 = vunpack.c.l.b16 %v8087
    %v8216 = vunpack.c.l.b16 %v8088
    %v8217 = vunpack.c.l.b16 %v8089
    %v8218 = vunpack.c.l.b16 %v8090
    %v8219 = vunpack.c.l.b16 %v8091
    %v8220 = vunpack.c.l.b16 %v8092
    %v8221 = vunpack.c.l.b16 %v8093
    %v8222 = vunpack.c.l.b16 %v8094
    %v8223 = vunpack.c.l.b16 %v8095
    %v8224 = vunpack.c.l.b16 %v8096
    %v8225 = vunpack.c.l.b16 %v8097
    %v8226 = vunpack.c.l.b16 %v8098
    %v8227 = vunpack.c.l.b16 %v8099
    %v8228 = vunpack.c.l.b16 %v8100
    %v8229 = vunpack.c.l.b16 %v8101
    %v8230 = vunpack.c.l.b16 %v8102
    %v8231 = vunpack.c.l.b16 %v8103
    %v8232 = vunpack.c.l.b16 %v8104
    %v8233 = vunpack.c.l.b16 %v8105
    %v8234 = vunpack.c.l.b16 %v8106
    %v8235 = vunpack.c.l.b16 %v8107
    %v8236 = vunpack.c.l.b16 %v8108
    %v8237 = vunpack.c.l.b16 %v8109
    %v8238 = vunpack.c.l.b16 %v8110
    %v8239 = vunpack.c.l.b16 %v8111
    %v8240 = vunpack.c.l.b16 %v8112
    %v8241 = vunpack.c.l.b16 %v8113
    %v8242 = vunpack.c.l.b16 %v8114
    %v8243 = vunpack.c.l.b16 %v8115
    %v8244 = vunpack.c.l.b16 %v8116
    %v8245 = vunpack.c.l.b16 %v8117
    %v8246 = vunpack.c.l.b16 %v8118
    %v8247 = vunpack.c.l.b16 %v8119
    %v8248 = vunpack.c.l.b16 %v8120
    %v8249 = vunpack.c.l.b16 %v8121
    %v8250 = vunpack.c.l.b16 %v8122
    %v8251 = vunpack.c.l.b16 %v8123
    %v8252 = vunpack.c.l.b16 %v8124
    %v8253 = vunpack.c.l.b16 %v8125
    %v8254 = vunpack.c.l.b16 %v8126
    %v8255 = vunpack.c.l.b16 %v8127
    %v8256 = vunpack.c.l.b16 %v8128
    %v8257 = vunpack.c.l.b16 %v8129
    %v8258 = vunpack.c.l.b16 %v8130
    %v8259 = vunpack.c.l.b16 %v8131
    %v8260 = vunpack.c.l.b16 %v8132
    %v8261 = vunpack.c.l.b16 %v8133
    %v8262 = vunpack.c.l.b16 %v8134
    %v8263 = vunpack.c.l.b16 %v8135
    %v8264 = vpack.c.b16 %v8201, %v8200
    %v8265 = vpack.c.b16 %v8203, %v8202
    %v8266 = vpack.c.b16 %v8205, %v8204
    %v8267 = vpack.c.b16 %v8207, %v8206
    %v8268 = vpack.c.b16 %v8209, %v8208
    %v8269 = vpack.c.b16 %v8211, %v8210
    %v8270 = vpack.c.b16 %v8213, %v8212
    %v8271 = vpack.c.b16 %v8215, %v8214
    %v8272 = vpack.c.b16 %v8217, %v8216
    %v8273 = vpack.c.b16 %v8219, %v8218
    %v8274 = vpack.c.b16 %v8221, %v8220
    %v8275 = vpack.c.b16 %v8223, %v8222
    %v8276 = vpack.c.b16 %v8225, %v8224
    %v8277 = vpack.c.b16 %v8227, %v8226
    %v8278 = vpack.c.b16 %v8229, %v8228
    %v8279 = vpack.c.b16 %v8231, %v8230
    %v8280 = vpack.c.b16 %v8233, %v8232
    %v8281 = vpack.c.b16 %v8235, %v8234
    %v8282 = vpack.c.b16 %v8237, %v8236
    %v8283 = vpack.c.b16 %v8239, %v8238
    %v8284 = vpack.c.b16 %v8241, %v8240
    %v8285 = vpack.c.b16 %v8243, %v8242
    %v8286 = vpack.c.b16 %v8245, %v8244
    %v8287 = vpack.c.b16 %v8247, %v8246
    %v8288 = vpack.c.b16 %v8249, %v8248
    %v8289 = vpack.c.b16 %v8251, %v8250
    %v8290 = vpack.c.b16 %v8253, %v8252
    %v8291 = vpack.c.b16 %v8255, %v8254
    %v8292 = vpack.c.b16 %v8257, %v8256
    %v8293 = vpack.c.b16 %v8259, %v8258
    %v8294 = vpack.c.b16 %v8261, %v8260
    %v8295 = vpack.c.b16 %v8263, %v8262
    %8328 = vmatprep.subr.bf16.mxu0 0
    %8329 = vmatpush1.bf16.msra.mxu0 %v8264
    %8330 = vmatprep.subr.bf16.mxu0 0
    %8331 = vmatpush1.bf16.msra.mxu0 %v8265
    %8332 = vmatprep.subr.bf16.mxu0 0
    %8333 = vmatpush1.bf16.msra.mxu0 %v8266
    %8334 = vmatprep.subr.bf16.mxu0 0
    %8335 = vmatpush1.bf16.msra.mxu0 %v8267
    %8336 = vmatprep.subr.bf16.mxu0 0
    %8337 = vmatpush1.bf16.msra.mxu0 %v8268
    %8338 = vmatprep.subr.bf16.mxu0 0
    %8339 = vmatpush1.bf16.msra.mxu0 %v8269
    %8340 = vmatprep.subr.bf16.mxu0 0
    %8341 = vmatpush1.bf16.msra.mxu0 %v8270
    %8342 = vmatprep.subr.bf16.mxu0 0
    %8343 = vmatpush1.bf16.msra.mxu0 %v8271
    %8344 = vmatprep.subr.bf16.mxu0 0
    %8345 = vmatpush1.bf16.msra.mxu0 %v8272
    %8346 = vmatprep.subr.bf16.mxu0 0
    %8347 = vmatpush1.bf16.msra.mxu0 %v8273
    %8348 = vmatprep.subr.bf16.mxu0 0
    %8349 = vmatpush1.bf16.msra.mxu0 %v8274
    %8350 = vmatprep.subr.bf16.mxu0 0
    %8351 = vmatpush1.bf16.msra.mxu0 %v8275
    %8352 = vmatprep.subr.bf16.mxu0 0
    %8353 = vmatpush1.bf16.msra.mxu0 %v8276
    %8354 = vmatprep.subr.bf16.mxu0 0
    %8355 = vmatpush1.bf16.msra.mxu0 %v8277
    %8356 = vmatprep.subr.bf16.mxu0 0
    %8357 = vmatpush1.bf16.msra.mxu0 %v8278
    %8358 = vmatprep.subr.bf16.mxu0 0
    %8359 = vmatpush1.bf16.msra.mxu0 %v8279
    %8360 = vmatprep.mubr.bf16.mxu0 %v8069
    %8361 = vmatmul.mubr.bf16.gmra.mrb[0].mxu0 %v8068
    %v8362 = vpop.f32.mrb[0].mxu0
    %v8363 = vadd.f32 0.0, %v8362
    %v8364 = vpop.f32.mrb[0].mxu0
    %v8365 = vpop.f32.mrb[0].mxu0
    %v8366 = vadd.f32 0.0, %v8365
    %v8367 = vpop.f32.mrb[0].mxu0
    %8368 = vdwg.mxu0
    %8369 = vmatprep.subr.bf16.mxu0 0
    %8370 = vmatpush1.bf16.msra.mxu0 %v8280
    %8371 = vmatprep.subr.bf16.mxu0 0
    %8372 = vmatpush1.bf16.msra.mxu0 %v8281
    %8373 = vmatprep.subr.bf16.mxu0 0
    %8374 = vmatpush1.bf16.msra.mxu0 %v8282
    %8375 = vmatprep.subr.bf16.mxu0 0
    %8376 = vmatpush1.bf16.msra.mxu0 %v8283
    %8377 = vmatprep.subr.bf16.mxu0 0
    %8378 = vmatpush1.bf16.msra.mxu0 %v8284
    %8379 = vmatprep.subr.bf16.mxu0 0
    %8380 = vmatpush1.bf16.msra.mxu0 %v8285
    %8381 = vmatprep.subr.bf16.mxu0 0
    %8382 = vmatpush1.bf16.msra.mxu0 %v8286
    %8383 = vmatprep.subr.bf16.mxu0 0
    %8384 = vmatpush1.bf16.msra.mxu0 %v8287
    %8385 = vmatprep.subr.bf16.mxu0 0
    %8386 = vmatpush1.bf16.msra.mxu0 %v8288
    %8387 = vmatprep.subr.bf16.mxu0 0
    %8388 = vmatpush1.bf16.msra.mxu0 %v8289
    %8389 = vmatprep.subr.bf16.mxu0 0
    %8390 = vmatpush1.bf16.msra.mxu0 %v8290
    %8391 = vmatprep.subr.bf16.mxu0 0
    %8392 = vmatpush1.bf16.msra.mxu0 %v8291
    %8393 = vmatprep.subr.bf16.mxu0 0
    %8394 = vmatpush1.bf16.msra.mxu0 %v8292
    %8395 = vmatprep.subr.bf16.mxu0 0
    %8396 = vmatpush1.bf16.msra.mxu0 %v8293
    %8397 = vmatprep.subr.bf16.mxu0 0
    %8398 = vmatpush1.bf16.msra.mxu0 %v8294
    %8399 = vmatprep.subr.bf16.mxu0 0
    %8400 = vmatpush1.bf16.msra.mxu0 %v8295
    %8401 = vmatprep.mubr.bf16.mxu0 %v8071
    %8402 = vmatmul.mubr.bf16.gmra.mrb[0].mxu0 %v8070
    %v8403 = vpop.f32.mrb[0].mxu0
    %v8404 = vadd.f32 %v8363, %v8403
    %v8405 = vpop.f32.mrb[0].mxu0
    %v8406 = vpop.f32.mrb[0].mxu0
    %v8407 = vadd.f32 %v8366, %v8406
    %v8408 = vpop.f32.mrb[0].mxu0
    %8409 = vdwg.mxu0
    %v8410 = vand.u32 %v356, 63
    %v8411 = vand.u32 %v8410, 7
    %v8412 = vshra.s32 %v8410, 3
    %vm8413 = vcmp.ge.s32.totalorder %v8411, 1
    %vm8414 = vcmp.le.s32.totalorder %v8411, 6
    %vm8415 = vcmp.ge.s32.totalorder %v8412, 1
    %vm8416 = vcmp.le.s32.totalorder %v8412, 6
    %vm8417 = vmand %vm8415, %vm8413
    %vm8418 = vmand %vm8415, %vm8414
    %vm8419 = vmand %vm8416, %vm8413
    %vm8420 = vmand %vm8416, %vm8414
    %v8421 = vsel %vm8417, 1, 0
    %vm8422 = vcmp.eq.s32.totalorder %v8421, 1
    %8425 = vrot.lane.b32.xlu0 0.0, 9
    %v8426 = vpop.permute.xlu0 %8425
    %8427 = vrot.lane.b32.xlu0 %v8404, 9
    %v8428 = vpop.permute.xlu0 %8427
    %8429 = vrot.lane.b32.xlu0 %v8407, 9
    %v8430 = vpop.permute.xlu0 %8429
    %vm8431 = vcmask 72704
    %v8432 = vsel %vm8431, %v8426, %v8428
    %v8433 = vsel %vm8431, %v8426, %v8430
    %v8436 = vsel %vm8422, %v8432, 0.0
    %v8437 = vsel %vm8422, %v8433, 0.0
    %v8438 = vsel %vm8415, 1, 0
    %vm8439 = vcmp.eq.s32.totalorder %v8438, 1
    %8440 = vrot.lane.b32.xlu0 0.0, 8
    %v8441 = vpop.permute.xlu0 %8440
    %8442 = vrot.lane.b32.xlu0 %v8404, 8
    %v8443 = vpop.permute.xlu0 %8442
    %8444 = vrot.lane.b32.xlu0 %v8407, 8
    %v8445 = vpop.permute.xlu0 %8444
    %vm8446 = vcmask 64512
    %v8447 = vsel %vm8446, %v8441, %v8443
    %v8448 = vsel %vm8446, %v8441, %v8445
    %v8451 = vsel %vm8439, %v8447, 0.0
    %v8452 = vsel %vm8439, %v8448, 0.0
    %v8453 = vsel %vm8418, 1, 0
    %vm8454 = vcmp.eq.s32.totalorder %v8453, 1
    %8455 = vrot.lane.b32.xlu0 0.0, 7
    %v8456 = vpop.permute.xlu0 %8455
    %8457 = vrot.lane.b32.xlu0 %v8404, 7
    %v8458 = vpop.permute.xlu0 %8457
    %8459 = vrot.lane.b32.xlu0 %v8407, 7
    %v8460 = vpop.permute.xlu0 %8459
    %vm8461 = vcmask 56320
    %v8462 = vsel %vm8461, %v8456, %v8458
    %v8463 = vsel %vm8461, %v8456, %v8460
    %v8466 = vsel %vm8454, %v8462, 0.0
    %v8467 = vsel %vm8454, %v8463, 0.0
    %v8468 = vsel %vm8413, 1, 0
    %vm8469 = vcmp.eq.s32.totalorder %v8468, 1
    %8470 = vrot.lane.b32.xlu0 %v8404, 1
    %v8471 = vpop.permute.xlu0 %8470
    %8472 = vrot.lane.b32.xlu0 %v8407, 1
    %v8473 = vpop.permute.xlu0 %8472
    %v8474 = vsel %vm976, %v943, %v8471
    %v8475 = vsel %vm976, %v943, %v8473
    %v8478 = vsel %vm8469, %v8474, 0.0
    %v8479 = vsel %vm8469, %v8475, 0.0
    %v8480 = vsel %vm8414, 1, 0
    %vm8481 = vcmp.eq.s32.totalorder %v8480, 1
    %8482 = vrot.lane.b32.xlu0 %v8404, 127
    %v8483 = vpop.permute.xlu0 %8482
    %8484 = vrot.lane.b32.xlu0 %v8407, 127
    %v8485 = vpop.permute.xlu0 %8484
    %v8486 = vsel %vm1091, %v8483, %v1090
    %v8487 = vsel %vm1091, %v8485, %v1090
    %v8490 = vsel %vm8481, %v8486, 0.0
    %v8491 = vsel %vm8481, %v8487, 0.0
    %v8492 = vsel %vm8419, 1, 0
    %vm8493 = vcmp.eq.s32.totalorder %v8492, 1
    %8494 = vrot.lane.b32.xlu0 %v8404, 121
    %v8495 = vpop.permute.xlu0 %8494
    %8496 = vrot.lane.b32.xlu0 0.0, 121
    %v8497 = vpop.permute.xlu0 %8496
    %8498 = vrot.lane.b32.xlu0 %v8407, 121
    %v8499 = vpop.permute.xlu0 %8498
    %vm8500 = vcmask 990208
    %v8501 = vsel %vm8500, %v8495, %v8497
    %v8502 = vsel %vm8500, %v8499, %v8497
    %v8505 = vsel %vm8493, %v8501, 0.0
    %v8506 = vsel %vm8493, %v8502, 0.0
    %v8507 = vsel %vm8416, 1, 0
    %vm8508 = vcmp.eq.s32.totalorder %v8507, 1
    %8509 = vrot.lane.b32.xlu0 %v8404, 120
    %v8510 = vpop.permute.xlu0 %8509
    %8511 = vrot.lane.b32.xlu0 0.0, 120
    %v8512 = vpop.permute.xlu0 %8511
    %8513 = vrot.lane.b32.xlu0 %v8407, 120
    %v8514 = vpop.permute.xlu0 %8513
    %vm8515 = vcmask 982016
    %v8516 = vsel %vm8515, %v8510, %v8512
    %v8517 = vsel %vm8515, %v8514, %v8512
    %v8520 = vsel %vm8508, %v8516, 0.0
    %v8521 = vsel %vm8508, %v8517, 0.0
    %v8522 = vsel %vm8420, 1, 0
    %vm8523 = vcmp.eq.s32.totalorder %v8522, 1
    %8524 = vrot.lane.b32.xlu0 %v8404, 119
    %v8525 = vpop.permute.xlu0 %8524
    %8526 = vrot.lane.b32.xlu0 0.0, 119
    %v8527 = vpop.permute.xlu0 %8526
    %8528 = vrot.lane.b32.xlu0 %v8407, 119
    %v8529 = vpop.permute.xlu0 %8528
    %vm8530 = vcmask 973824
    %v8531 = vsel %vm8530, %v8525, %v8527
    %v8532 = vsel %vm8530, %v8529, %v8527
    %v8535 = vsel %vm8523, %v8531, 0.0
    %v8536 = vsel %vm8523, %v8532, 0.0
    %v8537 = vpack.c.bf16 %v8437, %v8436
    %v8538 = vpack.c.bf16 %v8452, %v8451
    %v8539 = vpack.c.bf16 %v8467, %v8466
    %v8540 = vpack.c.bf16 %v8479, %v8478
    %v8541 = vpack.c.bf16 %v8407, %v8404
    %v8542 = vpack.c.bf16 %v8491, %v8490
    %v8543 = vpack.c.bf16 %v8506, %v8505
    %v8544 = vpack.c.bf16 %v8521, %v8520
    %v8545 = vpack.c.bf16 %v8536, %v8535
    %v8546 = vld [vmem:[#allocation11] sm:$0xff]
    %v8547 = vld [vmem:[#allocation11 + $0x8] sm:$0xff]
    %v8548 = vld [vmem:[%s21] sm:$0xff]
    %v8549 = vld [vmem:[%s21 + $0x8] sm:$0xff]
    %8551 = vset.pattern.permute.xlu0 0
    %8552 = vperm.xlu0 %8551, %v8548
    %v8553 = vpop.permute.xlu0 %8552
    %8556 = vset.pattern.permute.xlu0 0
    %8557 = vperm.xlu0 %8556, %v8549
    %v8558 = vpop.permute.xlu0 %8557
    %v8562 = vunpack.c.l.b16 %v8546
    %v8563 = vunpack.c.h.b16 %v8546
    %v8564 = vunpack.c.l.b16 %v8547
    %v8565 = vunpack.c.h.b16 %v8547
    %v8566 = vpack.c.b16 %v8564, %v8562
    %v8567 = vpack.c.b16 %v8565, %v8563
    %v8570 = vsel %vm7145, %v8567, 0
    %8572 = vmatprep.subr.bf16.mxu0 0
    %8573 = vmatpush1.bf16.msra.mxu0 %v8537
    %8574 = vmatprep.subr.bf16.mxu0 0
    %8575 = vmatpush1.bf16.msra.mxu0 %v8538
    %8576 = vmatprep.subr.bf16.mxu0 0
    %8577 = vmatpush1.bf16.msra.mxu0 %v8539
    %8578 = vmatprep.subr.bf16.mxu0 0
    %8579 = vmatpush1.bf16.msra.mxu0 %v8540
    %8580 = vmatprep.subr.bf16.mxu0 0
    %8581 = vmatpush1.bf16.msra.mxu0 %v8541
    %8582 = vmatprep.subr.bf16.mxu0 0
    %8583 = vmatpush1.bf16.msra.mxu0 %v8542
    %8584 = vmatprep.subr.bf16.mxu0 0
    %8585 = vmatpush1.bf16.msra.mxu0 %v8543
    %8586 = vmatprep.subr.bf16.mxu0 0
    %8587 = vmatpush1.bf16.msra.mxu0 %v8544
    %8588 = vmatprep.subr.bf16.mxu0 0
    %8589 = vmatpush1.bf16.msra.mxu0 %v8545
    %8590 = vmatprep.subr.bf16.mxu0 0
    %8591 = vmatpush1.bf16.msra.mxu0 0
    %8592 = vmatprep.subr.bf16.mxu0 0
    %8593 = vmatpush1.bf16.msra.mxu0 0
    %8594 = vmatprep.subr.bf16.mxu0 0
    %8595 = vmatpush1.bf16.msra.mxu0 0
    %8596 = vmatprep.subr.bf16.mxu0 0
    %8597 = vmatpush1.bf16.msra.mxu0 0
    %8598 = vmatprep.subr.bf16.mxu0 0
    %8599 = vmatpush1.bf16.msra.mxu0 0
    %8600 = vmatprep.subr.bf16.mxu0 0
    %8601 = vmatpush1.bf16.msra.mxu0 0
    %8602 = vmatprep.subr.bf16.mxu0 0
    %8603 = vmatpush1.bf16.msra.mxu0 0
    %8604 = vmatprep.mubr.bf16.mxu0 %v8570
    %8605 = vmatmul.mubr.bf16.gmra.mrb[0].mxu0 %v8566
    %v8606 = vpop.f32.mrb[0].mxu0
    %v8607 = vadd.f32 %v8553, %v8606
    %v8608 = vpop.f32.mrb[0].mxu0
    %v8609 = vpop.f32.mrb[0].mxu0
    %v8610 = vadd.f32 %v8558, %v8609
    %v8611 = vpop.f32.mrb[0].mxu0
    %8612 = vdwg.mxu0
    %v8613 = vmax.f32 %v8607, 0.0
    %v8614 = vmax.f32 %v8610, 0.0
    %8617 = vrot.lane.b32.xlu0 %v8613, 9
    %v8618 = vpop.permute.xlu0 %8617
    %8619 = vrot.lane.b32.xlu0 %v8614, 9
    %v8620 = vpop.permute.xlu0 %8619
    %v8621 = vsel %vm8431, %v8426, %v8618
    %v8622 = vsel %vm8431, %v8426, %v8620
    %v8625 = vsel %vm8422, %v8621, 0.0
    %v8626 = vsel %vm8422, %v8622, 0.0
    %8627 = vrot.lane.b32.xlu0 %v8613, 8
    %v8628 = vpop.permute.xlu0 %8627
    %8629 = vrot.lane.b32.xlu0 %v8614, 8
    %v8630 = vpop.permute.xlu0 %8629
    %v8631 = vsel %vm8446, %v8441, %v8628
    %v8632 = vsel %vm8446, %v8441, %v8630
    %v8635 = vsel %vm8439, %v8631, 0.0
    %v8636 = vsel %vm8439, %v8632, 0.0
    %8637 = vrot.lane.b32.xlu0 %v8613, 7
    %v8638 = vpop.permute.xlu0 %8637
    %8639 = vrot.lane.b32.xlu0 %v8614, 7
    %v8640 = vpop.permute.xlu0 %8639
    %v8641 = vsel %vm8461, %v8456, %v8638
    %v8642 = vsel %vm8461, %v8456, %v8640
    %v8645 = vsel %vm8454, %v8641, 0.0
    %v8646 = vsel %vm8454, %v8642, 0.0
    %8647 = vrot.lane.b32.xlu0 %v8613, 1
    %v8648 = vpop.permute.xlu0 %8647
    %8649 = vrot.lane.b32.xlu0 %v8614, 1
    %v8650 = vpop.permute.xlu0 %8649
    %v8651 = vsel %vm976, %v943, %v8648
    %v8652 = vsel %vm976, %v943, %v8650
    %v8655 = vsel %vm8469, %v8651, 0.0
    %v8656 = vsel %vm8469, %v8652, 0.0
    %8657 = vrot.lane.b32.xlu0 %v8613, 127
    %v8658 = vpop.permute.xlu0 %8657
    %8659 = vrot.lane.b32.xlu0 %v8614, 127
    %v8660 = vpop.permute.xlu0 %8659
    %v8661 = vsel %vm1091, %v8658, %v1090
    %v8662 = vsel %vm1091, %v8660, %v1090
    %v8665 = vsel %vm8481, %v8661, 0.0
    %v8666 = vsel %vm8481, %v8662, 0.0
    %8667 = vrot.lane.b32.xlu0 %v8613, 121
    %v8668 = vpop.permute.xlu0 %8667
    %8669 = vrot.lane.b32.xlu0 %v8614, 121
    %v8670 = vpop.permute.xlu0 %8669
    %v8671 = vsel %vm8500, %v8668, %v8497
    %v8672 = vsel %vm8500, %v8670, %v8497
    %v8675 = vsel %vm8493, %v8671, 0.0
    %v8676 = vsel %vm8493, %v8672, 0.0
    %8677 = vrot.lane.b32.xlu0 %v8613, 120
    %v8678 = vpop.permute.xlu0 %8677
    %8679 = vrot.lane.b32.xlu0 %v8614, 120
    %v8680 = vpop.permute.xlu0 %8679
    %v8681 = vsel %vm8515, %v8678, %v8512
    %v8682 = vsel %vm8515, %v8680, %v8512
    %v8685 = vsel %vm8508, %v8681, 0.0
    %v8686 = vsel %vm8508, %v8682, 0.0
    %8687 = vrot.lane.b32.xlu0 %v8613, 119
    %v8688 = vpop.permute.xlu0 %8687
    %8689 = vrot.lane.b32.xlu0 %v8614, 119
    %v8690 = vpop.permute.xlu0 %8689
    %v8691 = vsel %vm8530, %v8688, %v8527
    %v8692 = vsel %vm8530, %v8690, %v8527
    %v8695 = vsel %vm8523, %v8691, 0.0
    %v8696 = vsel %vm8523, %v8692, 0.0
    %v8697 = vpack.c.bf16 %v8626, %v8625
    %v8698 = vpack.c.bf16 %v8636, %v8635
    %v8699 = vpack.c.bf16 %v8646, %v8645
    %v8700 = vpack.c.bf16 %v8656, %v8655
    %v8701 = vpack.c.bf16 %v8614, %v8613
    %v8702 = vpack.c.bf16 %v8666, %v8665
    %v8703 = vpack.c.bf16 %v8676, %v8675
    %v8704 = vpack.c.bf16 %v8686, %v8685
    %v8705 = vpack.c.bf16 %v8696, %v8695
    %v8706 = vld [vmem:[#allocation13] sm:$0xff]
    %v8707 = vld [vmem:[#allocation13 + $0x8] sm:$0xff]
    %v8708 = vld [vmem:[%s25] sm:$0xff]
    %v8709 = vld [vmem:[%s25 + $0x8] sm:$0xff]
    %8711 = vset.pattern.permute.xlu0 0
    %8712 = vperm.xlu0 %8711, %v8708
    %v8713 = vpop.permute.xlu0 %8712
    %8716 = vset.pattern.permute.xlu0 0
    %8717 = vperm.xlu0 %8716, %v8709
    %v8718 = vpop.permute.xlu0 %8717
    %v8722 = vunpack.c.l.b16 %v8706
    %v8723 = vunpack.c.h.b16 %v8706
    %v8724 = vunpack.c.l.b16 %v8707
    %v8725 = vunpack.c.h.b16 %v8707
    %v8726 = vpack.c.b16 %v8724, %v8722
    %v8727 = vpack.c.b16 %v8725, %v8723
    %v8730 = vsel %vm7145, %v8727, 0
    %8732 = vmatprep.subr.bf16.mxu0 0
    %8733 = vmatpush1.bf16.msra.mxu0 %v8697
    %8734 = vmatprep.subr.bf16.mxu0 0
    %8735 = vmatpush1.bf16.msra.mxu0 %v8698
    %8736 = vmatprep.subr.bf16.mxu0 0
    %8737 = vmatpush1.bf16.msra.mxu0 %v8699
    %8738 = vmatprep.subr.bf16.mxu0 0
    %8739 = vmatpush1.bf16.msra.mxu0 %v8700
    %8740 = vmatprep.subr.bf16.mxu0 0
    %8741 = vmatpush1.bf16.msra.mxu0 %v8701
    %8742 = vmatprep.subr.bf16.mxu0 0
    %8743 = vmatpush1.bf16.msra.mxu0 %v8702
    %8744 = vmatprep.subr.bf16.mxu0 0
    %8745 = vmatpush1.bf16.msra.mxu0 %v8703
    %8746 = vmatprep.subr.bf16.mxu0 0
    %8747 = vmatpush1.bf16.msra.mxu0 %v8704
    %8748 = vmatprep.subr.bf16.mxu0 0
    %8749 = vmatpush1.bf16.msra.mxu0 %v8705
    %8750 = vmatprep.subr.bf16.mxu0 0
    %8751 = vmatpush1.bf16.msra.mxu0 0
    %8752 = vmatprep.subr.bf16.mxu0 0
    %8753 = vmatpush1.bf16.msra.mxu0 0
    %8754 = vmatprep.subr.bf16.mxu0 0
    %8755 = vmatpush1.bf16.msra.mxu0 0
    %8756 = vmatprep.subr.bf16.mxu0 0
    %8757 = vmatpush1.bf16.msra.mxu0 0
    %8758 = vmatprep.subr.bf16.mxu0 0
    %8759 = vmatpush1.bf16.msra.mxu0 0
    %8760 = vmatprep.subr.bf16.mxu0 0
    %8761 = vmatpush1.bf16.msra.mxu0 0
    %8762 = vmatprep.subr.bf16.mxu0 0
    %8763 = vmatpush1.bf16.msra.mxu0 0
    %8764 = vmatprep.mubr.bf16.mxu0 %v8730
    %8765 = vmatmul.mubr.bf16.gmra.mrb[0].mxu0 %v8726
    %v8766 = vpop.f32.mrb[0].mxu0
    %v8767 = vadd.f32 %v8713, %v8766
    %v8768 = vpop.f32.mrb[0].mxu0
    %v8769 = vpop.f32.mrb[0].mxu0
    %v8770 = vadd.f32 %v8718, %v8769
    %v8771 = vpop.f32.mrb[0].mxu0
    %8772 = vdwg.mxu0
    %v8773 = vmax.f32 %v8767, 0.0
    %v8774 = vmax.f32 %v8770, 0.0
    %8777 = vrot.lane.b32.xlu0 %v8773, 127
    %v8778 = vpop.permute.xlu0 %8777
    %8779 = vrot.lane.b32.xlu0 %v8774, 127
    %v8780 = vpop.permute.xlu0 %8779
    %v8781 = vsel %vm1091, %v8778, %v1090
    %v8782 = vsel %vm1091, %v8780, %v1090
    %v8785 = vmax.f32 %v8773, %v8781
    %v8786 = vmax.f32 %v8774, %v8782
    %8789 = vrot.lane.b32.xlu0 %v8785, 120
    %v8790 = vpop.permute.xlu0 %8789
    %8791 = vrot.lane.b32.xlu0 %v3204, 120
    %v8792 = vpop.permute.xlu0 %8791
    %8793 = vrot.lane.b32.xlu0 %v8786, 120
    %v8794 = vpop.permute.xlu0 %8793
    %v8795 = vsel %vm8515, %v8790, %v8792
    %v8796 = vsel %vm8515, %v8794, %v8792
    %v8799 = vmax.f32 %v8785, %v8795
    %v8800 = vmax.f32 %v8786, %v8796
    %v8801 = vpack.c.bf16 %v8800, %v8799
    %v8802 = vld [vmem:[%s47] sm:$0xf]
    %v8803 = vld [vmem:[%s47 + $0x4] sm:$0xf]
    %v8804 = vld [vmem:[%s47 + $0x8] sm:$0xf]
    %v8805 = vld [vmem:[%s47 + $0xc] sm:$0xf]
    %v8806 = vld [vmem:[%s47 + $0x10] sm:$0xf]
    %v8807 = vld [vmem:[%s47 + $0x14] sm:$0xf]
    %v8808 = vld [vmem:[%s47 + $0x18] sm:$0xf]
    %v8809 = vld [vmem:[%s47 + $0x1c] sm:$0xf]
    %v8810 = vld [vmem:[%s47 + $0x20] sm:$0xf]
    %v8811 = vld [vmem:[%s47 + $0x24] sm:$0xf]
    %v8812 = vld [vmem:[%s47 + $0x28] sm:$0xf]
    %v8813 = vld [vmem:[%s47 + $0x2c] sm:$0xf]
    %v8814 = vld [vmem:[%s47 + $0x30] sm:$0xf]
    %v8815 = vld [vmem:[%s47 + $0x34] sm:$0xf]
    %v8816 = vld [vmem:[%s47 + $0x38] sm:$0xf]
    %v8817 = vld [vmem:[%s47 + $0x3c] sm:$0xf]
    %v8834 = vunpack.c.l.b16 %v8802
    %v8835 = vunpack.c.l.b16 %v8803
    %v8836 = vunpack.c.l.b16 %v8804
    %v8837 = vunpack.c.l.b16 %v8805
    %v8838 = vunpack.c.l.b16 %v8806
    %v8839 = vunpack.c.l.b16 %v8807
    %v8840 = vunpack.c.l.b16 %v8808
    %v8841 = vunpack.c.l.b16 %v8809
    %v8842 = vunpack.c.l.b16 %v8810
    %v8843 = vunpack.c.l.b16 %v8811
    %v8844 = vunpack.c.l.b16 %v8812
    %v8845 = vunpack.c.l.b16 %v8813
    %v8846 = vunpack.c.l.b16 %v8814
    %v8847 = vunpack.c.l.b16 %v8815
    %v8848 = vunpack.c.l.b16 %v8816
    %v8849 = vunpack.c.l.b16 %v8817
    %v8850 = vpack.c.b16 %v8835, %v8834
    %v8851 = vpack.c.b16 %v8837, %v8836
    %v8852 = vpack.c.b16 %v8839, %v8838
    %v8853 = vpack.c.b16 %v8841, %v8840
    %v8854 = vpack.c.b16 %v8843, %v8842
    %v8855 = vpack.c.b16 %v8845, %v8844
    %v8856 = vpack.c.b16 %v8847, %v8846
    %v8857 = vpack.c.b16 %v8849, %v8848
    %8866 = vmatprep.subr.bf16.mxu0 0
    %8867 = vmatpush1.bf16.msra.mxu0 %v8850
    %8868 = vmatprep.subr.bf16.mxu0 0
    %8869 = vmatpush1.bf16.msra.mxu0 %v8851
    %8870 = vmatprep.subr.bf16.mxu0 0
    %8871 = vmatpush1.bf16.msra.mxu0 %v8852
    %8872 = vmatprep.subr.bf16.mxu0 0
    %8873 = vmatpush1.bf16.msra.mxu0 %v8853
    %8874 = vmatprep.subr.bf16.mxu0 0
    %8875 = vmatpush1.bf16.msra.mxu0 %v8854
    %8876 = vmatprep.subr.bf16.mxu0 0
    %8877 = vmatpush1.bf16.msra.mxu0 %v8855
    %8878 = vmatprep.subr.bf16.mxu0 0
    %8879 = vmatpush1.bf16.msra.mxu0 %v8856
    %8880 = vmatprep.subr.bf16.mxu0 0
    %8881 = vmatpush1.bf16.msra.mxu0 %v8857
    %8882 = vmatprep.subr.bf16.mxu0 0
    %8883 = vmatpush1.bf16.msra.mxu0 0
    %8884 = vmatprep.subr.bf16.mxu0 0
    %8885 = vmatpush1.bf16.msra.mxu0 0
    %8886 = vmatprep.subr.bf16.mxu0 0
    %8887 = vmatpush1.bf16.msra.mxu0 0
    %8888 = vmatprep.subr.bf16.mxu0 0
    %8889 = vmatpush1.bf16.msra.mxu0 0
    %8890 = vmatprep.subr.bf16.mxu0 0
    %8891 = vmatpush1.bf16.msra.mxu0 0
    %8892 = vmatprep.subr.bf16.mxu0 0
    %8893 = vmatpush1.bf16.msra.mxu0 0
    %8894 = vmatprep.subr.bf16.mxu0 0
    %8895 = vmatpush1.bf16.msra.mxu0 0
    %8896 = vmatprep.subr.bf16.mxu0 0
    %8897 = vmatpush1.bf16.msra.mxu0 0
    %8898 = vmatprep.mubr.bf16.mxu0 0
    %8899 = vmatmul.mubr.bf16.gmra.mrb[0].mxu0 %v8801
    %v8900 = vpop.f32.mrb[0].mxu0
    %v8901 = vadd.f32 0.0, %v8900
    %v8902 = vpop.f32.mrb[0].mxu0
    %v8903 = vpop.f32.mrb[0].mxu0
    %v8904 = vadd.f32 0.0, %v8903
    %v8905 = vpop.f32.mrb[0].mxu0
    %8906 = vdwg.mxu0
    %v8907 = vand.u32 %v356, 15
    %v8908 = vand.u32 %v8907, 3
    %v8909 = vshra.s32 %v8907, 2
    %vm8910 = vcmp.ge.s32.totalorder %v8908, 1
    %vm8911 = vcmp.le.s32.totalorder %v8908, 2
    %vm8912 = vcmp.ge.s32.totalorder %v8909, 1
    %vm8913 = vcmp.le.s32.totalorder %v8909, 2
    %vm8914 = vmand %vm8912, %vm8910
    %vm8915 = vmand %vm8912, %vm8911
    %vm8916 = vmand %vm8913, %vm8910
    %vm8917 = vmand %vm8913, %vm8911
    %v8918 = vsel %vm746, %v8901, 0.0
    %v8919 = vsel %vm746, %v8904, 0.0
    %v8920 = vsel %vm8914, 1, 0
    %vm8921 = vcmp.eq.s32.totalorder %v8920, 1
    %8924 = vrot.lane.b32.xlu0 0.0, 5
    %v8925 = vpop.permute.xlu0 %8924
    %8926 = vrot.lane.b32.xlu0 %v8918, 5
    %v8927 = vpop.permute.xlu0 %8926
    %8928 = vrot.lane.b32.xlu0 %v8919, 5
    %v8929 = vpop.permute.xlu0 %8928
    %vm8930 = vcmask 39936
    %v8931 = vsel %vm8930, %v8925, %v8927
    %v8932 = vsel %vm8930, %v8925, %v8929
    %v8935 = vsel %vm8921, %v8931, 0.0
    %v8936 = vsel %vm8921, %v8932, 0.0
    %v8937 = vsel %vm8912, 1, 0
    %vm8938 = vcmp.eq.s32.totalorder %v8937, 1
    %8939 = vrot.lane.b32.xlu0 0.0, 4
    %v8940 = vpop.permute.xlu0 %8939
    %8941 = vrot.lane.b32.xlu0 %v8918, 4
    %v8942 = vpop.permute.xlu0 %8941
    %8943 = vrot.lane.b32.xlu0 %v8919, 4
    %v8944 = vpop.permute.xlu0 %8943
    %vm8945 = vcmask 31744
    %v8946 = vsel %vm8945, %v8940, %v8942
    %v8947 = vsel %vm8945, %v8940, %v8944
    %v8950 = vsel %vm8938, %v8946, 0.0
    %v8951 = vsel %vm8938, %v8947, 0.0
    %v8952 = vsel %vm8915, 1, 0
    %vm8953 = vcmp.eq.s32.totalorder %v8952, 1
    %8954 = vrot.lane.b32.xlu0 0.0, 3
    %v8955 = vpop.permute.xlu0 %8954
    %8956 = vrot.lane.b32.xlu0 %v8918, 3
    %v8957 = vpop.permute.xlu0 %8956
    %8958 = vrot.lane.b32.xlu0 %v8919, 3
    %v8959 = vpop.permute.xlu0 %8958
    %vm8960 = vcmask 23552
    %v8961 = vsel %vm8960, %v8955, %v8957
    %v8962 = vsel %vm8960, %v8955, %v8959
    %v8965 = vsel %vm8953, %v8961, 0.0
    %v8966 = vsel %vm8953, %v8962, 0.0
    %v8967 = vsel %vm8910, 1, 0
    %vm8968 = vcmp.eq.s32.totalorder %v8967, 1
    %8969 = vrot.lane.b32.xlu0 %v8918, 1
    %v8970 = vpop.permute.xlu0 %8969
    %8971 = vrot.lane.b32.xlu0 %v8919, 1
    %v8972 = vpop.permute.xlu0 %8971
    %v8973 = vsel %vm976, %v943, %v8970
    %v8974 = vsel %vm976, %v943, %v8972
    %v8977 = vsel %vm8968, %v8973, 0.0
    %v8978 = vsel %vm8968, %v8974, 0.0
    %v8979 = vsel %vm8911, 1, 0
    %vm8980 = vcmp.eq.s32.totalorder %v8979, 1
    %8981 = vrot.lane.b32.xlu0 %v8918, 127
    %v8982 = vpop.permute.xlu0 %8981
    %8983 = vrot.lane.b32.xlu0 %v8919, 127
    %v8984 = vpop.permute.xlu0 %8983
    %v8987 = vsel %vm8980, %v8982, 0.0
    %v8988 = vsel %vm8980, %v8984, 0.0
    %v8989 = vsel %vm8916, 1, 0
    %vm8990 = vcmp.eq.s32.totalorder %v8989, 1
    %8991 = vrot.lane.b32.xlu0 %v8918, 125
    %v8992 = vpop.permute.xlu0 %8991
    %8993 = vrot.lane.b32.xlu0 %v8919, 125
    %v8994 = vpop.permute.xlu0 %8993
    %v8997 = vsel %vm8990, %v8992, 0.0
    %v8998 = vsel %vm8990, %v8994, 0.0
    %v8999 = vsel %vm8913, 1, 0
    %vm9000 = vcmp.eq.s32.totalorder %v8999, 1
    %9001 = vrot.lane.b32.xlu0 %v8918, 124
    %v9002 = vpop.permute.xlu0 %9001
    %9003 = vrot.lane.b32.xlu0 %v8919, 124
    %v9004 = vpop.permute.xlu0 %9003
    %v9007 = vsel %vm9000, %v9002, 0.0
    %v9008 = vsel %vm9000, %v9004, 0.0
    %v9009 = vsel %vm8917, 1, 0
    %vm9010 = vcmp.eq.s32.totalorder %v9009, 1
    %9011 = vrot.lane.b32.xlu0 %v8918, 123
    %v9012 = vpop.permute.xlu0 %9011
    %9013 = vrot.lane.b32.xlu0 %v8919, 123
    %v9014 = vpop.permute.xlu0 %9013
    %v9017 = vsel %vm9010, %v9012, 0.0
    %v9018 = vsel %vm9010, %v9014, 0.0
    %v9019 = vpack.c.bf16 %v8936, %v8935
    %v9020 = vpack.c.bf16 %v8951, %v8950
    %v9021 = vpack.c.bf16 %v8966, %v8965
    %v9022 = vpack.c.bf16 %v8978, %v8977
    %v9023 = vpack.c.bf16 %v8904, %v8901
    %v9024 = vpack.c.bf16 %v8988, %v8987
    %v9025 = vpack.c.bf16 %v8998, %v8997
    %v9026 = vpack.c.bf16 %v9008, %v9007
    %v9027 = vpack.c.bf16 %v9018, %v9017
    %v9028 = vld [vmem:[#allocation14] sm:$0xff]
    %v9029 = vld [vmem:[#allocation14 + $0x8] sm:$0xff]
    %v9030 = vld [vmem:[#allocation14 + $0x10] sm:$0xff]
    %v9031 = vld [vmem:[#allocation14 + $0x18] sm:$0xff]
    %v9032 = vld [vmem:[%s29] sm:$0xff]
    %v9033 = vld [vmem:[%s29 + $0x8] sm:$0xff]
    %v9034 = vld [vmem:[%s29 + $0x10] sm:$0xff]
    %v9035 = vld [vmem:[%s29 + $0x18] sm:$0xff]
    %9037 = vset.pattern.permute.xlu0 0
    %9038 = vperm.xlu0 %9037, %v9032
    %v9039 = vpop.permute.xlu0 %9038
    %9042 = vset.pattern.permute.xlu0 0
    %9043 = vperm.xlu0 %9042, %v9033
    %v9044 = vpop.permute.xlu0 %9043
    %9047 = vset.pattern.permute.xlu0 0
    %9048 = vperm.xlu0 %9047, %v9034
    %v9049 = vpop.permute.xlu0 %9048
    %9052 = vset.pattern.permute.xlu0 0
    %9053 = vperm.xlu0 %9052, %v9035
    %v9054 = vpop.permute.xlu0 %9053
    %v9060 = vunpack.c.l.b16 %v9028
    %v9061 = vunpack.c.h.b16 %v9028
    %v9062 = vunpack.c.l.b16 %v9029
    %v9063 = vunpack.c.h.b16 %v9029
    %v9064 = vunpack.c.l.b16 %v9030
    %v9065 = vunpack.c.h.b16 %v9030
    %v9066 = vunpack.c.l.b16 %v9031
    %v9067 = vunpack.c.h.b16 %v9031
    %v9068 = vpack.c.b16 %v9062, %v9060
    %v9069 = vpack.c.b16 %v9063, %v9061
    %v9070 = vpack.c.b16 %v9066, %v9064
    %v9071 = vpack.c.b16 %v9067, %v9065
    %v9075 = vsel %vm7145, %v9069, 0
    %v9078 = vsel %vm7145, %v9071, 0
    %9080 = vmatprep.subr.bf16.mxu0 0
    %9081 = vmatpush1.bf16.msra.mxu0 %v9019
    %9082 = vmatprep.subr.bf16.mxu0 0
    %9083 = vmatpush1.bf16.msra.mxu0 %v9020
    %9084 = vmatprep.subr.bf16.mxu0 0
    %9085 = vmatpush1.bf16.msra.mxu0 %v9021
    %9086 = vmatprep.subr.bf16.mxu0 0
    %9087 = vmatpush1.bf16.msra.mxu0 %v9022
    %9088 = vmatprep.subr.bf16.mxu0 0
    %9089 = vmatpush1.bf16.msra.mxu0 %v9023
    %9090 = vmatprep.subr.bf16.mxu0 0
    %9091 = vmatpush1.bf16.msra.mxu0 %v9024
    %9092 = vmatprep.subr.bf16.mxu0 0
    %9093 = vmatpush1.bf16.msra.mxu0 %v9025
    %9094 = vmatprep.subr.bf16.mxu0 0
    %9095 = vmatpush1.bf16.msra.mxu0 %v9026
    %9096 = vmatprep.subr.bf16.mxu0 0
    %9097 = vmatpush1.bf16.msra.mxu0 %v9027
    %9098 = vmatprep.subr.bf16.mxu0 0
    %9099 = vmatpush1.bf16.msra.mxu0 0
    %9100 = vmatprep.subr.bf16.mxu0 0
    %9101 = vmatpush1.bf16.msra.mxu0 0
    %9102 = vmatprep.subr.bf16.mxu0 0
    %9103 = vmatpush1.bf16.msra.mxu0 0
    %9104 = vmatprep.subr.bf16.mxu0 0
    %9105 = vmatpush1.bf16.msra.mxu0 0
    %9106 = vmatprep.subr.bf16.mxu0 0
    %9107 = vmatpush1.bf16.msra.mxu0 0
    %9108 = vmatprep.subr.bf16.mxu0 0
    %9109 = vmatpush1.bf16.msra.mxu0 0
    %9110 = vmatprep.subr.bf16.mxu0 0
    %9111 = vmatpush1.bf16.msra.mxu0 0
    %9112 = vmatprep.mubr.bf16.mxu0 %v9075
    %9113 = vmatmul.mubr.bf16.gmra.mrb[0].mxu0 %v9068
    %v9114 = vpop.f32.mrb[0].mxu0
    %v9115 = vadd.f32 %v9039, %v9114
    %v9116 = vpop.f32.mrb[0].mxu0
    %v9117 = vpop.f32.mrb[0].mxu0
    %v9118 = vadd.f32 %v9044, %v9117
    %v9119 = vpop.f32.mrb[0].mxu0
    %9120 = vmatprep.mubr.bf16.mxu0 %v9078
    %9121 = vmatmul.mubr.bf16.gmra.mrb[0].mxu0 %v9070
    %v9122 = vpop.f32.mrb[0].mxu0
    %v9123 = vadd.f32 %v9049, %v9122
    %v9124 = vpop.f32.mrb[0].mxu0
    %v9125 = vpop.f32.mrb[0].mxu0
    %v9126 = vadd.f32 %v9054, %v9125
    %v9127 = vpop.f32.mrb[0].mxu0
    %9128 = vdwg.mxu0
    %v9129 = vmax.f32 %v9115, 0.0
    %v9130 = vmax.f32 %v9118, 0.0
    %v9131 = vmax.f32 %v9123, 0.0
    %v9132 = vmax.f32 %v9126, 0.0
    %v9133 = vsel %vm746, %v9129, 0.0
    %v9134 = vsel %vm746, %v9130, 0.0
    %v9135 = vsel %vm746, %v9131, 0.0
    %v9136 = vsel %vm746, %v9132, 0.0
    %9141 = vrot.lane.b32.xlu0 %v9133, 5
    %v9142 = vpop.permute.xlu0 %9141
    %9143 = vrot.lane.b32.xlu0 %v9134, 5
    %v9144 = vpop.permute.xlu0 %9143
    %9145 = vrot.lane.b32.xlu0 %v9135, 5
    %v9146 = vpop.permute.xlu0 %9145
    %9147 = vrot.lane.b32.xlu0 %v9136, 5
    %v9148 = vpop.permute.xlu0 %9147
    %v9149 = vsel %vm8930, %v8925, %v9142
    %v9150 = vsel %vm8930, %v8925, %v9144
    %v9151 = vsel %vm8930, %v8925, %v9146
    %v9152 = vsel %vm8930, %v8925, %v9148
    %v9157 = vsel %vm8921, %v9149, 0.0
    %v9158 = vsel %vm8921, %v9150, 0.0
    %v9159 = vsel %vm8921, %v9151, 0.0
    %v9160 = vsel %vm8921, %v9152, 0.0
    %9161 = vrot.lane.b32.xlu0 %v9133, 4
    %v9162 = vpop.permute.xlu0 %9161
    %9163 = vrot.lane.b32.xlu0 %v9134, 4
    %v9164 = vpop.permute.xlu0 %9163
    %9165 = vrot.lane.b32.xlu0 %v9135, 4
    %v9166 = vpop.permute.xlu0 %9165
    %9167 = vrot.lane.b32.xlu0 %v9136, 4
    %v9168 = vpop.permute.xlu0 %9167
    %v9169 = vsel %vm8945, %v8940, %v9162
    %v9170 = vsel %vm8945, %v8940, %v9164
    %v9171 = vsel %vm8945, %v8940, %v9166
    %v9172 = vsel %vm8945, %v8940, %v9168
    %v9177 = vsel %vm8938, %v9169, 0.0
    %v9178 = vsel %vm8938, %v9170, 0.0
    %v9179 = vsel %vm8938, %v9171, 0.0
    %v9180 = vsel %vm8938, %v9172, 0.0
    %9181 = vrot.lane.b32.xlu0 %v9133, 3
    %v9182 = vpop.permute.xlu0 %9181
    %9183 = vrot.lane.b32.xlu0 %v9134, 3
    %v9184 = vpop.permute.xlu0 %9183
    %9185 = vrot.lane.b32.xlu0 %v9135, 3
    %v9186 = vpop.permute.xlu0 %9185
    %9187 = vrot.lane.b32.xlu0 %v9136, 3
    %v9188 = vpop.permute.xlu0 %9187
    %v9189 = vsel %vm8960, %v8955, %v9182
    %v9190 = vsel %vm8960, %v8955, %v9184
    %v9191 = vsel %vm8960, %v8955, %v9186
    %v9192 = vsel %vm8960, %v8955, %v9188
    %v9197 = vsel %vm8953, %v9189, 0.0
    %v9198 = vsel %vm8953, %v9190, 0.0
    %v9199 = vsel %vm8953, %v9191, 0.0
    %v9200 = vsel %vm8953, %v9192, 0.0
    %9201 = vrot.lane.b32.xlu0 %v9133, 1
    %v9202 = vpop.permute.xlu0 %9201
    %9203 = vrot.lane.b32.xlu0 %v9134, 1
    %v9204 = vpop.permute.xlu0 %9203
    %9205 = vrot.lane.b32.xlu0 %v9135, 1
    %v9206 = vpop.permute.xlu0 %9205
    %9207 = vrot.lane.b32.xlu0 %v9136, 1
    %v9208 = vpop.permute.xlu0 %9207
    %v9209 = vsel %vm976, %v943, %v9202
    %v9210 = vsel %vm976, %v943, %v9204
    %v9211 = vsel %vm976, %v943, %v9206
    %v9212 = vsel %vm976, %v943, %v9208
    %v9217 = vsel %vm8968, %v9209, 0.0
    %v9218 = vsel %vm8968, %v9210, 0.0
    %v9219 = vsel %vm8968, %v9211, 0.0
    %v9220 = vsel %vm8968, %v9212, 0.0
    %9221 = vrot.lane.b32.xlu0 %v9133, 127
    %v9222 = vpop.permute.xlu0 %9221
    %9223 = vrot.lane.b32.xlu0 %v9134, 127
    %v9224 = vpop.permute.xlu0 %9223
    %9225 = vrot.lane.b32.xlu0 %v9135, 127
    %v9226 = vpop.permute.xlu0 %9225
    %9227 = vrot.lane.b32.xlu0 %v9136, 127
    %v9228 = vpop.permute.xlu0 %9227
    %v9233 = vsel %vm8980, %v9222, 0.0
    %v9234 = vsel %vm8980, %v9224, 0.0
    %v9235 = vsel %vm8980, %v9226, 0.0
    %v9236 = vsel %vm8980, %v9228, 0.0
    %9237 = vrot.lane.b32.xlu0 %v9133, 125
    %v9238 = vpop.permute.xlu0 %9237
    %9239 = vrot.lane.b32.xlu0 %v9134, 125
    %v9240 = vpop.permute.xlu0 %9239
    %9241 = vrot.lane.b32.xlu0 %v9135, 125
    %v9242 = vpop.permute.xlu0 %9241
    %9243 = vrot.lane.b32.xlu0 %v9136, 125
    %v9244 = vpop.permute.xlu0 %9243
    %v9249 = vsel %vm8990, %v9238, 0.0
    %v9250 = vsel %vm8990, %v9240, 0.0
    %v9251 = vsel %vm8990, %v9242, 0.0
    %v9252 = vsel %vm8990, %v9244, 0.0
    %9253 = vrot.lane.b32.xlu0 %v9133, 124
    %v9254 = vpop.permute.xlu0 %9253
    %9255 = vrot.lane.b32.xlu0 %v9134, 124
    %v9256 = vpop.permute.xlu0 %9255
    %9257 = vrot.lane.b32.xlu0 %v9135, 124
    %v9258 = vpop.permute.xlu0 %9257
    %9259 = vrot.lane.b32.xlu0 %v9136, 124
    %v9260 = vpop.permute.xlu0 %9259
    %v9265 = vsel %vm9000, %v9254, 0.0
    %v9266 = vsel %vm9000, %v9256, 0.0
    %v9267 = vsel %vm9000, %v9258, 0.0
    %v9268 = vsel %vm9000, %v9260, 0.0
    %9269 = vrot.lane.b32.xlu0 %v9133, 123
    %v9270 = vpop.permute.xlu0 %9269
    %9271 = vrot.lane.b32.xlu0 %v9134, 123
    %v9272 = vpop.permute.xlu0 %9271
    %9273 = vrot.lane.b32.xlu0 %v9135, 123
    %v9274 = vpop.permute.xlu0 %9273
    %9275 = vrot.lane.b32.xlu0 %v9136, 123
    %v9276 = vpop.permute.xlu0 %9275
    %v9281 = vsel %vm9010, %v9270, 0.0
    %v9282 = vsel %vm9010, %v9272, 0.0
    %v9283 = vsel %vm9010, %v9274, 0.0
    %v9284 = vsel %vm9010, %v9276, 0.0
    %v9285 = vpack.c.bf16 %v9158, %v9157
    %v9286 = vpack.c.bf16 %v9160, %v9159
    %v9287 = vpack.c.bf16 %v9178, %v9177
    %v9288 = vpack.c.bf16 %v9180, %v9179
    %v9289 = vpack.c.bf16 %v9198, %v9197
    %v9290 = vpack.c.bf16 %v9200, %v9199
    %v9291 = vpack.c.bf16 %v9218, %v9217
    %v9292 = vpack.c.bf16 %v9220, %v9219
    %v9293 = vpack.c.bf16 %v9130, %v9129
    %v9294 = vpack.c.bf16 %v9132, %v9131
    %v9295 = vpack.c.bf16 %v9234, %v9233
    %v9296 = vpack.c.bf16 %v9236, %v9235
    %v9297 = vpack.c.bf16 %v9250, %v9249
    %v9298 = vpack.c.bf16 %v9252, %v9251
    %v9299 = vpack.c.bf16 %v9266, %v9265
    %v9300 = vpack.c.bf16 %v9268, %v9267
    %v9301 = vpack.c.bf16 %v9282, %v9281
    %v9302 = vpack.c.bf16 %v9284, %v9283
    %v9303 = vld [vmem:[#allocation16] sm:$0xff]
    %v9304 = vld [vmem:[#allocation16 + $0x8] sm:$0xf]
    %v9305 = vld [vmem:[#allocation16 + $0xc] sm:$0xff]
    %v9306 = vld [vmem:[#allocation16 + $0x14] sm:$0xf]
    %v9307 = vld [vmem:[#allocation16 + $0x18] sm:$0xff]
    %v9308 = vld [vmem:[#allocation16 + $0x20] sm:$0xf]
    %v9309 = vld [vmem:[#allocation16 + $0x24] sm:$0xff]
    %v9310 = vld [vmem:[#allocation16 + $0x2c] sm:$0xf]
    %v9311 = vld [vmem:[%s33] sm:$0xff]
    %v9312 = vld [vmem:[%s33 + $0x8] sm:$0xff]
    %v9313 = vld [vmem:[%s33 + $0x10] sm:$0xff]
    %v9314 = vld [vmem:[%s33 + $0x18] sm:$0xff]
    %9316 = vset.pattern.permute.xlu0 0
    %9317 = vperm.xlu0 %9316, %v9311
    %v9318 = vpop.permute.xlu0 %9317
    %9321 = vset.pattern.permute.xlu0 0
    %9322 = vperm.xlu0 %9321, %v9312
    %v9323 = vpop.permute.xlu0 %9322
    %9326 = vset.pattern.permute.xlu0 0
    %9327 = vperm.xlu0 %9326, %v9313
    %v9328 = vpop.permute.xlu0 %9327
    %9331 = vset.pattern.permute.xlu0 0
    %9332 = vperm.xlu0 %9331, %v9314
    %v9333 = vpop.permute.xlu0 %9332
    %v9343 = vunpack.c.l.b16 %v9303
    %v9344 = vunpack.c.h.b16 %v9303
    %v9345 = vunpack.c.l.b16 %v9304
    %v9346 = vunpack.c.l.b16 %v9305
    %v9347 = vunpack.c.h.b16 %v9305
    %v9348 = vunpack.c.l.b16 %v9306
    %v9349 = vunpack.c.l.b16 %v9307
    %v9350 = vunpack.c.h.b16 %v9307
    %v9351 = vunpack.c.l.b16 %v9308
    %v9352 = vunpack.c.l.b16 %v9309
    %v9353 = vunpack.c.h.b16 %v9309
    %v9354 = vunpack.c.l.b16 %v9310
    %v9355 = vpack.c.b16 %v9346, %v9343
    %v9356 = vpack.c.b16 %v9347, %v9344
    %v9357 = vpack.c.b16 %v9348, %v9345
    %v9358 = vpack.c.b16 %v9352, %v9349
    %v9359 = vpack.c.b16 %v9353, %v9350
    %v9360 = vpack.c.b16 %v9354, %v9351
    %v9366 = vsel %vm746, %v9357, 0
    %v9369 = vsel %vm746, %v9360, 0
    %9371 = vmatprep.subr.bf16.mxu0 0
    %9372 = vmatpush1.bf16.msra.mxu0 %v9285
    %9373 = vmatprep.subr.bf16.mxu0 0
    %9374 = vmatpush1.bf16.msra.mxu0 %v9286
    %9375 = vmatprep.subr.bf16.mxu0 0
    %9376 = vmatpush1.bf16.msra.mxu0 %v9287
    %9377 = vmatprep.subr.bf16.mxu0 0
    %9378 = vmatpush1.bf16.msra.mxu0 %v9288
    %9379 = vmatprep.subr.bf16.mxu0 0
    %9380 = vmatpush1.bf16.msra.mxu0 %v9289
    %9381 = vmatprep.subr.bf16.mxu0 0
    %9382 = vmatpush1.bf16.msra.mxu0 %v9290
    %9383 = vmatprep.subr.bf16.mxu0 0
    %9384 = vmatpush1.bf16.msra.mxu0 %v9291
    %9385 = vmatprep.subr.bf16.mxu0 0
    %9386 = vmatpush1.bf16.msra.mxu0 %v9292
    %9387 = vmatprep.subr.bf16.mxu0 0
    %9388 = vmatpush1.bf16.msra.mxu0 %v9293
    %9389 = vmatprep.subr.bf16.mxu0 0
    %9390 = vmatpush1.bf16.msra.mxu0 %v9294
    %9391 = vmatprep.subr.bf16.mxu0 0
    %9392 = vmatpush1.bf16.msra.mxu0 %v9295
    %9393 = vmatprep.subr.bf16.mxu0 0
    %9394 = vmatpush1.bf16.msra.mxu0 %v9296
    %9395 = vmatprep.subr.bf16.mxu0 0
    %9396 = vmatpush1.bf16.msra.mxu0 %v9297
    %9397 = vmatprep.subr.bf16.mxu0 0
    %9398 = vmatpush1.bf16.msra.mxu0 %v9298
    %9399 = vmatprep.subr.bf16.mxu0 0
    %9400 = vmatpush1.bf16.msra.mxu0 %v9299
    %9401 = vmatprep.subr.bf16.mxu0 0
    %9402 = vmatpush1.bf16.msra.mxu0 %v9300
    %9403 = vmatprep.mubr.bf16.mxu0 %v9356
    %9404 = vmatmul.mubr.bf16.gmra.mrb[0].mxu0 %v9355
    %v9405 = vpop.f32.mrb[0].mxu0
    %v9406 = vadd.f32 %v9318, %v9405
    %v9407 = vpop.f32.mrb[0].mxu0
    %v9408 = vpop.f32.mrb[0].mxu0
    %v9409 = vadd.f32 %v9323, %v9408
    %v9410 = vpop.f32.mrb[0].mxu0
    %9411 = vmatprep.mubr.bf16.mxu0 %v9359
    %9412 = vmatmul.mubr.bf16.gmra.mrb[0].mxu0 %v9358
    %v9413 = vpop.f32.mrb[0].mxu0
    %v9414 = vadd.f32 %v9328, %v9413
    %v9415 = vpop.f32.mrb[0].mxu0
    %v9416 = vpop.f32.mrb[0].mxu0
    %v9417 = vadd.f32 %v9333, %v9416
    %v9418 = vpop.f32.mrb[0].mxu0
    %9419 = vdwg.mxu0
    %9420 = vmatprep.subr.bf16.mxu0 0
    %9421 = vmatpush1.bf16.msra.mxu0 %v9301
    %9422 = vmatprep.subr.bf16.mxu0 0
    %9423 = vmatpush1.bf16.msra.mxu0 %v9302
    %9424 = vmatprep.subr.bf16.mxu0 0
    %9425 = vmatpush1.bf16.msra.mxu0 0
    %9426 = vmatprep.subr.bf16.mxu0 0
    %9427 = vmatpush1.bf16.msra.mxu0 0
    %9428 = vmatprep.subr.bf16.mxu0 0
    %9429 = vmatpush1.bf16.msra.mxu0 0
    %9430 = vmatprep.subr.bf16.mxu0 0
    %9431 = vmatpush1.bf16.msra.mxu0 0
    %9432 = vmatprep.subr.bf16.mxu0 0
    %9433 = vmatpush1.bf16.msra.mxu0 0
    %9434 = vmatprep.subr.bf16.mxu0 0
    %9435 = vmatpush1.bf16.msra.mxu0 0
    %9436 = vmatprep.subr.bf16.mxu0 0
    %9437 = vmatpush1.bf16.msra.mxu0 0
    %9438 = vmatprep.subr.bf16.mxu0 0
    %9439 = vmatpush1.bf16.msra.mxu0 0
    %9440 = vmatprep.subr.bf16.mxu0 0
    %9441 = vmatpush1.bf16.msra.mxu0 0
    %9442 = vmatprep.subr.bf16.mxu0 0
    %9443 = vmatpush1.bf16.msra.mxu0 0
    %9444 = vmatprep.subr.bf16.mxu0 0
    %9445 = vmatpush1.bf16.msra.mxu0 0
    %9446 = vmatprep.subr.bf16.mxu0 0
    %9447 = vmatpush1.bf16.msra.mxu0 0
    %9448 = vmatprep.subr.bf16.mxu0 0
    %9449 = vmatpush1.bf16.msra.mxu0 0
    %9450 = vmatprep.subr.bf16.mxu0 0
    %9451 = vmatpush1.bf16.msra.mxu0 0
    %9452 = vmatprep.mubr.bf16.mxu0 0
    %9453 = vmatmul.mubr.bf16.gmra.mrb[0].mxu0 %v9366
    %v9454 = vpop.f32.mrb[0].mxu0
    %v9455 = vadd.f32 %v9406, %v9454
    %v9456 = vpop.f32.mrb[0].mxu0
    %v9457 = vpop.f32.mrb[0].mxu0
    %v9458 = vadd.f32 %v9409, %v9457
    %v9459 = vpop.f32.mrb[0].mxu0
    %9460 = vmatprep.mubr.bf16.mxu0 0
    %9461 = vmatmul.mubr.bf16.gmra.mrb[0].mxu0 %v9369
    %v9462 = vpop.f32.mrb[0].mxu0
    %v9463 = vadd.f32 %v9414, %v9462
    %v9464 = vpop.f32.mrb[0].mxu0
    %v9465 = vpop.f32.mrb[0].mxu0
    %v9466 = vadd.f32 %v9417, %v9465
    %v9467 = vpop.f32.mrb[0].mxu0
    %9468 = vdwg.mxu0
    %v9469 = vmax.f32 %v9455, 0.0
    %v9470 = vmax.f32 %v9458, 0.0
    %v9471 = vmax.f32 %v9463, 0.0
    %v9472 = vmax.f32 %v9466, 0.0
    %v9473 = vsel %vm746, %v9469, 0.0
    %v9474 = vsel %vm746, %v9470, 0.0
    %v9475 = vsel %vm746, %v9471, 0.0
    %v9476 = vsel %vm746, %v9472, 0.0
    %9481 = vrot.lane.b32.xlu0 %v9473, 127
    %v9482 = vpop.permute.xlu0 %9481
    %9483 = vrot.lane.b32.xlu0 %v9474, 127
    %v9484 = vpop.permute.xlu0 %9483
    %9485 = vrot.lane.b32.xlu0 %v9475, 127
    %v9486 = vpop.permute.xlu0 %9485
    %9487 = vrot.lane.b32.xlu0 %v9476, 127
    %v9488 = vpop.permute.xlu0 %9487
    %v9493 = vmax.f32 %v9469, %v9482
    %v9494 = vmax.f32 %v9470, %v9484
    %v9495 = vmax.f32 %v9471, %v9486
    %v9496 = vmax.f32 %v9472, %v9488
    %v9497 = vmax.f32 %v9473, %v9482
    %v9498 = vmax.f32 %v9474, %v9484
    %v9499 = vmax.f32 %v9475, %v9486
    %v9500 = vmax.f32 %v9476, %v9488
    %9505 = vrot.lane.b32.xlu0 %v9497, 124
    %v9506 = vpop.permute.xlu0 %9505
    %9507 = vrot.lane.b32.xlu0 %v9498, 124
    %v9508 = vpop.permute.xlu0 %9507
    %9509 = vrot.lane.b32.xlu0 %v9499, 124
    %v9510 = vpop.permute.xlu0 %9509
    %9511 = vrot.lane.b32.xlu0 %v9500, 124
    %v9512 = vpop.permute.xlu0 %9511
    %v9517 = vmax.f32 %v9493, %v9506
    %v9518 = vmax.f32 %v9494, %v9508
    %v9519 = vmax.f32 %v9495, %v9510
    %v9520 = vmax.f32 %v9496, %v9512
    %v9521 = vpack.c.bf16 %v9518, %v9517
    %v9522 = vpack.c.bf16 %v9520, %v9519
    %v9523 = vld [vmem:[%s49] sm:$0xf]
    %v9524 = vld [vmem:[%s49 + $0x4] sm:$0xf]
    %v9525 = vld [vmem:[%s49 + $0x8] sm:$0xf]
    %v9526 = vld [vmem:[%s49 + $0xc] sm:$0xf]
    %v9531 = vunpack.c.l.b16 %v9523
    %v9532 = vunpack.c.l.b16 %v9524
    %v9533 = vunpack.c.l.b16 %v9525
    %v9534 = vunpack.c.l.b16 %v9526
    %v9535 = vpack.c.b16 %v9532, %v9531
    %v9536 = vpack.c.b16 %v9534, %v9533
    %v9540 = vsel %vm746, %v9521, 0
    %v9543 = vsel %vm746, %v9522, 0
    %9545 = vmatprep.subr.bf16.mxu0 0
    %9546 = vmatpush1.bf16.msra.mxu0 %v9535
    %9547 = vmatprep.subr.bf16.mxu0 0
    %9548 = vmatpush1.bf16.msra.mxu0 %v9536
    %9549 = vmatprep.subr.bf16.mxu0 0
    %9550 = vmatpush1.bf16.msra.mxu0 0
    %9551 = vmatprep.subr.bf16.mxu0 0
    %9552 = vmatpush1.bf16.msra.mxu0 0
    %9553 = vmatprep.subr.bf16.mxu0 0
    %9554 = vmatpush1.bf16.msra.mxu0 0
    %9555 = vmatprep.subr.bf16.mxu0 0
    %9556 = vmatpush1.bf16.msra.mxu0 0
    %9557 = vmatprep.subr.bf16.mxu0 0
    %9558 = vmatpush1.bf16.msra.mxu0 0
    %9559 = vmatprep.subr.bf16.mxu0 0
    %9560 = vmatpush1.bf16.msra.mxu0 0
    %9561 = vmatprep.subr.bf16.mxu0 0
    %9562 = vmatpush1.bf16.msra.mxu0 0
    %9563 = vmatprep.subr.bf16.mxu0 0
    %9564 = vmatpush1.bf16.msra.mxu0 0
    %9565 = vmatprep.subr.bf16.mxu0 0
    %9566 = vmatpush1.bf16.msra.mxu0 0
    %9567 = vmatprep.subr.bf16.mxu0 0
    %9568 = vmatpush1.bf16.msra.mxu0 0
    %9569 = vmatprep.subr.bf16.mxu0 0
    %9570 = vmatpush1.bf16.msra.mxu0 0
    %9571 = vmatprep.subr.bf16.mxu0 0
    %9572 = vmatpush1.bf16.msra.mxu0 0
    %9573 = vmatprep.subr.bf16.mxu0 0
    %9574 = vmatpush1.bf16.msra.mxu0 0
    %9575 = vmatprep.subr.bf16.mxu0 0
    %9576 = vmatpush1.bf16.msra.mxu0 0
    %9577 = vmatprep.mubr.bf16.mxu0 0
    %9578 = vmatmul.mubr.bf16.gmra.mrb[0].mxu0 %v9540
    %v9579 = vpop.f32.mrb[0].mxu0
    %v9580 = vadd.f32 0.0, %v9579
    %v9581 = vpop.f32.mrb[0].mxu0
    %v9582 = vpop.f32.mrb[0].mxu0
    %v9583 = vadd.f32 0.0, %v9582
    %v9584 = vpop.f32.mrb[0].mxu0
    %9585 = vmatprep.mubr.bf16.mxu0 0
    %9586 = vmatmul.mubr.bf16.gmra.mrb[0].mxu0 %v9543
    %v9587 = vpop.f32.mrb[0].mxu0
    %v9588 = vadd.f32 0.0, %v9587
    %v9589 = vpop.f32.mrb[0].mxu0
    %v9590 = vpop.f32.mrb[0].mxu0
    %v9591 = vadd.f32 0.0, %v9590
    %v9592 = vpop.f32.mrb[0].mxu0
    %9593 = vdwg.mxu0
    %v9594 = vand.u32 %v356, 3
    %v9595 = vand.u32 %v9594, 1
    %v9596 = vshra.s32 %v9594, 1
    %vm9597 = vcmp.ge.s32.totalorder %v9595, 1
    %vm9598 = vcmp.le.s32.totalorder %v9595, 0
    %vm9599 = vcmp.ge.s32.totalorder %v9596, 1
    %vm9600 = vcmp.le.s32.totalorder %v9596, 0
    %vm9601 = vmand %vm9599, %vm9597
    %vm9602 = vmand %vm9599, %vm9598
    %vm9603 = vmand %vm9600, %vm9597
    %vm9604 = vmand %vm9600, %vm9598
    %v9605 = vsel %vm8446, %v9580, 0.0
    %v9606 = vsel %vm8446, %v9583, 0.0
    %v9607 = vsel %vm8446, %v9588, 0.0
    %v9608 = vsel %vm8446, %v9591, 0.0
    %v9609 = vsel %vm9601, 1, 0
    %vm9610 = vcmp.eq.s32.totalorder %v9609, 1
    %9615 = vrot.lane.b32.xlu0 %v9605, 3
    %v9616 = vpop.permute.xlu0 %9615
    %9617 = vrot.lane.b32.xlu0 %v9606, 3
    %v9618 = vpop.permute.xlu0 %9617
    %9619 = vrot.lane.b32.xlu0 %v9607, 3
    %v9620 = vpop.permute.xlu0 %9619
    %9621 = vrot.lane.b32.xlu0 %v9608, 3
    %v9622 = vpop.permute.xlu0 %9621
    %v9623 = vsel %vm8960, %v8955, %v9616
    %v9624 = vsel %vm8960, %v8955, %v9618
    %v9625 = vsel %vm8960, %v8955, %v9620
    %v9626 = vsel %vm8960, %v8955, %v9622
    %v9631 = vsel %vm9610, %v9623, 0.0
    %v9632 = vsel %vm9610, %v9624, 0.0
    %v9633 = vsel %vm9610, %v9625, 0.0
    %v9634 = vsel %vm9610, %v9626, 0.0
    %v9635 = vsel %vm9599, 1, 0
    %vm9636 = vcmp.eq.s32.totalorder %v9635, 1
    %9637 = vrot.lane.b32.xlu0 0.0, 2
    %v9638 = vpop.permute.xlu0 %9637
    %9639 = vrot.lane.b32.xlu0 %v9605, 2
    %v9640 = vpop.permute.xlu0 %9639
    %9641 = vrot.lane.b32.xlu0 %v9606, 2
    %v9642 = vpop.permute.xlu0 %9641
    %9643 = vrot.lane.b32.xlu0 %v9607, 2
    %v9644 = vpop.permute.xlu0 %9643
    %9645 = vrot.lane.b32.xlu0 %v9608, 2
    %v9646 = vpop.permute.xlu0 %9645
    %vm9647 = vcmask 15360
    %v9648 = vsel %vm9647, %v9638, %v9640
    %v9649 = vsel %vm9647, %v9638, %v9642
    %v9650 = vsel %vm9647, %v9638, %v9644
    %v9651 = vsel %vm9647, %v9638, %v9646
    %v9656 = vsel %vm9636, %v9648, 0.0
    %v9657 = vsel %vm9636, %v9649, 0.0
    %v9658 = vsel %vm9636, %v9650, 0.0
    %v9659 = vsel %vm9636, %v9651, 0.0
    %v9660 = vsel %vm9602, 1, 0
    %vm9661 = vcmp.eq.s32.totalorder %v9660, 1
    %9662 = vrot.lane.b32.xlu0 %v9605, 1
    %v9663 = vpop.permute.xlu0 %9662
    %9664 = vrot.lane.b32.xlu0 %v9606, 1
    %v9665 = vpop.permute.xlu0 %9664
    %9666 = vrot.lane.b32.xlu0 %v9607, 1
    %v9667 = vpop.permute.xlu0 %9666
    %9668 = vrot.lane.b32.xlu0 %v9608, 1
    %v9669 = vpop.permute.xlu0 %9668
    %v9670 = vsel %vm976, %v943, %v9663
    %v9671 = vsel %vm976, %v943, %v9665
    %v9672 = vsel %vm976, %v943, %v9667
    %v9673 = vsel %vm976, %v943, %v9669
    %v9678 = vsel %vm9661, %v9670, 0.0
    %v9679 = vsel %vm9661, %v9671, 0.0
    %v9680 = vsel %vm9661, %v9672, 0.0
    %v9681 = vsel %vm9661, %v9673, 0.0
    %v9682 = vsel %vm9597, 1, 0
    %vm9683 = vcmp.eq.s32.totalorder %v9682, 1
    %v9684 = vsel %vm9683, %v9670, 0.0
    %v9685 = vsel %vm9683, %v9671, 0.0
    %v9686 = vsel %vm9683, %v9672, 0.0
    %v9687 = vsel %vm9683, %v9673, 0.0
    %v9688 = vsel %vm9598, 1, 0
    %vm9689 = vcmp.eq.s32.totalorder %v9688, 1
    %9690 = vrot.lane.b32.xlu0 %v9605, 127
    %v9691 = vpop.permute.xlu0 %9690
    %9692 = vrot.lane.b32.xlu0 %v9606, 127
    %v9693 = vpop.permute.xlu0 %9692
    %9694 = vrot.lane.b32.xlu0 %v9607, 127
    %v9695 = vpop.permute.xlu0 %9694
    %9696 = vrot.lane.b32.xlu0 %v9608, 127
    %v9697 = vpop.permute.xlu0 %9696
    %v9702 = vsel %vm9689, %v9691, 0.0
    %v9703 = vsel %vm9689, %v9693, 0.0
    %v9704 = vsel %vm9689, %v9695, 0.0
    %v9705 = vsel %vm9689, %v9697, 0.0
    %v9706 = vsel %vm9603, 1, 0
    %vm9707 = vcmp.eq.s32.totalorder %v9706, 1
    %v9708 = vsel %vm9707, %v9691, 0.0
    %v9709 = vsel %vm9707, %v9693, 0.0
    %v9710 = vsel %vm9707, %v9695, 0.0
    %v9711 = vsel %vm9707, %v9697, 0.0
    %v9712 = vsel %vm9600, 1, 0
    %vm9713 = vcmp.eq.s32.totalorder %v9712, 1
    %9714 = vrot.lane.b32.xlu0 %v9605, 126
    %v9715 = vpop.permute.xlu0 %9714
    %9716 = vrot.lane.b32.xlu0 %v9606, 126
    %v9717 = vpop.permute.xlu0 %9716
    %9718 = vrot.lane.b32.xlu0 %v9607, 126
    %v9719 = vpop.permute.xlu0 %9718
    %9720 = vrot.lane.b32.xlu0 %v9608, 126
    %v9721 = vpop.permute.xlu0 %9720
    %v9726 = vsel %vm9713, %v9715, 0.0
    %v9727 = vsel %vm9713, %v9717, 0.0
    %v9728 = vsel %vm9713, %v9719, 0.0
    %v9729 = vsel %vm9713, %v9721, 0.0
    %v9730 = vsel %vm9604, 1, 0
    %vm9731 = vcmp.eq.s32.totalorder %v9730, 1
    %9732 = vrot.lane.b32.xlu0 %v9605, 125
    %v9733 = vpop.permute.xlu0 %9732
    %9734 = vrot.lane.b32.xlu0 %v9606, 125
    %v9735 = vpop.permute.xlu0 %9734
    %9736 = vrot.lane.b32.xlu0 %v9607, 125
    %v9737 = vpop.permute.xlu0 %9736
    %9738 = vrot.lane.b32.xlu0 %v9608, 125
    %v9739 = vpop.permute.xlu0 %9738
    %v9744 = vsel %vm9731, %v9733, 0.0
    %v9745 = vsel %vm9731, %v9735, 0.0
    %v9746 = vsel %vm9731, %v9737, 0.0
    %v9747 = vsel %vm9731, %v9739, 0.0
    %v9748 = vpack.c.bf16 %v9632, %v9631
    %v9749 = vpack.c.bf16 %v9634, %v9633
    %v9750 = vpack.c.bf16 %v9657, %v9656
    %v9751 = vpack.c.bf16 %v9659, %v9658
    %v9752 = vpack.c.bf16 %v9679, %v9678
    %v9753 = vpack.c.bf16 %v9681, %v9680
    %v9754 = vpack.c.bf16 %v9685, %v9684
    %v9755 = vpack.c.bf16 %v9687, %v9686
    %v9756 = vpack.c.bf16 %v9583, %v9580
    %v9757 = vpack.c.bf16 %v9591, %v9588
    %v9758 = vpack.c.bf16 %v9703, %v9702
    %v9759 = vpack.c.bf16 %v9705, %v9704
    %v9760 = vpack.c.bf16 %v9709, %v9708
    %v9761 = vpack.c.bf16 %v9711, %v9710
    %v9762 = vpack.c.bf16 %v9727, %v9726
    %v9763 = vpack.c.bf16 %v9729, %v9728
    %v9764 = vpack.c.bf16 %v9745, %v9744
    %v9765 = vpack.c.bf16 %v9747, %v9746
    %v9766 = vld [vmem:[#allocation17] sm:$0xff]
    %v9767 = vld [vmem:[#allocation17 + $0x8] sm:$0xf]
    %v9768 = vld [vmem:[#allocation17 + $0xc] sm:$0xff]
    %v9769 = vld [vmem:[#allocation17 + $0x14] sm:$0xf]
    %v9770 = vld [vmem:[#allocation17 + $0x18] sm:$0xff]
    %v9771 = vld [vmem:[#allocation17 + $0x20] sm:$0xf]
    %v9772 = vld [vmem:[#allocation17 + $0x24] sm:$0xff]
    %v9773 = vld [vmem:[#allocation17 + $0x2c] sm:$0xf]
    %v9774 = vld [vmem:[%s37] sm:$0xff]
    %v9775 = vld [vmem:[%s37 + $0x8] sm:$0xff]
    %v9776 = vld [vmem:[%s37 + $0x10] sm:$0xff]
    %v9777 = vld [vmem:[%s37 + $0x18] sm:$0xff]
    %9779 = vset.pattern.permute.xlu0 0
    %9780 = vperm.xlu0 %9779, %v9774
    %v9781 = vpop.permute.xlu0 %9780
    %9784 = vset.pattern.permute.xlu0 0
    %9785 = vperm.xlu0 %9784, %v9775
    %v9786 = vpop.permute.xlu0 %9785
    %9789 = vset.pattern.permute.xlu0 0
    %9790 = vperm.xlu0 %9789, %v9776
    %v9791 = vpop.permute.xlu0 %9790
    %9794 = vset.pattern.permute.xlu0 0
    %9795 = vperm.xlu0 %9794, %v9777
    %v9796 = vpop.permute.xlu0 %9795
    %v9806 = vunpack.c.l.b16 %v9766
    %v9807 = vunpack.c.h.b16 %v9766
    %v9808 = vunpack.c.l.b16 %v9767
    %v9809 = vunpack.c.l.b16 %v9768
    %v9810 = vunpack.c.h.b16 %v9768
    %v9811 = vunpack.c.l.b16 %v9769
    %v9812 = vunpack.c.l.b16 %v9770
    %v9813 = vunpack.c.h.b16 %v9770
    %v9814 = vunpack.c.l.b16 %v9771
    %v9815 = vunpack.c.l.b16 %v9772
    %v9816 = vunpack.c.h.b16 %v9772
    %v9817 = vunpack.c.l.b16 %v9773
    %v9818 = vpack.c.b16 %v9809, %v9806
    %v9819 = vpack.c.b16 %v9810, %v9807
    %v9820 = vpack.c.b16 %v9811, %v9808
    %v9821 = vpack.c.b16 %v9815, %v9812
    %v9822 = vpack.c.b16 %v9816, %v9813
    %v9823 = vpack.c.b16 %v9817, %v9814
    %v9829 = vsel %vm746, %v9820, 0
    %v9832 = vsel %vm746, %v9823, 0
    %9834 = vmatprep.subr.bf16.mxu0 0
    %9835 = vmatpush1.bf16.msra.mxu0 %v9748
    %9836 = vmatprep.subr.bf16.mxu0 0
    %9837 = vmatpush1.bf16.msra.mxu0 %v9749
    %9838 = vmatprep.subr.bf16.mxu0 0
    %9839 = vmatpush1.bf16.msra.mxu0 %v9750
    %9840 = vmatprep.subr.bf16.mxu0 0
    %9841 = vmatpush1.bf16.msra.mxu0 %v9751
    %9842 = vmatprep.subr.bf16.mxu0 0
    %9843 = vmatpush1.bf16.msra.mxu0 %v9752
    %9844 = vmatprep.subr.bf16.mxu0 0
    %9845 = vmatpush1.bf16.msra.mxu0 %v9753
    %9846 = vmatprep.subr.bf16.mxu0 0
    %9847 = vmatpush1.bf16.msra.mxu0 %v9754
    %9848 = vmatprep.subr.bf16.mxu0 0
    %9849 = vmatpush1.bf16.msra.mxu0 %v9755
    %9850 = vmatprep.subr.bf16.mxu0 0
    %9851 = vmatpush1.bf16.msra.mxu0 %v9756
    %9852 = vmatprep.subr.bf16.mxu0 0
    %9853 = vmatpush1.bf16.msra.mxu0 %v9757
    %9854 = vmatprep.subr.bf16.mxu0 0
    %9855 = vmatpush1.bf16.msra.mxu0 %v9758
    %9856 = vmatprep.subr.bf16.mxu0 0
    %9857 = vmatpush1.bf16.msra.mxu0 %v9759
    %9858 = vmatprep.subr.bf16.mxu0 0
    %9859 = vmatpush1.bf16.msra.mxu0 %v9760
    %9860 = vmatprep.subr.bf16.mxu0 0
    %9861 = vmatpush1.bf16.msra.mxu0 %v9761
    %9862 = vmatprep.subr.bf16.mxu0 0
    %9863 = vmatpush1.bf16.msra.mxu0 %v9762
    %9864 = vmatprep.subr.bf16.mxu0 0
    %9865 = vmatpush1.bf16.msra.mxu0 %v9763
    %9866 = vmatprep.mubr.bf16.mxu0 %v9819
    %9867 = vmatmul.mubr.bf16.gmra.mrb[0].mxu0 %v9818
    %v9868 = vpop.f32.mrb[0].mxu0
    %v9869 = vadd.f32 %v9781, %v9868
    %v9870 = vpop.f32.mrb[0].mxu0
    %v9871 = vpop.f32.mrb[0].mxu0
    %v9872 = vadd.f32 %v9786, %v9871
    %v9873 = vpop.f32.mrb[0].mxu0
    %9874 = vmatprep.mubr.bf16.mxu0 %v9822
    %9875 = vmatmul.mubr.bf16.gmra.mrb[0].mxu0 %v9821
    %v9876 = vpop.f32.mrb[0].mxu0
    %v9877 = vadd.f32 %v9791, %v9876
    %v9878 = vpop.f32.mrb[0].mxu0
    %v9879 = vpop.f32.mrb[0].mxu0
    %v9880 = vadd.f32 %v9796, %v9879
    %v9881 = vpop.f32.mrb[0].mxu0
    %9882 = vdwg.mxu0
    %9883 = vmatprep.subr.bf16.mxu0 0
    %9884 = vmatpush1.bf16.msra.mxu0 %v9764
    %9885 = vmatprep.subr.bf16.mxu0 0
    %9886 = vmatpush1.bf16.msra.mxu0 %v9765
    %9887 = vmatprep.subr.bf16.mxu0 0
    %9888 = vmatpush1.bf16.msra.mxu0 0
    %9889 = vmatprep.subr.bf16.mxu0 0
    %9890 = vmatpush1.bf16.msra.mxu0 0
    %9891 = vmatprep.subr.bf16.mxu0 0
    %9892 = vmatpush1.bf16.msra.mxu0 0
    %9893 = vmatprep.subr.bf16.mxu0 0
    %9894 = vmatpush1.bf16.msra.mxu0 0
    %9895 = vmatprep.subr.bf16.mxu0 0
    %9896 = vmatpush1.bf16.msra.mxu0 0
    %9897 = vmatprep.subr.bf16.mxu0 0
    %9898 = vmatpush1.bf16.msra.mxu0 0
    %9899 = vmatprep.subr.bf16.mxu0 0
    %9900 = vmatpush1.bf16.msra.mxu0 0
    %9901 = vmatprep.subr.bf16.mxu0 0
    %9902 = vmatpush1.bf16.msra.mxu0 0
    %9903 = vmatprep.subr.bf16.mxu0 0
    %9904 = vmatpush1.bf16.msra.mxu0 0
    %9905 = vmatprep.subr.bf16.mxu0 0
    %9906 = vmatpush1.bf16.msra.mxu0 0
    %9907 = vmatprep.subr.bf16.mxu0 0
    %9908 = vmatpush1.bf16.msra.mxu0 0
    %9909 = vmatprep.subr.bf16.mxu0 0
    %9910 = vmatpush1.bf16.msra.mxu0 0
    %9911 = vmatprep.subr.bf16.mxu0 0
    %9912 = vmatpush1.bf16.msra.mxu0 0
    %9913 = vmatprep.subr.bf16.mxu0 0
    %9914 = vmatpush1.bf16.msra.mxu0 0
    %9915 = vmatprep.mubr.bf16.mxu0 0
    %9916 = vmatmul.mubr.bf16.gmra.mrb[0].mxu0 %v9829
    %v9917 = vpop.f32.mrb[0].mxu0
    %v9918 = vadd.f32 %v9869, %v9917
    %v9919 = vpop.f32.mrb[0].mxu0
    %v9920 = vpop.f32.mrb[0].mxu0
    %v9921 = vadd.f32 %v9872, %v9920
    %v9922 = vpop.f32.mrb[0].mxu0
    %9923 = vmatprep.mubr.bf16.mxu0 0
    %9924 = vmatmul.mubr.bf16.gmra.mrb[0].mxu0 %v9832
    %v9925 = vpop.f32.mrb[0].mxu0
    %v9926 = vadd.f32 %v9877, %v9925
    %v9927 = vpop.f32.mrb[0].mxu0
    %v9928 = vpop.f32.mrb[0].mxu0
    %v9929 = vadd.f32 %v9880, %v9928
    %v9930 = vpop.f32.mrb[0].mxu0
    %9931 = vdwg.mxu0
    %v9932 = vmax.f32 %v9918, 0.0
    %v9933 = vmax.f32 %v9921, 0.0
    %v9934 = vmax.f32 %v9926, 0.0
    %v9935 = vmax.f32 %v9929, 0.0
    %v9936 = vsel %vm8446, %v9932, 0.0
    %v9937 = vsel %vm8446, %v9933, 0.0
    %v9938 = vsel %vm8446, %v9934, 0.0
    %v9939 = vsel %vm8446, %v9935, 0.0
    %9944 = vrot.lane.b32.xlu0 %v9936, 3
    %v9945 = vpop.permute.xlu0 %9944
    %9946 = vrot.lane.b32.xlu0 %v9937, 3
    %v9947 = vpop.permute.xlu0 %9946
    %9948 = vrot.lane.b32.xlu0 %v9938, 3
    %v9949 = vpop.permute.xlu0 %9948
    %9950 = vrot.lane.b32.xlu0 %v9939, 3
    %v9951 = vpop.permute.xlu0 %9950
    %v9952 = vsel %vm8960, %v8955, %v9945
    %v9953 = vsel %vm8960, %v8955, %v9947
    %v9954 = vsel %vm8960, %v8955, %v9949
    %v9955 = vsel %vm8960, %v8955, %v9951
    %v9960 = vsel %vm9610, %v9952, 0.0
    %v9961 = vsel %vm9610, %v9953, 0.0
    %v9962 = vsel %vm9610, %v9954, 0.0
    %v9963 = vsel %vm9610, %v9955, 0.0
    %9964 = vrot.lane.b32.xlu0 %v9936, 2
    %v9965 = vpop.permute.xlu0 %9964
    %9966 = vrot.lane.b32.xlu0 %v9937, 2
    %v9967 = vpop.permute.xlu0 %9966
    %9968 = vrot.lane.b32.xlu0 %v9938, 2
    %v9969 = vpop.permute.xlu0 %9968
    %9970 = vrot.lane.b32.xlu0 %v9939, 2
    %v9971 = vpop.permute.xlu0 %9970
    %v9972 = vsel %vm9647, %v9638, %v9965
    %v9973 = vsel %vm9647, %v9638, %v9967
    %v9974 = vsel %vm9647, %v9638, %v9969
    %v9975 = vsel %vm9647, %v9638, %v9971
    %v9980 = vsel %vm9636, %v9972, 0.0
    %v9981 = vsel %vm9636, %v9973, 0.0
    %v9982 = vsel %vm9636, %v9974, 0.0
    %v9983 = vsel %vm9636, %v9975, 0.0
    %9984 = vrot.lane.b32.xlu0 %v9936, 1
    %v9985 = vpop.permute.xlu0 %9984
    %9986 = vrot.lane.b32.xlu0 %v9937, 1
    %v9987 = vpop.permute.xlu0 %9986
    %9988 = vrot.lane.b32.xlu0 %v9938, 1
    %v9989 = vpop.permute.xlu0 %9988
    %9990 = vrot.lane.b32.xlu0 %v9939, 1
    %v9991 = vpop.permute.xlu0 %9990
    %v9992 = vsel %vm976, %v943, %v9985
    %v9993 = vsel %vm976, %v943, %v9987
    %v9994 = vsel %vm976, %v943, %v9989
    %v9995 = vsel %vm976, %v943, %v9991
    %v10000 = vsel %vm9661, %v9992, 0.0
    %v10001 = vsel %vm9661, %v9993, 0.0
    %v10002 = vsel %vm9661, %v9994, 0.0
    %v10003 = vsel %vm9661, %v9995, 0.0
    %v10004 = vsel %vm9683, %v9992, 0.0
    %v10005 = vsel %vm9683, %v9993, 0.0
    %v10006 = vsel %vm9683, %v9994, 0.0
    %v10007 = vsel %vm9683, %v9995, 0.0
    %10008 = vrot.lane.b32.xlu0 %v9936, 127
    %v10009 = vpop.permute.xlu0 %10008
    %10010 = vrot.lane.b32.xlu0 %v9937, 127
    %v10011 = vpop.permute.xlu0 %10010
    %10012 = vrot.lane.b32.xlu0 %v9938, 127
    %v10013 = vpop.permute.xlu0 %10012
    %10014 = vrot.lane.b32.xlu0 %v9939, 127
    %v10015 = vpop.permute.xlu0 %10014
    %v10020 = vsel %vm9689, %v10009, 0.0
    %v10021 = vsel %vm9689, %v10011, 0.0
    %v10022 = vsel %vm9689, %v10013, 0.0
    %v10023 = vsel %vm9689, %v10015, 0.0
    %v10024 = vsel %vm9707, %v10009, 0.0
    %v10025 = vsel %vm9707, %v10011, 0.0
    %v10026 = vsel %vm9707, %v10013, 0.0
    %v10027 = vsel %vm9707, %v10015, 0.0
    %10028 = vrot.lane.b32.xlu0 %v9936, 126
    %v10029 = vpop.permute.xlu0 %10028
    %10030 = vrot.lane.b32.xlu0 %v9937, 126
    %v10031 = vpop.permute.xlu0 %10030
    %10032 = vrot.lane.b32.xlu0 %v9938, 126
    %v10033 = vpop.permute.xlu0 %10032
    %10034 = vrot.lane.b32.xlu0 %v9939, 126
    %v10035 = vpop.permute.xlu0 %10034
    %v10040 = vsel %vm9713, %v10029, 0.0
    %v10041 = vsel %vm9713, %v10031, 0.0
    %v10042 = vsel %vm9713, %v10033, 0.0
    %v10043 = vsel %vm9713, %v10035, 0.0
    %10044 = vrot.lane.b32.xlu0 %v9936, 125
    %v10045 = vpop.permute.xlu0 %10044
    %10046 = vrot.lane.b32.xlu0 %v9937, 125
    %v10047 = vpop.permute.xlu0 %10046
    %10048 = vrot.lane.b32.xlu0 %v9938, 125
    %v10049 = vpop.permute.xlu0 %10048
    %10050 = vrot.lane.b32.xlu0 %v9939, 125
    %v10051 = vpop.permute.xlu0 %10050
    %v10056 = vsel %vm9731, %v10045, 0.0
    %v10057 = vsel %vm9731, %v10047, 0.0
    %v10058 = vsel %vm9731, %v10049, 0.0
    %v10059 = vsel %vm9731, %v10051, 0.0
    %v10060 = vpack.c.bf16 %v9961, %v9960
    %v10061 = vpack.c.bf16 %v9963, %v9962
    %v10062 = vpack.c.bf16 %v9981, %v9980
    %v10063 = vpack.c.bf16 %v9983, %v9982
    %v10064 = vpack.c.bf16 %v10001, %v10000
    %v10065 = vpack.c.bf16 %v10003, %v10002
    %v10066 = vpack.c.bf16 %v10005, %v10004
    %v10067 = vpack.c.bf16 %v10007, %v10006
    %v10068 = vpack.c.bf16 %v9933, %v9932
    %v10069 = vpack.c.bf16 %v9935, %v9934
    %v10070 = vpack.c.bf16 %v10021, %v10020
    %v10071 = vpack.c.bf16 %v10023, %v10022
    %v10072 = vpack.c.bf16 %v10025, %v10024
    %v10073 = vpack.c.bf16 %v10027, %v10026
    %v10074 = vpack.c.bf16 %v10041, %v10040
    %v10075 = vpack.c.bf16 %v10043, %v10042
    %v10076 = vpack.c.bf16 %v10057, %v10056
    %v10077 = vpack.c.bf16 %v10059, %v10058
    %v10078 = vld [vmem:[#allocation19] sm:$0xff]
    %v10079 = vld [vmem:[#allocation19 + $0x8] sm:$0xf]
    %v10080 = vld [vmem:[#allocation19 + $0xc] sm:$0xff]
    %v10081 = vld [vmem:[#allocation19 + $0x14] sm:$0xf]
    %v10082 = vld [vmem:[#allocation19 + $0x18] sm:$0xff]
    %v10083 = vld [vmem:[#allocation19 + $0x20] sm:$0xf]
    %v10084 = vld [vmem:[#allocation19 + $0x24] sm:$0xff]
    %v10085 = vld [vmem:[#allocation19 + $0x2c] sm:$0xf]
    %v10086 = vld [vmem:[%s41] sm:$0xff]
    %v10087 = vld [vmem:[%s41 + $0x8] sm:$0xff]
    %v10088 = vld [vmem:[%s41 + $0x10] sm:$0xff]
    %v10089 = vld [vmem:[%s41 + $0x18] sm:$0xff]
    %10091 = vset.pattern.permute.xlu0 0
    %10092 = vperm.xlu0 %10091, %v10086
    %v10093 = vpop.permute.xlu0 %10092
    %10096 = vset.pattern.permute.xlu0 0
    %10097 = vperm.xlu0 %10096, %v10087
    %v10098 = vpop.permute.xlu0 %10097
    %10101 = vset.pattern.permute.xlu0 0
    %10102 = vperm.xlu0 %10101, %v10088
    %v10103 = vpop.permute.xlu0 %10102
    %10106 = vset.pattern.permute.xlu0 0
    %10107 = vperm.xlu0 %10106, %v10089
    %v10108 = vpop.permute.xlu0 %10107
    %v10118 = vunpack.c.l.b16 %v10078
    %v10119 = vunpack.c.h.b16 %v10078
    %v10120 = vunpack.c.l.b16 %v10079
    %v10121 = vunpack.c.l.b16 %v10080
    %v10122 = vunpack.c.h.b16 %v10080
    %v10123 = vunpack.c.l.b16 %v10081
    %v10124 = vunpack.c.l.b16 %v10082
    %v10125 = vunpack.c.h.b16 %v10082
    %v10126 = vunpack.c.l.b16 %v10083
    %v10127 = vunpack.c.l.b16 %v10084
    %v10128 = vunpack.c.h.b16 %v10084
    %v10129 = vunpack.c.l.b16 %v10085
    %v10130 = vpack.c.b16 %v10121, %v10118
    %v10131 = vpack.c.b16 %v10122, %v10119
    %v10132 = vpack.c.b16 %v10123, %v10120
    %v10133 = vpack.c.b16 %v10127, %v10124
    %v10134 = vpack.c.b16 %v10128, %v10125
    %v10135 = vpack.c.b16 %v10129, %v10126
    %v10141 = vsel %vm746, %v10132, 0
    %v10144 = vsel %vm746, %v10135, 0
    %10146 = vmatprep.subr.bf16.mxu0 0
    %10147 = vmatpush1.bf16.msra.mxu0 %v10060
    %10148 = vmatprep.subr.bf16.mxu0 0
    %10149 = vmatpush1.bf16.msra.mxu0 %v10061
    %10150 = vmatprep.subr.bf16.mxu0 0
    %10151 = vmatpush1.bf16.msra.mxu0 %v10062
    %10152 = vmatprep.subr.bf16.mxu0 0
    %10153 = vmatpush1.bf16.msra.mxu0 %v10063
    %10154 = vmatprep.subr.bf16.mxu0 0
    %10155 = vmatpush1.bf16.msra.mxu0 %v10064
    %10156 = vmatprep.subr.bf16.mxu0 0
    %10157 = vmatpush1.bf16.msra.mxu0 %v10065
    %10158 = vmatprep.subr.bf16.mxu0 0
    %10159 = vmatpush1.bf16.msra.mxu0 %v10066
    %10160 = vmatprep.subr.bf16.mxu0 0
    %10161 = vmatpush1.bf16.msra.mxu0 %v10067
    %10162 = vmatprep.subr.bf16.mxu0 0
    %10163 = vmatpush1.bf16.msra.mxu0 %v10068
    %10164 = vmatprep.subr.bf16.mxu0 0
    %10165 = vmatpush1.bf16.msra.mxu0 %v10069
    %10166 = vmatprep.subr.bf16.mxu0 0
    %10167 = vmatpush1.bf16.msra.mxu0 %v10070
    %10168 = vmatprep.subr.bf16.mxu0 0
    %10169 = vmatpush1.bf16.msra.mxu0 %v10071
    %10170 = vmatprep.subr.bf16.mxu0 0
    %10171 = vmatpush1.bf16.msra.mxu0 %v10072
    %10172 = vmatprep.subr.bf16.mxu0 0
    %10173 = vmatpush1.bf16.msra.mxu0 %v10073
    %10174 = vmatprep.subr.bf16.mxu0 0
    %10175 = vmatpush1.bf16.msra.mxu0 %v10074
    %10176 = vmatprep.subr.bf16.mxu0 0
    %10177 = vmatpush1.bf16.msra.mxu0 %v10075
    %10178 = vmatprep.mubr.bf16.mxu0 %v10131
    %10179 = vmatmul.mubr.bf16.gmra.mrb[0].mxu0 %v10130
    %v10180 = vpop.f32.mrb[0].mxu0
    %v10181 = vadd.f32 %v10093, %v10180
    %v10182 = vpop.f32.mrb[0].mxu0
    %v10183 = vpop.f32.mrb[0].mxu0
    %v10184 = vadd.f32 %v10098, %v10183
    %v10185 = vpop.f32.mrb[0].mxu0
    %10186 = vmatprep.mubr.bf16.mxu0 %v10134
    %10187 = vmatmul.mubr.bf16.gmra.mrb[0].mxu0 %v10133
    %v10188 = vpop.f32.mrb[0].mxu0
    %v10189 = vadd.f32 %v10103, %v10188
    %v10190 = vpop.f32.mrb[0].mxu0
    %v10191 = vpop.f32.mrb[0].mxu0
    %v10192 = vadd.f32 %v10108, %v10191
    %v10193 = vpop.f32.mrb[0].mxu0
    %10194 = vdwg.mxu0
    %10195 = vmatprep.subr.bf16.mxu0 0
    %10196 = vmatpush1.bf16.msra.mxu0 %v10076
    %10197 = vmatprep.subr.bf16.mxu0 0
    %10198 = vmatpush1.bf16.msra.mxu0 %v10077
    %10199 = vmatprep.subr.bf16.mxu0 0
    %10200 = vmatpush1.bf16.msra.mxu0 0
    %10201 = vmatprep.subr.bf16.mxu0 0
    %10202 = vmatpush1.bf16.msra.mxu0 0
    %10203 = vmatprep.subr.bf16.mxu0 0
    %10204 = vmatpush1.bf16.msra.mxu0 0
    %10205 = vmatprep.subr.bf16.mxu0 0
    %10206 = vmatpush1.bf16.msra.mxu0 0
    %10207 = vmatprep.subr.bf16.mxu0 0
    %10208 = vmatpush1.bf16.msra.mxu0 0
    %10209 = vmatprep.subr.bf16.mxu0 0
    %10210 = vmatpush1.bf16.msra.mxu0 0
    %10211 = vmatprep.subr.bf16.mxu0 0
    %10212 = vmatpush1.bf16.msra.mxu0 0
    %10213 = vmatprep.subr.bf16.mxu0 0
    %10214 = vmatpush1.bf16.msra.mxu0 0
    %10215 = vmatprep.subr.bf16.mxu0 0
    %10216 = vmatpush1.bf16.msra.mxu0 0
    %10217 = vmatprep.subr.bf16.mxu0 0
    %10218 = vmatpush1.bf16.msra.mxu0 0
    %10219 = vmatprep.subr.bf16.mxu0 0
    %10220 = vmatpush1.bf16.msra.mxu0 0
    %10221 = vmatprep.subr.bf16.mxu0 0
    %10222 = vmatpush1.bf16.msra.mxu0 0
    %10223 = vmatprep.subr.bf16.mxu0 0
    %10224 = vmatpush1.bf16.msra.mxu0 0
    %10225 = vmatprep.subr.bf16.mxu0 0
    %10226 = vmatpush1.bf16.msra.mxu0 0
    %10227 = vmatprep.mubr.bf16.mxu0 0
    %10228 = vmatmul.mubr.bf16.gmra.mrb[0].mxu0 %v10141
    %v10229 = vpop.f32.mrb[0].mxu0
    %v10230 = vadd.f32 %v10181, %v10229
    %v10231 = vpop.f32.mrb[0].mxu0
    %v10232 = vpop.f32.mrb[0].mxu0
    %v10233 = vadd.f32 %v10184, %v10232
    %v10234 = vpop.f32.mrb[0].mxu0
    %10235 = vmatprep.mubr.bf16.mxu0 0
    %10236 = vmatmul.mubr.bf16.gmra.mrb[0].mxu0 %v10144
    %v10237 = vpop.f32.mrb[0].mxu0
    %v10238 = vadd.f32 %v10189, %v10237
    %v10239 = vpop.f32.mrb[0].mxu0
    %v10240 = vpop.f32.mrb[0].mxu0
    %v10241 = vadd.f32 %v10192, %v10240
    %v10242 = vpop.f32.mrb[0].mxu0
    %10243 = vdwg.mxu0
    %v10244 = vmax.f32 %v10230, 0.0
    %v10245 = vmax.f32 %v10233, 0.0
    %v10246 = vmax.f32 %v10238, 0.0
    %v10247 = vmax.f32 %v10241, 0.0
    %v10248 = vsel %vm8446, %v10244, 0.0
    %v10249 = vsel %vm8446, %v10245, 0.0
    %v10250 = vsel %vm8446, %v10246, 0.0
    %v10251 = vsel %vm8446, %v10247, 0.0
    %10256 = vrot.lane.b32.xlu0 %v10248, 127
    %v10257 = vpop.permute.xlu0 %10256
    %10258 = vrot.lane.b32.xlu0 %v10249, 127
    %v10259 = vpop.permute.xlu0 %10258
    %10260 = vrot.lane.b32.xlu0 %v10250, 127
    %v10261 = vpop.permute.xlu0 %10260
    %10262 = vrot.lane.b32.xlu0 %v10251, 127
    %v10263 = vpop.permute.xlu0 %10262
    %v10268 = vmax.f32 %v10244, %v10257
    %v10269 = vmax.f32 %v10245, %v10259
    %v10270 = vmax.f32 %v10246, %v10261
    %v10271 = vmax.f32 %v10247, %v10263
    %v10272 = vmax.f32 %v10248, %v10257
    %v10273 = vmax.f32 %v10249, %v10259
    %v10274 = vmax.f32 %v10250, %v10261
    %v10275 = vmax.f32 %v10251, %v10263
    %10280 = vrot.lane.b32.xlu0 %v10272, 126
    %v10281 = vpop.permute.xlu0 %10280
    %10282 = vrot.lane.b32.xlu0 %v10273, 126
    %v10283 = vpop.permute.xlu0 %10282
    %10284 = vrot.lane.b32.xlu0 %v10274, 126
    %v10285 = vpop.permute.xlu0 %10284
    %10286 = vrot.lane.b32.xlu0 %v10275, 126
    %v10287 = vpop.permute.xlu0 %10286
    %v10292 = vmax.f32 %v10268, %v10281
    %v10293 = vmax.f32 %v10269, %v10283
    %v10294 = vmax.f32 %v10270, %v10285
    %v10295 = vmax.f32 %v10271, %v10287
    %v10296 = vpack.c.bf16 %v10293, %v10292
    %v10297 = vpack.c.bf16 %v10295, %v10294
    %v10298 = vld [vmem:[%s51] sm:$0xf]
    %v10300 = vsel %vm8446, %v10296, 0
    %v10303 = vsel %vm8446, %v10297, 0
    %v10306 = vsel %vm1576, %v10298, 0
    %10308 = vmatprep.subr.bf16.mxu0 0
    %10309 = vmatpush1.bf16.msra.mxu0 %v10306
    %10310 = vmatprep.subr.bf16.mxu0 0
    %10311 = vmatpush1.bf16.msra.mxu0 0
    %10312 = vmatprep.subr.bf16.mxu0 0
    %10313 = vmatpush1.bf16.msra.mxu0 0
    %10314 = vmatprep.subr.bf16.mxu0 0
    %10315 = vmatpush1.bf16.msra.mxu0 0
    %10316 = vmatprep.subr.bf16.mxu0 0
    %10317 = vmatpush1.bf16.msra.mxu0 0
    %10318 = vmatprep.subr.bf16.mxu0 0
    %10319 = vmatpush1.bf16.msra.mxu0 0
    %10320 = vmatprep.subr.bf16.mxu0 0
    %10321 = vmatpush1.bf16.msra.mxu0 0
    %10322 = vmatprep.subr.bf16.mxu0 0
    %10323 = vmatpush1.bf16.msra.mxu0 0
    %10324 = vmatprep.subr.bf16.mxu0 0
    %10325 = vmatpush1.bf16.msra.mxu0 0
    %10326 = vmatprep.subr.bf16.mxu0 0
    %10327 = vmatpush1.bf16.msra.mxu0 0
    %10328 = vmatprep.subr.bf16.mxu0 0
    %10329 = vmatpush1.bf16.msra.mxu0 0
    %10330 = vmatprep.subr.bf16.mxu0 0
    %10331 = vmatpush1.bf16.msra.mxu0 0
    %10332 = vmatprep.subr.bf16.mxu0 0
    %10333 = vmatpush1.bf16.msra.mxu0 0
    %10334 = vmatprep.subr.bf16.mxu0 0
    %10335 = vmatpush1.bf16.msra.mxu0 0
    %10336 = vmatprep.subr.bf16.mxu0 0
    %10337 = vmatpush1.bf16.msra.mxu0 0
    %10338 = vmatprep.subr.bf16.mxu0 0
    %10339 = vmatpush1.bf16.msra.mxu0 0
    %10340 = vmatprep.mubr.bf16.mxu0 0
    %10341 = vmatmul.mubr.bf16.gmra.mrb[0].mxu0 %v10300
    %v10342 = vpop.f32.mrb[0].mxu0
    %v10343 = vadd.f32 0.0, %v10342
    %v10344 = vpop.f32.mrb[0].mxu0
    %v10345 = vpop.f32.mrb[0].mxu0
    %v10346 = vadd.f32 0.0, %v10345
    %v10347 = vpop.f32.mrb[0].mxu0
    %10348 = vmatprep.mubr.bf16.mxu0 0
    %10349 = vmatmul.mubr.bf16.gmra.mrb[0].mxu0 %v10303
    %v10350 = vpop.f32.mrb[0].mxu0
    %v10351 = vadd.f32 0.0, %v10350
    %v10352 = vpop.f32.mrb[0].mxu0
    %v10353 = vpop.f32.mrb[0].mxu0
    %v10354 = vadd.f32 0.0, %v10353
    %v10355 = vpop.f32.mrb[0].mxu0
    %10356 = vdwg.mxu0
    %v10357 = vld [vmem:[%s53] sm:$0xff]
    %v10358 = vld [vmem:[%s53 + $0x8] sm:$0xff]
    %v10359 = vld [vmem:[%s53 + $0x10] sm:$0xff]
    %v10360 = vld [vmem:[%s53 + $0x18] sm:$0xff]
    %v10361 = vld [vmem:[%s53 + $0x20] sm:$0xff]
    %v10362 = vld [vmem:[%s53 + $0x28] sm:$0xff]
    %v10363 = vld [vmem:[%s53 + $0x30] sm:$0xff]
    %v10364 = vld [vmem:[%s53 + $0x38] sm:$0xff]
    %v10365 = vld [vmem:[%s55] sm:$0xff]
    %v10366 = vld [vmem:[%s55 + $0x8] sm:$0xff]
    %v10367 = vld [vmem:[%s55 + $0x10] sm:$0xff]
    %v10368 = vld [vmem:[%s55 + $0x18] sm:$0xff]
    %v10369 = vld [vmem:[%s55 + $0x20] sm:$0xff]
    %v10370 = vld [vmem:[%s55 + $0x28] sm:$0xff]
    %v10371 = vld [vmem:[%s55 + $0x30] sm:$0xff]
    %v10372 = vld [vmem:[%s55 + $0x38] sm:$0xff]
    %10374 = vset.pattern.permute.xlu0 0
    %10375 = vperm.xlu0 %10374, %v10365
    %v10376 = vpop.permute.xlu0 %10375
    %10379 = vset.pattern.permute.xlu0 0
    %10380 = vperm.xlu0 %10379, %v10366
    %v10381 = vpop.permute.xlu0 %10380
    %10384 = vset.pattern.permute.xlu0 0
    %10385 = vperm.xlu0 %10384, %v10367
    %v10386 = vpop.permute.xlu0 %10385
    %10389 = vset.pattern.permute.xlu0 0
    %10390 = vperm.xlu0 %10389, %v10368
    %v10391 = vpop.permute.xlu0 %10390
    %10394 = vset.pattern.permute.xlu0 0
    %10395 = vperm.xlu0 %10394, %v10369
    %v10396 = vpop.permute.xlu0 %10395
    %10399 = vset.pattern.permute.xlu0 0
    %10400 = vperm.xlu0 %10399, %v10370
    %v10401 = vpop.permute.xlu0 %10400
    %10404 = vset.pattern.permute.xlu0 0
    %10405 = vperm.xlu0 %10404, %v10371
    %v10406 = vpop.permute.xlu0 %10405
    %10409 = vset.pattern.permute.xlu0 0
    %10410 = vperm.xlu0 %10409, %v10372
    %v10411 = vpop.permute.xlu0 %10410
    %v10414 = vsel %vm746, %v10357, 0
    %v10417 = vsel %vm746, %v10358, 0
    %v10420 = vsel %vm746, %v10359, 0
    %v10423 = vsel %vm746, %v10360, 0
    %v10426 = vsel %vm746, %v10361, 0
    %v10429 = vsel %vm746, %v10362, 0
    %v10432 = vsel %vm746, %v10363, 0
    %v10435 = vsel %vm746, %v10364, 0
    %10437 = vmatprep.subr.mxu0 0.0
    %10438 = vmatpush1.msra.mxu0 %v10343
    %10439 = vmatprep.subr.mxu0 0.0
    %10440 = vmatpush1.msra.mxu0 %v10346
    %10441 = vmatprep.subr.mxu0 0.0
    %10442 = vmatpush1.msra.mxu0 %v10351
    %10443 = vmatprep.subr.mxu0 0.0
    %10444 = vmatpush1.msra.mxu0 %v10354
    %10445 = vmatprep.subr.mxu0 0.0
    %10446 = vmatpush1.msra.mxu0 0.0
    %10447 = vmatprep.subr.mxu0 0.0
    %10448 = vmatpush1.msra.mxu0 0.0
    %10449 = vmatprep.subr.mxu0 0.0
    %10450 = vmatpush1.msra.mxu0 0.0
    %10451 = vmatprep.subr.mxu0 0.0
    %10452 = vmatpush1.msra.mxu0 0.0
    %10453 = vmatprep.subr.mxu0 0.0
    %10454 = vmatpush1.msra.mxu0 0.0
    %10455 = vmatprep.subr.mxu0 0.0
    %10456 = vmatpush1.msra.mxu0 0.0
    %10457 = vmatprep.subr.mxu0 0.0
    %10458 = vmatpush1.msra.mxu0 0.0
    %10459 = vmatprep.subr.mxu0 0.0
    %10460 = vmatpush1.msra.mxu0 0.0
    %10461 = vmatprep.subr.mxu0 0.0
    %10462 = vmatpush1.msra.mxu0 0.0
    %10463 = vmatprep.subr.mxu0 0.0
    %10464 = vmatpush1.msra.mxu0 0.0
    %10465 = vmatprep.subr.mxu0 0.0
    %10466 = vmatpush1.msra.mxu0 0.0
    %10467 = vmatprep.subr.mxu0 0.0
    %10468 = vmatpush1.msra.mxu0 0.0
    %10469 = vmatprep.subr.mxu0 0.0
    %10470 = vmatpush1.msra.mxu0 0.0
    %10471 = vmatprep.subr.mxu0 0.0
    %10472 = vmatpush1.msra.mxu0 0.0
    %10473 = vmatprep.subr.mxu0 0.0
    %10474 = vmatpush1.msra.mxu0 0.0
    %10475 = vmatprep.subr.mxu0 0.0
    %10476 = vmatpush1.msra.mxu0 0.0
    %10477 = vmatprep.subr.mxu0 0.0
    %10478 = vmatpush1.msra.mxu0 0.0
    %10479 = vmatprep.subr.mxu0 0.0
    %10480 = vmatpush1.msra.mxu0 0.0
    %10481 = vmatprep.subr.mxu0 0.0
    %10482 = vmatpush1.msra.mxu0 0.0
    %10483 = vmatprep.subr.mxu0 0.0
    %10484 = vmatpush1.msra.mxu0 0.0
    %10485 = vmatprep.subr.mxu0 0.0
    %10486 = vmatpush1.msra.mxu0 0.0
    %10487 = vmatprep.subr.mxu0 0.0
    %10488 = vmatpush1.msra.mxu0 0.0
    %10489 = vmatprep.subr.mxu0 0.0
    %10490 = vmatpush1.msra.mxu0 0.0
    %10491 = vmatprep.subr.mxu0 0.0
    %10492 = vmatpush1.msra.mxu0 0.0
    %10493 = vmatprep.subr.mxu0 0.0
    %10494 = vmatpush1.msra.mxu0 0.0
    %10495 = vmatprep.subr.mxu0 0.0
    %10496 = vmatpush1.msra.mxu0 0.0
    %10497 = vmatprep.subr.mxu0 0.0
    %10498 = vmatpush1.msra.mxu0 0.0
    %10499 = vmatprep.subr.mxu0 0.0
    %10500 = vmatpush1.msra.mxu0 0.0
    %10501 = vmatprep.mubr.f32.mxu0 0.0
    %10502 = vmatmul.mubr.f32.gmra.mrb[0].mxu0 %v10414
    %v10503 = vpop.f32.mrb[0].mxu0
    %v10504 = vadd.f32 %v10376, %v10503
    %v10505 = vpop.f32.mrb[0].mxu0
    %10506 = vmatprep.mubr.f32.mxu0 0.0
    %10507 = vmatmul.mubr.f32.gmra.mrb[0].mxu0 %v10417
    %v10508 = vpop.f32.mrb[0].mxu0
    %v10509 = vadd.f32 %v10381, %v10508
    %v10510 = vpop.f32.mrb[0].mxu0
    %10511 = vmatprep.mubr.f32.mxu0 0.0
    %10512 = vmatmul.mubr.f32.gmra.mrb[0].mxu0 %v10420
    %v10513 = vpop.f32.mrb[0].mxu0
    %v10514 = vadd.f32 %v10386, %v10513
    %v10515 = vpop.f32.mrb[0].mxu0
    %10516 = vmatprep.mubr.f32.mxu0 0.0
    %10517 = vmatmul.mubr.f32.gmra.mrb[0].mxu0 %v10423
    %v10518 = vpop.f32.mrb[0].mxu0
    %v10519 = vadd.f32 %v10391, %v10518
    %v10520 = vpop.f32.mrb[0].mxu0
    %10521 = vmatprep.mubr.f32.mxu0 0.0
    %10522 = vmatmul.mubr.f32.gmra.mrb[0].mxu0 %v10426
    %v10523 = vpop.f32.mrb[0].mxu0
    %v10524 = vadd.f32 %v10396, %v10523
    %v10525 = vpop.f32.mrb[0].mxu0
    %10526 = vmatprep.mubr.f32.mxu0 0.0
    %10527 = vmatmul.mubr.f32.gmra.mrb[0].mxu0 %v10429
    %v10528 = vpop.f32.mrb[0].mxu0
    %v10529 = vadd.f32 %v10401, %v10528
    %v10530 = vpop.f32.mrb[0].mxu0
    %10531 = vmatprep.mubr.f32.mxu0 0.0
    %10532 = vmatmul.mubr.f32.gmra.mrb[0].mxu0 %v10432
    %v10533 = vpop.f32.mrb[0].mxu0
    %v10534 = vadd.f32 %v10406, %v10533
    %v10535 = vpop.f32.mrb[0].mxu0
    %10536 = vmatprep.mubr.f32.mxu0 0.0
    %10537 = vmatmul.mubr.f32.gmra.mrb[0].mxu0 %v10435
    %v10538 = vpop.f32.mrb[0].mxu0
    %v10539 = vadd.f32 %v10411, %v10538
    %v10540 = vpop.f32.mrb[0].mxu0
    %10541 = vdwg.mxu0
    %v10542 = vmax.f32 %v10504, 0.0
    %v10543 = vmax.f32 %v10509, 0.0
    %v10544 = vmax.f32 %v10514, 0.0
    %v10545 = vmax.f32 %v10519, 0.0
    %v10546 = vmax.f32 %v10524, 0.0
    %v10547 = vmax.f32 %v10529, 0.0
    %v10548 = vmax.f32 %v10534, 0.0
    %v10549 = vmax.f32 %v10539, 0.0
    %v10550 = vld [vmem:[#allocation23] sm:$0xff]
    %v10551 = vld [vmem:[#allocation23 + $0x8] sm:$0xff]
    %v10552 = vld [vmem:[#allocation23 + $0x10] sm:$0xff]
    %v10553 = vld [vmem:[#allocation23 + $0x18] sm:$0xff]
    %v10554 = vld [vmem:[#allocation23 + $0x20] sm:$0xff]
    %v10555 = vld [vmem:[#allocation23 + $0x28] sm:$0xff]
    %v10556 = vld [vmem:[#allocation23 + $0x30] sm:$0xff]
    %v10557 = vld [vmem:[#allocation23 + $0x38] sm:$0xff]
    %v10558 = vld [vmem:[%s59] sm:$0xff]
    %v10559 = vld [vmem:[%s59 + $0x8] sm:$0xff]
    %v10560 = vld [vmem:[%s59 + $0x10] sm:$0xff]
    %v10561 = vld [vmem:[%s59 + $0x18] sm:$0xff]
    %v10562 = vld [vmem:[%s59 + $0x20] sm:$0xff]
    %v10563 = vld [vmem:[%s59 + $0x28] sm:$0xff]
    %v10564 = vld [vmem:[%s59 + $0x30] sm:$0xff]
    %v10565 = vld [vmem:[%s59 + $0x38] sm:$0xff]
    %10567 = vset.pattern.permute.xlu0 0
    %10568 = vperm.xlu0 %10567, %v10558
    %v10569 = vpop.permute.xlu0 %10568
    %10572 = vset.pattern.permute.xlu0 0
    %10573 = vperm.xlu0 %10572, %v10559
    %v10574 = vpop.permute.xlu0 %10573
    %10577 = vset.pattern.permute.xlu0 0
    %10578 = vperm.xlu0 %10577, %v10560
    %v10579 = vpop.permute.xlu0 %10578
    %10582 = vset.pattern.permute.xlu0 0
    %10583 = vperm.xlu0 %10582, %v10561
    %v10584 = vpop.permute.xlu0 %10583
    %10587 = vset.pattern.permute.xlu0 0
    %10588 = vperm.xlu0 %10587, %v10562
    %v10589 = vpop.permute.xlu0 %10588
    %10592 = vset.pattern.permute.xlu0 0
    %10593 = vperm.xlu0 %10592, %v10563
    %v10594 = vpop.permute.xlu0 %10593
    %10597 = vset.pattern.permute.xlu0 0
    %10598 = vperm.xlu0 %10597, %v10564
    %v10599 = vpop.permute.xlu0 %10598
    %10602 = vset.pattern.permute.xlu0 0
    %10603 = vperm.xlu0 %10602, %v10565
    %v10604 = vpop.permute.xlu0 %10603
    %vm10606 = vcmask 523264
    %v10608 = vsel %vm10606, %v10550, 0
    %v10611 = vsel %vm10606, %v10551, 0
    %v10614 = vsel %vm10606, %v10552, 0
    %v10617 = vsel %vm10606, %v10553, 0
    %v10620 = vsel %vm10606, %v10554, 0
    %v10623 = vsel %vm10606, %v10555, 0
    %v10626 = vsel %vm10606, %v10556, 0
    %v10629 = vsel %vm10606, %v10557, 0
    %10631 = vmatprep.subr.mxu0 0.0
    %10632 = vmatpush1.msra.mxu0 %v10542
    %10633 = vmatprep.subr.mxu0 0.0
    %10634 = vmatpush1.msra.mxu0 %v10543
    %10635 = vmatprep.subr.mxu0 0.0
    %10636 = vmatpush1.msra.mxu0 %v10544
    %10637 = vmatprep.subr.mxu0 0.0
    %10638 = vmatpush1.msra.mxu0 %v10545
    %10639 = vmatprep.subr.mxu0 0.0
    %10640 = vmatpush1.msra.mxu0 %v10546
    %10641 = vmatprep.subr.mxu0 0.0
    %10642 = vmatpush1.msra.mxu0 %v10547
    %10643 = vmatprep.subr.mxu0 0.0
    %10644 = vmatpush1.msra.mxu0 %v10548
    %10645 = vmatprep.subr.mxu0 0.0
    %10646 = vmatpush1.msra.mxu0 %v10549
    %10647 = vmatprep.subr.mxu0 0.0
    %10648 = vmatpush1.msra.mxu0 0.0
    %10649 = vmatprep.subr.mxu0 0.0
    %10650 = vmatpush1.msra.mxu0 0.0
    %10651 = vmatprep.subr.mxu0 0.0
    %10652 = vmatpush1.msra.mxu0 0.0
    %10653 = vmatprep.subr.mxu0 0.0
    %10654 = vmatpush1.msra.mxu0 0.0
    %10655 = vmatprep.subr.mxu0 0.0
    %10656 = vmatpush1.msra.mxu0 0.0
    %10657 = vmatprep.subr.mxu0 0.0
    %10658 = vmatpush1.msra.mxu0 0.0
    %10659 = vmatprep.subr.mxu0 0.0
    %10660 = vmatpush1.msra.mxu0 0.0
    %10661 = vmatprep.subr.mxu0 0.0
    %10662 = vmatpush1.msra.mxu0 0.0
    %10663 = vmatprep.subr.mxu0 0.0
    %10664 = vmatpush1.msra.mxu0 0.0
    %10665 = vmatprep.subr.mxu0 0.0
    %10666 = vmatpush1.msra.mxu0 0.0
    %10667 = vmatprep.subr.mxu0 0.0
    %10668 = vmatpush1.msra.mxu0 0.0
    %10669 = vmatprep.subr.mxu0 0.0
    %10670 = vmatpush1.msra.mxu0 0.0
    %10671 = vmatprep.subr.mxu0 0.0
    %10672 = vmatpush1.msra.mxu0 0.0
    %10673 = vmatprep.subr.mxu0 0.0
    %10674 = vmatpush1.msra.mxu0 0.0
    %10675 = vmatprep.subr.mxu0 0.0
    %10676 = vmatpush1.msra.mxu0 0.0
    %10677 = vmatprep.subr.mxu0 0.0
    %10678 = vmatpush1.msra.mxu0 0.0
    %10679 = vmatprep.subr.mxu0 0.0
    %10680 = vmatpush1.msra.mxu0 0.0
    %10681 = vmatprep.subr.mxu0 0.0
    %10682 = vmatpush1.msra.mxu0 0.0
    %10683 = vmatprep.subr.mxu0 0.0
    %10684 = vmatpush1.msra.mxu0 0.0
    %10685 = vmatprep.subr.mxu0 0.0
    %10686 = vmatpush1.msra.mxu0 0.0
    %10687 = vmatprep.subr.mxu0 0.0
    %10688 = vmatpush1.msra.mxu0 0.0
    %10689 = vmatprep.subr.mxu0 0.0
    %10690 = vmatpush1.msra.mxu0 0.0
    %10691 = vmatprep.subr.mxu0 0.0
    %10692 = vmatpush1.msra.mxu0 0.0
    %10693 = vmatprep.subr.mxu0 0.0
    %10694 = vmatpush1.msra.mxu0 0.0
    %10695 = vmatprep.mubr.f32.mxu0 0.0
    %10696 = vmatmul.mubr.f32.gmra.mrb[0].mxu0 %v10608
    %v10697 = vpop.f32.mrb[0].mxu0
    %v10698 = vadd.f32 %v10569, %v10697
    %v10699 = vpop.f32.mrb[0].mxu0
    %10700 = vmatprep.mubr.f32.mxu0 0.0
    %10701 = vmatmul.mubr.f32.gmra.mrb[0].mxu0 %v10611
    %v10702 = vpop.f32.mrb[0].mxu0
    %v10703 = vadd.f32 %v10574, %v10702
    %v10704 = vpop.f32.mrb[0].mxu0
    %10705 = vmatprep.mubr.f32.mxu0 0.0
    %10706 = vmatmul.mubr.f32.gmra.mrb[0].mxu0 %v10614
    %v10707 = vpop.f32.mrb[0].mxu0
    %v10708 = vadd.f32 %v10579, %v10707
    %v10709 = vpop.f32.mrb[0].mxu0
    %10710 = vmatprep.mubr.f32.mxu0 0.0
    %10711 = vmatmul.mubr.f32.gmra.mrb[0].mxu0 %v10617
    %v10712 = vpop.f32.mrb[0].mxu0
    %v10713 = vadd.f32 %v10584, %v10712
    %v10714 = vpop.f32.mrb[0].mxu0
    %10715 = vmatprep.mubr.f32.mxu0 0.0
    %10716 = vmatmul.mubr.f32.gmra.mrb[0].mxu0 %v10620
    %v10717 = vpop.f32.mrb[0].mxu0
    %v10718 = vadd.f32 %v10589, %v10717
    %v10719 = vpop.f32.mrb[0].mxu0
    %10720 = vmatprep.mubr.f32.mxu0 0.0
    %10721 = vmatmul.mubr.f32.gmra.mrb[0].mxu0 %v10623
    %v10722 = vpop.f32.mrb[0].mxu0
    %v10723 = vadd.f32 %v10594, %v10722
    %v10724 = vpop.f32.mrb[0].mxu0
    %10725 = vmatprep.mubr.f32.mxu0 0.0
    %10726 = vmatmul.mubr.f32.gmra.mrb[0].mxu0 %v10626
    %v10727 = vpop.f32.mrb[0].mxu0
    %v10728 = vadd.f32 %v10599, %v10727
    %v10729 = vpop.f32.mrb[0].mxu0
    %10730 = vmatprep.mubr.f32.mxu0 0.0
    %10731 = vmatmul.mubr.f32.gmra.mrb[0].mxu0 %v10629
    %v10732 = vpop.f32.mrb[0].mxu0
    %v10733 = vadd.f32 %v10604, %v10732
    %v10734 = vpop.f32.mrb[0].mxu0
    %10735 = vdwg.mxu0
    %v10736 = vmax.f32 %v10698, 0.0
    %v10737 = vmax.f32 %v10703, 0.0
    %v10738 = vmax.f32 %v10708, 0.0
    %v10739 = vmax.f32 %v10713, 0.0
    %v10740 = vmax.f32 %v10718, 0.0
    %v10741 = vmax.f32 %v10723, 0.0
    %v10742 = vmax.f32 %v10728, 0.0
    %v10743 = vmax.f32 %v10733, 0.0
    %v10744 = vld [vmem:[#allocation25] sm:$0x3]
    %v10745 = vld [vmem:[%s63] sm:$0x3]
    %10747 = vset.pattern.permute.xlu0 0
    %10748 = vperm.xlu0 %10747, %v10745
    %v10749 = vpop.permute.xlu0 %10748
    %v10752 = vsel %vm10606, %v10744, 0
    %10754 = vmatprep.subr.mxu0 0.0
    %10755 = vmatpush1.msra.mxu0 %v10736
    %10756 = vmatprep.subr.mxu0 0.0
    %10757 = vmatpush1.msra.mxu0 %v10737
    %10758 = vmatprep.subr.mxu0 0.0
    %10759 = vmatpush1.msra.mxu0 %v10738
    %10760 = vmatprep.subr.mxu0 0.0
    %10761 = vmatpush1.msra.mxu0 %v10739
    %10762 = vmatprep.subr.mxu0 0.0
    %10763 = vmatpush1.msra.mxu0 %v10740
    %10764 = vmatprep.subr.mxu0 0.0
    %10765 = vmatpush1.msra.mxu0 %v10741
    %10766 = vmatprep.subr.mxu0 0.0
    %10767 = vmatpush1.msra.mxu0 %v10742
    %10768 = vmatprep.subr.mxu0 0.0
    %10769 = vmatpush1.msra.mxu0 %v10743
    %10770 = vmatprep.subr.mxu0 0.0
    %10771 = vmatpush1.msra.mxu0 0.0
    %10772 = vmatprep.subr.mxu0 0.0
    %10773 = vmatpush1.msra.mxu0 0.0
    %10774 = vmatprep.subr.mxu0 0.0
    %10775 = vmatpush1.msra.mxu0 0.0
    %10776 = vmatprep.subr.mxu0 0.0
    %10777 = vmatpush1.msra.mxu0 0.0
    %10778 = vmatprep.subr.mxu0 0.0
    %10779 = vmatpush1.msra.mxu0 0.0
    %10780 = vmatprep.subr.mxu0 0.0
    %10781 = vmatpush1.msra.mxu0 0.0
    %10782 = vmatprep.subr.mxu0 0.0
    %10783 = vmatpush1.msra.mxu0 0.0
    %10784 = vmatprep.subr.mxu0 0.0
    %10785 = vmatpush1.msra.mxu0 0.0
    %10786 = vmatprep.subr.mxu0 0.0
    %10787 = vmatpush1.msra.mxu0 0.0
    %10788 = vmatprep.subr.mxu0 0.0
    %10789 = vmatpush1.msra.mxu0 0.0
    %10790 = vmatprep.subr.mxu0 0.0
    %10791 = vmatpush1.msra.mxu0 0.0
    %10792 = vmatprep.subr.mxu0 0.0
    %10793 = vmatpush1.msra.mxu0 0.0
    %10794 = vmatprep.subr.mxu0 0.0
    %10795 = vmatpush1.msra.mxu0 0.0
    %10796 = vmatprep.subr.mxu0 0.0
    %10797 = vmatpush1.msra.mxu0 0.0
    %10798 = vmatprep.subr.mxu0 0.0
    %10799 = vmatpush1.msra.mxu0 0.0
    %10800 = vmatprep.subr.mxu0 0.0
    %10801 = vmatpush1.msra.mxu0 0.0
    %10802 = vmatprep.subr.mxu0 0.0
    %10803 = vmatpush1.msra.mxu0 0.0
    %10804 = vmatprep.subr.mxu0 0.0
    %10805 = vmatpush1.msra.mxu0 0.0
    %10806 = vmatprep.subr.mxu0 0.0
    %10807 = vmatpush1.msra.mxu0 0.0
    %10808 = vmatprep.subr.mxu0 0.0
    %10809 = vmatpush1.msra.mxu0 0.0
    %10810 = vmatprep.subr.mxu0 0.0
    %10811 = vmatpush1.msra.mxu0 0.0
    %10812 = vmatprep.subr.mxu0 0.0
    %10813 = vmatpush1.msra.mxu0 0.0
    %10814 = vmatprep.subr.mxu0 0.0
    %10815 = vmatpush1.msra.mxu0 0.0
    %10816 = vmatprep.subr.mxu0 0.0
    %10817 = vmatpush1.msra.mxu0 0.0
    %10818 = vmatprep.mubr.f32.mxu0 0.0
    %10819 = vmatmul.mubr.f32.gmra.mrb[0].mxu0 %v10752
    %v10820 = vpop.f32.mrb[0].mxu0
    %v10821 = vadd.f32 %v10749, %v10820
    %v10822 = vpop.f32.mrb[0].mxu0
    %10823 = vdwg.mxu0
    %vm10824 = vcmask 9216
    %10825 = vst.msk [vmem:[#allocation26] sm:$0x3] %vm10824, %v10821
    // Predicated region
    $region190: #{tpu_custom_call.1} parent=1 // pred_check
      _
    $region191: #{tpu_custom_call.1} parent=1 // pred_check_branch
      %10827 = sbr.rel (0) target = $region193
    $region192: #{tpu_custom_call.1} parent=1 // pred_region
      %s10829 = ssub.s32 32, 32
      %10830 = vsyncadd [#allocation4], %s10829
      %s10832 = sshll.u32 [#allocation26], 4
      %s10833 = int_to_ptr.vmem [resolvable:$true] %s10832
      %10835 = dma.vmem_to_hbm [thread:$0]  %s10833, 32, %s65, [#allocation4]
    $region193: #{tpu_custom_call.1} parent=1 // pred_fallthru
      _
    // Predicated region
    $region194: #{tpu_custom_call.1} parent=1 // pred_check
      _
    $region195: #{tpu_custom_call.1} parent=1 // pred_check_branch
      %10837 = sbr.rel (0) target = $region197
    $region196: #{tpu_custom_call.1} parent=1 // pred_region
      %10838 = dma.done [#allocation4], 32
    $region197: #{tpu_custom_call.1} parent=1 // pred_fallthru
      _
    %10839 = vsyncpa [#allocation3], 1
    %10840 = vsyncpa [#allocation6], 1
    %10841 = vsyncpa [#allocation9], 1
    %10842 = vsyncpa [#allocation12], 1
    %10843 = vsyncpa [#allocation15], 1
    %10844 = vsyncpa [#allocation18], 1
    %10845 = vsyncpa [#allocation21], 1
    %10846 = vsyncpa [#allocation24], 1
    %10847 = vsyncpa [#allocation4], 1

</llo_original>
